<compile_context>
chip_gen: v7x
topology: tpu7x:2x2x1
jax: 0.10.0
libtpu: 0.0.40
codegen_flags: <defaults>
</compile_context>

<pallas_src>
import functools
import math

import numpy as np
import jax
import jax.numpy as jnp
from jax.experimental import pallas as pl
from jax.experimental.pallas import tpu as pltpu

INF = 1e10
PAD = 1
LN_EPS = 1e-6


# ----------------------------- fully fused forward kernel -----------------------------

def _fused_forward_kernel(h_ref, enc_ref,
                          wq1_ref, wk1_ref, wv1_ref, wo1_ref, g1_ref, b1_ref,
                          wq2_ref, wk2_ref, wv2_ref, wo2_ref, g2_ref, b2_ref,
                          fw1_ref, fb1_ref, fw2_ref, fb2_ref, g3_ref, b3_ref,
                          outw_ref, outb_ref,
                          logits_ref,
                          *, n_layers, n_heads, d_model):
    T = h_ref.shape[1]
    S = enc_ref.shape[1]
    Dp = h_ref.shape[2]
    H = n_heads
    Dhp = wq1_ref.shape[3]                       # padded per-head dim
    inv_scale = 1.0 / math.sqrt(d_model)         # reference scales by sqrt(d_model)

    # mask over the real d_model lanes (padded lanes excluded from LayerNorm stats)
    lane = jax.lax.broadcasted_iota(jnp.int32, (1, Dp), 1)
    d_mask = (lane < d_model).astype(jnp.float32)

    # causal bias: built once, shared across layers; subtracted BEFORE the 1/sqrt scale
    row = jax.lax.broadcasted_iota(jnp.int32, (T, T), 0)
    col = jax.lax.broadcasted_iota(jnp.int32, (T, T), 1)
    causal_bias = jnp.where(col > row, jnp.float32(INF), jnp.float32(0.0))   # (T, T)

    x = h_ref[0]                                  # (T, Dp)  -- one batch element per step
    enc = enc_ref[0]                              # (S, Dp)
    encb = jnp.broadcast_to(enc[None], (H, S, Dp))          # hoisted: enc is layer-invariant

    def ln_residual(a, r, gamma, beta):
        # LayerNorm(a + r), torch.std unbiased (N-1) estimator, (std + eps); stats masked
        # to the real d_model lanes; padded gamma/beta are zero -> padded lanes stay zero.
        z = a + r
        mean = jnp.sum(z * d_mask, axis=-1, keepdims=True) * (1.0 / d_model)
        dev = (z - mean) * d_mask
        var = jnp.sum(dev * dev, axis=-1, keepdims=True) * (1.0 / (d_model - 1))
        std = jnp.sqrt(var)
        return gamma * (z - mean) / (std + LN_EPS) + beta

    def mha(q, k, v, wo, causal):
        # q/k/v: (H, Tq/Tk, Dhp) head-major; wo: (H, Dhp, Dp).
        s = jnp.einsum('hqd,hkd->hqk', q, k,
                       preferred_element_type=jnp.float32)               # (H, Tq, Tk)
        if causal:
            s = s - causal_bias[None]
        s = s * inv_scale
        m = jnp.max(s, axis=-1, keepdims=True)
        p = jnp.exp(s - m)
        p = p / jnp.sum(p, axis=-1, keepdims=True)        # exact divide (== F.softmax)
        o = jnp.einsum('hqk,hkd->hqd', p, v,
                       preferred_element_type=jnp.float32)               # (H, Tq, Dhp)
        a_h = jnp.einsum('hqd,hde->hqe', o, wo,
                         preferred_element_type=jnp.float32)             # (H, Tq, Dp)
        return jnp.sum(a_h, axis=0)               # sum over heads == concat @ wo

    for l in range(n_layers):                     # statically unrolled inside ONE kernel
        # ---------------- self-attention residual block (causal) ----------------
        xb = jnp.broadcast_to(x[None], (H, T, Dp))
        q = jnp.einsum('htd,hdk->htk', xb, wq1_ref[l], preferred_element_type=jnp.float32)
        k = jnp.einsum('htd,hdk->htk', xb, wk1_ref[l], preferred_element_type=jnp.float32)
        v = jnp.einsum('htd,hdk->htk', xb, wv1_ref[l], preferred_element_type=jnp.float32)
        a = mha(q, k, v, wo1_ref[l], causal=True)
        x = ln_residual(x, a, g1_ref[l], b1_ref[l])

        # ---------------- cross-attention residual block ----------------
        xb = jnp.broadcast_to(x[None], (H, T, Dp))
        q = jnp.einsum('htd,hdk->htk', xb, wq2_ref[l], preferred_element_type=jnp.float32)
        k = jnp.einsum('hsd,hdk->hsk', encb, wk2_ref[l], preferred_element_type=jnp.float32)
        v = jnp.einsum('hsd,hdk->hsk', encb, wv2_ref[l], preferred_element_type=jnp.float32)
        a = mha(q, k, v, wo2_ref[l], causal=False)
        x = ln_residual(x, a, g2_ref[l], b2_ref[l])

        # ---------------- feed-forward residual block ----------------
        h1 = jnp.maximum(
            jnp.dot(x, fw1_ref[l], preferred_element_type=jnp.float32) + fb1_ref[l], 0.0)
        f = jnp.dot(h1, fw2_ref[l], preferred_element_type=jnp.float32) + fb2_ref[l]
        x = ln_residual(x, f, g3_ref[l], b3_ref[l])

    # fused output projection -> lane-dense (T, Vp=128) store
    logits_ref[0] = (jnp.dot(x, outw_ref[...], preferred_element_type=jnp.float32)
                     + outb_ref[...])


def fused_decoder_forward(h0, enc, p, *, d_model, n_heads):
    """Single pallas_call for the whole decoder stack + output projection."""
    B, T, Dp = h0.shape
    S = enc.shape[1]
    L = p['wq1'].shape[0]
    Dhp = p['wq1'].shape[3]
    Hp = p['ff_w1'].shape[2]
    Vp = p['out_wT_pad'].shape[1]

    weights = (p['wq1'], p['wk1'], p['wv1'], p['wo1'], p['ln1_g'], p['ln1_b'],
               p['wq2'], p['wk2'], p['wv2'], p['wo2'], p['ln2_g'], p['ln2_b'],
               p['ff_w1'], p['ff_b1'], p['ff_w2'], p['ff_b2'], p['ln3_g'], p['ln3_b'],
               p['out_wT_pad'], p['out_b_pad'])

    def full_spec(a):
        nd = a.ndim
        return pl.BlockSpec(a.shape, lambda b, n=nd: (0,) * n)   # constant -> no re-DMA

    in_specs = ([pl.BlockSpec((1, T, Dp), lambda b: (b, 0, 0)),
                 pl.BlockSpec((1, S, Dp), lambda b: (b, 0, 0))]
                + [full_spec(w) for w in weights])
    out_spec = pl.BlockSpec((1, T, Vp), lambda b: (b, 0, 0))

    # advisory cost hint for the XLA scheduler
    per_layer = (3 * 2 * T * Dp * Dp * 1                       # self q/k/v (per head summed)
                 + 2 * 2 * n_heads * T * T * Dhp               # self scores + attn*V
                 + 2 * n_heads * T * Dhp * Dp                  # self wo
                 + 2 * T * Dp * Dp + 2 * 2 * S * Dp * Dp       # cross q, k, v
                 + 2 * 2 * n_heads * T * S * Dhp               # cross scores + attn*V
                 + 2 * n_heads * T * Dhp * Dp                  # cross wo
                 + 2 * T * Dp * Hp + 2 * T * Hp * Dp)          # feed-forward
    flops = B * (L * per_layer + 2 * T * Dp * Vp)
    transcendentals = B * L * n_heads * (T * T + T * S)
    bytes_accessed = 4 * (h0.size + enc.size + sum(int(w.size) for w in weights)
                          + B * T * Vp)

    kernel = functools.partial(_fused_forward_kernel, n_layers=L,
                               n_heads=n_heads, d_model=d_model)
    return pl.pallas_call(
        kernel,
        out_shape=jax.ShapeDtypeStruct((B, T, Vp), jnp.float32),
        grid_spec=pltpu.PrefetchScalarGridSpec(
            num_scalar_prefetch=0, grid=(B,),
            in_specs=in_specs, out_specs=out_spec),
        compiler_params=pltpu.CompilerParams(
            dimension_semantics=("parallel",)),
        cost_estimate=pl.CostEstimate(flops=int(flops),
                                      transcendentals=int(transcendentals),
                                      bytes_accessed=int(bytes_accessed)),
    )(h0, enc, *weights)


# ------------------------------ model glue (all under jit) ------------------------------

@functools.lru_cache(maxsize=None)
def _positional_encodings_np(T, D):
    positions = np.arange(T, dtype=np.float32)
    enc = np.zeros((T, D), dtype=np.float32)
    for c in range(D):
        if c % 2 == 0:
            enc[:, c] = np.sin(positions / 10000 ** (c / D))
        else:
            enc[:, c] = np.cos(positions / 10000 ** ((c - 1) / D))
    return enc


@functools.partial(jax.jit, static_argnames=("d_model", "n_heads", "vocab_size"))
def _forward_jit(x_enc, tokens, keep_idx, pos_enc_pad, params, *,
                 d_model, n_heads, vocab_size):
    d_pad = params['out_w_pad'].shape[1]
    B, S, D = x_enc.shape
    x_pad = jnp.pad(x_enc, ((0, 0), (0, 0), (0, d_pad - D)))            # lane-dense enc
    # embedding tied to the output projection weight, scaled by sqrt(d_model); dropout
    # is identity (eval mode).
    embedW = params['out_w_pad'] * math.sqrt(d_model)                   # (Vp, Dp)
    h0 = jnp.take(embedW, tokens, axis=0) + pos_enc_pad[None]           # (B, T, Dp)
    # TODO(synk): `encoder` is an externally injected module in the reference; stubbed as
    # "the same (B, S_enc, d_model) features fed to every decoder layer".
    logits_pad = fused_decoder_forward(h0, x_pad, params,
                                       d_model=d_model, n_heads=n_heads)  # (B, T, Vp)
    Bt, T, Vp = logits_pad.shape
    flat = logits_pad.reshape(Bt * T, Vp)[:, :vocab_size]               # drop padded vocab
    # fixed-length gather of the kept (non-<pad>) rows (kept rows first, rest ignored)
    return jnp.take(flat, keep_idx, axis=0)                             # (B*T, V)


def real_transformer_forward(x, s, params, d_model, n_heads, n_layers, vocab_size):
    del n_layers  # layer count comes from the stacked weights in params
    # TODO(synk): mask() is a dynamic-shape boolean row-gather; keep indices are computed
    # host-side from the (host-known) token tensor and padded to a FIXED length so the
    # jitted device forward compiles once; only the final [:n_keep] slice depends on the
    # keep count.
    s_np = np.asarray(s)
    targets_full = s_np[:, 1:].reshape(-1)
    keep = np.nonzero(targets_full != PAD)[0].astype(np.int32)
    n_keep = int(keep.size)
    keep_idx = np.zeros((targets_full.size,), np.int32)
    keep_idx[:n_keep] = keep

    tokens = jnp.asarray(s_np[:, :-1], dtype=jnp.int32)
    T = int(tokens.shape[1])
    d_pad = int(params['out_w_pad'].shape[1])
    pe = _positional_encodings_np(T, d_model)
    pe_pad = np.zeros((T, d_pad), np.float32)
    pe_pad[:, :d_model] = pe

    logits_all = _forward_jit(jnp.asarray(x), tokens, jnp.asarray(keep_idx),
                              jnp.asarray(pe_pad), params,
                              d_model=d_model, n_heads=n_heads, vocab_size=vocab_size)
    logits = logits_all[:n_keep]
    targets = jnp.asarray(targets_full[keep])
    return logits, targets


# ------------------------------ parameters (padded at init) ------------------------------

def init_params(key, d_model, d_hidden, n_layers, n_heads, vocab_size,
                d_pad=128, h_pad=128, v_pad=128):
    dh = d_model // n_heads
    dhp = d_pad // n_heads
    keys = iter(jax.random.split(key, 10 * n_layers + 1))

    def nrm(shape, scale=0.05):
        return np.asarray(scale * jax.random.normal(next(keys), shape, dtype=jnp.float32))

    def pad2(w, r, c):
        out = np.zeros((r, c), np.float32)
        out[:w.shape[0], :w.shape[1]] = w
        return out

    def pad_head_proj(w):     # real (D, D), output cols = head concat -> (H, Dp, Dhp)
        out = np.zeros((n_heads, d_pad, dhp), np.float32)
        for h in range(n_heads):
            out[h, :d_model, :dh] = w[:, h * dh:(h + 1) * dh]
        return out

    def pad_head_out(w):      # real (D, D), input rows = head concat -> (H, Dhp, Dp)
        out = np.zeros((n_heads, dhp, d_pad), np.float32)
        for h in range(n_heads):
            out[h, :dh, :d_model] = w[h * dh:(h + 1) * dh, :]
        return out

    def pad_gamma():          # padded gamma lanes are ZERO so padded LN output stays zero
        g = np.zeros((1, d_pad), np.float32)
        g[0, :d_model] = 1.0
        return g

    names = ('wq1', 'wk1', 'wv1', 'wo1', 'ln1_g', 'ln1_b',
             'wq2', 'wk2', 'wv2', 'wo2', 'ln2_g', 'ln2_b',
             'ff_w1', 'ff_b1', 'ff_w2', 'ff_b2', 'ln3_g', 'ln3_b')
    stacks = {n: [] for n in names}
    for _ in range(n_layers):
        stacks['wq1'].append(pad_head_proj(nrm((d_model, d_model))))
        stacks['wk1'].append(pad_head_proj(nrm((d_model, d_model))))
        stacks['wv1'].append(pad_head_proj(nrm((d_model, d_model))))
        stacks['wo1'].append(pad_head_out(nrm((d_model, d_model))))
        stacks['ln1_g'].append(pad_gamma())
        stacks['ln1_b'].append(np.zeros((1, d_pad), np.float32))
        stacks['wq2'].append(pad_head_proj(nrm((d_model, d_model))))
        stacks['wk2'].append(pad_head_proj(nrm((d_model, d_model))))
        stacks['wv2'].append(pad_head_proj(nrm((d_model, d_model))))
        stacks['wo2'].append(pad_head_out(nrm((d_model, d_model))))
        stacks['ln2_g'].append(pad_gamma())
        stacks['ln2_b'].append(np.zeros((1, d_pad), np.float32))
        stacks['ff_w1'].append(pad2(nrm((d_model, d_hidden)), d_pad, h_pad))
        stacks['ff_b1'].append(np.zeros((1, h_pad), np.float32))
        stacks['ff_w2'].append(pad2(nrm((d_hidden, d_model)), h_pad, d_pad))
        stacks['ff_b2'].append(np.zeros((1, d_pad), np.float32))
        stacks['ln3_g'].append(pad_gamma())
        stacks['ln3_b'].append(np.zeros((1, d_pad), np.float32))

    params = {k: jnp.asarray(np.stack(v, axis=0)) for k, v in stacks.items()}
    out_w = nrm((vocab_size, d_model))                       # torch Linear layout (V, D)
    out_w_pad = pad2(out_w, v_pad, d_pad)                    # (Vp, Dp), zero padded
    params['out_w_pad'] = jnp.asarray(out_w_pad)             # tied embedding weight
    params['out_wT_pad'] = jnp.asarray(np.ascontiguousarray(out_w_pad.T))   # (Dp, Vp)
    params['out_b_pad'] = jnp.zeros((1, v_pad), jnp.float32)
    return params


# --------------------------------- main ---------------------------------

if __name__ == "__main__":
    d_model, d_hidden, n_layers, n_heads = 32, 64, 2, 4
    vocab_size = 16
    B, S_enc, T_plus1 = 2, 8, 9

    key = jax.random.PRNGKey(0)
    k_params, k_x, k_s = jax.random.split(key, 3)

    params = init_params(k_params, d_model, d_hidden, n_layers, n_heads, vocab_size)
    x = jax.random.normal(k_x, (B, S_enc, d_model), dtype=jnp.float32)   # encoder features

    # np.array(...) makes a WRITABLE host copy (np.asarray of a jax array is read-only)
    s_np = np.array(jax.random.randint(k_s, (B, T_plus1), 2, vocab_size), dtype=np.int32)
    s_np[0, -2:] = PAD       # some padding to exercise mask()
    s_np[1, -1:] = PAD

    logits, targets = real_transformer_forward(x, s_np, params, d_model, n_heads,
                                               n_layers, vocab_size)
    jax.block_until_ready(logits)
    jax.block_until_ready(targets)

    n_keep = int((s_np[:, 1:] != PAD).sum())
    assert logits.shape == (n_keep, vocab_size)
    assert targets.shape == (n_keep,)
    print("KERNEL_OK")
</pallas_src>

<mosaic_0001>
module attributes {stable_mosaic.version = 11 : i64} {
  func.func @_fused_forward_kernel(%arg0: i32, %arg1: memref<1x8x128xf32, #tpu.memory_space<vmem>>, %arg2: memref<1x8x128xf32, #tpu.memory_space<vmem>>, %arg3: memref<2x4x128x32xf32, #tpu.memory_space<vmem>>, %arg4: memref<2x4x128x32xf32, #tpu.memory_space<vmem>>, %arg5: memref<2x4x128x32xf32, #tpu.memory_space<vmem>>, %arg6: memref<2x4x32x128xf32, #tpu.memory_space<vmem>>, %arg7: memref<2x1x128xf32, #tpu.memory_space<vmem>>, %arg8: memref<2x1x128xf32, #tpu.memory_space<vmem>>, %arg9: memref<2x4x128x32xf32, #tpu.memory_space<vmem>>, %arg10: memref<2x4x128x32xf32, #tpu.memory_space<vmem>>, %arg11: memref<2x4x128x32xf32, #tpu.memory_space<vmem>>, %arg12: memref<2x4x32x128xf32, #tpu.memory_space<vmem>>, %arg13: memref<2x1x128xf32, #tpu.memory_space<vmem>>, %arg14: memref<2x1x128xf32, #tpu.memory_space<vmem>>, %arg15: memref<2x128x128xf32, #tpu.memory_space<vmem>>, %arg16: memref<2x1x128xf32, #tpu.memory_space<vmem>>, %arg17: memref<2x128x128xf32, #tpu.memory_space<vmem>>, %arg18: memref<2x1x128xf32, #tpu.memory_space<vmem>>, %arg19: memref<2x1x128xf32, #tpu.memory_space<vmem>>, %arg20: memref<2x1x128xf32, #tpu.memory_space<vmem>>, %arg21: memref<128x128xf32, #tpu.memory_space<vmem>>, %arg22: memref<1x128xf32, #tpu.memory_space<vmem>>, %arg23: memref<1x8x128xf32, #tpu.memory_space<vmem>>) attributes {dimension_semantics = [#tpu.dimension_semantics<parallel>], iteration_bounds = array<i64: 2>, scalar_prefetch = 0 : i64, scratch_operands = 0 : i64, tpu.core_type = #tpu.core_type<tc>, window_params = [{transform_indices = @transform_0, window_bounds = array<i64: 1, 8, 128>}, {transform_indices = @transform_1, window_bounds = array<i64: 1, 8, 128>}, {pipeline_mode = #tpu.pipeline_mode<synchronous>, transform_indices = @transform_2, window_bounds = array<i64: 2, 4, 128, 32>}, {pipeline_mode = #tpu.pipeline_mode<synchronous>, transform_indices = @transform_3, window_bounds = array<i64: 2, 4, 128, 32>}, {pipeline_mode = #tpu.pipeline_mode<synchronous>, transform_indices = @transform_4, window_bounds = array<i64: 2, 4, 128, 32>}, {pipeline_mode = #tpu.pipeline_mode<synchronous>, transform_indices = @transform_5, window_bounds = array<i64: 2, 4, 32, 128>}, {pipeline_mode = #tpu.pipeline_mode<synchronous>, transform_indices = @transform_6, window_bounds = array<i64: 2, 1, 128>}, {pipeline_mode = #tpu.pipeline_mode<synchronous>, transform_indices = @transform_7, window_bounds = array<i64: 2, 1, 128>}, {pipeline_mode = #tpu.pipeline_mode<synchronous>, transform_indices = @transform_8, window_bounds = array<i64: 2, 4, 128, 32>}, {pipeline_mode = #tpu.pipeline_mode<synchronous>, transform_indices = @transform_9, window_bounds = array<i64: 2, 4, 128, 32>}, {pipeline_mode = #tpu.pipeline_mode<synchronous>, transform_indices = @transform_10, window_bounds = array<i64: 2, 4, 128, 32>}, {pipeline_mode = #tpu.pipeline_mode<synchronous>, transform_indices = @transform_11, window_bounds = array<i64: 2, 4, 32, 128>}, {pipeline_mode = #tpu.pipeline_mode<synchronous>, transform_indices = @transform_12, window_bounds = array<i64: 2, 1, 128>}, {pipeline_mode = #tpu.pipeline_mode<synchronous>, transform_indices = @transform_13, window_bounds = array<i64: 2, 1, 128>}, {pipeline_mode = #tpu.pipeline_mode<synchronous>, transform_indices = @transform_14, window_bounds = array<i64: 2, 128, 128>}, {pipeline_mode = #tpu.pipeline_mode<synchronous>, transform_indices = @transform_15, window_bounds = array<i64: 2, 1, 128>}, {pipeline_mode = #tpu.pipeline_mode<synchronous>, transform_indices = @transform_16, window_bounds = array<i64: 2, 128, 128>}, {pipeline_mode = #tpu.pipeline_mode<synchronous>, transform_indices = @transform_17, window_bounds = array<i64: 2, 1, 128>}, {pipeline_mode = #tpu.pipeline_mode<synchronous>, transform_indices = @transform_18, window_bounds = array<i64: 2, 1, 128>}, {pipeline_mode = #tpu.pipeline_mode<synchronous>, transform_indices = @transform_19, window_bounds = array<i64: 2, 1, 128>}, {pipeline_mode = #tpu.pipeline_mode<synchronous>, transform_indices = @transform_20, window_bounds = array<i64: 128, 128>}, {pipeline_mode = #tpu.pipeline_mode<synchronous>, transform_indices = @transform_21, window_bounds = array<i64: 1, 128>}, {transform_indices = @transform_22, window_bounds = array<i64: 1, 8, 128>}]} {
    %0 = tpu.iota {dimensions = array<i32: 1>} : vector<1x128xi32>
    %c32_i32 = arith.constant 32 : i32
    %1 = vector.broadcast %c32_i32 : i32 to vector<1x128xi32>
    %2 = arith.cmpi slt, %0, %1 : vector<1x128xi32>
    %3 = arith.extui %2 : vector<1x128xi1> to vector<1x128xi32>
    %4 = arith.sitofp %3 : vector<1x128xi32> to vector<1x128xf32>
    %5 = tpu.iota {dimensions = array<i32: 0>} : vector<8x8xi32>
    %6 = tpu.iota {dimensions = array<i32: 1>} : vector<8x8xi32>
    %7 = arith.cmpi sgt, %6, %5 : vector<8x8xi32>
    %cst = arith.constant 1.000000e+10 : f32
    %cst_0 = arith.constant 0.000000e+00 : f32
    %8 = vector.broadcast %cst : f32 to vector<8x8xf32>
    %9 = vector.broadcast %cst_0 : f32 to vector<8x8xf32>
    %10 = arith.select %7, %8, %9 : vector<8x8xi1>, vector<8x8xf32>
    %c0 = arith.constant 0 : index
    %c0_1 = arith.constant 0 : index
    %c0_2 = arith.constant 0 : index
    %11 = vector.load %arg1[%c0, %c0_1, %c0_2] : memref<1x8x128xf32, #tpu.memory_space<vmem>>, vector<1x8x128xf32>
    %12 = vector.shape_cast %11 : vector<1x8x128xf32> to vector<8x128xf32>
    %c0_3 = arith.constant 0 : index
    %c0_4 = arith.constant 0 : index
    %c0_5 = arith.constant 0 : index
    %13 = vector.load %arg2[%c0_3, %c0_4, %c0_5] : memref<1x8x128xf32, #tpu.memory_space<vmem>>, vector<1x8x128xf32>
    %14 = vector.shape_cast %13 : vector<1x8x128xf32> to vector<8x128xf32>
    %15 = vector.shape_cast %14 : vector<8x128xf32> to vector<1x8x128xf32>
    %16 = vector.shape_cast %15 : vector<1x8x128xf32> to vector<1x8x128xf32>
    %17 = vector.broadcast %16 : vector<1x8x128xf32> to vector<4x8x128xf32>
    %18 = vector.shape_cast %12 : vector<8x128xf32> to vector<1x8x128xf32>
    %19 = vector.shape_cast %18 : vector<1x8x128xf32> to vector<1x8x128xf32>
    %20 = vector.broadcast %19 : vector<1x8x128xf32> to vector<4x8x128xf32>
    %c0_6 = arith.constant 0 : index
    %c0_7 = arith.constant 0 : index
    %c0_8 = arith.constant 0 : index
    %c0_9 = arith.constant 0 : index
    %21 = vector.load %arg3[%c0_6, %c0_7, %c0_8, %c0_9] : memref<2x4x128x32xf32, #tpu.memory_space<vmem>>, vector<1x4x128x32xf32>
    %22 = vector.shape_cast %21 : vector<1x4x128x32xf32> to vector<4x128x32xf32>
    "tpu.trace_start"() <{level = 10 : i32, message = "htd,hdk->htk"}> : () -> ()
    %cst_10 = arith.constant dense<0.000000e+00> : vector<4x8x32xf32>
    %23 = tpu.matmul %20, %22, %cst_10 {dimension_numbers = #tpu.dot_dimension_numbers<[2], [1], [1], [2], [0, 0, 0, 1, 1, 2], [0], [0]>} : vector<4x8x128xf32>, vector<4x128x32xf32>, vector<4x8x32xf32> -> vector<4x8x32xf32>
    "tpu.trace_stop"() : () -> ()
    %c0_11 = arith.constant 0 : index
    %c0_12 = arith.constant 0 : index
    %c0_13 = arith.constant 0 : index
    %c0_14 = arith.constant 0 : index
    %24 = vector.load %arg4[%c0_11, %c0_12, %c0_13, %c0_14] : memref<2x4x128x32xf32, #tpu.memory_space<vmem>>, vector<1x4x128x32xf32>
    %25 = vector.shape_cast %24 : vector<1x4x128x32xf32> to vector<4x128x32xf32>
    "tpu.trace_start"() <{level = 10 : i32, message = "htd,hdk->htk"}> : () -> ()
    %cst_15 = arith.constant dense<0.000000e+00> : vector<4x8x32xf32>
    %26 = tpu.matmul %20, %25, %cst_15 {dimension_numbers = #tpu.dot_dimension_numbers<[2], [1], [1], [2], [0, 0, 0, 1, 1, 2], [0], [0]>} : vector<4x8x128xf32>, vector<4x128x32xf32>, vector<4x8x32xf32> -> vector<4x8x32xf32>
    "tpu.trace_stop"() : () -> ()
    %c0_16 = arith.constant 0 : index
    %c0_17 = arith.constant 0 : index
    %c0_18 = arith.constant 0 : index
    %c0_19 = arith.constant 0 : index
    %27 = vector.load %arg5[%c0_16, %c0_17, %c0_18, %c0_19] : memref<2x4x128x32xf32, #tpu.memory_space<vmem>>, vector<1x4x128x32xf32>
    %28 = vector.shape_cast %27 : vector<1x4x128x32xf32> to vector<4x128x32xf32>
    "tpu.trace_start"() <{level = 10 : i32, message = "htd,hdk->htk"}> : () -> ()
    %cst_20 = arith.constant dense<0.000000e+00> : vector<4x8x32xf32>
    %29 = tpu.matmul %20, %28, %cst_20 {dimension_numbers = #tpu.dot_dimension_numbers<[2], [1], [1], [2], [0, 0, 0, 1, 1, 2], [0], [0]>} : vector<4x8x128xf32>, vector<4x128x32xf32>, vector<4x8x32xf32> -> vector<4x8x32xf32>
    "tpu.trace_stop"() : () -> ()
    %c0_21 = arith.constant 0 : index
    %c0_22 = arith.constant 0 : index
    %c0_23 = arith.constant 0 : index
    %c0_24 = arith.constant 0 : index
    %30 = vector.load %arg6[%c0_21, %c0_22, %c0_23, %c0_24] : memref<2x4x32x128xf32, #tpu.memory_space<vmem>>, vector<1x4x32x128xf32>
    %31 = vector.shape_cast %30 : vector<1x4x32x128xf32> to vector<4x32x128xf32>
    "tpu.trace_start"() <{level = 10 : i32, message = "hqd,hkd->hqk"}> : () -> ()
    %cst_25 = arith.constant dense<0.000000e+00> : vector<4x8x8xf32>
    %32 = tpu.matmul %23, %26, %cst_25 {dimension_numbers = #tpu.dot_dimension_numbers<[2], [2], [1], [1], [0, 0, 0, 1, 1, 1], [0], [0]>} : vector<4x8x32xf32>, vector<4x8x32xf32>, vector<4x8x8xf32> -> vector<4x8x8xf32>
    "tpu.trace_stop"() : () -> ()
    %33 = vector.shape_cast %10 : vector<8x8xf32> to vector<1x8x8xf32>
    %34 = vector.broadcast %33 : vector<1x8x8xf32> to vector<4x8x8xf32>
    %35 = arith.subf %32, %34 : vector<4x8x8xf32>
    %cst_26 = arith.constant 0.176776692 : f32
    %36 = vector.broadcast %cst_26 : f32 to vector<4x8x8xf32>
    %37 = arith.mulf %35, %36 : vector<4x8x8xf32>
    %cst_27 = arith.constant dense<0xFF800000> : vector<4x8xf32>
    %38 = vector.multi_reduction <maximumf>, %37, %cst_27 [2] : vector<4x8x8xf32> to vector<4x8xf32>
    %39 = vector.shape_cast %38 : vector<4x8xf32> to vector<4x8x1xf32>
    %40 = vector.broadcast %39 : vector<4x8x1xf32> to vector<4x8x8xf32>
    %41 = arith.subf %37, %40 : vector<4x8x8xf32>
    %42 = math.exp %41 : vector<4x8x8xf32>
    %cst_28 = arith.constant dense<0.000000e+00> : vector<4x8xf32>
    %43 = vector.multi_reduction <add>, %42, %cst_28 [2] : vector<4x8x8xf32> to vector<4x8xf32>
    %44 = vector.shape_cast %43 : vector<4x8xf32> to vector<4x8x1xf32>
    %45 = vector.broadcast %44 : vector<4x8x1xf32> to vector<4x8x8xf32>
    %46 = arith.divf %42, %45 : vector<4x8x8xf32>
    "tpu.trace_start"() <{level = 10 : i32, message = "hqk,hkd->hqd"}> : () -> ()
    %cst_29 = arith.constant dense<0.000000e+00> : vector<4x8x32xf32>
    %47 = tpu.matmul %46, %29, %cst_29 {dimension_numbers = #tpu.dot_dimension_numbers<[2], [1], [1], [2], [0, 0, 0, 1, 1, 2], [0], [0]>} : vector<4x8x8xf32>, vector<4x8x32xf32>, vector<4x8x32xf32> -> vector<4x8x32xf32>
    "tpu.trace_stop"() : () -> ()
    "tpu.trace_start"() <{level = 10 : i32, message = "hqd,hde->hqe"}> : () -> ()
    %cst_30 = arith.constant dense<0.000000e+00> : vector<4x8x128xf32>
    %48 = tpu.matmul %47, %31, %cst_30 {dimension_numbers = #tpu.dot_dimension_numbers<[2], [1], [1], [2], [0, 0, 0, 1, 1, 2], [0], [0]>} : vector<4x8x32xf32>, vector<4x32x128xf32>, vector<4x8x128xf32> -> vector<4x8x128xf32>
    "tpu.trace_stop"() : () -> ()
    %cst_31 = arith.constant dense<0.000000e+00> : vector<8x128xf32>
    %49 = vector.multi_reduction <add>, %48, %cst_31 [0] : vector<4x8x128xf32> to vector<8x128xf32>
    %c0_32 = arith.constant 0 : index
    %c0_33 = arith.constant 0 : index
    %c0_34 = arith.constant 0 : index
    %50 = vector.load %arg7[%c0_32, %c0_33, %c0_34] : memref<2x1x128xf32, #tpu.memory_space<vmem>>, vector<1x1x128xf32>
    %51 = vector.shape_cast %50 : vector<1x1x128xf32> to vector<1x128xf32>
    %c0_35 = arith.constant 0 : index
    %c0_36 = arith.constant 0 : index
    %c0_37 = arith.constant 0 : index
    %52 = vector.load %arg8[%c0_35, %c0_36, %c0_37] : memref<2x1x128xf32, #tpu.memory_space<vmem>>, vector<1x1x128xf32>
    %53 = vector.shape_cast %52 : vector<1x1x128xf32> to vector<1x128xf32>
    %54 = arith.addf %12, %49 : vector<8x128xf32>
    %55 = vector.broadcast %4 : vector<1x128xf32> to vector<8x128xf32>
    %56 = arith.mulf %54, %55 : vector<8x128xf32>
    %cst_38 = arith.constant dense<0.000000e+00> : vector<8xf32>
    %57 = vector.multi_reduction <add>, %56, %cst_38 [1] : vector<8x128xf32> to vector<8xf32>
    %58 = vector.shape_cast %57 : vector<8xf32> to vector<8x1xf32>
    %cst_39 = arith.constant 3.125000e-02 : f32
    %59 = vector.broadcast %cst_39 : f32 to vector<8x1xf32>
    %60 = arith.mulf %58, %59 : vector<8x1xf32>
    %61 = vector.broadcast %60 : vector<8x1xf32> to vector<8x128xf32>
    %62 = arith.subf %54, %61 : vector<8x128xf32>
    %63 = vector.broadcast %4 : vector<1x128xf32> to vector<8x128xf32>
    %64 = arith.mulf %62, %63 : vector<8x128xf32>
    %65 = arith.mulf %64, %64 : vector<8x128xf32>
    %cst_40 = arith.constant dense<0.000000e+00> : vector<8xf32>
    %66 = vector.multi_reduction <add>, %65, %cst_40 [1] : vector<8x128xf32> to vector<8xf32>
    %67 = vector.shape_cast %66 : vector<8xf32> to vector<8x1xf32>
    %cst_41 = arith.constant 0.0322580636 : f32
    %68 = vector.broadcast %cst_41 : f32 to vector<8x1xf32>
    %69 = arith.mulf %67, %68 : vector<8x1xf32>
    %70 = math.sqrt %69 : vector<8x1xf32>
    %71 = vector.broadcast %60 : vector<8x1xf32> to vector<8x128xf32>
    %72 = arith.subf %54, %71 : vector<8x128xf32>
    %73 = vector.broadcast %51 : vector<1x128xf32> to vector<8x128xf32>
    %74 = arith.mulf %73, %72 : vector<8x128xf32>
    %cst_42 = arith.constant 9.99999997E-7 : f32
    %75 = vector.broadcast %cst_42 : f32 to vector<8x1xf32>
    %76 = arith.addf %70, %75 : vector<8x1xf32>
    %77 = vector.broadcast %76 : vector<8x1xf32> to vector<8x128xf32>
    %78 = arith.divf %74, %77 : vector<8x128xf32>
    %79 = vector.broadcast %53 : vector<1x128xf32> to vector<8x128xf32>
    %80 = arith.addf %78, %79 : vector<8x128xf32>
    %81 = vector.shape_cast %80 : vector<8x128xf32> to vector<1x8x128xf32>
    %82 = vector.shape_cast %81 : vector<1x8x128xf32> to vector<1x8x128xf32>
    %83 = vector.broadcast %82 : vector<1x8x128xf32> to vector<4x8x128xf32>
    %c0_43 = arith.constant 0 : index
    %c0_44 = arith.constant 0 : index
    %c0_45 = arith.constant 0 : index
    %c0_46 = arith.constant 0 : index
    %84 = vector.load %arg9[%c0_43, %c0_44, %c0_45, %c0_46] : memref<2x4x128x32xf32, #tpu.memory_space<vmem>>, vector<1x4x128x32xf32>
    %85 = vector.shape_cast %84 : vector<1x4x128x32xf32> to vector<4x128x32xf32>
    "tpu.trace_start"() <{level = 10 : i32, message = "htd,hdk->htk"}> : () -> ()
    %cst_47 = arith.constant dense<0.000000e+00> : vector<4x8x32xf32>
    %86 = tpu.matmul %83, %85, %cst_47 {dimension_numbers = #tpu.dot_dimension_numbers<[2], [1], [1], [2], [0, 0, 0, 1, 1, 2], [0], [0]>} : vector<4x8x128xf32>, vector<4x128x32xf32>, vector<4x8x32xf32> -> vector<4x8x32xf32>
    "tpu.trace_stop"() : () -> ()
    %c0_48 = arith.constant 0 : index
    %c0_49 = arith.constant 0 : index
    %c0_50 = arith.constant 0 : index
    %c0_51 = arith.constant 0 : index
    %87 = vector.load %arg10[%c0_48, %c0_49, %c0_50, %c0_51] : memref<2x4x128x32xf32, #tpu.memory_space<vmem>>, vector<1x4x128x32xf32>
    %88 = vector.shape_cast %87 : vector<1x4x128x32xf32> to vector<4x128x32xf32>
    "tpu.trace_start"() <{level = 10 : i32, message = "hsd,hdk->hsk"}> : () -> ()
    %cst_52 = arith.constant dense<0.000000e+00> : vector<4x8x32xf32>
    %89 = tpu.matmul %17, %88, %cst_52 {dimension_numbers = #tpu.dot_dimension_numbers<[2], [1], [1], [2], [0, 0, 0, 1, 1, 2], [0], [0]>} : vector<4x8x128xf32>, vector<4x128x32xf32>, vector<4x8x32xf32> -> vector<4x8x32xf32>
    "tpu.trace_stop"() : () -> ()
    %c0_53 = arith.constant 0 : index
    %c0_54 = arith.constant 0 : index
    %c0_55 = arith.constant 0 : index
    %c0_56 = arith.constant 0 : index
    %90 = vector.load %arg11[%c0_53, %c0_54, %c0_55, %c0_56] : memref<2x4x128x32xf32, #tpu.memory_space<vmem>>, vector<1x4x128x32xf32>
    %91 = vector.shape_cast %90 : vector<1x4x128x32xf32> to vector<4x128x32xf32>
    "tpu.trace_start"() <{level = 10 : i32, message = "hsd,hdk->hsk"}> : () -> ()
    %cst_57 = arith.constant dense<0.000000e+00> : vector<4x8x32xf32>
    %92 = tpu.matmul %17, %91, %cst_57 {dimension_numbers = #tpu.dot_dimension_numbers<[2], [1], [1], [2], [0, 0, 0, 1, 1, 2], [0], [0]>} : vector<4x8x128xf32>, vector<4x128x32xf32>, vector<4x8x32xf32> -> vector<4x8x32xf32>
    "tpu.trace_stop"() : () -> ()
    %c0_58 = arith.constant 0 : index
    %c0_59 = arith.constant 0 : index
    %c0_60 = arith.constant 0 : index
    %c0_61 = arith.constant 0 : index
    %93 = vector.load %arg12[%c0_58, %c0_59, %c0_60, %c0_61] : memref<2x4x32x128xf32, #tpu.memory_space<vmem>>, vector<1x4x32x128xf32>
    %94 = vector.shape_cast %93 : vector<1x4x32x128xf32> to vector<4x32x128xf32>
    "tpu.trace_start"() <{level = 10 : i32, message = "hqd,hkd->hqk"}> : () -> ()
    %cst_62 = arith.constant dense<0.000000e+00> : vector<4x8x8xf32>
    %95 = tpu.matmul %86, %89, %cst_62 {dimension_numbers = #tpu.dot_dimension_numbers<[2], [2], [1], [1], [0, 0, 0, 1, 1, 1], [0], [0]>} : vector<4x8x32xf32>, vector<4x8x32xf32>, vector<4x8x8xf32> -> vector<4x8x8xf32>
    "tpu.trace_stop"() : () -> ()
    %cst_63 = arith.constant 0.176776692 : f32
    %96 = vector.broadcast %cst_63 : f32 to vector<4x8x8xf32>
    %97 = arith.mulf %95, %96 : vector<4x8x8xf32>
    %cst_64 = arith.constant dense<0xFF800000> : vector<4x8xf32>
    %98 = vector.multi_reduction <maximumf>, %97, %cst_64 [2] : vector<4x8x8xf32> to vector<4x8xf32>
    %99 = vector.shape_cast %98 : vector<4x8xf32> to vector<4x8x1xf32>
    %100 = vector.broadcast %99 : vector<4x8x1xf32> to vector<4x8x8xf32>
    %101 = arith.subf %97, %100 : vector<4x8x8xf32>
    %102 = math.exp %101 : vector<4x8x8xf32>
    %cst_65 = arith.constant dense<0.000000e+00> : vector<4x8xf32>
    %103 = vector.multi_reduction <add>, %102, %cst_65 [2] : vector<4x8x8xf32> to vector<4x8xf32>
    %104 = vector.shape_cast %103 : vector<4x8xf32> to vector<4x8x1xf32>
    %105 = vector.broadcast %104 : vector<4x8x1xf32> to vector<4x8x8xf32>
    %106 = arith.divf %102, %105 : vector<4x8x8xf32>
    "tpu.trace_start"() <{level = 10 : i32, message = "hqk,hkd->hqd"}> : () -> ()
    %cst_66 = arith.constant dense<0.000000e+00> : vector<4x8x32xf32>
    %107 = tpu.matmul %106, %92, %cst_66 {dimension_numbers = #tpu.dot_dimension_numbers<[2], [1], [1], [2], [0, 0, 0, 1, 1, 2], [0], [0]>} : vector<4x8x8xf32>, vector<4x8x32xf32>, vector<4x8x32xf32> -> vector<4x8x32xf32>
    "tpu.trace_stop"() : () -> ()
    "tpu.trace_start"() <{level = 10 : i32, message = "hqd,hde->hqe"}> : () -> ()
    %cst_67 = arith.constant dense<0.000000e+00> : vector<4x8x128xf32>
    %108 = tpu.matmul %107, %94, %cst_67 {dimension_numbers = #tpu.dot_dimension_numbers<[2], [1], [1], [2], [0, 0, 0, 1, 1, 2], [0], [0]>} : vector<4x8x32xf32>, vector<4x32x128xf32>, vector<4x8x128xf32> -> vector<4x8x128xf32>
    "tpu.trace_stop"() : () -> ()
    %cst_68 = arith.constant dense<0.000000e+00> : vector<8x128xf32>
    %109 = vector.multi_reduction <add>, %108, %cst_68 [0] : vector<4x8x128xf32> to vector<8x128xf32>
    %c0_69 = arith.constant 0 : index
    %c0_70 = arith.constant 0 : index
    %c0_71 = arith.constant 0 : index
    %110 = vector.load %arg13[%c0_69, %c0_70, %c0_71] : memref<2x1x128xf32, #tpu.memory_space<vmem>>, vector<1x1x128xf32>
    %111 = vector.shape_cast %110 : vector<1x1x128xf32> to vector<1x128xf32>
    %c0_72 = arith.constant 0 : index
    %c0_73 = arith.constant 0 : index
    %c0_74 = arith.constant 0 : index
    %112 = vector.load %arg14[%c0_72, %c0_73, %c0_74] : memref<2x1x128xf32, #tpu.memory_space<vmem>>, vector<1x1x128xf32>
    %113 = vector.shape_cast %112 : vector<1x1x128xf32> to vector<1x128xf32>
    %114 = arith.addf %80, %109 : vector<8x128xf32>
    %115 = vector.broadcast %4 : vector<1x128xf32> to vector<8x128xf32>
    %116 = arith.mulf %114, %115 : vector<8x128xf32>
    %cst_75 = arith.constant dense<0.000000e+00> : vector<8xf32>
    %117 = vector.multi_reduction <add>, %116, %cst_75 [1] : vector<8x128xf32> to vector<8xf32>
    %118 = vector.shape_cast %117 : vector<8xf32> to vector<8x1xf32>
    %cst_76 = arith.constant 3.125000e-02 : f32
    %119 = vector.broadcast %cst_76 : f32 to vector<8x1xf32>
    %120 = arith.mulf %118, %119 : vector<8x1xf32>
    %121 = vector.broadcast %120 : vector<8x1xf32> to vector<8x128xf32>
    %122 = arith.subf %114, %121 : vector<8x128xf32>
    %123 = vector.broadcast %4 : vector<1x128xf32> to vector<8x128xf32>
    %124 = arith.mulf %122, %123 : vector<8x128xf32>
    %125 = arith.mulf %124, %124 : vector<8x128xf32>
    %cst_77 = arith.constant dense<0.000000e+00> : vector<8xf32>
    %126 = vector.multi_reduction <add>, %125, %cst_77 [1] : vector<8x128xf32> to vector<8xf32>
    %127 = vector.shape_cast %126 : vector<8xf32> to vector<8x1xf32>
    %cst_78 = arith.constant 0.0322580636 : f32
    %128 = vector.broadcast %cst_78 : f32 to vector<8x1xf32>
    %129 = arith.mulf %127, %128 : vector<8x1xf32>
    %130 = math.sqrt %129 : vector<8x1xf32>
    %131 = vector.broadcast %120 : vector<8x1xf32> to vector<8x128xf32>
    %132 = arith.subf %114, %131 : vector<8x128xf32>
    %133 = vector.broadcast %111 : vector<1x128xf32> to vector<8x128xf32>
    %134 = arith.mulf %133, %132 : vector<8x128xf32>
    %cst_79 = arith.constant 9.99999997E-7 : f32
    %135 = vector.broadcast %cst_79 : f32 to vector<8x1xf32>
    %136 = arith.addf %130, %135 : vector<8x1xf32>
    %137 = vector.broadcast %136 : vector<8x1xf32> to vector<8x128xf32>
    %138 = arith.divf %134, %137 : vector<8x128xf32>
    %139 = vector.broadcast %113 : vector<1x128xf32> to vector<8x128xf32>
    %140 = arith.addf %138, %139 : vector<8x128xf32>
    %c0_80 = arith.constant 0 : index
    %c0_81 = arith.constant 0 : index
    %c0_82 = arith.constant 0 : index
    %141 = vector.load %arg15[%c0_80, %c0_81, %c0_82] : memref<2x128x128xf32, #tpu.memory_space<vmem>>, vector<1x128x128xf32>
    %142 = vector.shape_cast %141 : vector<1x128x128xf32> to vector<128x128xf32>
    %cst_83 = arith.constant dense<0.000000e+00> : vector<8x128xf32>
    %143 = tpu.matmul %140, %142, %cst_83 {dimension_numbers = #tpu.dot_dimension_numbers<[1], [0], [0], [1], [0, 0, 1, 1], [], []>} : vector<8x128xf32>, vector<128x128xf32>, vector<8x128xf32> -> vector<8x128xf32>
    %c0_84 = arith.constant 0 : index
    %c0_85 = arith.constant 0 : index
    %c0_86 = arith.constant 0 : index
    %144 = vector.load %arg16[%c0_84, %c0_85, %c0_86] : memref<2x1x128xf32, #tpu.memory_space<vmem>>, vector<1x1x128xf32>
    %145 = vector.shape_cast %144 : vector<1x1x128xf32> to vector<1x128xf32>
    %146 = vector.broadcast %145 : vector<1x128xf32> to vector<8x128xf32>
    %147 = arith.addf %143, %146 : vector<8x128xf32>
    %cst_87 = arith.constant 0.000000e+00 : f32
    %148 = vector.broadcast %cst_87 : f32 to vector<8x128xf32>
    %149 = arith.maximumf %147, %148 : vector<8x128xf32>
    %c0_88 = arith.constant 0 : index
    %c0_89 = arith.constant 0 : index
    %c0_90 = arith.constant 0 : index
    %150 = vector.load %arg17[%c0_88, %c0_89, %c0_90] : memref<2x128x128xf32, #tpu.memory_space<vmem>>, vector<1x128x128xf32>
    %151 = vector.shape_cast %150 : vector<1x128x128xf32> to vector<128x128xf32>
    %cst_91 = arith.constant dense<0.000000e+00> : vector<8x128xf32>
    %152 = tpu.matmul %149, %151, %cst_91 {dimension_numbers = #tpu.dot_dimension_numbers<[1], [0], [0], [1], [0, 0, 1, 1], [], []>} : vector<8x128xf32>, vector<128x128xf32>, vector<8x128xf32> -> vector<8x128xf32>
    %c0_92 = arith.constant 0 : index
    %c0_93 = arith.constant 0 : index
    %c0_94 = arith.constant 0 : index
    %153 = vector.load %arg18[%c0_92, %c0_93, %c0_94] : memref<2x1x128xf32, #tpu.memory_space<vmem>>, vector<1x1x128xf32>
    %154 = vector.shape_cast %153 : vector<1x1x128xf32> to vector<1x128xf32>
    %155 = vector.broadcast %154 : vector<1x128xf32> to vector<8x128xf32>
    %156 = arith.addf %152, %155 : vector<8x128xf32>
    %c0_95 = arith.constant 0 : index
    %c0_96 = arith.constant 0 : index
    %c0_97 = arith.constant 0 : index
    %157 = vector.load %arg19[%c0_95, %c0_96, %c0_97] : memref<2x1x128xf32, #tpu.memory_space<vmem>>, vector<1x1x128xf32>
    %158 = vector.shape_cast %157 : vector<1x1x128xf32> to vector<1x128xf32>
    %c0_98 = arith.constant 0 : index
    %c0_99 = arith.constant 0 : index
    %c0_100 = arith.constant 0 : index
    %159 = vector.load %arg20[%c0_98, %c0_99, %c0_100] : memref<2x1x128xf32, #tpu.memory_space<vmem>>, vector<1x1x128xf32>
    %160 = vector.shape_cast %159 : vector<1x1x128xf32> to vector<1x128xf32>
    %161 = arith.addf %140, %156 : vector<8x128xf32>
    %162 = vector.broadcast %4 : vector<1x128xf32> to vector<8x128xf32>
    %163 = arith.mulf %161, %162 : vector<8x128xf32>
    %cst_101 = arith.constant dense<0.000000e+00> : vector<8xf32>
    %164 = vector.multi_reduction <add>, %163, %cst_101 [1] : vector<8x128xf32> to vector<8xf32>
    %165 = vector.shape_cast %164 : vector<8xf32> to vector<8x1xf32>
    %cst_102 = arith.constant 3.125000e-02 : f32
    %166 = vector.broadcast %cst_102 : f32 to vector<8x1xf32>
    %167 = arith.mulf %165, %166 : vector<8x1xf32>
    %168 = vector.broadcast %167 : vector<8x1xf32> to vector<8x128xf32>
    %169 = arith.subf %161, %168 : vector<8x128xf32>
    %170 = vector.broadcast %4 : vector<1x128xf32> to vector<8x128xf32>
    %171 = arith.mulf %169, %170 : vector<8x128xf32>
    %172 = arith.mulf %171, %171 : vector<8x128xf32>
    %cst_103 = arith.constant dense<0.000000e+00> : vector<8xf32>
    %173 = vector.multi_reduction <add>, %172, %cst_103 [1] : vector<8x128xf32> to vector<8xf32>
    %174 = vector.shape_cast %173 : vector<8xf32> to vector<8x1xf32>
    %cst_104 = arith.constant 0.0322580636 : f32
    %175 = vector.broadcast %cst_104 : f32 to vector<8x1xf32>
    %176 = arith.mulf %174, %175 : vector<8x1xf32>
    %177 = math.sqrt %176 : vector<8x1xf32>
    %178 = vector.broadcast %167 : vector<8x1xf32> to vector<8x128xf32>
    %179 = arith.subf %161, %178 : vector<8x128xf32>
    %180 = vector.broadcast %158 : vector<1x128xf32> to vector<8x128xf32>
    %181 = arith.mulf %180, %179 : vector<8x128xf32>
    %cst_105 = arith.constant 9.99999997E-7 : f32
    %182 = vector.broadcast %cst_105 : f32 to vector<8x1xf32>
    %183 = arith.addf %177, %182 : vector<8x1xf32>
    %184 = vector.broadcast %183 : vector<8x1xf32> to vector<8x128xf32>
    %185 = arith.divf %181, %184 : vector<8x128xf32>
    %186 = vector.broadcast %160 : vector<1x128xf32> to vector<8x128xf32>
    %187 = arith.addf %185, %186 : vector<8x128xf32>
    %188 = vector.shape_cast %187 : vector<8x128xf32> to vector<1x8x128xf32>
    %189 = vector.shape_cast %188 : vector<1x8x128xf32> to vector<1x8x128xf32>
    %190 = vector.broadcast %189 : vector<1x8x128xf32> to vector<4x8x128xf32>
    %c1 = arith.constant 1 : index
    %c0_106 = arith.constant 0 : index
    %c0_107 = arith.constant 0 : index
    %c0_108 = arith.constant 0 : index
    %191 = vector.load %arg3[%c1, %c0_106, %c0_107, %c0_108] : memref<2x4x128x32xf32, #tpu.memory_space<vmem>>, vector<1x4x128x32xf32>
    %192 = vector.shape_cast %191 : vector<1x4x128x32xf32> to vector<4x128x32xf32>
    "tpu.trace_start"() <{level = 10 : i32, message = "htd,hdk->htk"}> : () -> ()
    %cst_109 = arith.constant dense<0.000000e+00> : vector<4x8x32xf32>
    %193 = tpu.matmul %190, %192, %cst_109 {dimension_numbers = #tpu.dot_dimension_numbers<[2], [1], [1], [2], [0, 0, 0, 1, 1, 2], [0], [0]>} : vector<4x8x128xf32>, vector<4x128x32xf32>, vector<4x8x32xf32> -> vector<4x8x32xf32>
    "tpu.trace_stop"() : () -> ()
    %c1_110 = arith.constant 1 : index
    %c0_111 = arith.constant 0 : index
    %c0_112 = arith.constant 0 : index
    %c0_113 = arith.constant 0 : index
    %194 = vector.load %arg4[%c1_110, %c0_111, %c0_112, %c0_113] : memref<2x4x128x32xf32, #tpu.memory_space<vmem>>, vector<1x4x128x32xf32>
    %195 = vector.shape_cast %194 : vector<1x4x128x32xf32> to vector<4x128x32xf32>
    "tpu.trace_start"() <{level = 10 : i32, message = "htd,hdk->htk"}> : () -> ()
    %cst_114 = arith.constant dense<0.000000e+00> : vector<4x8x32xf32>
    %196 = tpu.matmul %190, %195, %cst_114 {dimension_numbers = #tpu.dot_dimension_numbers<[2], [1], [1], [2], [0, 0, 0, 1, 1, 2], [0], [0]>} : vector<4x8x128xf32>, vector<4x128x32xf32>, vector<4x8x32xf32> -> vector<4x8x32xf32>
    "tpu.trace_stop"() : () -> ()
    %c1_115 = arith.constant 1 : index
    %c0_116 = arith.constant 0 : index
    %c0_117 = arith.constant 0 : index
    %c0_118 = arith.constant 0 : index
    %197 = vector.load %arg5[%c1_115, %c0_116, %c0_117, %c0_118] : memref<2x4x128x32xf32, #tpu.memory_space<vmem>>, vector<1x4x128x32xf32>
    %198 = vector.shape_cast %197 : vector<1x4x128x32xf32> to vector<4x128x32xf32>
    "tpu.trace_start"() <{level = 10 : i32, message = "htd,hdk->htk"}> : () -> ()
    %cst_119 = arith.constant dense<0.000000e+00> : vector<4x8x32xf32>
    %199 = tpu.matmul %190, %198, %cst_119 {dimension_numbers = #tpu.dot_dimension_numbers<[2], [1], [1], [2], [0, 0, 0, 1, 1, 2], [0], [0]>} : vector<4x8x128xf32>, vector<4x128x32xf32>, vector<4x8x32xf32> -> vector<4x8x32xf32>
    "tpu.trace_stop"() : () -> ()
    %c1_120 = arith.constant 1 : index
    %c0_121 = arith.constant 0 : index
    %c0_122 = arith.constant 0 : index
    %c0_123 = arith.constant 0 : index
    %200 = vector.load %arg6[%c1_120, %c0_121, %c0_122, %c0_123] : memref<2x4x32x128xf32, #tpu.memory_space<vmem>>, vector<1x4x32x128xf32>
    %201 = vector.shape_cast %200 : vector<1x4x32x128xf32> to vector<4x32x128xf32>
    "tpu.trace_start"() <{level = 10 : i32, message = "hqd,hkd->hqk"}> : () -> ()
    %cst_124 = arith.constant dense<0.000000e+00> : vector<4x8x8xf32>
    %202 = tpu.matmul %193, %196, %cst_124 {dimension_numbers = #tpu.dot_dimension_numbers<[2], [2], [1], [1], [0, 0, 0, 1, 1, 1], [0], [0]>} : vector<4x8x32xf32>, vector<4x8x32xf32>, vector<4x8x8xf32> -> vector<4x8x8xf32>
    "tpu.trace_stop"() : () -> ()
    %203 = vector.shape_cast %10 : vector<8x8xf32> to vector<1x8x8xf32>
    %204 = vector.broadcast %203 : vector<1x8x8xf32> to vector<4x8x8xf32>
    %205 = arith.subf %202, %204 : vector<4x8x8xf32>
    %cst_125 = arith.constant 0.176776692 : f32
    %206 = vector.broadcast %cst_125 : f32 to vector<4x8x8xf32>
    %207 = arith.mulf %205, %206 : vector<4x8x8xf32>
    %cst_126 = arith.constant dense<0xFF800000> : vector<4x8xf32>
    %208 = vector.multi_reduction <maximumf>, %207, %cst_126 [2] : vector<4x8x8xf32> to vector<4x8xf32>
    %209 = vector.shape_cast %208 : vector<4x8xf32> to vector<4x8x1xf32>
    %210 = vector.broadcast %209 : vector<4x8x1xf32> to vector<4x8x8xf32>
    %211 = arith.subf %207, %210 : vector<4x8x8xf32>
    %212 = math.exp %211 : vector<4x8x8xf32>
    %cst_127 = arith.constant dense<0.000000e+00> : vector<4x8xf32>
    %213 = vector.multi_reduction <add>, %212, %cst_127 [2] : vector<4x8x8xf32> to vector<4x8xf32>
    %214 = vector.shape_cast %213 : vector<4x8xf32> to vector<4x8x1xf32>
    %215 = vector.broadcast %214 : vector<4x8x1xf32> to vector<4x8x8xf32>
    %216 = arith.divf %212, %215 : vector<4x8x8xf32>
    "tpu.trace_start"() <{level = 10 : i32, message = "hqk,hkd->hqd"}> : () -> ()
    %cst_128 = arith.constant dense<0.000000e+00> : vector<4x8x32xf32>
    %217 = tpu.matmul %216, %199, %cst_128 {dimension_numbers = #tpu.dot_dimension_numbers<[2], [1], [1], [2], [0, 0, 0, 1, 1, 2], [0], [0]>} : vector<4x8x8xf32>, vector<4x8x32xf32>, vector<4x8x32xf32> -> vector<4x8x32xf32>
    "tpu.trace_stop"() : () -> ()
    "tpu.trace_start"() <{level = 10 : i32, message = "hqd,hde->hqe"}> : () -> ()
    %cst_129 = arith.constant dense<0.000000e+00> : vector<4x8x128xf32>
    %218 = tpu.matmul %217, %201, %cst_129 {dimension_numbers = #tpu.dot_dimension_numbers<[2], [1], [1], [2], [0, 0, 0, 1, 1, 2], [0], [0]>} : vector<4x8x32xf32>, vector<4x32x128xf32>, vector<4x8x128xf32> -> vector<4x8x128xf32>
    "tpu.trace_stop"() : () -> ()
    %cst_130 = arith.constant dense<0.000000e+00> : vector<8x128xf32>
    %219 = vector.multi_reduction <add>, %218, %cst_130 [0] : vector<4x8x128xf32> to vector<8x128xf32>
    %c1_131 = arith.constant 1 : index
    %c0_132 = arith.constant 0 : index
    %c0_133 = arith.constant 0 : index
    %220 = vector.load %arg7[%c1_131, %c0_132, %c0_133] : memref<2x1x128xf32, #tpu.memory_space<vmem>>, vector<1x1x128xf32>
    %221 = vector.shape_cast %220 : vector<1x1x128xf32> to vector<1x128xf32>
    %c1_134 = arith.constant 1 : index
    %c0_135 = arith.constant 0 : index
    %c0_136 = arith.constant 0 : index
    %222 = vector.load %arg8[%c1_134, %c0_135, %c0_136] : memref<2x1x128xf32, #tpu.memory_space<vmem>>, vector<1x1x128xf32>
    %223 = vector.shape_cast %222 : vector<1x1x128xf32> to vector<1x128xf32>
    %224 = arith.addf %187, %219 : vector<8x128xf32>
    %225 = vector.broadcast %4 : vector<1x128xf32> to vector<8x128xf32>
    %226 = arith.mulf %224, %225 : vector<8x128xf32>
    %cst_137 = arith.constant dense<0.000000e+00> : vector<8xf32>
    %227 = vector.multi_reduction <add>, %226, %cst_137 [1] : vector<8x128xf32> to vector<8xf32>
    %228 = vector.shape_cast %227 : vector<8xf32> to vector<8x1xf32>
    %cst_138 = arith.constant 3.125000e-02 : f32
    %229 = vector.broadcast %cst_138 : f32 to vector<8x1xf32>
    %230 = arith.mulf %228, %229 : vector<8x1xf32>
    %231 = vector.broadcast %230 : vector<8x1xf32> to vector<8x128xf32>
    %232 = arith.subf %224, %231 : vector<8x128xf32>
    %233 = vector.broadcast %4 : vector<1x128xf32> to vector<8x128xf32>
    %234 = arith.mulf %232, %233 : vector<8x128xf32>
    %235 = arith.mulf %234, %234 : vector<8x128xf32>
    %cst_139 = arith.constant dense<0.000000e+00> : vector<8xf32>
    %236 = vector.multi_reduction <add>, %235, %cst_139 [1] : vector<8x128xf32> to vector<8xf32>
    %237 = vector.shape_cast %236 : vector<8xf32> to vector<8x1xf32>
    %cst_140 = arith.constant 0.0322580636 : f32
    %238 = vector.broadcast %cst_140 : f32 to vector<8x1xf32>
    %239 = arith.mulf %237, %238 : vector<8x1xf32>
    %240 = math.sqrt %239 : vector<8x1xf32>
    %241 = vector.broadcast %230 : vector<8x1xf32> to vector<8x128xf32>
    %242 = arith.subf %224, %241 : vector<8x128xf32>
    %243 = vector.broadcast %221 : vector<1x128xf32> to vector<8x128xf32>
    %244 = arith.mulf %243, %242 : vector<8x128xf32>
    %cst_141 = arith.constant 9.99999997E-7 : f32
    %245 = vector.broadcast %cst_141 : f32 to vector<8x1xf32>
    %246 = arith.addf %240, %245 : vector<8x1xf32>
    %247 = vector.broadcast %246 : vector<8x1xf32> to vector<8x128xf32>
    %248 = arith.divf %244, %247 : vector<8x128xf32>
    %249 = vector.broadcast %223 : vector<1x128xf32> to vector<8x128xf32>
    %250 = arith.addf %248, %249 : vector<8x128xf32>
    %251 = vector.shape_cast %250 : vector<8x128xf32> to vector<1x8x128xf32>
    %252 = vector.shape_cast %251 : vector<1x8x128xf32> to vector<1x8x128xf32>
    %253 = vector.broadcast %252 : vector<1x8x128xf32> to vector<4x8x128xf32>
    %c1_142 = arith.constant 1 : index
    %c0_143 = arith.constant 0 : index
    %c0_144 = arith.constant 0 : index
    %c0_145 = arith.constant 0 : index
    %254 = vector.load %arg9[%c1_142, %c0_143, %c0_144, %c0_145] : memref<2x4x128x32xf32, #tpu.memory_space<vmem>>, vector<1x4x128x32xf32>
    %255 = vector.shape_cast %254 : vector<1x4x128x32xf32> to vector<4x128x32xf32>
    "tpu.trace_start"() <{level = 10 : i32, message = "htd,hdk->htk"}> : () -> ()
    %cst_146 = arith.constant dense<0.000000e+00> : vector<4x8x32xf32>
    %256 = tpu.matmul %253, %255, %cst_146 {dimension_numbers = #tpu.dot_dimension_numbers<[2], [1], [1], [2], [0, 0, 0, 1, 1, 2], [0], [0]>} : vector<4x8x128xf32>, vector<4x128x32xf32>, vector<4x8x32xf32> -> vector<4x8x32xf32>
    "tpu.trace_stop"() : () -> ()
    %c1_147 = arith.constant 1 : index
    %c0_148 = arith.constant 0 : index
    %c0_149 = arith.constant 0 : index
    %c0_150 = arith.constant 0 : index
    %257 = vector.load %arg10[%c1_147, %c0_148, %c0_149, %c0_150] : memref<2x4x128x32xf32, #tpu.memory_space<vmem>>, vector<1x4x128x32xf32>
    %258 = vector.shape_cast %257 : vector<1x4x128x32xf32> to vector<4x128x32xf32>
    "tpu.trace_start"() <{level = 10 : i32, message = "hsd,hdk->hsk"}> : () -> ()
    %cst_151 = arith.constant dense<0.000000e+00> : vector<4x8x32xf32>
    %259 = tpu.matmul %17, %258, %cst_151 {dimension_numbers = #tpu.dot_dimension_numbers<[2], [1], [1], [2], [0, 0, 0, 1, 1, 2], [0], [0]>} : vector<4x8x128xf32>, vector<4x128x32xf32>, vector<4x8x32xf32> -> vector<4x8x32xf32>
    "tpu.trace_stop"() : () -> ()
    %c1_152 = arith.constant 1 : index
    %c0_153 = arith.constant 0 : index
    %c0_154 = arith.constant 0 : index
    %c0_155 = arith.constant 0 : index
    %260 = vector.load %arg11[%c1_152, %c0_153, %c0_154, %c0_155] : memref<2x4x128x32xf32, #tpu.memory_space<vmem>>, vector<1x4x128x32xf32>
    %261 = vector.shape_cast %260 : vector<1x4x128x32xf32> to vector<4x128x32xf32>
    "tpu.trace_start"() <{level = 10 : i32, message = "hsd,hdk->hsk"}> : () -> ()
    %cst_156 = arith.constant dense<0.000000e+00> : vector<4x8x32xf32>
    %262 = tpu.matmul %17, %261, %cst_156 {dimension_numbers = #tpu.dot_dimension_numbers<[2], [1], [1], [2], [0, 0, 0, 1, 1, 2], [0], [0]>} : vector<4x8x128xf32>, vector<4x128x32xf32>, vector<4x8x32xf32> -> vector<4x8x32xf32>
    "tpu.trace_stop"() : () -> ()
    %c1_157 = arith.constant 1 : index
    %c0_158 = arith.constant 0 : index
    %c0_159 = arith.constant 0 : index
    %c0_160 = arith.constant 0 : index
    %263 = vector.load %arg12[%c1_157, %c0_158, %c0_159, %c0_160] : memref<2x4x32x128xf32, #tpu.memory_space<vmem>>, vector<1x4x32x128xf32>
    %264 = vector.shape_cast %263 : vector<1x4x32x128xf32> to vector<4x32x128xf32>
    "tpu.trace_start"() <{level = 10 : i32, message = "hqd,hkd->hqk"}> : () -> ()
    %cst_161 = arith.constant dense<0.000000e+00> : vector<4x8x8xf32>
    %265 = tpu.matmul %256, %259, %cst_161 {dimension_numbers = #tpu.dot_dimension_numbers<[2], [2], [1], [1], [0, 0, 0, 1, 1, 1], [0], [0]>} : vector<4x8x32xf32>, vector<4x8x32xf32>, vector<4x8x8xf32> -> vector<4x8x8xf32>
    "tpu.trace_stop"() : () -> ()
    %cst_162 = arith.constant 0.176776692 : f32
    %266 = vector.broadcast %cst_162 : f32 to vector<4x8x8xf32>
    %267 = arith.mulf %265, %266 : vector<4x8x8xf32>
    %cst_163 = arith.constant dense<0xFF800000> : vector<4x8xf32>
    %268 = vector.multi_reduction <maximumf>, %267, %cst_163 [2] : vector<4x8x8xf32> to vector<4x8xf32>
    %269 = vector.shape_cast %268 : vector<4x8xf32> to vector<4x8x1xf32>
    %270 = vector.broadcast %269 : vector<4x8x1xf32> to vector<4x8x8xf32>
    %271 = arith.subf %267, %270 : vector<4x8x8xf32>
    %272 = math.exp %271 : vector<4x8x8xf32>
    %cst_164 = arith.constant dense<0.000000e+00> : vector<4x8xf32>
    %273 = vector.multi_reduction <add>, %272, %cst_164 [2] : vector<4x8x8xf32> to vector<4x8xf32>
    %274 = vector.shape_cast %273 : vector<4x8xf32> to vector<4x8x1xf32>
    %275 = vector.broadcast %274 : vector<4x8x1xf32> to vector<4x8x8xf32>
    %276 = arith.divf %272, %275 : vector<4x8x8xf32>
    "tpu.trace_start"() <{level = 10 : i32, message = "hqk,hkd->hqd"}> : () -> ()
    %cst_165 = arith.constant dense<0.000000e+00> : vector<4x8x32xf32>
    %277 = tpu.matmul %276, %262, %cst_165 {dimension_numbers = #tpu.dot_dimension_numbers<[2], [1], [1], [2], [0, 0, 0, 1, 1, 2], [0], [0]>} : vector<4x8x8xf32>, vector<4x8x32xf32>, vector<4x8x32xf32> -> vector<4x8x32xf32>
    "tpu.trace_stop"() : () -> ()
    "tpu.trace_start"() <{level = 10 : i32, message = "hqd,hde->hqe"}> : () -> ()
    %cst_166 = arith.constant dense<0.000000e+00> : vector<4x8x128xf32>
    %278 = tpu.matmul %277, %264, %cst_166 {dimension_numbers = #tpu.dot_dimension_numbers<[2], [1], [1], [2], [0, 0, 0, 1, 1, 2], [0], [0]>} : vector<4x8x32xf32>, vector<4x32x128xf32>, vector<4x8x128xf32> -> vector<4x8x128xf32>
    "tpu.trace_stop"() : () -> ()
    %cst_167 = arith.constant dense<0.000000e+00> : vector<8x128xf32>
    %279 = vector.multi_reduction <add>, %278, %cst_167 [0] : vector<4x8x128xf32> to vector<8x128xf32>
    %c1_168 = arith.constant 1 : index
    %c0_169 = arith.constant 0 : index
    %c0_170 = arith.constant 0 : index
    %280 = vector.load %arg13[%c1_168, %c0_169, %c0_170] : memref<2x1x128xf32, #tpu.memory_space<vmem>>, vector<1x1x128xf32>
    %281 = vector.shape_cast %280 : vector<1x1x128xf32> to vector<1x128xf32>
    %c1_171 = arith.constant 1 : index
    %c0_172 = arith.constant 0 : index
    %c0_173 = arith.constant 0 : index
    %282 = vector.load %arg14[%c1_171, %c0_172, %c0_173] : memref<2x1x128xf32, #tpu.memory_space<vmem>>, vector<1x1x128xf32>
    %283 = vector.shape_cast %282 : vector<1x1x128xf32> to vector<1x128xf32>
    %284 = arith.addf %250, %279 : vector<8x128xf32>
    %285 = vector.broadcast %4 : vector<1x128xf32> to vector<8x128xf32>
    %286 = arith.mulf %284, %285 : vector<8x128xf32>
    %cst_174 = arith.constant dense<0.000000e+00> : vector<8xf32>
    %287 = vector.multi_reduction <add>, %286, %cst_174 [1] : vector<8x128xf32> to vector<8xf32>
    %288 = vector.shape_cast %287 : vector<8xf32> to vector<8x1xf32>
    %cst_175 = arith.constant 3.125000e-02 : f32
    %289 = vector.broadcast %cst_175 : f32 to vector<8x1xf32>
    %290 = arith.mulf %288, %289 : vector<8x1xf32>
    %291 = vector.broadcast %290 : vector<8x1xf32> to vector<8x128xf32>
    %292 = arith.subf %284, %291 : vector<8x128xf32>
    %293 = vector.broadcast %4 : vector<1x128xf32> to vector<8x128xf32>
    %294 = arith.mulf %292, %293 : vector<8x128xf32>
    %295 = arith.mulf %294, %294 : vector<8x128xf32>
    %cst_176 = arith.constant dense<0.000000e+00> : vector<8xf32>
    %296 = vector.multi_reduction <add>, %295, %cst_176 [1] : vector<8x128xf32> to vector<8xf32>
    %297 = vector.shape_cast %296 : vector<8xf32> to vector<8x1xf32>
    %cst_177 = arith.constant 0.0322580636 : f32
    %298 = vector.broadcast %cst_177 : f32 to vector<8x1xf32>
    %299 = arith.mulf %297, %298 : vector<8x1xf32>
    %300 = math.sqrt %299 : vector<8x1xf32>
    %301 = vector.broadcast %290 : vector<8x1xf32> to vector<8x128xf32>
    %302 = arith.subf %284, %301 : vector<8x128xf32>
    %303 = vector.broadcast %281 : vector<1x128xf32> to vector<8x128xf32>
    %304 = arith.mulf %303, %302 : vector<8x128xf32>
    %cst_178 = arith.constant 9.99999997E-7 : f32
    %305 = vector.broadcast %cst_178 : f32 to vector<8x1xf32>
    %306 = arith.addf %300, %305 : vector<8x1xf32>
    %307 = vector.broadcast %306 : vector<8x1xf32> to vector<8x128xf32>
    %308 = arith.divf %304, %307 : vector<8x128xf32>
    %309 = vector.broadcast %283 : vector<1x128xf32> to vector<8x128xf32>
    %310 = arith.addf %308, %309 : vector<8x128xf32>
    %c1_179 = arith.constant 1 : index
    %c0_180 = arith.constant 0 : index
    %c0_181 = arith.constant 0 : index
    %311 = vector.load %arg15[%c1_179, %c0_180, %c0_181] : memref<2x128x128xf32, #tpu.memory_space<vmem>>, vector<1x128x128xf32>
    %312 = vector.shape_cast %311 : vector<1x128x128xf32> to vector<128x128xf32>
    %cst_182 = arith.constant dense<0.000000e+00> : vector<8x128xf32>
    %313 = tpu.matmul %310, %312, %cst_182 {dimension_numbers = #tpu.dot_dimension_numbers<[1], [0], [0], [1], [0, 0, 1, 1], [], []>} : vector<8x128xf32>, vector<128x128xf32>, vector<8x128xf32> -> vector<8x128xf32>
    %c1_183 = arith.constant 1 : index
    %c0_184 = arith.constant 0 : index
    %c0_185 = arith.constant 0 : index
    %314 = vector.load %arg16[%c1_183, %c0_184, %c0_185] : memref<2x1x128xf32, #tpu.memory_space<vmem>>, vector<1x1x128xf32>
    %315 = vector.shape_cast %314 : vector<1x1x128xf32> to vector<1x128xf32>
    %316 = vector.broadcast %315 : vector<1x128xf32> to vector<8x128xf32>
    %317 = arith.addf %313, %316 : vector<8x128xf32>
    %cst_186 = arith.constant 0.000000e+00 : f32
    %318 = vector.broadcast %cst_186 : f32 to vector<8x128xf32>
    %319 = arith.maximumf %317, %318 : vector<8x128xf32>
    %c1_187 = arith.constant 1 : index
    %c0_188 = arith.constant 0 : index
    %c0_189 = arith.constant 0 : index
    %320 = vector.load %arg17[%c1_187, %c0_188, %c0_189] : memref<2x128x128xf32, #tpu.memory_space<vmem>>, vector<1x128x128xf32>
    %321 = vector.shape_cast %320 : vector<1x128x128xf32> to vector<128x128xf32>
    %cst_190 = arith.constant dense<0.000000e+00> : vector<8x128xf32>
    %322 = tpu.matmul %319, %321, %cst_190 {dimension_numbers = #tpu.dot_dimension_numbers<[1], [0], [0], [1], [0, 0, 1, 1], [], []>} : vector<8x128xf32>, vector<128x128xf32>, vector<8x128xf32> -> vector<8x128xf32>
    %c1_191 = arith.constant 1 : index
    %c0_192 = arith.constant 0 : index
    %c0_193 = arith.constant 0 : index
    %323 = vector.load %arg18[%c1_191, %c0_192, %c0_193] : memref<2x1x128xf32, #tpu.memory_space<vmem>>, vector<1x1x128xf32>
    %324 = vector.shape_cast %323 : vector<1x1x128xf32> to vector<1x128xf32>
    %325 = vector.broadcast %324 : vector<1x128xf32> to vector<8x128xf32>
    %326 = arith.addf %322, %325 : vector<8x128xf32>
    %c1_194 = arith.constant 1 : index
    %c0_195 = arith.constant 0 : index
    %c0_196 = arith.constant 0 : index
    %327 = vector.load %arg19[%c1_194, %c0_195, %c0_196] : memref<2x1x128xf32, #tpu.memory_space<vmem>>, vector<1x1x128xf32>
    %328 = vector.shape_cast %327 : vector<1x1x128xf32> to vector<1x128xf32>
    %c1_197 = arith.constant 1 : index
    %c0_198 = arith.constant 0 : index
    %c0_199 = arith.constant 0 : index
    %329 = vector.load %arg20[%c1_197, %c0_198, %c0_199] : memref<2x1x128xf32, #tpu.memory_space<vmem>>, vector<1x1x128xf32>
    %330 = vector.shape_cast %329 : vector<1x1x128xf32> to vector<1x128xf32>
    %331 = arith.addf %310, %326 : vector<8x128xf32>
    %332 = vector.broadcast %4 : vector<1x128xf32> to vector<8x128xf32>
    %333 = arith.mulf %331, %332 : vector<8x128xf32>
    %cst_200 = arith.constant dense<0.000000e+00> : vector<8xf32>
    %334 = vector.multi_reduction <add>, %333, %cst_200 [1] : vector<8x128xf32> to vector<8xf32>
    %335 = vector.shape_cast %334 : vector<8xf32> to vector<8x1xf32>
    %cst_201 = arith.constant 3.125000e-02 : f32
    %336 = vector.broadcast %cst_201 : f32 to vector<8x1xf32>
    %337 = arith.mulf %335, %336 : vector<8x1xf32>
    %338 = vector.broadcast %337 : vector<8x1xf32> to vector<8x128xf32>
    %339 = arith.subf %331, %338 : vector<8x128xf32>
    %340 = vector.broadcast %4 : vector<1x128xf32> to vector<8x128xf32>
    %341 = arith.mulf %339, %340 : vector<8x128xf32>
    %342 = arith.mulf %341, %341 : vector<8x128xf32>
    %cst_202 = arith.constant dense<0.000000e+00> : vector<8xf32>
    %343 = vector.multi_reduction <add>, %342, %cst_202 [1] : vector<8x128xf32> to vector<8xf32>
    %344 = vector.shape_cast %343 : vector<8xf32> to vector<8x1xf32>
    %cst_203 = arith.constant 0.0322580636 : f32
    %345 = vector.broadcast %cst_203 : f32 to vector<8x1xf32>
    %346 = arith.mulf %344, %345 : vector<8x1xf32>
    %347 = math.sqrt %346 : vector<8x1xf32>
    %348 = vector.broadcast %337 : vector<8x1xf32> to vector<8x128xf32>
    %349 = arith.subf %331, %348 : vector<8x128xf32>
    %350 = vector.broadcast %328 : vector<1x128xf32> to vector<8x128xf32>
    %351 = arith.mulf %350, %349 : vector<8x128xf32>
    %cst_204 = arith.constant 9.99999997E-7 : f32
    %352 = vector.broadcast %cst_204 : f32 to vector<8x1xf32>
    %353 = arith.addf %347, %352 : vector<8x1xf32>
    %354 = vector.broadcast %353 : vector<8x1xf32> to vector<8x128xf32>
    %355 = arith.divf %351, %354 : vector<8x128xf32>
    %356 = vector.broadcast %330 : vector<1x128xf32> to vector<8x128xf32>
    %357 = arith.addf %355, %356 : vector<8x128xf32>
    %c0_205 = arith.constant 0 : index
    %c0_206 = arith.constant 0 : index
    %358 = vector.load %arg21[%c0_205, %c0_206] : memref<128x128xf32, #tpu.memory_space<vmem>>, vector<128x128xf32>
    %cst_207 = arith.constant dense<0.000000e+00> : vector<8x128xf32>
    %359 = tpu.matmul %357, %358, %cst_207 {dimension_numbers = #tpu.dot_dimension_numbers<[1], [0], [0], [1], [0, 0, 1, 1], [], []>} : vector<8x128xf32>, vector<128x128xf32>, vector<8x128xf32> -> vector<8x128xf32>
    %c0_208 = arith.constant 0 : index
    %c0_209 = arith.constant 0 : index
    %360 = vector.load %arg22[%c0_208, %c0_209] : memref<1x128xf32, #tpu.memory_space<vmem>>, vector<1x128xf32>
    %361 = vector.broadcast %360 : vector<1x128xf32> to vector<8x128xf32>
    %362 = arith.addf %359, %361 : vector<8x128xf32>
    %c0_210 = arith.constant 0 : index
    %c0_211 = arith.constant 0 : index
    %c0_212 = arith.constant 0 : index
    %363 = vector.load %arg23[%c0_210, %c0_211, %c0_212] : memref<1x8x128xf32, #tpu.memory_space<vmem>>, vector<1x8x128xf32>
    %364 = vector.shape_cast %363 : vector<1x8x128xf32> to vector<8x128xf32>
    %365 = vector.shape_cast %362 : vector<8x128xf32> to vector<1x8x128xf32>
    tpu.vector_store %arg23[%c0_210, %c0_211, %c0_212], %365 {strides = array<i32>} : memref<1x8x128xf32, #tpu.memory_space<vmem>>, vector<1x8x128xf32>,
    return
  }
  func.func @transform_0(%arg0: i32) -> (i32, i32, i32) {
    %c0_i32 = arith.constant 0 : i32
    %c0_i32_0 = arith.constant 0 : i32
    %c0_i32_1 = arith.constant 0 : i32
    return %arg0, %c0_i32, %c0_i32_0 : i32, i32, i32
  }
  func.func @transform_1(%arg0: i32) -> (i32, i32, i32) {
    %c0_i32 = arith.constant 0 : i32
    %c0_i32_0 = arith.constant 0 : i32
    %c0_i32_1 = arith.constant 0 : i32
    return %arg0, %c0_i32, %c0_i32_0 : i32, i32, i32
  }
  func.func @transform_2(%arg0: i32) -> (i32, i32, i32, i32) {
    %c0_i32 = arith.constant 0 : i32
    %c0_i32_0 = arith.constant 0 : i32
    %c0_i32_1 = arith.constant 0 : i32
    %c0_i32_2 = arith.constant 0 : i32
    %c0_i32_3 = arith.constant 0 : i32
    return %c0_i32, %c0_i32_0, %c0_i32_1, %c0_i32_2 : i32, i32, i32, i32
  }
  func.func @transform_3(%arg0: i32) -> (i32, i32, i32, i32) {
    %c0_i32 = arith.constant 0 : i32
    %c0_i32_0 = arith.constant 0 : i32
    %c0_i32_1 = arith.constant 0 : i32
    %c0_i32_2 = arith.constant 0 : i32
    %c0_i32_3 = arith.constant 0 : i32
    return %c0_i32, %c0_i32_0, %c0_i32_1, %c0_i32_2 : i32, i32, i32, i32
  }
  func.func @transform_4(%arg0: i32) -> (i32, i32, i32, i32) {
    %c0_i32 = arith.constant 0 : i32
    %c0_i32_0 = arith.constant 0 : i32
    %c0_i32_1 = arith.constant 0 : i32
    %c0_i32_2 = arith.constant 0 : i32
    %c0_i32_3 = arith.constant 0 : i32
    return %c0_i32, %c0_i32_0, %c0_i32_1, %c0_i32_2 : i32, i32, i32, i32
  }
  func.func @transform_5(%arg0: i32) -> (i32, i32, i32, i32) {
    %c0_i32 = arith.constant 0 : i32
    %c0_i32_0 = arith.constant 0 : i32
    %c0_i32_1 = arith.constant 0 : i32
    %c0_i32_2 = arith.constant 0 : i32
    %c0_i32_3 = arith.constant 0 : i32
    return %c0_i32, %c0_i32_0, %c0_i32_1, %c0_i32_2 : i32, i32, i32, i32
  }
  func.func @transform_6(%arg0: i32) -> (i32, i32, i32) {
    %c0_i32 = arith.constant 0 : i32
    %c0_i32_0 = arith.constant 0 : i32
    %c0_i32_1 = arith.constant 0 : i32
    %c0_i32_2 = arith.constant 0 : i32
    return %c0_i32, %c0_i32_0, %c0_i32_1 : i32, i32, i32
  }
  func.func @transform_7(%arg0: i32) -> (i32, i32, i32) {
    %c0_i32 = arith.constant 0 : i32
    %c0_i32_0 = arith.constant 0 : i32
    %c0_i32_1 = arith.constant 0 : i32
    %c0_i32_2 = arith.constant 0 : i32
    return %c0_i32, %c0_i32_0, %c0_i32_1 : i32, i32, i32
  }
  func.func @transform_8(%arg0: i32) -> (i32, i32, i32, i32) {
    %c0_i32 = arith.constant 0 : i32
    %c0_i32_0 = arith.constant 0 : i32
    %c0_i32_1 = arith.constant 0 : i32
    %c0_i32_2 = arith.constant 0 : i32
    %c0_i32_3 = arith.constant 0 : i32
    return %c0_i32, %c0_i32_0, %c0_i32_1, %c0_i32_2 : i32, i32, i32, i32
  }
  func.func @transform_9(%arg0: i32) -> (i32, i32, i32, i32) {
    %c0_i32 = arith.constant 0 : i32
    %c0_i32_0 = arith.constant 0 : i32
    %c0_i32_1 = arith.constant 0 : i32
    %c0_i32_2 = arith.constant 0 : i32
    %c0_i32_3 = arith.constant 0 : i32
    return %c0_i32, %c0_i32_0, %c0_i32_1, %c0_i32_2 : i32, i32, i32, i32
  }
  func.func @transform_10(%arg0: i32) -> (i32, i32, i32, i32) {
    %c0_i32 = arith.constant 0 : i32
    %c0_i32_0 = arith.constant 0 : i32
    %c0_i32_1 = arith.constant 0 : i32
    %c0_i32_2 = arith.constant 0 : i32
    %c0_i32_3 = arith.constant 0 : i32
    return %c0_i32, %c0_i32_0, %c0_i32_1, %c0_i32_2 : i32, i32, i32, i32
  }
  func.func @transform_11(%arg0: i32) -> (i32, i32, i32, i32) {
    %c0_i32 = arith.constant 0 : i32
    %c0_i32_0 = arith.constant 0 : i32
    %c0_i32_1 = arith.constant 0 : i32
    %c0_i32_2 = arith.constant 0 : i32
    %c0_i32_3 = arith.constant 0 : i32
    return %c0_i32, %c0_i32_0, %c0_i32_1, %c0_i32_2 : i32, i32, i32, i32
  }
  func.func @transform_12(%arg0: i32) -> (i32, i32, i32) {
    %c0_i32 = arith.constant 0 : i32
    %c0_i32_0 = arith.constant 0 : i32
    %c0_i32_1 = arith.constant 0 : i32
    %c0_i32_2 = arith.constant 0 : i32
    return %c0_i32, %c0_i32_0, %c0_i32_1 : i32, i32, i32
  }
  func.func @transform_13(%arg0: i32) -> (i32, i32, i32) {
    %c0_i32 = arith.constant 0 : i32
    %c0_i32_0 = arith.constant 0 : i32
    %c0_i32_1 = arith.constant 0 : i32
    %c0_i32_2 = arith.constant 0 : i32
    return %c0_i32, %c0_i32_0, %c0_i32_1 : i32, i32, i32
  }
  func.func @transform_14(%arg0: i32) -> (i32, i32, i32) {
    %c0_i32 = arith.constant 0 : i32
    %c0_i32_0 = arith.constant 0 : i32
    %c0_i32_1 = arith.constant 0 : i32
    %c0_i32_2 = arith.constant 0 : i32
    return %c0_i32, %c0_i32_0, %c0_i32_1 : i32, i32, i32
  }
  func.func @transform_15(%arg0: i32) -> (i32, i32, i32) {
    %c0_i32 = arith.constant 0 : i32
    %c0_i32_0 = arith.constant 0 : i32
    %c0_i32_1 = arith.constant 0 : i32
    %c0_i32_2 = arith.constant 0 : i32
    return %c0_i32, %c0_i32_0, %c0_i32_1 : i32, i32, i32
  }
  func.func @transform_16(%arg0: i32) -> (i32, i32, i32) {
    %c0_i32 = arith.constant 0 : i32
    %c0_i32_0 = arith.constant 0 : i32
    %c0_i32_1 = arith.constant 0 : i32
    %c0_i32_2 = arith.constant 0 : i32
    return %c0_i32, %c0_i32_0, %c0_i32_1 : i32, i32, i32
  }
  func.func @transform_17(%arg0: i32) -> (i32, i32, i32) {
    %c0_i32 = arith.constant 0 : i32
    %c0_i32_0 = arith.constant 0 : i32
    %c0_i32_1 = arith.constant 0 : i32
    %c0_i32_2 = arith.constant 0 : i32
    return %c0_i32, %c0_i32_0, %c0_i32_1 : i32, i32, i32
  }
  func.func @transform_18(%arg0: i32) -> (i32, i32, i32) {
    %c0_i32 = arith.constant 0 : i32
    %c0_i32_0 = arith.constant 0 : i32
    %c0_i32_1 = arith.constant 0 : i32
    %c0_i32_2 = arith.constant 0 : i32
    return %c0_i32, %c0_i32_0, %c0_i32_1 : i32, i32, i32
  }
  func.func @transform_19(%arg0: i32) -> (i32, i32, i32) {
    %c0_i32 = arith.constant 0 : i32
    %c0_i32_0 = arith.constant 0 : i32
    %c0_i32_1 = arith.constant 0 : i32
    %c0_i32_2 = arith.constant 0 : i32
    return %c0_i32, %c0_i32_0, %c0_i32_1 : i32, i32, i32
  }
  func.func @transform_20(%arg0: i32) -> (i32, i32) {
    %c0_i32 = arith.constant 0 : i32
    %c0_i32_0 = arith.constant 0 : i32
    %c0_i32_1 = arith.constant 0 : i32
    return %c0_i32, %c0_i32_0 : i32, i32
  }
  func.func @transform_21(%arg0: i32) -> (i32, i32) {
    %c0_i32 = arith.constant 0 : i32
    %c0_i32_0 = arith.constant 0 : i32
    %c0_i32_1 = arith.constant 0 : i32
    return %c0_i32, %c0_i32_0 : i32, i32
  }
  func.func @transform_22(%arg0: i32) -> (i32, i32, i32) {
    %c0_i32 = arith.constant 0 : i32
    %c0_i32_0 = arith.constant 0 : i32
    %c0_i32_1 = arith.constant 0 : i32
    return %arg0, %c0_i32, %c0_i32_0 : i32, i32, i32
  }
}

</mosaic_0001>

<llo_original>
// kernel: _forward_jit.1
$region0: #{_forward_jit.1}
  #allocation0 [shape = 'u32[]', space=smem, size = 0x4, offset = 0x4, fixed_abs, tag = 'smem constant byte address 0x4 - core index']
  #allocation1 [shape = 'u32[144,128]{1,0:T(1,128)}', space=vmem, size = 0x12000, scoped, tag = 'internal scratch']
  %s0 = inlined_call_operand.vmem [shape: f32[2,8,128], index: 0, kind: input, shape index: {}]
  %s1 = inlined_call_operand.vmem [shape: f32[2,8,128], index: 1, kind: input, shape index: {}]
  %s2 = inlined_call_operand.vmem [shape: f32[2,4,128,32], index: 2, kind: input, shape index: {}]
  %s3 = inlined_call_operand.vmem [shape: f32[2,4,128,32], index: 3, kind: input, shape index: {}]
  %s4 = inlined_call_operand.vmem [shape: f32[2,4,128,32], index: 4, kind: input, shape index: {}]
  %s5 = inlined_call_operand.vmem [shape: f32[2,4,32,128], index: 5, kind: input, shape index: {}]
  %s6 = inlined_call_operand.vmem [shape: f32[2,1,128], index: 6, kind: input, shape index: {}]
  %s7 = inlined_call_operand.vmem [shape: f32[2,1,128], index: 7, kind: input, shape index: {}]
  %s8 = inlined_call_operand.vmem [shape: f32[2,4,128,32], index: 8, kind: input, shape index: {}]
  %s9 = inlined_call_operand.vmem [shape: f32[2,4,128,32], index: 9, kind: input, shape index: {}]
  %s10 = inlined_call_operand.vmem [shape: f32[2,4,128,32], index: 10, kind: input, shape index: {}]
  %s11 = inlined_call_operand.vmem [shape: f32[2,4,32,128], index: 11, kind: input, shape index: {}]
  %s12 = inlined_call_operand.vmem [shape: f32[2,1,128], index: 12, kind: input, shape index: {}]
  %s13 = inlined_call_operand.vmem [shape: f32[2,1,128], index: 13, kind: input, shape index: {}]
  %s14 = inlined_call_operand.vmem [shape: f32[2,128,128], index: 14, kind: input, shape index: {}]
  %s15 = inlined_call_operand.vmem [shape: f32[2,1,128], index: 15, kind: input, shape index: {}]
  %s16 = inlined_call_operand.vmem [shape: f32[2,128,128], index: 16, kind: input, shape index: {}]
  %s17 = inlined_call_operand.vmem [shape: f32[2,1,128], index: 17, kind: input, shape index: {}]
  %s18 = inlined_call_operand.vmem [shape: f32[2,1,128], index: 18, kind: input, shape index: {}]
  %s19 = inlined_call_operand.vmem [shape: f32[2,1,128], index: 19, kind: input, shape index: {}]
  %s20 = inlined_call_operand.vmem [shape: f32[128,128], index: 20, kind: input, shape index: {}]
  %s21 = inlined_call_operand.vmem [shape: f32[1,128], index: 21, kind: input, shape index: {}]
  %s22 = inlined_call_operand.vmem [shape: f32[2,8,128], index: 22, kind: output, shape index: {}]
  %s23 = sld [smem:[#allocation0]]
  $region121: #{_forward_jit.1} parent=0
    _
  %s25 = ssub.s32 1, %s23
  %s26 = scalar_select 0, %s25, %s23
  loop: start=0, step=1, limit=4
  $region2: #{_forward_jit.1} parent=0 // loop_pre_header
    _
  $region3: #{_forward_jit.1} parent=0 // loop_header
    %s28 = sphi 0, %s32
    %p29 = scmp.ge.s32.totalorder %s28, 4
    %s38 = sphi 0, %s40
    %s41 = sphi 0, %s38
    %s42 = sphi 0, %s41
    %s58 = sphi 0, %s42
    %s64 = sphi 0, %s66
    %s67 = sphi 0, %s64
    %s68 = sphi 0, %s67
    %s84 = sphi 0, %s68
    %s88 = sphi 0, %s88
    %s90 = sphi 0, %s88
    %s91 = sphi 0, %s90
    %s105 = sphi 0, %s91
    %s109 = sphi 0, %s109
    %s111 = sphi 0, %s109
    %s112 = sphi 0, %s111
    %s126 = sphi 0, %s112
    %s130 = sphi 0, %s130
    %s132 = sphi 0, %s130
    %s133 = sphi 0, %s132
    %s147 = sphi 0, %s133
    %s151 = sphi 0, %s151
    %s153 = sphi 0, %s151
    %s154 = sphi 0, %s153
    %s168 = sphi 0, %s154
    %s172 = sphi 0, %s172
    %s174 = sphi 0, %s172
    %s175 = sphi 0, %s174
    %s189 = sphi 0, %s175
    %s193 = sphi 0, %s193
    %s195 = sphi 0, %s193
    %s196 = sphi 0, %s195
    %s210 = sphi 0, %s196
    %s214 = sphi 0, %s214
    %s216 = sphi 0, %s214
    %s217 = sphi 0, %s216
    %s231 = sphi 0, %s217
    %s235 = sphi 0, %s235
    %s237 = sphi 0, %s235
    %s238 = sphi 0, %s237
    %s252 = sphi 0, %s238
    %s256 = sphi 0, %s256
    %s258 = sphi 0, %s256
    %s259 = sphi 0, %s258
    %s273 = sphi 0, %s259
    %s277 = sphi 0, %s277
    %s279 = sphi 0, %s277
    %s280 = sphi 0, %s279
    %s294 = sphi 0, %s280
    %s298 = sphi 0, %s298
    %s300 = sphi 0, %s298
    %s301 = sphi 0, %s300
    %s315 = sphi 0, %s301
    %s319 = sphi 0, %s319
    %s321 = sphi 0, %s319
    %s322 = sphi 0, %s321
    %s336 = sphi 0, %s322
    %s340 = sphi 0, %s340
    %s342 = sphi 0, %s340
    %s343 = sphi 0, %s342
    %s357 = sphi 0, %s343
    %s361 = sphi 0, %s361
    %s363 = sphi 0, %s361
    %s364 = sphi 0, %s363
    %s378 = sphi 0, %s364
    %s382 = sphi 0, %s382
    %s384 = sphi 0, %s382
    %s385 = sphi 0, %s384
    %s399 = sphi 0, %s385
    %s403 = sphi 0, %s403
    %s405 = sphi 0, %s403
    %s406 = sphi 0, %s405
    %s420 = sphi 0, %s406
    %s424 = sphi 0, %s424
    %s426 = sphi 0, %s424
    %s427 = sphi 0, %s426
    %s441 = sphi 0, %s427
    %s445 = sphi 0, %s445
    %s447 = sphi 0, %s445
    %s448 = sphi 0, %s447
    %s462 = sphi 0, %s448
    %s466 = sphi 0, %s466
    %s468 = sphi 0, %s466
    %s469 = sphi 0, %s468
    %s483 = sphi 0, %s469
    %s487 = sphi 0, %s487
    %s489 = sphi 0, %s487
    %s490 = sphi 0, %s489
    %s504 = sphi 0, %s490
    %s510 = sphi 0, %s512
    %s513 = sphi 0, %s510
    %s514 = sphi 0, %s513
    %s530 = sphi 0, %s514
  $region4: #{_forward_jit.1} parent=0 // loop_header_branch
    %31 = sbr.rel (%p29) target = $region8
  $region5: #{_forward_jit.1} parent=0 // loop_body
    %s33 = ssub.s32 %s28, 1
    %s34 = ssub.s32 %s28, 2
    %s35 = sadd.s32 %s28, 1
    %s36 = ssub.s32 %s28, %s35
    %p37 = scmp.eq.s32.totalorder %s36, 0
    %s39 = sadd.s32 %s38, 1
    %s40 = scalar_select %p37, %s38, %s39
    %p43 = pneg %p37
    %p44 = scmp.eq.s32.totalorder %s28, 1
    %p45 = por %p43, %p44
    %p46 = scmp.ne.s32.totalorder %s38, %s41
    %p47 = scmp.eq.s32.totalorder %s28, 0
    %p48 = por %p46, %p47
    %p49 = scmp.ne.s32.totalorder %s38, %s41
    %p50 = scmp.eq.s32.totalorder %s33, 1
    %p51 = por %p49, %p50
    %p52 = scmp.ne.s32.totalorder %s41, %s42
    %p53 = scmp.eq.s32.totalorder %s33, 0
    %p54 = por %p52, %p53
    %p55 = scmp.ne.s32.totalorder %s41, %s42
    %p56 = scmp.eq.s32.totalorder %s34, 1
    %p57 = por %p55, %p56
    %p59 = scmp.ne.s32.totalorder %s42, %s58
    %p60 = scmp.eq.s32.totalorder %s34, 0
    %p61 = por %p59, %p60
    %s62 = ssub.s32 %s28, %s35
    %p63 = scmp.eq.s32.totalorder %s62, 0
    %s65 = sadd.s32 %s64, 1
    %s66 = scalar_select %p63, %s64, %s65
    %p69 = pneg %p63
    %p70 = scmp.eq.s32.totalorder %s28, 1
    %p71 = por %p69, %p70
    %p72 = scmp.ne.s32.totalorder %s64, %s67
    %p73 = scmp.eq.s32.totalorder %s28, 0
    %p74 = por %p72, %p73
    %p75 = scmp.ne.s32.totalorder %s64, %s67
    %p76 = scmp.eq.s32.totalorder %s33, 1
    %p77 = por %p75, %p76
    %p78 = scmp.ne.s32.totalorder %s67, %s68
    %p79 = scmp.eq.s32.totalorder %s33, 0
    %p80 = por %p78, %p79
    %p81 = scmp.ne.s32.totalorder %s67, %s68
    %p82 = scmp.eq.s32.totalorder %s34, 1
    %p83 = por %p81, %p82
    %p85 = scmp.ne.s32.totalorder %s68, %s84
    %p86 = scmp.eq.s32.totalorder %s34, 0
    %p87 = por %p85, %p86
    %s89 = sadd.s32 %s88, 1
    %p92 = scmp.eq.s32.totalorder %s28, 1
    %p93 = scmp.ne.s32.totalorder %s88, %s90
    %p94 = scmp.eq.s32.totalorder %s28, 0
    %p95 = por %p93, %p94
    %p96 = scmp.ne.s32.totalorder %s88, %s90
    %p97 = scmp.eq.s32.totalorder %s33, 1
    %p98 = por %p96, %p97
    %p99 = scmp.ne.s32.totalorder %s90, %s91
    %p100 = scmp.eq.s32.totalorder %s33, 0
    %p101 = por %p99, %p100
    %p102 = scmp.ne.s32.totalorder %s90, %s91
    %p103 = scmp.eq.s32.totalorder %s34, 1
    %p104 = por %p102, %p103
    %p106 = scmp.ne.s32.totalorder %s91, %s105
    %p107 = scmp.eq.s32.totalorder %s34, 0
    %p108 = por %p106, %p107
    %s110 = sadd.s32 %s109, 1
    %p113 = scmp.eq.s32.totalorder %s28, 1
    %p114 = scmp.ne.s32.totalorder %s109, %s111
    %p115 = scmp.eq.s32.totalorder %s28, 0
    %p116 = por %p114, %p115
    %p117 = scmp.ne.s32.totalorder %s109, %s111
    %p118 = scmp.eq.s32.totalorder %s33, 1
    %p119 = por %p117, %p118
    %p120 = scmp.ne.s32.totalorder %s111, %s112
    %p121 = scmp.eq.s32.totalorder %s33, 0
    %p122 = por %p120, %p121
    %p123 = scmp.ne.s32.totalorder %s111, %s112
    %p124 = scmp.eq.s32.totalorder %s34, 1
    %p125 = por %p123, %p124
    %p127 = scmp.ne.s32.totalorder %s112, %s126
    %p128 = scmp.eq.s32.totalorder %s34, 0
    %p129 = por %p127, %p128
    %s131 = sadd.s32 %s130, 1
    %p134 = scmp.eq.s32.totalorder %s28, 1
    %p135 = scmp.ne.s32.totalorder %s130, %s132
    %p136 = scmp.eq.s32.totalorder %s28, 0
    %p137 = por %p135, %p136
    %p138 = scmp.ne.s32.totalorder %s130, %s132
    %p139 = scmp.eq.s32.totalorder %s33, 1
    %p140 = por %p138, %p139
    %p141 = scmp.ne.s32.totalorder %s132, %s133
    %p142 = scmp.eq.s32.totalorder %s33, 0
    %p143 = por %p141, %p142
    %p144 = scmp.ne.s32.totalorder %s132, %s133
    %p145 = scmp.eq.s32.totalorder %s34, 1
    %p146 = por %p144, %p145
    %p148 = scmp.ne.s32.totalorder %s133, %s147
    %p149 = scmp.eq.s32.totalorder %s34, 0
    %p150 = por %p148, %p149
    %s152 = sadd.s32 %s151, 1
    %p155 = scmp.eq.s32.totalorder %s28, 1
    %p156 = scmp.ne.s32.totalorder %s151, %s153
    %p157 = scmp.eq.s32.totalorder %s28, 0
    %p158 = por %p156, %p157
    %p159 = scmp.ne.s32.totalorder %s151, %s153
    %p160 = scmp.eq.s32.totalorder %s33, 1
    %p161 = por %p159, %p160
    %p162 = scmp.ne.s32.totalorder %s153, %s154
    %p163 = scmp.eq.s32.totalorder %s33, 0
    %p164 = por %p162, %p163
    %p165 = scmp.ne.s32.totalorder %s153, %s154
    %p166 = scmp.eq.s32.totalorder %s34, 1
    %p167 = por %p165, %p166
    %p169 = scmp.ne.s32.totalorder %s154, %s168
    %p170 = scmp.eq.s32.totalorder %s34, 0
    %p171 = por %p169, %p170
    %s173 = sadd.s32 %s172, 1
    %p176 = scmp.eq.s32.totalorder %s28, 1
    %p177 = scmp.ne.s32.totalorder %s172, %s174
    %p178 = scmp.eq.s32.totalorder %s28, 0
    %p179 = por %p177, %p178
    %p180 = scmp.ne.s32.totalorder %s172, %s174
    %p181 = scmp.eq.s32.totalorder %s33, 1
    %p182 = por %p180, %p181
    %p183 = scmp.ne.s32.totalorder %s174, %s175
    %p184 = scmp.eq.s32.totalorder %s33, 0
    %p185 = por %p183, %p184
    %p186 = scmp.ne.s32.totalorder %s174, %s175
    %p187 = scmp.eq.s32.totalorder %s34, 1
    %p188 = por %p186, %p187
    %p190 = scmp.ne.s32.totalorder %s175, %s189
    %p191 = scmp.eq.s32.totalorder %s34, 0
    %p192 = por %p190, %p191
    %s194 = sadd.s32 %s193, 1
    %p197 = scmp.eq.s32.totalorder %s28, 1
    %p198 = scmp.ne.s32.totalorder %s193, %s195
    %p199 = scmp.eq.s32.totalorder %s28, 0
    %p200 = por %p198, %p199
    %p201 = scmp.ne.s32.totalorder %s193, %s195
    %p202 = scmp.eq.s32.totalorder %s33, 1
    %p203 = por %p201, %p202
    %p204 = scmp.ne.s32.totalorder %s195, %s196
    %p205 = scmp.eq.s32.totalorder %s33, 0
    %p206 = por %p204, %p205
    %p207 = scmp.ne.s32.totalorder %s195, %s196
    %p208 = scmp.eq.s32.totalorder %s34, 1
    %p209 = por %p207, %p208
    %p211 = scmp.ne.s32.totalorder %s196, %s210
    %p212 = scmp.eq.s32.totalorder %s34, 0
    %p213 = por %p211, %p212
    %s215 = sadd.s32 %s214, 1
    %p218 = scmp.eq.s32.totalorder %s28, 1
    %p219 = scmp.ne.s32.totalorder %s214, %s216
    %p220 = scmp.eq.s32.totalorder %s28, 0
    %p221 = por %p219, %p220
    %p222 = scmp.ne.s32.totalorder %s214, %s216
    %p223 = scmp.eq.s32.totalorder %s33, 1
    %p224 = por %p222, %p223
    %p225 = scmp.ne.s32.totalorder %s216, %s217
    %p226 = scmp.eq.s32.totalorder %s33, 0
    %p227 = por %p225, %p226
    %p228 = scmp.ne.s32.totalorder %s216, %s217
    %p229 = scmp.eq.s32.totalorder %s34, 1
    %p230 = por %p228, %p229
    %p232 = scmp.ne.s32.totalorder %s217, %s231
    %p233 = scmp.eq.s32.totalorder %s34, 0
    %p234 = por %p232, %p233
    %s236 = sadd.s32 %s235, 1
    %p239 = scmp.eq.s32.totalorder %s28, 1
    %p240 = scmp.ne.s32.totalorder %s235, %s237
    %p241 = scmp.eq.s32.totalorder %s28, 0
    %p242 = por %p240, %p241
    %p243 = scmp.ne.s32.totalorder %s235, %s237
    %p244 = scmp.eq.s32.totalorder %s33, 1
    %p245 = por %p243, %p244
    %p246 = scmp.ne.s32.totalorder %s237, %s238
    %p247 = scmp.eq.s32.totalorder %s33, 0
    %p248 = por %p246, %p247
    %p249 = scmp.ne.s32.totalorder %s237, %s238
    %p250 = scmp.eq.s32.totalorder %s34, 1
    %p251 = por %p249, %p250
    %p253 = scmp.ne.s32.totalorder %s238, %s252
    %p254 = scmp.eq.s32.totalorder %s34, 0
    %p255 = por %p253, %p254
    %s257 = sadd.s32 %s256, 1
    %p260 = scmp.eq.s32.totalorder %s28, 1
    %p261 = scmp.ne.s32.totalorder %s256, %s258
    %p262 = scmp.eq.s32.totalorder %s28, 0
    %p263 = por %p261, %p262
    %p264 = scmp.ne.s32.totalorder %s256, %s258
    %p265 = scmp.eq.s32.totalorder %s33, 1
    %p266 = por %p264, %p265
    %p267 = scmp.ne.s32.totalorder %s258, %s259
    %p268 = scmp.eq.s32.totalorder %s33, 0
    %p269 = por %p267, %p268
    %p270 = scmp.ne.s32.totalorder %s258, %s259
    %p271 = scmp.eq.s32.totalorder %s34, 1
    %p272 = por %p270, %p271
    %p274 = scmp.ne.s32.totalorder %s259, %s273
    %p275 = scmp.eq.s32.totalorder %s34, 0
    %p276 = por %p274, %p275
    %s278 = sadd.s32 %s277, 1
    %p281 = scmp.eq.s32.totalorder %s28, 1
    %p282 = scmp.ne.s32.totalorder %s277, %s279
    %p283 = scmp.eq.s32.totalorder %s28, 0
    %p284 = por %p282, %p283
    %p285 = scmp.ne.s32.totalorder %s277, %s279
    %p286 = scmp.eq.s32.totalorder %s33, 1
    %p287 = por %p285, %p286
    %p288 = scmp.ne.s32.totalorder %s279, %s280
    %p289 = scmp.eq.s32.totalorder %s33, 0
    %p290 = por %p288, %p289
    %p291 = scmp.ne.s32.totalorder %s279, %s280
    %p292 = scmp.eq.s32.totalorder %s34, 1
    %p293 = por %p291, %p292
    %p295 = scmp.ne.s32.totalorder %s280, %s294
    %p296 = scmp.eq.s32.totalorder %s34, 0
    %p297 = por %p295, %p296
    %s299 = sadd.s32 %s298, 1
    %p302 = scmp.eq.s32.totalorder %s28, 1
    %p303 = scmp.ne.s32.totalorder %s298, %s300
    %p304 = scmp.eq.s32.totalorder %s28, 0
    %p305 = por %p303, %p304
    %p306 = scmp.ne.s32.totalorder %s298, %s300
    %p307 = scmp.eq.s32.totalorder %s33, 1
    %p308 = por %p306, %p307
    %p309 = scmp.ne.s32.totalorder %s300, %s301
    %p310 = scmp.eq.s32.totalorder %s33, 0
    %p311 = por %p309, %p310
    %p312 = scmp.ne.s32.totalorder %s300, %s301
    %p313 = scmp.eq.s32.totalorder %s34, 1
    %p314 = por %p312, %p313
    %p316 = scmp.ne.s32.totalorder %s301, %s315
    %p317 = scmp.eq.s32.totalorder %s34, 0
    %p318 = por %p316, %p317
    %s320 = sadd.s32 %s319, 1
    %p323 = scmp.eq.s32.totalorder %s28, 1
    %p324 = scmp.ne.s32.totalorder %s319, %s321
    %p325 = scmp.eq.s32.totalorder %s28, 0
    %p326 = por %p324, %p325
    %p327 = scmp.ne.s32.totalorder %s319, %s321
    %p328 = scmp.eq.s32.totalorder %s33, 1
    %p329 = por %p327, %p328
    %p330 = scmp.ne.s32.totalorder %s321, %s322
    %p331 = scmp.eq.s32.totalorder %s33, 0
    %p332 = por %p330, %p331
    %p333 = scmp.ne.s32.totalorder %s321, %s322
    %p334 = scmp.eq.s32.totalorder %s34, 1
    %p335 = por %p333, %p334
    %p337 = scmp.ne.s32.totalorder %s322, %s336
    %p338 = scmp.eq.s32.totalorder %s34, 0
    %p339 = por %p337, %p338
    %s341 = sadd.s32 %s340, 1
    %p344 = scmp.eq.s32.totalorder %s28, 1
    %p345 = scmp.ne.s32.totalorder %s340, %s342
    %p346 = scmp.eq.s32.totalorder %s28, 0
    %p347 = por %p345, %p346
    %p348 = scmp.ne.s32.totalorder %s340, %s342
    %p349 = scmp.eq.s32.totalorder %s33, 1
    %p350 = por %p348, %p349
    %p351 = scmp.ne.s32.totalorder %s342, %s343
    %p352 = scmp.eq.s32.totalorder %s33, 0
    %p353 = por %p351, %p352
    %p354 = scmp.ne.s32.totalorder %s342, %s343
    %p355 = scmp.eq.s32.totalorder %s34, 1
    %p356 = por %p354, %p355
    %p358 = scmp.ne.s32.totalorder %s343, %s357
    %p359 = scmp.eq.s32.totalorder %s34, 0
    %p360 = por %p358, %p359
    %s362 = sadd.s32 %s361, 1
    %p365 = scmp.eq.s32.totalorder %s28, 1
    %p366 = scmp.ne.s32.totalorder %s361, %s363
    %p367 = scmp.eq.s32.totalorder %s28, 0
    %p368 = por %p366, %p367
    %p369 = scmp.ne.s32.totalorder %s361, %s363
    %p370 = scmp.eq.s32.totalorder %s33, 1
    %p371 = por %p369, %p370
    %p372 = scmp.ne.s32.totalorder %s363, %s364
    %p373 = scmp.eq.s32.totalorder %s33, 0
    %p374 = por %p372, %p373
    %p375 = scmp.ne.s32.totalorder %s363, %s364
    %p376 = scmp.eq.s32.totalorder %s34, 1
    %p377 = por %p375, %p376
    %p379 = scmp.ne.s32.totalorder %s364, %s378
    %p380 = scmp.eq.s32.totalorder %s34, 0
    %p381 = por %p379, %p380
    %s383 = sadd.s32 %s382, 1
    %p386 = scmp.eq.s32.totalorder %s28, 1
    %p387 = scmp.ne.s32.totalorder %s382, %s384
    %p388 = scmp.eq.s32.totalorder %s28, 0
    %p389 = por %p387, %p388
    %p390 = scmp.ne.s32.totalorder %s382, %s384
    %p391 = scmp.eq.s32.totalorder %s33, 1
    %p392 = por %p390, %p391
    %p393 = scmp.ne.s32.totalorder %s384, %s385
    %p394 = scmp.eq.s32.totalorder %s33, 0
    %p395 = por %p393, %p394
    %p396 = scmp.ne.s32.totalorder %s384, %s385
    %p397 = scmp.eq.s32.totalorder %s34, 1
    %p398 = por %p396, %p397
    %p400 = scmp.ne.s32.totalorder %s385, %s399
    %p401 = scmp.eq.s32.totalorder %s34, 0
    %p402 = por %p400, %p401
    %s404 = sadd.s32 %s403, 1
    %p407 = scmp.eq.s32.totalorder %s28, 1
    %p408 = scmp.ne.s32.totalorder %s403, %s405
    %p409 = scmp.eq.s32.totalorder %s28, 0
    %p410 = por %p408, %p409
    %p411 = scmp.ne.s32.totalorder %s403, %s405
    %p412 = scmp.eq.s32.totalorder %s33, 1
    %p413 = por %p411, %p412
    %p414 = scmp.ne.s32.totalorder %s405, %s406
    %p415 = scmp.eq.s32.totalorder %s33, 0
    %p416 = por %p414, %p415
    %p417 = scmp.ne.s32.totalorder %s405, %s406
    %p418 = scmp.eq.s32.totalorder %s34, 1
    %p419 = por %p417, %p418
    %p421 = scmp.ne.s32.totalorder %s406, %s420
    %p422 = scmp.eq.s32.totalorder %s34, 0
    %p423 = por %p421, %p422
    %s425 = sadd.s32 %s424, 1
    %p428 = scmp.eq.s32.totalorder %s28, 1
    %p429 = scmp.ne.s32.totalorder %s424, %s426
    %p430 = scmp.eq.s32.totalorder %s28, 0
    %p431 = por %p429, %p430
    %p432 = scmp.ne.s32.totalorder %s424, %s426
    %p433 = scmp.eq.s32.totalorder %s33, 1
    %p434 = por %p432, %p433
    %p435 = scmp.ne.s32.totalorder %s426, %s427
    %p436 = scmp.eq.s32.totalorder %s33, 0
    %p437 = por %p435, %p436
    %p438 = scmp.ne.s32.totalorder %s426, %s427
    %p439 = scmp.eq.s32.totalorder %s34, 1
    %p440 = por %p438, %p439
    %p442 = scmp.ne.s32.totalorder %s427, %s441
    %p443 = scmp.eq.s32.totalorder %s34, 0
    %p444 = por %p442, %p443
    %s446 = sadd.s32 %s445, 1
    %p449 = scmp.eq.s32.totalorder %s28, 1
    %p450 = scmp.ne.s32.totalorder %s445, %s447
    %p451 = scmp.eq.s32.totalorder %s28, 0
    %p452 = por %p450, %p451
    %p453 = scmp.ne.s32.totalorder %s445, %s447
    %p454 = scmp.eq.s32.totalorder %s33, 1
    %p455 = por %p453, %p454
    %p456 = scmp.ne.s32.totalorder %s447, %s448
    %p457 = scmp.eq.s32.totalorder %s33, 0
    %p458 = por %p456, %p457
    %p459 = scmp.ne.s32.totalorder %s447, %s448
    %p460 = scmp.eq.s32.totalorder %s34, 1
    %p461 = por %p459, %p460
    %p463 = scmp.ne.s32.totalorder %s448, %s462
    %p464 = scmp.eq.s32.totalorder %s34, 0
    %p465 = por %p463, %p464
    %s467 = sadd.s32 %s466, 1
    %p470 = scmp.eq.s32.totalorder %s28, 1
    %p471 = scmp.ne.s32.totalorder %s466, %s468
    %p472 = scmp.eq.s32.totalorder %s28, 0
    %p473 = por %p471, %p472
    %p474 = scmp.ne.s32.totalorder %s466, %s468
    %p475 = scmp.eq.s32.totalorder %s33, 1
    %p476 = por %p474, %p475
    %p477 = scmp.ne.s32.totalorder %s468, %s469
    %p478 = scmp.eq.s32.totalorder %s33, 0
    %p479 = por %p477, %p478
    %p480 = scmp.ne.s32.totalorder %s468, %s469
    %p481 = scmp.eq.s32.totalorder %s34, 1
    %p482 = por %p480, %p481
    %p484 = scmp.ne.s32.totalorder %s469, %s483
    %p485 = scmp.eq.s32.totalorder %s34, 0
    %p486 = por %p484, %p485
    %s488 = sadd.s32 %s487, 1
    %p491 = scmp.eq.s32.totalorder %s28, 1
    %p492 = scmp.ne.s32.totalorder %s487, %s489
    %p493 = scmp.eq.s32.totalorder %s28, 0
    %p494 = por %p492, %p493
    %p495 = scmp.ne.s32.totalorder %s487, %s489
    %p496 = scmp.eq.s32.totalorder %s33, 1
    %p497 = por %p495, %p496
    %p498 = scmp.ne.s32.totalorder %s489, %s490
    %p499 = scmp.eq.s32.totalorder %s33, 0
    %p500 = por %p498, %p499
    %p501 = scmp.ne.s32.totalorder %s489, %s490
    %p502 = scmp.eq.s32.totalorder %s34, 1
    %p503 = por %p501, %p502
    %p505 = scmp.ne.s32.totalorder %s490, %s504
    %p506 = scmp.eq.s32.totalorder %s34, 0
    %p507 = por %p505, %p506
    %s508 = ssub.s32 %s28, %s35
    %p509 = scmp.eq.s32.totalorder %s508, 0
    %s511 = sadd.s32 %s510, 1
    %s512 = scalar_select %p509, %s510, %s511
    %p515 = pneg %p509
    %p516 = scmp.eq.s32.totalorder %s28, 1
    %p517 = por %p515, %p516
    %p518 = scmp.ne.s32.totalorder %s510, %s513
    %p519 = scmp.eq.s32.totalorder %s28, 0
    %p520 = por %p518, %p519
    %p521 = scmp.ne.s32.totalorder %s510, %s513
    %p522 = scmp.eq.s32.totalorder %s33, 1
    %p523 = por %p521, %p522
    %p524 = scmp.ne.s32.totalorder %s513, %s514
    %p525 = scmp.eq.s32.totalorder %s33, 0
    %p526 = por %p524, %p525
    %p527 = scmp.ne.s32.totalorder %s513, %s514
    %p528 = scmp.eq.s32.totalorder %s34, 1
    %p529 = por %p527, %p528
    %p531 = scmp.ne.s32.totalorder %s514, %s530
    %p532 = scmp.eq.s32.totalorder %s34, 0
    %p533 = por %p531, %p532
    %p534 = scmp.le.s32.totalorder 1, %s28
    %p535 = scmp.lt.s32.totalorder %s28, 3
    %p536 = pnand %p534, %p535
    %p537 = pneg %p536
    // Predicated region
    $region9: #{_forward_jit.1} parent=5 // pred_check
      _
    $region10: #{_forward_jit.1} parent=5 // pred_check_branch
      %539 = sbr.rel (%p536) target = $region12
    $region11: #{_forward_jit.1} parent=5 // pred_region
      %s540 = ssub.s32 %s28, 1
      // Predicated region
      $region13: #{_forward_jit.1} parent=11 // pred_check
        %p541 = pneg %p101
      $region14: #{_forward_jit.1} parent=11 // pred_check_branch
        %543 = sbr.rel (%p541) target = $region16
      $region15: #{_forward_jit.1} parent=11 // pred_region
        _
      $region16: #{_forward_jit.1} parent=11 // pred_fallthru
        _
      // Predicated region
      $region17: #{_forward_jit.1} parent=11 // pred_check
        %p544 = pneg %p122
      $region18: #{_forward_jit.1} parent=11 // pred_check_branch
        %546 = sbr.rel (%p544) target = $region20
      $region19: #{_forward_jit.1} parent=11 // pred_region
        _
      $region20: #{_forward_jit.1} parent=11 // pred_fallthru
        _
      // Predicated region
      $region21: #{_forward_jit.1} parent=11 // pred_check
        %p547 = pneg %p143
      $region22: #{_forward_jit.1} parent=11 // pred_check_branch
        %549 = sbr.rel (%p547) target = $region24
      $region23: #{_forward_jit.1} parent=11 // pred_region
        _
      $region24: #{_forward_jit.1} parent=11 // pred_fallthru
        _
      // Predicated region
      $region25: #{_forward_jit.1} parent=11 // pred_check
        %p550 = pneg %p164
      $region26: #{_forward_jit.1} parent=11 // pred_check_branch
        %552 = sbr.rel (%p550) target = $region28
      $region27: #{_forward_jit.1} parent=11 // pred_region
        _
      $region28: #{_forward_jit.1} parent=11 // pred_fallthru
        _
      // Predicated region
      $region29: #{_forward_jit.1} parent=11 // pred_check
        %p553 = pneg %p185
      $region30: #{_forward_jit.1} parent=11 // pred_check_branch
        %555 = sbr.rel (%p553) target = $region32
      $region31: #{_forward_jit.1} parent=11 // pred_region
        _
      $region32: #{_forward_jit.1} parent=11 // pred_fallthru
        _
      // Predicated region
      $region33: #{_forward_jit.1} parent=11 // pred_check
        %p556 = pneg %p206
      $region34: #{_forward_jit.1} parent=11 // pred_check_branch
        %558 = sbr.rel (%p556) target = $region36
      $region35: #{_forward_jit.1} parent=11 // pred_region
        _
      $region36: #{_forward_jit.1} parent=11 // pred_fallthru
        _
      // Predicated region
      $region37: #{_forward_jit.1} parent=11 // pred_check
        %p559 = pneg %p227
      $region38: #{_forward_jit.1} parent=11 // pred_check_branch
        %561 = sbr.rel (%p559) target = $region40
      $region39: #{_forward_jit.1} parent=11 // pred_region
        _
      $region40: #{_forward_jit.1} parent=11 // pred_fallthru
        _
      // Predicated region
      $region41: #{_forward_jit.1} parent=11 // pred_check
        %p562 = pneg %p248
      $region42: #{_forward_jit.1} parent=11 // pred_check_branch
        %564 = sbr.rel (%p562) target = $region44
      $region43: #{_forward_jit.1} parent=11 // pred_region
        _
      $region44: #{_forward_jit.1} parent=11 // pred_fallthru
        _
      // Predicated region
      $region45: #{_forward_jit.1} parent=11 // pred_check
        %p565 = pneg %p269
      $region46: #{_forward_jit.1} parent=11 // pred_check_branch
        %567 = sbr.rel (%p565) target = $region48
      $region47: #{_forward_jit.1} parent=11 // pred_region
        _
      $region48: #{_forward_jit.1} parent=11 // pred_fallthru
        _
      // Predicated region
      $region49: #{_forward_jit.1} parent=11 // pred_check
        %p568 = pneg %p290
      $region50: #{_forward_jit.1} parent=11 // pred_check_branch
        %570 = sbr.rel (%p568) target = $region52
      $region51: #{_forward_jit.1} parent=11 // pred_region
        _
      $region52: #{_forward_jit.1} parent=11 // pred_fallthru
        _
      // Predicated region
      $region53: #{_forward_jit.1} parent=11 // pred_check
        %p571 = pneg %p311
      $region54: #{_forward_jit.1} parent=11 // pred_check_branch
        %573 = sbr.rel (%p571) target = $region56
      $region55: #{_forward_jit.1} parent=11 // pred_region
        _
      $region56: #{_forward_jit.1} parent=11 // pred_fallthru
        _
      // Predicated region
      $region57: #{_forward_jit.1} parent=11 // pred_check
        %p574 = pneg %p332
      $region58: #{_forward_jit.1} parent=11 // pred_check_branch
        %576 = sbr.rel (%p574) target = $region60
      $region59: #{_forward_jit.1} parent=11 // pred_region
        _
      $region60: #{_forward_jit.1} parent=11 // pred_fallthru
        _
      // Predicated region
      $region61: #{_forward_jit.1} parent=11 // pred_check
        %p577 = pneg %p353
      $region62: #{_forward_jit.1} parent=11 // pred_check_branch
        %579 = sbr.rel (%p577) target = $region64
      $region63: #{_forward_jit.1} parent=11 // pred_region
        _
      $region64: #{_forward_jit.1} parent=11 // pred_fallthru
        _
      // Predicated region
      $region65: #{_forward_jit.1} parent=11 // pred_check
        %p580 = pneg %p374
      $region66: #{_forward_jit.1} parent=11 // pred_check_branch
        %582 = sbr.rel (%p580) target = $region68
      $region67: #{_forward_jit.1} parent=11 // pred_region
        _
      $region68: #{_forward_jit.1} parent=11 // pred_fallthru
        _
      // Predicated region
      $region69: #{_forward_jit.1} parent=11 // pred_check
        %p583 = pneg %p395
      $region70: #{_forward_jit.1} parent=11 // pred_check_branch
        %585 = sbr.rel (%p583) target = $region72
      $region71: #{_forward_jit.1} parent=11 // pred_region
        _
      $region72: #{_forward_jit.1} parent=11 // pred_fallthru
        _
      // Predicated region
      $region73: #{_forward_jit.1} parent=11 // pred_check
        %p586 = pneg %p416
      $region74: #{_forward_jit.1} parent=11 // pred_check_branch
        %588 = sbr.rel (%p586) target = $region76
      $region75: #{_forward_jit.1} parent=11 // pred_region
        _
      $region76: #{_forward_jit.1} parent=11 // pred_fallthru
        _
      // Predicated region
      $region77: #{_forward_jit.1} parent=11 // pred_check
        %p589 = pneg %p437
      $region78: #{_forward_jit.1} parent=11 // pred_check_branch
        %591 = sbr.rel (%p589) target = $region80
      $region79: #{_forward_jit.1} parent=11 // pred_region
        _
      $region80: #{_forward_jit.1} parent=11 // pred_fallthru
        _
      // Predicated region
      $region81: #{_forward_jit.1} parent=11 // pred_check
        %p592 = pneg %p458
      $region82: #{_forward_jit.1} parent=11 // pred_check_branch
        %594 = sbr.rel (%p592) target = $region84
      $region83: #{_forward_jit.1} parent=11 // pred_region
        _
      $region84: #{_forward_jit.1} parent=11 // pred_fallthru
        _
      // Predicated region
      $region85: #{_forward_jit.1} parent=11 // pred_check
        %p595 = pneg %p479
      $region86: #{_forward_jit.1} parent=11 // pred_check_branch
        %597 = sbr.rel (%p595) target = $region88
      $region87: #{_forward_jit.1} parent=11 // pred_region
        _
      $region88: #{_forward_jit.1} parent=11 // pred_fallthru
        _
      // Predicated region
      $region89: #{_forward_jit.1} parent=11 // pred_check
        %p598 = pneg %p500
      $region90: #{_forward_jit.1} parent=11 // pred_check_branch
        %600 = sbr.rel (%p598) target = $region92
      $region91: #{_forward_jit.1} parent=11 // pred_region
        _
      $region92: #{_forward_jit.1} parent=11 // pred_fallthru
        _
    $region12: #{_forward_jit.1} parent=5 // pred_fallthru
      _
    %p601 = scmp.lt.s32.totalorder %s28, 2
    // Predicated region
    $region93: #{_forward_jit.1} parent=5 // pred_check
      %p602 = pneg %p601
    $region94: #{_forward_jit.1} parent=5 // pred_check_branch
      %604 = sbr.rel (%p602) target = $region96
    $region95: #{_forward_jit.1} parent=5 // pred_region
      // Predicated region
      $region97: #{_forward_jit.1} parent=95 // pred_check
        %p605 = pneg %p48
      $region98: #{_forward_jit.1} parent=95 // pred_check_branch
        %607 = sbr.rel (%p605) target = $region100
      $region99: #{_forward_jit.1} parent=95 // pred_region
        %p608 = scmp.lt.s32.totalorder %s28, 1
        %s609 = scalar_select %p608, %s28, 1
        %s610 = smul.addr %s609, 8
        %s611 = scalar_lea.vmem %s0, %s610
      $region100: #{_forward_jit.1} parent=95 // pred_fallthru
        _
      // Predicated region
      $region101: #{_forward_jit.1} parent=95 // pred_check
        %p612 = pneg %p74
      $region102: #{_forward_jit.1} parent=95 // pred_check_branch
        %614 = sbr.rel (%p612) target = $region104
      $region103: #{_forward_jit.1} parent=95 // pred_region
        %p615 = scmp.lt.s32.totalorder %s28, 1
        %s616 = scalar_select %p615, %s28, 1
        %s617 = smul.addr %s616, 8
        %s618 = scalar_lea.vmem %s1, %s617
      $region104: #{_forward_jit.1} parent=95 // pred_fallthru
        _
    $region96: #{_forward_jit.1} parent=5 // pred_fallthru
      _
    %p619 = scmp.le.s32.totalorder 1, %s28
    %p620 = scmp.lt.s32.totalorder %s28, 3
    %p621 = pnand %p619, %p620
    %p622 = pneg %p621
    // Predicated region
    $region105: #{_forward_jit.1} parent=5 // pred_check
      _
    $region106: #{_forward_jit.1} parent=5 // pred_check_branch
      %624 = sbr.rel (%p621) target = $region108
    $region107: #{_forward_jit.1} parent=5 // pred_region
      %s625 = ssub.s32 %s28, 1
      %p626 = scmp.lt.s32.totalorder %s33, 1
      %s627 = scalar_select %p626, %s33, 1
      %s628 = smul.addr %s627, 8
      %s629 = scalar_lea.vmem %s0, %s628
      %p630 = pneg %p54
      %p631 = pneg %p51
      %p632 = scmp.lt.s32.totalorder %s33, 1
      %s633 = scalar_select %p632, %s33, 1
      %s634 = smul.addr %s633, 8
      %s635 = scalar_lea.vmem %s1, %s634
      %p636 = pneg %p80
      %p637 = pneg %p77
      %p638 = pneg %p101
      %p639 = pneg %p98
      %p640 = pneg %p122
      %p641 = pneg %p119
      %p642 = pneg %p143
      %p643 = pneg %p140
      %p644 = pneg %p164
      %p645 = pneg %p161
      %p646 = pneg %p185
      %p647 = pneg %p182
      %p648 = pneg %p206
      %p649 = pneg %p203
      %p650 = pneg %p227
      %p651 = pneg %p224
      %p652 = pneg %p248
      %p653 = pneg %p245
      %p654 = pneg %p269
      %p655 = pneg %p266
      %p656 = pneg %p290
      %p657 = pneg %p287
      %p658 = pneg %p311
      %p659 = pneg %p308
      %p660 = pneg %p332
      %p661 = pneg %p329
      %p662 = pneg %p353
      %p663 = pneg %p350
      %p664 = pneg %p374
      %p665 = pneg %p371
      %p666 = pneg %p395
      %p667 = pneg %p392
      %p668 = pneg %p416
      %p669 = pneg %p413
      %p670 = pneg %p437
      %p671 = pneg %p434
      %p672 = pneg %p458
      %p673 = pneg %p455
      %p674 = pneg %p479
      %p675 = pneg %p476
      %p676 = pneg %p500
      %p677 = pneg %p497
      %p678 = pneg %p526
      %p679 = pneg %p523
      %p680 = scmp.lt.s32.totalorder %s33, 1
      %s681 = scalar_select %p680, %s33, 1
      %s682 = smul.addr %s681, 8
      %s683 = scalar_lea.vmem %s22, %s682
      %p684 = scmp.lt.s32.totalorder %s33, 1
      %s685 = scalar_select %p684, %s33, 1
      %s686 = smul.addr %s685, 8
      %s687 = scalar_lea.vmem %s0, %s686
      %p688 = scmp.lt.s32.totalorder %s33, 1
      %s689 = scalar_select %p688, %s33, 1
      %s690 = smul.addr %s689, 8
      %s691 = scalar_lea.vmem %s1, %s690
      %p692 = scmp.lt.s32.totalorder %s33, 1
      %s693 = scalar_select %p692, %s33, 1
      %s694 = smul.addr %s693, 8
      %s695 = scalar_lea.vmem %s22, %s694
      %v696 = vlaneseq
      %v697 = vand.u32 %v696, 127
      %vm698 = vcmp.lt.s32.totalorder %v697, 32
      %v699 = vsel %vm698, 1, 0
      %v700 = vcvt.s32.f32 %v699
      %v701 = vlaneseq
      %v702 = vshrl.u32 %v701, 7
      %vm703 = vcmp.gt.s32.totalorder %v697, %v702
      %v704 = vsel %vm703, 1e+10, 0.0
      %v705 = vld [vmem:[%s687] sm:$0xff]
      %v706 = vld [vmem:[%s691] sm:$0xff]
      %v707 = vld [vmem:[%s2] sm:$0xff]
      %v708 = vld [vmem:[%s2 + $0x8] sm:$0xff]
      %v709 = vld [vmem:[%s2 + $0x10] sm:$0xff]
      %v710 = vld [vmem:[%s2 + $0x18] sm:$0xff]
      %v711 = vld [vmem:[%s2 + $0x20] sm:$0xff]
      %v712 = vld [vmem:[%s2 + $0x28] sm:$0xff]
      %v713 = vld [vmem:[%s2 + $0x30] sm:$0xff]
      %v714 = vld [vmem:[%s2 + $0x38] sm:$0xff]
      %v715 = vld [vmem:[%s2 + $0x40] sm:$0xff]
      %v716 = vld [vmem:[%s2 + $0x48] sm:$0xff]
      %v717 = vld [vmem:[%s2 + $0x50] sm:$0xff]
      %v718 = vld [vmem:[%s2 + $0x58] sm:$0xff]
      %v719 = vld [vmem:[%s2 + $0x60] sm:$0xff]
      %v720 = vld [vmem:[%s2 + $0x68] sm:$0xff]
      %v721 = vld [vmem:[%s2 + $0x70] sm:$0xff]
      %v722 = vld [vmem:[%s2 + $0x78] sm:$0xff]
      %v723 = vld [vmem:[%s2 + $0x80] sm:$0xff]
      %v724 = vld [vmem:[%s2 + $0x88] sm:$0xff]
      %v725 = vld [vmem:[%s2 + $0x90] sm:$0xff]
      %v726 = vld [vmem:[%s2 + $0x98] sm:$0xff]
      %v727 = vld [vmem:[%s2 + $0xa0] sm:$0xff]
      %v728 = vld [vmem:[%s2 + $0xa8] sm:$0xff]
      %v729 = vld [vmem:[%s2 + $0xb0] sm:$0xff]
      %v730 = vld [vmem:[%s2 + $0xb8] sm:$0xff]
      %v731 = vld [vmem:[%s2 + $0xc0] sm:$0xff]
      %v732 = vld [vmem:[%s2 + $0xc8] sm:$0xff]
      %v733 = vld [vmem:[%s2 + $0xd0] sm:$0xff]
      %v734 = vld [vmem:[%s2 + $0xd8] sm:$0xff]
      %v735 = vld [vmem:[%s2 + $0xe0] sm:$0xff]
      %v736 = vld [vmem:[%s2 + $0xe8] sm:$0xff]
      %v737 = vld [vmem:[%s2 + $0xf0] sm:$0xff]
      %v738 = vld [vmem:[%s2 + $0xf8] sm:$0xff]
      %v739 = vld [vmem:[%s2 + $0x100] sm:$0xff]
      %v740 = vld [vmem:[%s2 + $0x108] sm:$0xff]
      %v741 = vld [vmem:[%s2 + $0x110] sm:$0xff]
      %v742 = vld [vmem:[%s2 + $0x118] sm:$0xff]
      %v743 = vld [vmem:[%s2 + $0x120] sm:$0xff]
      %v744 = vld [vmem:[%s2 + $0x128] sm:$0xff]
      %v745 = vld [vmem:[%s2 + $0x130] sm:$0xff]
      %v746 = vld [vmem:[%s2 + $0x138] sm:$0xff]
      %v747 = vld [vmem:[%s2 + $0x140] sm:$0xff]
      %v748 = vld [vmem:[%s2 + $0x148] sm:$0xff]
      %v749 = vld [vmem:[%s2 + $0x150] sm:$0xff]
      %v750 = vld [vmem:[%s2 + $0x158] sm:$0xff]
      %v751 = vld [vmem:[%s2 + $0x160] sm:$0xff]
      %v752 = vld [vmem:[%s2 + $0x168] sm:$0xff]
      %v753 = vld [vmem:[%s2 + $0x170] sm:$0xff]
      %v754 = vld [vmem:[%s2 + $0x178] sm:$0xff]
      %v755 = vld [vmem:[%s2 + $0x180] sm:$0xff]
      %v756 = vld [vmem:[%s2 + $0x188] sm:$0xff]
      %v757 = vld [vmem:[%s2 + $0x190] sm:$0xff]
      %v758 = vld [vmem:[%s2 + $0x198] sm:$0xff]
      %v759 = vld [vmem:[%s2 + $0x1a0] sm:$0xff]
      %v760 = vld [vmem:[%s2 + $0x1a8] sm:$0xff]
      %v761 = vld [vmem:[%s2 + $0x1b0] sm:$0xff]
      %v762 = vld [vmem:[%s2 + $0x1b8] sm:$0xff]
      %v763 = vld [vmem:[%s2 + $0x1c0] sm:$0xff]
      %v764 = vld [vmem:[%s2 + $0x1c8] sm:$0xff]
      %v765 = vld [vmem:[%s2 + $0x1d0] sm:$0xff]
      %v766 = vld [vmem:[%s2 + $0x1d8] sm:$0xff]
      %v767 = vld [vmem:[%s2 + $0x1e0] sm:$0xff]
      %v768 = vld [vmem:[%s2 + $0x1e8] sm:$0xff]
      %v769 = vld [vmem:[%s2 + $0x1f0] sm:$0xff]
      %v770 = vld [vmem:[%s2 + $0x1f8] sm:$0xff]
      %771 = vmatprep.subr.mxu0 0.0
      %772 = vmatpush1.msra.mxu0 %v707
      %773 = vmatprep.subr.mxu0 0.0
      %774 = vmatpush1.msra.mxu0 %v708
      %775 = vmatprep.subr.mxu0 0.0
      %776 = vmatpush1.msra.mxu0 %v709
      %777 = vmatprep.subr.mxu0 0.0
      %778 = vmatpush1.msra.mxu0 %v710
      %779 = vmatprep.subr.mxu0 0.0
      %780 = vmatpush1.msra.mxu0 %v711
      %781 = vmatprep.subr.mxu0 0.0
      %782 = vmatpush1.msra.mxu0 %v712
      %783 = vmatprep.subr.mxu0 0.0
      %784 = vmatpush1.msra.mxu0 %v713
      %785 = vmatprep.subr.mxu0 0.0
      %786 = vmatpush1.msra.mxu0 %v714
      %787 = vmatprep.subr.mxu0 0.0
      %788 = vmatpush1.msra.mxu0 %v715
      %789 = vmatprep.subr.mxu0 0.0
      %790 = vmatpush1.msra.mxu0 %v716
      %791 = vmatprep.subr.mxu0 0.0
      %792 = vmatpush1.msra.mxu0 %v717
      %793 = vmatprep.subr.mxu0 0.0
      %794 = vmatpush1.msra.mxu0 %v718
      %795 = vmatprep.subr.mxu0 0.0
      %796 = vmatpush1.msra.mxu0 %v719
      %797 = vmatprep.subr.mxu0 0.0
      %798 = vmatpush1.msra.mxu0 %v720
      %799 = vmatprep.subr.mxu0 0.0
      %800 = vmatpush1.msra.mxu0 %v721
      %801 = vmatprep.subr.mxu0 0.0
      %802 = vmatpush1.msra.mxu0 %v722
      %803 = vmatprep.subr.mxu0 0.0
      %804 = vmatpush1.msra.mxu0 0.0
      %805 = vmatprep.subr.mxu0 0.0
      %806 = vmatpush1.msra.mxu0 0.0
      %807 = vmatprep.subr.mxu0 0.0
      %808 = vmatpush1.msra.mxu0 0.0
      %809 = vmatprep.subr.mxu0 0.0
      %810 = vmatpush1.msra.mxu0 0.0
      %811 = vmatprep.subr.mxu0 0.0
      %812 = vmatpush1.msra.mxu0 0.0
      %813 = vmatprep.subr.mxu0 0.0
      %814 = vmatpush1.msra.mxu0 0.0
      %815 = vmatprep.subr.mxu0 0.0
      %816 = vmatpush1.msra.mxu0 0.0
      %817 = vmatprep.subr.mxu0 0.0
      %818 = vmatpush1.msra.mxu0 0.0
      %819 = vmatprep.subr.mxu0 0.0
      %820 = vmatpush1.msra.mxu0 0.0
      %821 = vmatprep.subr.mxu0 0.0
      %822 = vmatpush1.msra.mxu0 0.0
      %823 = vmatprep.subr.mxu0 0.0
      %824 = vmatpush1.msra.mxu0 0.0
      %825 = vmatprep.subr.mxu0 0.0
      %826 = vmatpush1.msra.mxu0 0.0
      %827 = vmatprep.subr.mxu0 0.0
      %828 = vmatpush1.msra.mxu0 0.0
      %829 = vmatprep.subr.mxu0 0.0
      %830 = vmatpush1.msra.mxu0 0.0
      %831 = vmatprep.subr.mxu0 0.0
      %832 = vmatpush1.msra.mxu0 0.0
      %833 = vmatprep.subr.mxu0 0.0
      %834 = vmatpush1.msra.mxu0 0.0
      %835 = vmatprep.mubr.f32.mxu0 0.0
      %836 = vmatmul.mubr.f32.gmra.mrb[0].mxu0 %v705
      %v837 = vpop.f32.mrb[0].mxu0
      %v838 = vadd.f32 0.0, %v837
      %v839 = vpop.f32.mrb[0].mxu0
      %840 = vdwg.mxu0
      %841 = vmatprep.subr.mxu0 0.0
      %842 = vmatpush1.msra.mxu0 %v723
      %843 = vmatprep.subr.mxu0 0.0
      %844 = vmatpush1.msra.mxu0 %v724
      %845 = vmatprep.subr.mxu0 0.0
      %846 = vmatpush1.msra.mxu0 %v725
      %847 = vmatprep.subr.mxu0 0.0
      %848 = vmatpush1.msra.mxu0 %v726
      %849 = vmatprep.subr.mxu0 0.0
      %850 = vmatpush1.msra.mxu0 %v727
      %851 = vmatprep.subr.mxu0 0.0
      %852 = vmatpush1.msra.mxu0 %v728
      %853 = vmatprep.subr.mxu0 0.0
      %854 = vmatpush1.msra.mxu0 %v729
      %855 = vmatprep.subr.mxu0 0.0
      %856 = vmatpush1.msra.mxu0 %v730
      %857 = vmatprep.subr.mxu0 0.0
      %858 = vmatpush1.msra.mxu0 %v731
      %859 = vmatprep.subr.mxu0 0.0
      %860 = vmatpush1.msra.mxu0 %v732
      %861 = vmatprep.subr.mxu0 0.0
      %862 = vmatpush1.msra.mxu0 %v733
      %863 = vmatprep.subr.mxu0 0.0
      %864 = vmatpush1.msra.mxu0 %v734
      %865 = vmatprep.subr.mxu0 0.0
      %866 = vmatpush1.msra.mxu0 %v735
      %867 = vmatprep.subr.mxu0 0.0
      %868 = vmatpush1.msra.mxu0 %v736
      %869 = vmatprep.subr.mxu0 0.0
      %870 = vmatpush1.msra.mxu0 %v737
      %871 = vmatprep.subr.mxu0 0.0
      %872 = vmatpush1.msra.mxu0 %v738
      %873 = vmatprep.subr.mxu0 0.0
      %874 = vmatpush1.msra.mxu0 0.0
      %875 = vmatprep.subr.mxu0 0.0
      %876 = vmatpush1.msra.mxu0 0.0
      %877 = vmatprep.subr.mxu0 0.0
      %878 = vmatpush1.msra.mxu0 0.0
      %879 = vmatprep.subr.mxu0 0.0
      %880 = vmatpush1.msra.mxu0 0.0
      %881 = vmatprep.subr.mxu0 0.0
      %882 = vmatpush1.msra.mxu0 0.0
      %883 = vmatprep.subr.mxu0 0.0
      %884 = vmatpush1.msra.mxu0 0.0
      %885 = vmatprep.subr.mxu0 0.0
      %886 = vmatpush1.msra.mxu0 0.0
      %887 = vmatprep.subr.mxu0 0.0
      %888 = vmatpush1.msra.mxu0 0.0
      %889 = vmatprep.subr.mxu0 0.0
      %890 = vmatpush1.msra.mxu0 0.0
      %891 = vmatprep.subr.mxu0 0.0
      %892 = vmatpush1.msra.mxu0 0.0
      %893 = vmatprep.subr.mxu0 0.0
      %894 = vmatpush1.msra.mxu0 0.0
      %895 = vmatprep.subr.mxu0 0.0
      %896 = vmatpush1.msra.mxu0 0.0
      %897 = vmatprep.subr.mxu0 0.0
      %898 = vmatpush1.msra.mxu0 0.0
      %899 = vmatprep.subr.mxu0 0.0
      %900 = vmatpush1.msra.mxu0 0.0
      %901 = vmatprep.subr.mxu0 0.0
      %902 = vmatpush1.msra.mxu0 0.0
      %903 = vmatprep.subr.mxu0 0.0
      %904 = vmatpush1.msra.mxu0 0.0
      %905 = vmatprep.mubr.f32.mxu0 0.0
      %906 = vmatmul.mubr.f32.gmra.mrb[0].mxu0 %v705
      %v907 = vpop.f32.mrb[0].mxu0
      %v908 = vadd.f32 0.0, %v907
      %v909 = vpop.f32.mrb[0].mxu0
      %910 = vdwg.mxu0
      %911 = vmatprep.subr.mxu0 0.0
      %912 = vmatpush1.msra.mxu0 %v739
      %913 = vmatprep.subr.mxu0 0.0
      %914 = vmatpush1.msra.mxu0 %v740
      %915 = vmatprep.subr.mxu0 0.0
      %916 = vmatpush1.msra.mxu0 %v741
      %917 = vmatprep.subr.mxu0 0.0
      %918 = vmatpush1.msra.mxu0 %v742
      %919 = vmatprep.subr.mxu0 0.0
      %920 = vmatpush1.msra.mxu0 %v743
      %921 = vmatprep.subr.mxu0 0.0
      %922 = vmatpush1.msra.mxu0 %v744
      %923 = vmatprep.subr.mxu0 0.0
      %924 = vmatpush1.msra.mxu0 %v745
      %925 = vmatprep.subr.mxu0 0.0
      %926 = vmatpush1.msra.mxu0 %v746
      %927 = vmatprep.subr.mxu0 0.0
      %928 = vmatpush1.msra.mxu0 %v747
      %929 = vmatprep.subr.mxu0 0.0
      %930 = vmatpush1.msra.mxu0 %v748
      %931 = vmatprep.subr.mxu0 0.0
      %932 = vmatpush1.msra.mxu0 %v749
      %933 = vmatprep.subr.mxu0 0.0
      %934 = vmatpush1.msra.mxu0 %v750
      %935 = vmatprep.subr.mxu0 0.0
      %936 = vmatpush1.msra.mxu0 %v751
      %937 = vmatprep.subr.mxu0 0.0
      %938 = vmatpush1.msra.mxu0 %v752
      %939 = vmatprep.subr.mxu0 0.0
      %940 = vmatpush1.msra.mxu0 %v753
      %941 = vmatprep.subr.mxu0 0.0
      %942 = vmatpush1.msra.mxu0 %v754
      %943 = vmatprep.subr.mxu0 0.0
      %944 = vmatpush1.msra.mxu0 0.0
      %945 = vmatprep.subr.mxu0 0.0
      %946 = vmatpush1.msra.mxu0 0.0
      %947 = vmatprep.subr.mxu0 0.0
      %948 = vmatpush1.msra.mxu0 0.0
      %949 = vmatprep.subr.mxu0 0.0
      %950 = vmatpush1.msra.mxu0 0.0
      %951 = vmatprep.subr.mxu0 0.0
      %952 = vmatpush1.msra.mxu0 0.0
      %953 = vmatprep.subr.mxu0 0.0
      %954 = vmatpush1.msra.mxu0 0.0
      %955 = vmatprep.subr.mxu0 0.0
      %956 = vmatpush1.msra.mxu0 0.0
      %957 = vmatprep.subr.mxu0 0.0
      %958 = vmatpush1.msra.mxu0 0.0
      %959 = vmatprep.subr.mxu0 0.0
      %960 = vmatpush1.msra.mxu0 0.0
      %961 = vmatprep.subr.mxu0 0.0
      %962 = vmatpush1.msra.mxu0 0.0
      %963 = vmatprep.subr.mxu0 0.0
      %964 = vmatpush1.msra.mxu0 0.0
      %965 = vmatprep.subr.mxu0 0.0
      %966 = vmatpush1.msra.mxu0 0.0
      %967 = vmatprep.subr.mxu0 0.0
      %968 = vmatpush1.msra.mxu0 0.0
      %969 = vmatprep.subr.mxu0 0.0
      %970 = vmatpush1.msra.mxu0 0.0
      %971 = vmatprep.subr.mxu0 0.0
      %972 = vmatpush1.msra.mxu0 0.0
      %973 = vmatprep.subr.mxu0 0.0
      %974 = vmatpush1.msra.mxu0 0.0
      %975 = vmatprep.mubr.f32.mxu0 0.0
      %976 = vmatmul.mubr.f32.gmra.mrb[0].mxu0 %v705
      %v977 = vpop.f32.mrb[0].mxu0
      %v978 = vadd.f32 0.0, %v977
      %v979 = vpop.f32.mrb[0].mxu0
      %980 = vdwg.mxu0
      %981 = vmatprep.subr.mxu0 0.0
      %982 = vmatpush1.msra.mxu0 %v755
      %983 = vmatprep.subr.mxu0 0.0
      %984 = vmatpush1.msra.mxu0 %v756
      %985 = vmatprep.subr.mxu0 0.0
      %986 = vmatpush1.msra.mxu0 %v757
      %987 = vmatprep.subr.mxu0 0.0
      %988 = vmatpush1.msra.mxu0 %v758
      %989 = vmatprep.subr.mxu0 0.0
      %990 = vmatpush1.msra.mxu0 %v759
      %991 = vmatprep.subr.mxu0 0.0
      %992 = vmatpush1.msra.mxu0 %v760
      %993 = vmatprep.subr.mxu0 0.0
      %994 = vmatpush1.msra.mxu0 %v761
      %995 = vmatprep.subr.mxu0 0.0
      %996 = vmatpush1.msra.mxu0 %v762
      %997 = vmatprep.subr.mxu0 0.0
      %998 = vmatpush1.msra.mxu0 %v763
      %999 = vmatprep.subr.mxu0 0.0
      %1000 = vmatpush1.msra.mxu0 %v764
      %1001 = vmatprep.subr.mxu0 0.0
      %1002 = vmatpush1.msra.mxu0 %v765
      %1003 = vmatprep.subr.mxu0 0.0
      %1004 = vmatpush1.msra.mxu0 %v766
      %1005 = vmatprep.subr.mxu0 0.0
      %1006 = vmatpush1.msra.mxu0 %v767
      %1007 = vmatprep.subr.mxu0 0.0
      %1008 = vmatpush1.msra.mxu0 %v768
      %1009 = vmatprep.subr.mxu0 0.0
      %1010 = vmatpush1.msra.mxu0 %v769
      %1011 = vmatprep.subr.mxu0 0.0
      %1012 = vmatpush1.msra.mxu0 %v770
      %1013 = vmatprep.subr.mxu0 0.0
      %1014 = vmatpush1.msra.mxu0 0.0
      %1015 = vmatprep.subr.mxu0 0.0
      %1016 = vmatpush1.msra.mxu0 0.0
      %1017 = vmatprep.subr.mxu0 0.0
      %1018 = vmatpush1.msra.mxu0 0.0
      %1019 = vmatprep.subr.mxu0 0.0
      %1020 = vmatpush1.msra.mxu0 0.0
      %1021 = vmatprep.subr.mxu0 0.0
      %1022 = vmatpush1.msra.mxu0 0.0
      %1023 = vmatprep.subr.mxu0 0.0
      %1024 = vmatpush1.msra.mxu0 0.0
      %1025 = vmatprep.subr.mxu0 0.0
      %1026 = vmatpush1.msra.mxu0 0.0
      %1027 = vmatprep.subr.mxu0 0.0
      %1028 = vmatpush1.msra.mxu0 0.0
      %1029 = vmatprep.subr.mxu0 0.0
      %1030 = vmatpush1.msra.mxu0 0.0
      %1031 = vmatprep.subr.mxu0 0.0
      %1032 = vmatpush1.msra.mxu0 0.0
      %1033 = vmatprep.subr.mxu0 0.0
      %1034 = vmatpush1.msra.mxu0 0.0
      %1035 = vmatprep.subr.mxu0 0.0
      %1036 = vmatpush1.msra.mxu0 0.0
      %1037 = vmatprep.subr.mxu0 0.0
      %1038 = vmatpush1.msra.mxu0 0.0
      %1039 = vmatprep.subr.mxu0 0.0
      %1040 = vmatpush1.msra.mxu0 0.0
      %1041 = vmatprep.subr.mxu0 0.0
      %1042 = vmatpush1.msra.mxu0 0.0
      %1043 = vmatprep.subr.mxu0 0.0
      %1044 = vmatpush1.msra.mxu0 0.0
      %1045 = vmatprep.mubr.f32.mxu0 0.0
      %1046 = vmatmul.mubr.f32.gmra.mrb[0].mxu0 %v705
      %v1047 = vpop.f32.mrb[0].mxu0
      %v1048 = vadd.f32 0.0, %v1047
      %v1049 = vpop.f32.mrb[0].mxu0
      %1050 = vdwg.mxu0
      %v1051 = vld [vmem:[%s3] sm:$0xff]
      %v1052 = vld [vmem:[%s3 + $0x8] sm:$0xff]
      %v1053 = vld [vmem:[%s3 + $0x10] sm:$0xff]
      %v1054 = vld [vmem:[%s3 + $0x18] sm:$0xff]
      %v1055 = vld [vmem:[%s3 + $0x20] sm:$0xff]
      %v1056 = vld [vmem:[%s3 + $0x28] sm:$0xff]
      %v1057 = vld [vmem:[%s3 + $0x30] sm:$0xff]
      %v1058 = vld [vmem:[%s3 + $0x38] sm:$0xff]
      %v1059 = vld [vmem:[%s3 + $0x40] sm:$0xff]
      %v1060 = vld [vmem:[%s3 + $0x48] sm:$0xff]
      %v1061 = vld [vmem:[%s3 + $0x50] sm:$0xff]
      %v1062 = vld [vmem:[%s3 + $0x58] sm:$0xff]
      %v1063 = vld [vmem:[%s3 + $0x60] sm:$0xff]
      %v1064 = vld [vmem:[%s3 + $0x68] sm:$0xff]
      %v1065 = vld [vmem:[%s3 + $0x70] sm:$0xff]
      %v1066 = vld [vmem:[%s3 + $0x78] sm:$0xff]
      %v1067 = vld [vmem:[%s3 + $0x80] sm:$0xff]
      %v1068 = vld [vmem:[%s3 + $0x88] sm:$0xff]
      %v1069 = vld [vmem:[%s3 + $0x90] sm:$0xff]
      %v1070 = vld [vmem:[%s3 + $0x98] sm:$0xff]
      %v1071 = vld [vmem:[%s3 + $0xa0] sm:$0xff]
      %v1072 = vld [vmem:[%s3 + $0xa8] sm:$0xff]
      %v1073 = vld [vmem:[%s3 + $0xb0] sm:$0xff]
      %v1074 = vld [vmem:[%s3 + $0xb8] sm:$0xff]
      %v1075 = vld [vmem:[%s3 + $0xc0] sm:$0xff]
      %v1076 = vld [vmem:[%s3 + $0xc8] sm:$0xff]
      %v1077 = vld [vmem:[%s3 + $0xd0] sm:$0xff]
      %v1078 = vld [vmem:[%s3 + $0xd8] sm:$0xff]
      %v1079 = vld [vmem:[%s3 + $0xe0] sm:$0xff]
      %v1080 = vld [vmem:[%s3 + $0xe8] sm:$0xff]
      %v1081 = vld [vmem:[%s3 + $0xf0] sm:$0xff]
      %v1082 = vld [vmem:[%s3 + $0xf8] sm:$0xff]
      %v1083 = vld [vmem:[%s3 + $0x100] sm:$0xff]
      %v1084 = vld [vmem:[%s3 + $0x108] sm:$0xff]
      %v1085 = vld [vmem:[%s3 + $0x110] sm:$0xff]
      %v1086 = vld [vmem:[%s3 + $0x118] sm:$0xff]
      %v1087 = vld [vmem:[%s3 + $0x120] sm:$0xff]
      %v1088 = vld [vmem:[%s3 + $0x128] sm:$0xff]
      %v1089 = vld [vmem:[%s3 + $0x130] sm:$0xff]
      %v1090 = vld [vmem:[%s3 + $0x138] sm:$0xff]
      %v1091 = vld [vmem:[%s3 + $0x140] sm:$0xff]
      %v1092 = vld [vmem:[%s3 + $0x148] sm:$0xff]
      %v1093 = vld [vmem:[%s3 + $0x150] sm:$0xff]
      %v1094 = vld [vmem:[%s3 + $0x158] sm:$0xff]
      %v1095 = vld [vmem:[%s3 + $0x160] sm:$0xff]
      %v1096 = vld [vmem:[%s3 + $0x168] sm:$0xff]
      %v1097 = vld [vmem:[%s3 + $0x170] sm:$0xff]
      %v1098 = vld [vmem:[%s3 + $0x178] sm:$0xff]
      %v1099 = vld [vmem:[%s3 + $0x180] sm:$0xff]
      %v1100 = vld [vmem:[%s3 + $0x188] sm:$0xff]
      %v1101 = vld [vmem:[%s3 + $0x190] sm:$0xff]
      %v1102 = vld [vmem:[%s3 + $0x198] sm:$0xff]
      %v1103 = vld [vmem:[%s3 + $0x1a0] sm:$0xff]
      %v1104 = vld [vmem:[%s3 + $0x1a8] sm:$0xff]
      %v1105 = vld [vmem:[%s3 + $0x1b0] sm:$0xff]
      %v1106 = vld [vmem:[%s3 + $0x1b8] sm:$0xff]
      %v1107 = vld [vmem:[%s3 + $0x1c0] sm:$0xff]
      %v1108 = vld [vmem:[%s3 + $0x1c8] sm:$0xff]
      %v1109 = vld [vmem:[%s3 + $0x1d0] sm:$0xff]
      %v1110 = vld [vmem:[%s3 + $0x1d8] sm:$0xff]
      %v1111 = vld [vmem:[%s3 + $0x1e0] sm:$0xff]
      %v1112 = vld [vmem:[%s3 + $0x1e8] sm:$0xff]
      %v1113 = vld [vmem:[%s3 + $0x1f0] sm:$0xff]
      %v1114 = vld [vmem:[%s3 + $0x1f8] sm:$0xff]
      %1115 = vmatprep.subr.mxu0 0.0
      %1116 = vmatpush1.msra.mxu0 %v1051
      %1117 = vmatprep.subr.mxu0 0.0
      %1118 = vmatpush1.msra.mxu0 %v1052
      %1119 = vmatprep.subr.mxu0 0.0
      %1120 = vmatpush1.msra.mxu0 %v1053
      %1121 = vmatprep.subr.mxu0 0.0
      %1122 = vmatpush1.msra.mxu0 %v1054
      %1123 = vmatprep.subr.mxu0 0.0
      %1124 = vmatpush1.msra.mxu0 %v1055
      %1125 = vmatprep.subr.mxu0 0.0
      %1126 = vmatpush1.msra.mxu0 %v1056
      %1127 = vmatprep.subr.mxu0 0.0
      %1128 = vmatpush1.msra.mxu0 %v1057
      %1129 = vmatprep.subr.mxu0 0.0
      %1130 = vmatpush1.msra.mxu0 %v1058
      %1131 = vmatprep.subr.mxu0 0.0
      %1132 = vmatpush1.msra.mxu0 %v1059
      %1133 = vmatprep.subr.mxu0 0.0
      %1134 = vmatpush1.msra.mxu0 %v1060
      %1135 = vmatprep.subr.mxu0 0.0
      %1136 = vmatpush1.msra.mxu0 %v1061
      %1137 = vmatprep.subr.mxu0 0.0
      %1138 = vmatpush1.msra.mxu0 %v1062
      %1139 = vmatprep.subr.mxu0 0.0
      %1140 = vmatpush1.msra.mxu0 %v1063
      %1141 = vmatprep.subr.mxu0 0.0
      %1142 = vmatpush1.msra.mxu0 %v1064
      %1143 = vmatprep.subr.mxu0 0.0
      %1144 = vmatpush1.msra.mxu0 %v1065
      %1145 = vmatprep.subr.mxu0 0.0
      %1146 = vmatpush1.msra.mxu0 %v1066
      %1147 = vmatprep.subr.mxu0 0.0
      %1148 = vmatpush1.msra.mxu0 0.0
      %1149 = vmatprep.subr.mxu0 0.0
      %1150 = vmatpush1.msra.mxu0 0.0
      %1151 = vmatprep.subr.mxu0 0.0
      %1152 = vmatpush1.msra.mxu0 0.0
      %1153 = vmatprep.subr.mxu0 0.0
      %1154 = vmatpush1.msra.mxu0 0.0
      %1155 = vmatprep.subr.mxu0 0.0
      %1156 = vmatpush1.msra.mxu0 0.0
      %1157 = vmatprep.subr.mxu0 0.0
      %1158 = vmatpush1.msra.mxu0 0.0
      %1159 = vmatprep.subr.mxu0 0.0
      %1160 = vmatpush1.msra.mxu0 0.0
      %1161 = vmatprep.subr.mxu0 0.0
      %1162 = vmatpush1.msra.mxu0 0.0
      %1163 = vmatprep.subr.mxu0 0.0
      %1164 = vmatpush1.msra.mxu0 0.0
      %1165 = vmatprep.subr.mxu0 0.0
      %1166 = vmatpush1.msra.mxu0 0.0
      %1167 = vmatprep.subr.mxu0 0.0
      %1168 = vmatpush1.msra.mxu0 0.0
      %1169 = vmatprep.subr.mxu0 0.0
      %1170 = vmatpush1.msra.mxu0 0.0
      %1171 = vmatprep.subr.mxu0 0.0
      %1172 = vmatpush1.msra.mxu0 0.0
      %1173 = vmatprep.subr.mxu0 0.0
      %1174 = vmatpush1.msra.mxu0 0.0
      %1175 = vmatprep.subr.mxu0 0.0
      %1176 = vmatpush1.msra.mxu0 0.0
      %1177 = vmatprep.subr.mxu0 0.0
      %1178 = vmatpush1.msra.mxu0 0.0
      %1179 = vmatprep.mubr.f32.mxu0 0.0
      %1180 = vmatmul.mubr.f32.gmra.mrb[0].mxu0 %v705
      %v1181 = vpop.f32.mrb[0].mxu0
      %v1182 = vadd.f32 0.0, %v1181
      %v1183 = vpop.f32.mrb[0].mxu0
      %1184 = vdwg.mxu0
      %1185 = vmatprep.subr.mxu0 0.0
      %1186 = vmatpush1.msra.mxu0 %v1067
      %1187 = vmatprep.subr.mxu0 0.0
      %1188 = vmatpush1.msra.mxu0 %v1068
      %1189 = vmatprep.subr.mxu0 0.0
      %1190 = vmatpush1.msra.mxu0 %v1069
      %1191 = vmatprep.subr.mxu0 0.0
      %1192 = vmatpush1.msra.mxu0 %v1070
      %1193 = vmatprep.subr.mxu0 0.0
      %1194 = vmatpush1.msra.mxu0 %v1071
      %1195 = vmatprep.subr.mxu0 0.0
      %1196 = vmatpush1.msra.mxu0 %v1072
      %1197 = vmatprep.subr.mxu0 0.0
      %1198 = vmatpush1.msra.mxu0 %v1073
      %1199 = vmatprep.subr.mxu0 0.0
      %1200 = vmatpush1.msra.mxu0 %v1074
      %1201 = vmatprep.subr.mxu0 0.0
      %1202 = vmatpush1.msra.mxu0 %v1075
      %1203 = vmatprep.subr.mxu0 0.0
      %1204 = vmatpush1.msra.mxu0 %v1076
      %1205 = vmatprep.subr.mxu0 0.0
      %1206 = vmatpush1.msra.mxu0 %v1077
      %1207 = vmatprep.subr.mxu0 0.0
      %1208 = vmatpush1.msra.mxu0 %v1078
      %1209 = vmatprep.subr.mxu0 0.0
      %1210 = vmatpush1.msra.mxu0 %v1079
      %1211 = vmatprep.subr.mxu0 0.0
      %1212 = vmatpush1.msra.mxu0 %v1080
      %1213 = vmatprep.subr.mxu0 0.0
      %1214 = vmatpush1.msra.mxu0 %v1081
      %1215 = vmatprep.subr.mxu0 0.0
      %1216 = vmatpush1.msra.mxu0 %v1082
      %1217 = vmatprep.subr.mxu0 0.0
      %1218 = vmatpush1.msra.mxu0 0.0
      %1219 = vmatprep.subr.mxu0 0.0
      %1220 = vmatpush1.msra.mxu0 0.0
      %1221 = vmatprep.subr.mxu0 0.0
      %1222 = vmatpush1.msra.mxu0 0.0
      %1223 = vmatprep.subr.mxu0 0.0
      %1224 = vmatpush1.msra.mxu0 0.0
      %1225 = vmatprep.subr.mxu0 0.0
      %1226 = vmatpush1.msra.mxu0 0.0
      %1227 = vmatprep.subr.mxu0 0.0
      %1228 = vmatpush1.msra.mxu0 0.0
      %1229 = vmatprep.subr.mxu0 0.0
      %1230 = vmatpush1.msra.mxu0 0.0
      %1231 = vmatprep.subr.mxu0 0.0
      %1232 = vmatpush1.msra.mxu0 0.0
      %1233 = vmatprep.subr.mxu0 0.0
      %1234 = vmatpush1.msra.mxu0 0.0
      %1235 = vmatprep.subr.mxu0 0.0
      %1236 = vmatpush1.msra.mxu0 0.0
      %1237 = vmatprep.subr.mxu0 0.0
      %1238 = vmatpush1.msra.mxu0 0.0
      %1239 = vmatprep.subr.mxu0 0.0
      %1240 = vmatpush1.msra.mxu0 0.0
      %1241 = vmatprep.subr.mxu0 0.0
      %1242 = vmatpush1.msra.mxu0 0.0
      %1243 = vmatprep.subr.mxu0 0.0
      %1244 = vmatpush1.msra.mxu0 0.0
      %1245 = vmatprep.subr.mxu0 0.0
      %1246 = vmatpush1.msra.mxu0 0.0
      %1247 = vmatprep.subr.mxu0 0.0
      %1248 = vmatpush1.msra.mxu0 0.0
      %1249 = vmatprep.mubr.f32.mxu0 0.0
      %1250 = vmatmul.mubr.f32.gmra.mrb[0].mxu0 %v705
      %v1251 = vpop.f32.mrb[0].mxu0
      %v1252 = vadd.f32 0.0, %v1251
      %v1253 = vpop.f32.mrb[0].mxu0
      %1254 = vdwg.mxu0
      %1255 = vmatprep.subr.mxu0 0.0
      %1256 = vmatpush1.msra.mxu0 %v1083
      %1257 = vmatprep.subr.mxu0 0.0
      %1258 = vmatpush1.msra.mxu0 %v1084
      %1259 = vmatprep.subr.mxu0 0.0
      %1260 = vmatpush1.msra.mxu0 %v1085
      %1261 = vmatprep.subr.mxu0 0.0
      %1262 = vmatpush1.msra.mxu0 %v1086
      %1263 = vmatprep.subr.mxu0 0.0
      %1264 = vmatpush1.msra.mxu0 %v1087
      %1265 = vmatprep.subr.mxu0 0.0
      %1266 = vmatpush1.msra.mxu0 %v1088
      %1267 = vmatprep.subr.mxu0 0.0
      %1268 = vmatpush1.msra.mxu0 %v1089
      %1269 = vmatprep.subr.mxu0 0.0
      %1270 = vmatpush1.msra.mxu0 %v1090
      %1271 = vmatprep.subr.mxu0 0.0
      %1272 = vmatpush1.msra.mxu0 %v1091
      %1273 = vmatprep.subr.mxu0 0.0
      %1274 = vmatpush1.msra.mxu0 %v1092
      %1275 = vmatprep.subr.mxu0 0.0
      %1276 = vmatpush1.msra.mxu0 %v1093
      %1277 = vmatprep.subr.mxu0 0.0
      %1278 = vmatpush1.msra.mxu0 %v1094
      %1279 = vmatprep.subr.mxu0 0.0
      %1280 = vmatpush1.msra.mxu0 %v1095
      %1281 = vmatprep.subr.mxu0 0.0
      %1282 = vmatpush1.msra.mxu0 %v1096
      %1283 = vmatprep.subr.mxu0 0.0
      %1284 = vmatpush1.msra.mxu0 %v1097
      %1285 = vmatprep.subr.mxu0 0.0
      %1286 = vmatpush1.msra.mxu0 %v1098
      %1287 = vmatprep.subr.mxu0 0.0
      %1288 = vmatpush1.msra.mxu0 0.0
      %1289 = vmatprep.subr.mxu0 0.0
      %1290 = vmatpush1.msra.mxu0 0.0
      %1291 = vmatprep.subr.mxu0 0.0
      %1292 = vmatpush1.msra.mxu0 0.0
      %1293 = vmatprep.subr.mxu0 0.0
      %1294 = vmatpush1.msra.mxu0 0.0
      %1295 = vmatprep.subr.mxu0 0.0
      %1296 = vmatpush1.msra.mxu0 0.0
      %1297 = vmatprep.subr.mxu0 0.0
      %1298 = vmatpush1.msra.mxu0 0.0
      %1299 = vmatprep.subr.mxu0 0.0
      %1300 = vmatpush1.msra.mxu0 0.0
      %1301 = vmatprep.subr.mxu0 0.0
      %1302 = vmatpush1.msra.mxu0 0.0
      %1303 = vmatprep.subr.mxu0 0.0
      %1304 = vmatpush1.msra.mxu0 0.0
      %1305 = vmatprep.subr.mxu0 0.0
      %1306 = vmatpush1.msra.mxu0 0.0
      %1307 = vmatprep.subr.mxu0 0.0
      %1308 = vmatpush1.msra.mxu0 0.0
      %1309 = vmatprep.subr.mxu0 0.0
      %1310 = vmatpush1.msra.mxu0 0.0
      %1311 = vmatprep.subr.mxu0 0.0
      %1312 = vmatpush1.msra.mxu0 0.0
      %1313 = vmatprep.subr.mxu0 0.0
      %1314 = vmatpush1.msra.mxu0 0.0
      %1315 = vmatprep.subr.mxu0 0.0
      %1316 = vmatpush1.msra.mxu0 0.0
      %1317 = vmatprep.subr.mxu0 0.0
      %1318 = vmatpush1.msra.mxu0 0.0
      %1319 = vmatprep.mubr.f32.mxu0 0.0
      %1320 = vmatmul.mubr.f32.gmra.mrb[0].mxu0 %v705
      %v1321 = vpop.f32.mrb[0].mxu0
      %v1322 = vadd.f32 0.0, %v1321
      %v1323 = vpop.f32.mrb[0].mxu0
      %1324 = vdwg.mxu0
      %1325 = vmatprep.subr.mxu0 0.0
      %1326 = vmatpush1.msra.mxu0 %v1099
      %1327 = vmatprep.subr.mxu0 0.0
      %1328 = vmatpush1.msra.mxu0 %v1100
      %1329 = vmatprep.subr.mxu0 0.0
      %1330 = vmatpush1.msra.mxu0 %v1101
      %1331 = vmatprep.subr.mxu0 0.0
      %1332 = vmatpush1.msra.mxu0 %v1102
      %1333 = vmatprep.subr.mxu0 0.0
      %1334 = vmatpush1.msra.mxu0 %v1103
      %1335 = vmatprep.subr.mxu0 0.0
      %1336 = vmatpush1.msra.mxu0 %v1104
      %1337 = vmatprep.subr.mxu0 0.0
      %1338 = vmatpush1.msra.mxu0 %v1105
      %1339 = vmatprep.subr.mxu0 0.0
      %1340 = vmatpush1.msra.mxu0 %v1106
      %1341 = vmatprep.subr.mxu0 0.0
      %1342 = vmatpush1.msra.mxu0 %v1107
      %1343 = vmatprep.subr.mxu0 0.0
      %1344 = vmatpush1.msra.mxu0 %v1108
      %1345 = vmatprep.subr.mxu0 0.0
      %1346 = vmatpush1.msra.mxu0 %v1109
      %1347 = vmatprep.subr.mxu0 0.0
      %1348 = vmatpush1.msra.mxu0 %v1110
      %1349 = vmatprep.subr.mxu0 0.0
      %1350 = vmatpush1.msra.mxu0 %v1111
      %1351 = vmatprep.subr.mxu0 0.0
      %1352 = vmatpush1.msra.mxu0 %v1112
      %1353 = vmatprep.subr.mxu0 0.0
      %1354 = vmatpush1.msra.mxu0 %v1113
      %1355 = vmatprep.subr.mxu0 0.0
      %1356 = vmatpush1.msra.mxu0 %v1114
      %1357 = vmatprep.subr.mxu0 0.0
      %1358 = vmatpush1.msra.mxu0 0.0
      %1359 = vmatprep.subr.mxu0 0.0
      %1360 = vmatpush1.msra.mxu0 0.0
      %1361 = vmatprep.subr.mxu0 0.0
      %1362 = vmatpush1.msra.mxu0 0.0
      %1363 = vmatprep.subr.mxu0 0.0
      %1364 = vmatpush1.msra.mxu0 0.0
      %1365 = vmatprep.subr.mxu0 0.0
      %1366 = vmatpush1.msra.mxu0 0.0
      %1367 = vmatprep.subr.mxu0 0.0
      %1368 = vmatpush1.msra.mxu0 0.0
      %1369 = vmatprep.subr.mxu0 0.0
      %1370 = vmatpush1.msra.mxu0 0.0
      %1371 = vmatprep.subr.mxu0 0.0
      %1372 = vmatpush1.msra.mxu0 0.0
      %1373 = vmatprep.subr.mxu0 0.0
      %1374 = vmatpush1.msra.mxu0 0.0
      %1375 = vmatprep.subr.mxu0 0.0
      %1376 = vmatpush1.msra.mxu0 0.0
      %1377 = vmatprep.subr.mxu0 0.0
      %1378 = vmatpush1.msra.mxu0 0.0
      %1379 = vmatprep.subr.mxu0 0.0
      %1380 = vmatpush1.msra.mxu0 0.0
      %1381 = vmatprep.subr.mxu0 0.0
      %1382 = vmatpush1.msra.mxu0 0.0
      %1383 = vmatprep.subr.mxu0 0.0
      %1384 = vmatpush1.msra.mxu0 0.0
      %1385 = vmatprep.subr.mxu0 0.0
      %1386 = vmatpush1.msra.mxu0 0.0
      %1387 = vmatprep.subr.mxu0 0.0
      %1388 = vmatpush1.msra.mxu0 0.0
      %1389 = vmatprep.mubr.f32.mxu0 0.0
      %1390 = vmatmul.mubr.f32.gmra.mrb[0].mxu0 %v705
      %v1391 = vpop.f32.mrb[0].mxu0
      %v1392 = vadd.f32 0.0, %v1391
      %v1393 = vpop.f32.mrb[0].mxu0
      %1394 = vdwg.mxu0
      %v1395 = vld [vmem:[%s4] sm:$0xff]
      %v1396 = vld [vmem:[%s4 + $0x8] sm:$0xff]
      %v1397 = vld [vmem:[%s4 + $0x10] sm:$0xff]
      %v1398 = vld [vmem:[%s4 + $0x18] sm:$0xff]
      %v1399 = vld [vmem:[%s4 + $0x20] sm:$0xff]
      %v1400 = vld [vmem:[%s4 + $0x28] sm:$0xff]
      %v1401 = vld [vmem:[%s4 + $0x30] sm:$0xff]
      %v1402 = vld [vmem:[%s4 + $0x38] sm:$0xff]
      %v1403 = vld [vmem:[%s4 + $0x40] sm:$0xff]
      %v1404 = vld [vmem:[%s4 + $0x48] sm:$0xff]
      %v1405 = vld [vmem:[%s4 + $0x50] sm:$0xff]
      %v1406 = vld [vmem:[%s4 + $0x58] sm:$0xff]
      %v1407 = vld [vmem:[%s4 + $0x60] sm:$0xff]
      %v1408 = vld [vmem:[%s4 + $0x68] sm:$0xff]
      %v1409 = vld [vmem:[%s4 + $0x70] sm:$0xff]
      %v1410 = vld [vmem:[%s4 + $0x78] sm:$0xff]
      %v1411 = vld [vmem:[%s4 + $0x80] sm:$0xff]
      %v1412 = vld [vmem:[%s4 + $0x88] sm:$0xff]
      %v1413 = vld [vmem:[%s4 + $0x90] sm:$0xff]
      %v1414 = vld [vmem:[%s4 + $0x98] sm:$0xff]
      %v1415 = vld [vmem:[%s4 + $0xa0] sm:$0xff]
      %v1416 = vld [vmem:[%s4 + $0xa8] sm:$0xff]
      %v1417 = vld [vmem:[%s4 + $0xb0] sm:$0xff]
      %v1418 = vld [vmem:[%s4 + $0xb8] sm:$0xff]
      %v1419 = vld [vmem:[%s4 + $0xc0] sm:$0xff]
      %v1420 = vld [vmem:[%s4 + $0xc8] sm:$0xff]
      %v1421 = vld [vmem:[%s4 + $0xd0] sm:$0xff]
      %v1422 = vld [vmem:[%s4 + $0xd8] sm:$0xff]
      %v1423 = vld [vmem:[%s4 + $0xe0] sm:$0xff]
      %v1424 = vld [vmem:[%s4 + $0xe8] sm:$0xff]
      %v1425 = vld [vmem:[%s4 + $0xf0] sm:$0xff]
      %v1426 = vld [vmem:[%s4 + $0xf8] sm:$0xff]
      %v1427 = vld [vmem:[%s4 + $0x100] sm:$0xff]
      %v1428 = vld [vmem:[%s4 + $0x108] sm:$0xff]
      %v1429 = vld [vmem:[%s4 + $0x110] sm:$0xff]
      %v1430 = vld [vmem:[%s4 + $0x118] sm:$0xff]
      %v1431 = vld [vmem:[%s4 + $0x120] sm:$0xff]
      %v1432 = vld [vmem:[%s4 + $0x128] sm:$0xff]
      %v1433 = vld [vmem:[%s4 + $0x130] sm:$0xff]
      %v1434 = vld [vmem:[%s4 + $0x138] sm:$0xff]
      %v1435 = vld [vmem:[%s4 + $0x140] sm:$0xff]
      %v1436 = vld [vmem:[%s4 + $0x148] sm:$0xff]
      %v1437 = vld [vmem:[%s4 + $0x150] sm:$0xff]
      %v1438 = vld [vmem:[%s4 + $0x158] sm:$0xff]
      %v1439 = vld [vmem:[%s4 + $0x160] sm:$0xff]
      %v1440 = vld [vmem:[%s4 + $0x168] sm:$0xff]
      %v1441 = vld [vmem:[%s4 + $0x170] sm:$0xff]
      %v1442 = vld [vmem:[%s4 + $0x178] sm:$0xff]
      %v1443 = vld [vmem:[%s4 + $0x180] sm:$0xff]
      %v1444 = vld [vmem:[%s4 + $0x188] sm:$0xff]
      %v1445 = vld [vmem:[%s4 + $0x190] sm:$0xff]
      %v1446 = vld [vmem:[%s4 + $0x198] sm:$0xff]
      %v1447 = vld [vmem:[%s4 + $0x1a0] sm:$0xff]
      %v1448 = vld [vmem:[%s4 + $0x1a8] sm:$0xff]
      %v1449 = vld [vmem:[%s4 + $0x1b0] sm:$0xff]
      %v1450 = vld [vmem:[%s4 + $0x1b8] sm:$0xff]
      %v1451 = vld [vmem:[%s4 + $0x1c0] sm:$0xff]
      %v1452 = vld [vmem:[%s4 + $0x1c8] sm:$0xff]
      %v1453 = vld [vmem:[%s4 + $0x1d0] sm:$0xff]
      %v1454 = vld [vmem:[%s4 + $0x1d8] sm:$0xff]
      %v1455 = vld [vmem:[%s4 + $0x1e0] sm:$0xff]
      %v1456 = vld [vmem:[%s4 + $0x1e8] sm:$0xff]
      %v1457 = vld [vmem:[%s4 + $0x1f0] sm:$0xff]
      %v1458 = vld [vmem:[%s4 + $0x1f8] sm:$0xff]
      %1459 = vmatprep.subr.mxu0 0.0
      %1460 = vmatpush1.msra.mxu0 %v1395
      %1461 = vmatprep.subr.mxu0 0.0
      %1462 = vmatpush1.msra.mxu0 %v1396
      %1463 = vmatprep.subr.mxu0 0.0
      %1464 = vmatpush1.msra.mxu0 %v1397
      %1465 = vmatprep.subr.mxu0 0.0
      %1466 = vmatpush1.msra.mxu0 %v1398
      %1467 = vmatprep.subr.mxu0 0.0
      %1468 = vmatpush1.msra.mxu0 %v1399
      %1469 = vmatprep.subr.mxu0 0.0
      %1470 = vmatpush1.msra.mxu0 %v1400
      %1471 = vmatprep.subr.mxu0 0.0
      %1472 = vmatpush1.msra.mxu0 %v1401
      %1473 = vmatprep.subr.mxu0 0.0
      %1474 = vmatpush1.msra.mxu0 %v1402
      %1475 = vmatprep.subr.mxu0 0.0
      %1476 = vmatpush1.msra.mxu0 %v1403
      %1477 = vmatprep.subr.mxu0 0.0
      %1478 = vmatpush1.msra.mxu0 %v1404
      %1479 = vmatprep.subr.mxu0 0.0
      %1480 = vmatpush1.msra.mxu0 %v1405
      %1481 = vmatprep.subr.mxu0 0.0
      %1482 = vmatpush1.msra.mxu0 %v1406
      %1483 = vmatprep.subr.mxu0 0.0
      %1484 = vmatpush1.msra.mxu0 %v1407
      %1485 = vmatprep.subr.mxu0 0.0
      %1486 = vmatpush1.msra.mxu0 %v1408
      %1487 = vmatprep.subr.mxu0 0.0
      %1488 = vmatpush1.msra.mxu0 %v1409
      %1489 = vmatprep.subr.mxu0 0.0
      %1490 = vmatpush1.msra.mxu0 %v1410
      %1491 = vmatprep.subr.mxu0 0.0
      %1492 = vmatpush1.msra.mxu0 0.0
      %1493 = vmatprep.subr.mxu0 0.0
      %1494 = vmatpush1.msra.mxu0 0.0
      %1495 = vmatprep.subr.mxu0 0.0
      %1496 = vmatpush1.msra.mxu0 0.0
      %1497 = vmatprep.subr.mxu0 0.0
      %1498 = vmatpush1.msra.mxu0 0.0
      %1499 = vmatprep.subr.mxu0 0.0
      %1500 = vmatpush1.msra.mxu0 0.0
      %1501 = vmatprep.subr.mxu0 0.0
      %1502 = vmatpush1.msra.mxu0 0.0
      %1503 = vmatprep.subr.mxu0 0.0
      %1504 = vmatpush1.msra.mxu0 0.0
      %1505 = vmatprep.subr.mxu0 0.0
      %1506 = vmatpush1.msra.mxu0 0.0
      %1507 = vmatprep.subr.mxu0 0.0
      %1508 = vmatpush1.msra.mxu0 0.0
      %1509 = vmatprep.subr.mxu0 0.0
      %1510 = vmatpush1.msra.mxu0 0.0
      %1511 = vmatprep.subr.mxu0 0.0
      %1512 = vmatpush1.msra.mxu0 0.0
      %1513 = vmatprep.subr.mxu0 0.0
      %1514 = vmatpush1.msra.mxu0 0.0
      %1515 = vmatprep.subr.mxu0 0.0
      %1516 = vmatpush1.msra.mxu0 0.0
      %1517 = vmatprep.subr.mxu0 0.0
      %1518 = vmatpush1.msra.mxu0 0.0
      %1519 = vmatprep.subr.mxu0 0.0
      %1520 = vmatpush1.msra.mxu0 0.0
      %1521 = vmatprep.subr.mxu0 0.0
      %1522 = vmatpush1.msra.mxu0 0.0
      %1523 = vmatprep.mubr.f32.mxu0 0.0
      %1524 = vmatmul.mubr.f32.gmra.mrb[0].mxu0 %v705
      %v1525 = vpop.f32.mrb[0].mxu0
      %v1526 = vadd.f32 0.0, %v1525
      %v1527 = vpop.f32.mrb[0].mxu0
      %1528 = vdwg.mxu0
      %1529 = vmatprep.subr.mxu0 0.0
      %1530 = vmatpush1.msra.mxu0 %v1411
      %1531 = vmatprep.subr.mxu0 0.0
      %1532 = vmatpush1.msra.mxu0 %v1412
      %1533 = vmatprep.subr.mxu0 0.0
      %1534 = vmatpush1.msra.mxu0 %v1413
      %1535 = vmatprep.subr.mxu0 0.0
      %1536 = vmatpush1.msra.mxu0 %v1414
      %1537 = vmatprep.subr.mxu0 0.0
      %1538 = vmatpush1.msra.mxu0 %v1415
      %1539 = vmatprep.subr.mxu0 0.0
      %1540 = vmatpush1.msra.mxu0 %v1416
      %1541 = vmatprep.subr.mxu0 0.0
      %1542 = vmatpush1.msra.mxu0 %v1417
      %1543 = vmatprep.subr.mxu0 0.0
      %1544 = vmatpush1.msra.mxu0 %v1418
      %1545 = vmatprep.subr.mxu0 0.0
      %1546 = vmatpush1.msra.mxu0 %v1419
      %1547 = vmatprep.subr.mxu0 0.0
      %1548 = vmatpush1.msra.mxu0 %v1420
      %1549 = vmatprep.subr.mxu0 0.0
      %1550 = vmatpush1.msra.mxu0 %v1421
      %1551 = vmatprep.subr.mxu0 0.0
      %1552 = vmatpush1.msra.mxu0 %v1422
      %1553 = vmatprep.subr.mxu0 0.0
      %1554 = vmatpush1.msra.mxu0 %v1423
      %1555 = vmatprep.subr.mxu0 0.0
      %1556 = vmatpush1.msra.mxu0 %v1424
      %1557 = vmatprep.subr.mxu0 0.0
      %1558 = vmatpush1.msra.mxu0 %v1425
      %1559 = vmatprep.subr.mxu0 0.0
      %1560 = vmatpush1.msra.mxu0 %v1426
      %1561 = vmatprep.subr.mxu0 0.0
      %1562 = vmatpush1.msra.mxu0 0.0
      %1563 = vmatprep.subr.mxu0 0.0
      %1564 = vmatpush1.msra.mxu0 0.0
      %1565 = vmatprep.subr.mxu0 0.0
      %1566 = vmatpush1.msra.mxu0 0.0
      %1567 = vmatprep.subr.mxu0 0.0
      %1568 = vmatpush1.msra.mxu0 0.0
      %1569 = vmatprep.subr.mxu0 0.0
      %1570 = vmatpush1.msra.mxu0 0.0
      %1571 = vmatprep.subr.mxu0 0.0
      %1572 = vmatpush1.msra.mxu0 0.0
      %1573 = vmatprep.subr.mxu0 0.0
      %1574 = vmatpush1.msra.mxu0 0.0
      %1575 = vmatprep.subr.mxu0 0.0
      %1576 = vmatpush1.msra.mxu0 0.0
      %1577 = vmatprep.subr.mxu0 0.0
      %1578 = vmatpush1.msra.mxu0 0.0
      %1579 = vmatprep.subr.mxu0 0.0
      %1580 = vmatpush1.msra.mxu0 0.0
      %1581 = vmatprep.subr.mxu0 0.0
      %1582 = vmatpush1.msra.mxu0 0.0
      %1583 = vmatprep.subr.mxu0 0.0
      %1584 = vmatpush1.msra.mxu0 0.0
      %1585 = vmatprep.subr.mxu0 0.0
      %1586 = vmatpush1.msra.mxu0 0.0
      %1587 = vmatprep.subr.mxu0 0.0
      %1588 = vmatpush1.msra.mxu0 0.0
      %1589 = vmatprep.subr.mxu0 0.0
      %1590 = vmatpush1.msra.mxu0 0.0
      %1591 = vmatprep.subr.mxu0 0.0
      %1592 = vmatpush1.msra.mxu0 0.0
      %1593 = vmatprep.mubr.f32.mxu0 0.0
      %1594 = vmatmul.mubr.f32.gmra.mrb[0].mxu0 %v705
      %v1595 = vpop.f32.mrb[0].mxu0
      %v1596 = vadd.f32 0.0, %v1595
      %v1597 = vpop.f32.mrb[0].mxu0
      %1598 = vdwg.mxu0
      %1599 = vmatprep.subr.mxu0 0.0
      %1600 = vmatpush1.msra.mxu0 %v1427
      %1601 = vmatprep.subr.mxu0 0.0
      %1602 = vmatpush1.msra.mxu0 %v1428
      %1603 = vmatprep.subr.mxu0 0.0
      %1604 = vmatpush1.msra.mxu0 %v1429
      %1605 = vmatprep.subr.mxu0 0.0
      %1606 = vmatpush1.msra.mxu0 %v1430
      %1607 = vmatprep.subr.mxu0 0.0
      %1608 = vmatpush1.msra.mxu0 %v1431
      %1609 = vmatprep.subr.mxu0 0.0
      %1610 = vmatpush1.msra.mxu0 %v1432
      %1611 = vmatprep.subr.mxu0 0.0
      %1612 = vmatpush1.msra.mxu0 %v1433
      %1613 = vmatprep.subr.mxu0 0.0
      %1614 = vmatpush1.msra.mxu0 %v1434
      %1615 = vmatprep.subr.mxu0 0.0
      %1616 = vmatpush1.msra.mxu0 %v1435
      %1617 = vmatprep.subr.mxu0 0.0
      %1618 = vmatpush1.msra.mxu0 %v1436
      %1619 = vmatprep.subr.mxu0 0.0
      %1620 = vmatpush1.msra.mxu0 %v1437
      %1621 = vmatprep.subr.mxu0 0.0
      %1622 = vmatpush1.msra.mxu0 %v1438
      %1623 = vmatprep.subr.mxu0 0.0
      %1624 = vmatpush1.msra.mxu0 %v1439
      %1625 = vmatprep.subr.mxu0 0.0
      %1626 = vmatpush1.msra.mxu0 %v1440
      %1627 = vmatprep.subr.mxu0 0.0
      %1628 = vmatpush1.msra.mxu0 %v1441
      %1629 = vmatprep.subr.mxu0 0.0
      %1630 = vmatpush1.msra.mxu0 %v1442
      %1631 = vmatprep.subr.mxu0 0.0
      %1632 = vmatpush1.msra.mxu0 0.0
      %1633 = vmatprep.subr.mxu0 0.0
      %1634 = vmatpush1.msra.mxu0 0.0
      %1635 = vmatprep.subr.mxu0 0.0
      %1636 = vmatpush1.msra.mxu0 0.0
      %1637 = vmatprep.subr.mxu0 0.0
      %1638 = vmatpush1.msra.mxu0 0.0
      %1639 = vmatprep.subr.mxu0 0.0
      %1640 = vmatpush1.msra.mxu0 0.0
      %1641 = vmatprep.subr.mxu0 0.0
      %1642 = vmatpush1.msra.mxu0 0.0
      %1643 = vmatprep.subr.mxu0 0.0
      %1644 = vmatpush1.msra.mxu0 0.0
      %1645 = vmatprep.subr.mxu0 0.0
      %1646 = vmatpush1.msra.mxu0 0.0
      %1647 = vmatprep.subr.mxu0 0.0
      %1648 = vmatpush1.msra.mxu0 0.0
      %1649 = vmatprep.subr.mxu0 0.0
      %1650 = vmatpush1.msra.mxu0 0.0
      %1651 = vmatprep.subr.mxu0 0.0
      %1652 = vmatpush1.msra.mxu0 0.0
      %1653 = vmatprep.subr.mxu0 0.0
      %1654 = vmatpush1.msra.mxu0 0.0
      %1655 = vmatprep.subr.mxu0 0.0
      %1656 = vmatpush1.msra.mxu0 0.0
      %1657 = vmatprep.subr.mxu0 0.0
      %1658 = vmatpush1.msra.mxu0 0.0
      %1659 = vmatprep.subr.mxu0 0.0
      %1660 = vmatpush1.msra.mxu0 0.0
      %1661 = vmatprep.subr.mxu0 0.0
      %1662 = vmatpush1.msra.mxu0 0.0
      %1663 = vmatprep.mubr.f32.mxu0 0.0
      %1664 = vmatmul.mubr.f32.gmra.mrb[0].mxu0 %v705
      %v1665 = vpop.f32.mrb[0].mxu0
      %v1666 = vadd.f32 0.0, %v1665
      %v1667 = vpop.f32.mrb[0].mxu0
      %1668 = vdwg.mxu0
      %1669 = vmatprep.subr.mxu0 0.0
      %1670 = vmatpush1.msra.mxu0 %v1443
      %1671 = vmatprep.subr.mxu0 0.0
      %1672 = vmatpush1.msra.mxu0 %v1444
      %1673 = vmatprep.subr.mxu0 0.0
      %1674 = vmatpush1.msra.mxu0 %v1445
      %1675 = vmatprep.subr.mxu0 0.0
      %1676 = vmatpush1.msra.mxu0 %v1446
      %1677 = vmatprep.subr.mxu0 0.0
      %1678 = vmatpush1.msra.mxu0 %v1447
      %1679 = vmatprep.subr.mxu0 0.0
      %1680 = vmatpush1.msra.mxu0 %v1448
      %1681 = vmatprep.subr.mxu0 0.0
      %1682 = vmatpush1.msra.mxu0 %v1449
      %1683 = vmatprep.subr.mxu0 0.0
      %1684 = vmatpush1.msra.mxu0 %v1450
      %1685 = vmatprep.subr.mxu0 0.0
      %1686 = vmatpush1.msra.mxu0 %v1451
      %1687 = vmatprep.subr.mxu0 0.0
      %1688 = vmatpush1.msra.mxu0 %v1452
      %1689 = vmatprep.subr.mxu0 0.0
      %1690 = vmatpush1.msra.mxu0 %v1453
      %1691 = vmatprep.subr.mxu0 0.0
      %1692 = vmatpush1.msra.mxu0 %v1454
      %1693 = vmatprep.subr.mxu0 0.0
      %1694 = vmatpush1.msra.mxu0 %v1455
      %1695 = vmatprep.subr.mxu0 0.0
      %1696 = vmatpush1.msra.mxu0 %v1456
      %1697 = vmatprep.subr.mxu0 0.0
      %1698 = vmatpush1.msra.mxu0 %v1457
      %1699 = vmatprep.subr.mxu0 0.0
      %1700 = vmatpush1.msra.mxu0 %v1458
      %1701 = vmatprep.subr.mxu0 0.0
      %1702 = vmatpush1.msra.mxu0 0.0
      %1703 = vmatprep.subr.mxu0 0.0
      %1704 = vmatpush1.msra.mxu0 0.0
      %1705 = vmatprep.subr.mxu0 0.0
      %1706 = vmatpush1.msra.mxu0 0.0
      %1707 = vmatprep.subr.mxu0 0.0
      %1708 = vmatpush1.msra.mxu0 0.0
      %1709 = vmatprep.subr.mxu0 0.0
      %1710 = vmatpush1.msra.mxu0 0.0
      %1711 = vmatprep.subr.mxu0 0.0
      %1712 = vmatpush1.msra.mxu0 0.0
      %1713 = vmatprep.subr.mxu0 0.0
      %1714 = vmatpush1.msra.mxu0 0.0
      %1715 = vmatprep.subr.mxu0 0.0
      %1716 = vmatpush1.msra.mxu0 0.0
      %1717 = vmatprep.subr.mxu0 0.0
      %1718 = vmatpush1.msra.mxu0 0.0
      %1719 = vmatprep.subr.mxu0 0.0
      %1720 = vmatpush1.msra.mxu0 0.0
      %1721 = vmatprep.subr.mxu0 0.0
      %1722 = vmatpush1.msra.mxu0 0.0
      %1723 = vmatprep.subr.mxu0 0.0
      %1724 = vmatpush1.msra.mxu0 0.0
      %1725 = vmatprep.subr.mxu0 0.0
      %1726 = vmatpush1.msra.mxu0 0.0
      %1727 = vmatprep.subr.mxu0 0.0
      %1728 = vmatpush1.msra.mxu0 0.0
      %1729 = vmatprep.subr.mxu0 0.0
      %1730 = vmatpush1.msra.mxu0 0.0
      %1731 = vmatprep.subr.mxu0 0.0
      %1732 = vmatpush1.msra.mxu0 0.0
      %1733 = vmatprep.mubr.f32.mxu0 0.0
      %1734 = vmatmul.mubr.f32.gmra.mrb[0].mxu0 %v705
      %v1735 = vpop.f32.mrb[0].mxu0
      %v1736 = vadd.f32 0.0, %v1735
      %v1737 = vpop.f32.mrb[0].mxu0
      %1738 = vdwg.mxu0
      %v1739 = vld [vmem:[%s5] sm:$0xff]
      %v1740 = vld [vmem:[%s5 + $0x8] sm:$0xff]
      %v1741 = vld [vmem:[%s5 + $0x10] sm:$0xff]
      %v1742 = vld [vmem:[%s5 + $0x18] sm:$0xff]
      %v1743 = vld [vmem:[%s5 + $0x20] sm:$0xff]
      %v1744 = vld [vmem:[%s5 + $0x28] sm:$0xff]
      %v1745 = vld [vmem:[%s5 + $0x30] sm:$0xff]
      %v1746 = vld [vmem:[%s5 + $0x38] sm:$0xff]
      %v1747 = vld [vmem:[%s5 + $0x40] sm:$0xff]
      %v1748 = vld [vmem:[%s5 + $0x48] sm:$0xff]
      %v1749 = vld [vmem:[%s5 + $0x50] sm:$0xff]
      %v1750 = vld [vmem:[%s5 + $0x58] sm:$0xff]
      %v1751 = vld [vmem:[%s5 + $0x60] sm:$0xff]
      %v1752 = vld [vmem:[%s5 + $0x68] sm:$0xff]
      %v1753 = vld [vmem:[%s5 + $0x70] sm:$0xff]
      %v1754 = vld [vmem:[%s5 + $0x78] sm:$0xff]
      %vm1755 = vcmask 261120
      %v1757 = vsel %vm1755, %v838, 0
      %v1760 = vsel %vm1755, %v1182, 0
      %1762 = vmatprep.subr.mxu0 0.0
      %1763 = vmatpush1.xpose.msra.mxu0 %v1760
      %1764 = vmatprep.subr.mxu0 0.0
      %1765 = vmatpush1.xpose.msra.mxu0 0.0
      %1766 = vmatprep.subr.mxu0 0.0
      %1767 = vmatpush1.xpose.msra.mxu0 0.0
      %1768 = vmatprep.subr.mxu0 0.0
      %1769 = vmatpush1.xpose.msra.mxu0 0.0
      %1770 = vmatprep.subr.mxu0 0.0
      %1771 = vmatpush1.xpose.msra.mxu0 0.0
      %1772 = vmatprep.subr.mxu0 0.0
      %1773 = vmatpush1.xpose.msra.mxu0 0.0
      %1774 = vmatprep.subr.mxu0 0.0
      %1775 = vmatpush1.xpose.msra.mxu0 0.0
      %1776 = vmatprep.subr.mxu0 0.0
      %1777 = vmatpush1.xpose.msra.mxu0 0.0
      %1778 = vmatprep.subr.mxu0 0.0
      %1779 = vmatpush1.xpose.msra.mxu0 0.0
      %1780 = vmatprep.subr.mxu0 0.0
      %1781 = vmatpush1.xpose.msra.mxu0 0.0
      %1782 = vmatprep.subr.mxu0 0.0
      %1783 = vmatpush1.xpose.msra.mxu0 0.0
      %1784 = vmatprep.subr.mxu0 0.0
      %1785 = vmatpush1.xpose.msra.mxu0 0.0
      %1786 = vmatprep.subr.mxu0 0.0
      %1787 = vmatpush1.xpose.msra.mxu0 0.0
      %1788 = vmatprep.subr.mxu0 0.0
      %1789 = vmatpush1.xpose.msra.mxu0 0.0
      %1790 = vmatprep.subr.mxu0 0.0
      %1791 = vmatpush1.xpose.msra.mxu0 0.0
      %1792 = vmatprep.subr.mxu0 0.0
      %1793 = vmatpush1.xpose.msra.mxu0 0.0
      %1794 = vmatprep.subr.mxu0 0.0
      %1795 = vmatpush1.xpose.msra.mxu0 0.0
      %1796 = vmatprep.subr.mxu0 0.0
      %1797 = vmatpush1.xpose.msra.mxu0 0.0
      %1798 = vmatprep.subr.mxu0 0.0
      %1799 = vmatpush1.xpose.msra.mxu0 0.0
      %1800 = vmatprep.subr.mxu0 0.0
      %1801 = vmatpush1.xpose.msra.mxu0 0.0
      %1802 = vmatprep.subr.mxu0 0.0
      %1803 = vmatpush1.xpose.msra.mxu0 0.0
      %1804 = vmatprep.subr.mxu0 0.0
      %1805 = vmatpush1.xpose.msra.mxu0 0.0
      %1806 = vmatprep.subr.mxu0 0.0
      %1807 = vmatpush1.xpose.msra.mxu0 0.0
      %1808 = vmatprep.subr.mxu0 0.0
      %1809 = vmatpush1.xpose.msra.mxu0 0.0
      %1810 = vmatprep.subr.mxu0 0.0
      %1811 = vmatpush1.xpose.msra.mxu0 0.0
      %1812 = vmatprep.subr.mxu0 0.0
      %1813 = vmatpush1.xpose.msra.mxu0 0.0
      %1814 = vmatprep.subr.mxu0 0.0
      %1815 = vmatpush1.xpose.msra.mxu0 0.0
      %1816 = vmatprep.subr.mxu0 0.0
      %1817 = vmatpush1.xpose.msra.mxu0 0.0
      %1818 = vmatprep.subr.mxu0 0.0
      %1819 = vmatpush1.xpose.msra.mxu0 0.0
      %1820 = vmatprep.subr.mxu0 0.0
      %1821 = vmatpush1.xpose.msra.mxu0 0.0
      %1822 = vmatprep.subr.mxu0 0.0
      %1823 = vmatpush1.xpose.msra.mxu0 0.0
      %1824 = vmatprep.subr.mxu0 0.0
      %1825 = vmatpush1.xpose.msra.mxu0 0.0
      %1826 = vmatprep.mubr.f32.mxu0 0.0
      %1827 = vmatmul.mubr.f32.gmra.mrb[0].mxu0 %v1757
      %v1828 = vpop.f32.mrb[0].mxu0
      %v1829 = vadd.f32 0.0, %v1828
      %v1830 = vpop.f32.mrb[0].mxu0
      %1831 = vdwg.mxu0
      %v1833 = vsel %vm1755, %v908, 0
      %v1836 = vsel %vm1755, %v1252, 0
      %1838 = vmatprep.subr.mxu0 0.0
      %1839 = vmatpush1.xpose.msra.mxu0 %v1836
      %1840 = vmatprep.subr.mxu0 0.0
      %1841 = vmatpush1.xpose.msra.mxu0 0.0
      %1842 = vmatprep.subr.mxu0 0.0
      %1843 = vmatpush1.xpose.msra.mxu0 0.0
      %1844 = vmatprep.subr.mxu0 0.0
      %1845 = vmatpush1.xpose.msra.mxu0 0.0
      %1846 = vmatprep.subr.mxu0 0.0
      %1847 = vmatpush1.xpose.msra.mxu0 0.0
      %1848 = vmatprep.subr.mxu0 0.0
      %1849 = vmatpush1.xpose.msra.mxu0 0.0
      %1850 = vmatprep.subr.mxu0 0.0
      %1851 = vmatpush1.xpose.msra.mxu0 0.0
      %1852 = vmatprep.subr.mxu0 0.0
      %1853 = vmatpush1.xpose.msra.mxu0 0.0
      %1854 = vmatprep.subr.mxu0 0.0
      %1855 = vmatpush1.xpose.msra.mxu0 0.0
      %1856 = vmatprep.subr.mxu0 0.0
      %1857 = vmatpush1.xpose.msra.mxu0 0.0
      %1858 = vmatprep.subr.mxu0 0.0
      %1859 = vmatpush1.xpose.msra.mxu0 0.0
      %1860 = vmatprep.subr.mxu0 0.0
      %1861 = vmatpush1.xpose.msra.mxu0 0.0
      %1862 = vmatprep.subr.mxu0 0.0
      %1863 = vmatpush1.xpose.msra.mxu0 0.0
      %1864 = vmatprep.subr.mxu0 0.0
      %1865 = vmatpush1.xpose.msra.mxu0 0.0
      %1866 = vmatprep.subr.mxu0 0.0
      %1867 = vmatpush1.xpose.msra.mxu0 0.0
      %1868 = vmatprep.subr.mxu0 0.0
      %1869 = vmatpush1.xpose.msra.mxu0 0.0
      %1870 = vmatprep.subr.mxu0 0.0
      %1871 = vmatpush1.xpose.msra.mxu0 0.0
      %1872 = vmatprep.subr.mxu0 0.0
      %1873 = vmatpush1.xpose.msra.mxu0 0.0
      %1874 = vmatprep.subr.mxu0 0.0
      %1875 = vmatpush1.xpose.msra.mxu0 0.0
      %1876 = vmatprep.subr.mxu0 0.0
      %1877 = vmatpush1.xpose.msra.mxu0 0.0
      %1878 = vmatprep.subr.mxu0 0.0
      %1879 = vmatpush1.xpose.msra.mxu0 0.0
      %1880 = vmatprep.subr.mxu0 0.0
      %1881 = vmatpush1.xpose.msra.mxu0 0.0
      %1882 = vmatprep.subr.mxu0 0.0
      %1883 = vmatpush1.xpose.msra.mxu0 0.0
      %1884 = vmatprep.subr.mxu0 0.0
      %1885 = vmatpush1.xpose.msra.mxu0 0.0
      %1886 = vmatprep.subr.mxu0 0.0
      %1887 = vmatpush1.xpose.msra.mxu0 0.0
      %1888 = vmatprep.subr.mxu0 0.0
      %1889 = vmatpush1.xpose.msra.mxu0 0.0
      %1890 = vmatprep.subr.mxu0 0.0
      %1891 = vmatpush1.xpose.msra.mxu0 0.0
      %1892 = vmatprep.subr.mxu0 0.0
      %1893 = vmatpush1.xpose.msra.mxu0 0.0
      %1894 = vmatprep.subr.mxu0 0.0
      %1895 = vmatpush1.xpose.msra.mxu0 0.0
      %1896 = vmatprep.subr.mxu0 0.0
      %1897 = vmatpush1.xpose.msra.mxu0 0.0
      %1898 = vmatprep.subr.mxu0 0.0
      %1899 = vmatpush1.xpose.msra.mxu0 0.0
      %1900 = vmatprep.subr.mxu0 0.0
      %1901 = vmatpush1.xpose.msra.mxu0 0.0
      %1902 = vmatprep.mubr.f32.mxu0 0.0
      %1903 = vmatmul.mubr.f32.gmra.mrb[0].mxu0 %v1833
      %v1904 = vpop.f32.mrb[0].mxu0
      %v1905 = vadd.f32 0.0, %v1904
      %v1906 = vpop.f32.mrb[0].mxu0
      %1907 = vdwg.mxu0
      %v1909 = vsel %vm1755, %v978, 0
      %v1912 = vsel %vm1755, %v1322, 0
      %1914 = vmatprep.subr.mxu0 0.0
      %1915 = vmatpush1.xpose.msra.mxu0 %v1912
      %1916 = vmatprep.subr.mxu0 0.0
      %1917 = vmatpush1.xpose.msra.mxu0 0.0
      %1918 = vmatprep.subr.mxu0 0.0
      %1919 = vmatpush1.xpose.msra.mxu0 0.0
      %1920 = vmatprep.subr.mxu0 0.0
      %1921 = vmatpush1.xpose.msra.mxu0 0.0
      %1922 = vmatprep.subr.mxu0 0.0
      %1923 = vmatpush1.xpose.msra.mxu0 0.0
      %1924 = vmatprep.subr.mxu0 0.0
      %1925 = vmatpush1.xpose.msra.mxu0 0.0
      %1926 = vmatprep.subr.mxu0 0.0
      %1927 = vmatpush1.xpose.msra.mxu0 0.0
      %1928 = vmatprep.subr.mxu0 0.0
      %1929 = vmatpush1.xpose.msra.mxu0 0.0
      %1930 = vmatprep.subr.mxu0 0.0
      %1931 = vmatpush1.xpose.msra.mxu0 0.0
      %1932 = vmatprep.subr.mxu0 0.0
      %1933 = vmatpush1.xpose.msra.mxu0 0.0
      %1934 = vmatprep.subr.mxu0 0.0
      %1935 = vmatpush1.xpose.msra.mxu0 0.0
      %1936 = vmatprep.subr.mxu0 0.0
      %1937 = vmatpush1.xpose.msra.mxu0 0.0
      %1938 = vmatprep.subr.mxu0 0.0
      %1939 = vmatpush1.xpose.msra.mxu0 0.0
      %1940 = vmatprep.subr.mxu0 0.0
      %1941 = vmatpush1.xpose.msra.mxu0 0.0
      %1942 = vmatprep.subr.mxu0 0.0
      %1943 = vmatpush1.xpose.msra.mxu0 0.0
      %1944 = vmatprep.subr.mxu0 0.0
      %1945 = vmatpush1.xpose.msra.mxu0 0.0
      %1946 = vmatprep.subr.mxu0 0.0
      %1947 = vmatpush1.xpose.msra.mxu0 0.0
      %1948 = vmatprep.subr.mxu0 0.0
      %1949 = vmatpush1.xpose.msra.mxu0 0.0
      %1950 = vmatprep.subr.mxu0 0.0
      %1951 = vmatpush1.xpose.msra.mxu0 0.0
      %1952 = vmatprep.subr.mxu0 0.0
      %1953 = vmatpush1.xpose.msra.mxu0 0.0
      %1954 = vmatprep.subr.mxu0 0.0
      %1955 = vmatpush1.xpose.msra.mxu0 0.0
      %1956 = vmatprep.subr.mxu0 0.0
      %1957 = vmatpush1.xpose.msra.mxu0 0.0
      %1958 = vmatprep.subr.mxu0 0.0
      %1959 = vmatpush1.xpose.msra.mxu0 0.0
      %1960 = vmatprep.subr.mxu0 0.0
      %1961 = vmatpush1.xpose.msra.mxu0 0.0
      %1962 = vmatprep.subr.mxu0 0.0
      %1963 = vmatpush1.xpose.msra.mxu0 0.0
      %1964 = vmatprep.subr.mxu0 0.0
      %1965 = vmatpush1.xpose.msra.mxu0 0.0
      %1966 = vmatprep.subr.mxu0 0.0
      %1967 = vmatpush1.xpose.msra.mxu0 0.0
      %1968 = vmatprep.subr.mxu0 0.0
      %1969 = vmatpush1.xpose.msra.mxu0 0.0
      %1970 = vmatprep.subr.mxu0 0.0
      %1971 = vmatpush1.xpose.msra.mxu0 0.0
      %1972 = vmatprep.subr.mxu0 0.0
      %1973 = vmatpush1.xpose.msra.mxu0 0.0
      %1974 = vmatprep.subr.mxu0 0.0
      %1975 = vmatpush1.xpose.msra.mxu0 0.0
      %1976 = vmatprep.subr.mxu0 0.0
      %1977 = vmatpush1.xpose.msra.mxu0 0.0
      %1978 = vmatprep.mubr.f32.mxu0 0.0
      %1979 = vmatmul.mubr.f32.gmra.mrb[0].mxu0 %v1909
      %v1980 = vpop.f32.mrb[0].mxu0
      %v1981 = vadd.f32 0.0, %v1980
      %v1982 = vpop.f32.mrb[0].mxu0
      %1983 = vdwg.mxu0
      %v1985 = vsel %vm1755, %v1048, 0
      %v1988 = vsel %vm1755, %v1392, 0
      %1990 = vmatprep.subr.mxu0 0.0
      %1991 = vmatpush1.xpose.msra.mxu0 %v1988
      %1992 = vmatprep.subr.mxu0 0.0
      %1993 = vmatpush1.xpose.msra.mxu0 0.0
      %1994 = vmatprep.subr.mxu0 0.0
      %1995 = vmatpush1.xpose.msra.mxu0 0.0
      %1996 = vmatprep.subr.mxu0 0.0
      %1997 = vmatpush1.xpose.msra.mxu0 0.0
      %1998 = vmatprep.subr.mxu0 0.0
      %1999 = vmatpush1.xpose.msra.mxu0 0.0
      %2000 = vmatprep.subr.mxu0 0.0
      %2001 = vmatpush1.xpose.msra.mxu0 0.0
      %2002 = vmatprep.subr.mxu0 0.0
      %2003 = vmatpush1.xpose.msra.mxu0 0.0
      %2004 = vmatprep.subr.mxu0 0.0
      %2005 = vmatpush1.xpose.msra.mxu0 0.0
      %2006 = vmatprep.subr.mxu0 0.0
      %2007 = vmatpush1.xpose.msra.mxu0 0.0
      %2008 = vmatprep.subr.mxu0 0.0
      %2009 = vmatpush1.xpose.msra.mxu0 0.0
      %2010 = vmatprep.subr.mxu0 0.0
      %2011 = vmatpush1.xpose.msra.mxu0 0.0
      %2012 = vmatprep.subr.mxu0 0.0
      %2013 = vmatpush1.xpose.msra.mxu0 0.0
      %2014 = vmatprep.subr.mxu0 0.0
      %2015 = vmatpush1.xpose.msra.mxu0 0.0
      %2016 = vmatprep.subr.mxu0 0.0
      %2017 = vmatpush1.xpose.msra.mxu0 0.0
      %2018 = vmatprep.subr.mxu0 0.0
      %2019 = vmatpush1.xpose.msra.mxu0 0.0
      %2020 = vmatprep.subr.mxu0 0.0
      %2021 = vmatpush1.xpose.msra.mxu0 0.0
      %2022 = vmatprep.subr.mxu0 0.0
      %2023 = vmatpush1.xpose.msra.mxu0 0.0
      %2024 = vmatprep.subr.mxu0 0.0
      %2025 = vmatpush1.xpose.msra.mxu0 0.0
      %2026 = vmatprep.subr.mxu0 0.0
      %2027 = vmatpush1.xpose.msra.mxu0 0.0
      %2028 = vmatprep.subr.mxu0 0.0
      %2029 = vmatpush1.xpose.msra.mxu0 0.0
      %2030 = vmatprep.subr.mxu0 0.0
      %2031 = vmatpush1.xpose.msra.mxu0 0.0
      %2032 = vmatprep.subr.mxu0 0.0
      %2033 = vmatpush1.xpose.msra.mxu0 0.0
      %2034 = vmatprep.subr.mxu0 0.0
      %2035 = vmatpush1.xpose.msra.mxu0 0.0
      %2036 = vmatprep.subr.mxu0 0.0
      %2037 = vmatpush1.xpose.msra.mxu0 0.0
      %2038 = vmatprep.subr.mxu0 0.0
      %2039 = vmatpush1.xpose.msra.mxu0 0.0
      %2040 = vmatprep.subr.mxu0 0.0
      %2041 = vmatpush1.xpose.msra.mxu0 0.0
      %2042 = vmatprep.subr.mxu0 0.0
      %2043 = vmatpush1.xpose.msra.mxu0 0.0
      %2044 = vmatprep.subr.mxu0 0.0
      %2045 = vmatpush1.xpose.msra.mxu0 0.0
      %2046 = vmatprep.subr.mxu0 0.0
      %2047 = vmatpush1.xpose.msra.mxu0 0.0
      %2048 = vmatprep.subr.mxu0 0.0
      %2049 = vmatpush1.xpose.msra.mxu0 0.0
      %2050 = vmatprep.subr.mxu0 0.0
      %2051 = vmatpush1.xpose.msra.mxu0 0.0
      %2052 = vmatprep.subr.mxu0 0.0
      %2053 = vmatpush1.xpose.msra.mxu0 0.0
      %2054 = vmatprep.mubr.f32.mxu0 0.0
      %2055 = vmatmul.mubr.f32.gmra.mrb[0].mxu0 %v1985
      %v2056 = vpop.f32.mrb[0].mxu0
      %v2057 = vadd.f32 0.0, %v2056
      %v2058 = vpop.f32.mrb[0].mxu0
      %2059 = vdwg.mxu0
      %v2060 = vsub.f32 %v1829, %v704
      %v2061 = vsub.f32 %v1905, %v704
      %v2062 = vsub.f32 %v1981, %v704
      %v2063 = vsub.f32 %v2057, %v704
      %v2064 = vmul.f32 %v2060, 0.17677669
      %v2065 = vmul.f32 %v2061, 0.17677669
      %v2066 = vmul.f32 %v2062, 0.17677669
      %v2067 = vmul.f32 %v2063, 0.17677669
      %vm2068 = vcmask 64512
      %v2069 = vsel %vm2068, %v2064, -inf
      %2070 = vmax.xlane.f32.xlu0 %v2069
      %v2071 = vpop.xlane.xlu0 %2070
      %v2072 = vsel %vm2068, %v2065, -inf
      %2073 = vmax.xlane.f32.xlu0 %v2072
      %v2074 = vpop.xlane.xlu0 %2073
      %v2075 = vsel %vm2068, %v2066, -inf
      %2076 = vmax.xlane.f32.xlu0 %v2075
      %v2077 = vpop.xlane.xlu0 %2076
      %v2078 = vsel %vm2068, %v2067, -inf
      %2079 = vmax.xlane.f32.xlu0 %v2078
      %v2080 = vpop.xlane.xlu0 %2079
      %v2081 = vsub.f32 %v2064, %v2071
      %v2082 = vsub.f32 %v2065, %v2074
      %v2083 = vsub.f32 %v2066, %v2077
      %v2084 = vsub.f32 %v2067, %v2080
      %v2085 = vmul.f32 %v2081, 1.442695
      %v2086 = vpow.pop %v2085
      %v2087 = vmul.f32 %v2082, 1.442695
      %v2088 = vpow.pop %v2087
      %v2089 = vmul.f32 %v2083, 1.442695
      %v2090 = vpow.pop %v2089
      %v2091 = vmul.f32 %v2084, 1.442695
      %v2092 = vpow.pop %v2091
      %v2093 = vsel %vm2068, %v2086, 0.0
      %2094 = vadd.xlane.f32.xlu0 %v2093
      %v2095 = vpop.xlane.xlu0 %2094
      %v2096 = vsel %vm2068, %v2088, 0.0
      %2097 = vadd.xlane.f32.xlu0 %v2096
      %v2098 = vpop.xlane.xlu0 %2097
      %v2099 = vsel %vm2068, %v2090, 0.0
      %2100 = vadd.xlane.f32.xlu0 %v2099
      %v2101 = vpop.xlane.xlu0 %2100
      %v2102 = vsel %vm2068, %v2092, 0.0
      %2103 = vadd.xlane.f32.xlu0 %v2102
      %v2104 = vpop.xlane.xlu0 %2103
      %v2105 = vrcp.pop %v2095
      %v2106 = vmul.f32 %v2086, %v2105
      %v2107 = vrcp.pop %v2098
      %v2108 = vmul.f32 %v2088, %v2107
      %v2109 = vrcp.pop %v2101
      %v2110 = vmul.f32 %v2090, %v2109
      %v2111 = vrcp.pop %v2104
      %v2112 = vmul.f32 %v2092, %v2111
      %v2114 = vsel %vm2068, %v2106, 0
      %2116 = vmatprep.subr.mxu0 0.0
      %2117 = vmatpush1.msra.mxu0 %v1526
      %2118 = vmatprep.subr.mxu0 0.0
      %2119 = vmatpush1.msra.mxu0 0.0
      %2120 = vmatprep.subr.mxu0 0.0
      %2121 = vmatpush1.msra.mxu0 0.0
      %2122 = vmatprep.subr.mxu0 0.0
      %2123 = vmatpush1.msra.mxu0 0.0
      %2124 = vmatprep.subr.mxu0 0.0
      %2125 = vmatpush1.msra.mxu0 0.0
      %2126 = vmatprep.subr.mxu0 0.0
      %2127 = vmatpush1.msra.mxu0 0.0
      %2128 = vmatprep.subr.mxu0 0.0
      %2129 = vmatpush1.msra.mxu0 0.0
      %2130 = vmatprep.subr.mxu0 0.0
      %2131 = vmatpush1.msra.mxu0 0.0
      %2132 = vmatprep.subr.mxu0 0.0
      %2133 = vmatpush1.msra.mxu0 0.0
      %2134 = vmatprep.subr.mxu0 0.0
      %2135 = vmatpush1.msra.mxu0 0.0
      %2136 = vmatprep.subr.mxu0 0.0
      %2137 = vmatpush1.msra.mxu0 0.0
      %2138 = vmatprep.subr.mxu0 0.0
      %2139 = vmatpush1.msra.mxu0 0.0
      %2140 = vmatprep.subr.mxu0 0.0
      %2141 = vmatpush1.msra.mxu0 0.0
      %2142 = vmatprep.subr.mxu0 0.0
      %2143 = vmatpush1.msra.mxu0 0.0
      %2144 = vmatprep.subr.mxu0 0.0
      %2145 = vmatpush1.msra.mxu0 0.0
      %2146 = vmatprep.subr.mxu0 0.0
      %2147 = vmatpush1.msra.mxu0 0.0
      %2148 = vmatprep.subr.mxu0 0.0
      %2149 = vmatpush1.msra.mxu0 0.0
      %2150 = vmatprep.subr.mxu0 0.0
      %2151 = vmatpush1.msra.mxu0 0.0
      %2152 = vmatprep.subr.mxu0 0.0
      %2153 = vmatpush1.msra.mxu0 0.0
      %2154 = vmatprep.subr.mxu0 0.0
      %2155 = vmatpush1.msra.mxu0 0.0
      %2156 = vmatprep.subr.mxu0 0.0
      %2157 = vmatpush1.msra.mxu0 0.0
      %2158 = vmatprep.subr.mxu0 0.0
      %2159 = vmatpush1.msra.mxu0 0.0
      %2160 = vmatprep.subr.mxu0 0.0
      %2161 = vmatpush1.msra.mxu0 0.0
      %2162 = vmatprep.subr.mxu0 0.0
      %2163 = vmatpush1.msra.mxu0 0.0
      %2164 = vmatprep.subr.mxu0 0.0
      %2165 = vmatpush1.msra.mxu0 0.0
      %2166 = vmatprep.subr.mxu0 0.0
      %2167 = vmatpush1.msra.mxu0 0.0
      %2168 = vmatprep.subr.mxu0 0.0
      %2169 = vmatpush1.msra.mxu0 0.0
      %2170 = vmatprep.subr.mxu0 0.0
      %2171 = vmatpush1.msra.mxu0 0.0
      %2172 = vmatprep.subr.mxu0 0.0
      %2173 = vmatpush1.msra.mxu0 0.0
      %2174 = vmatprep.subr.mxu0 0.0
      %2175 = vmatpush1.msra.mxu0 0.0
      %2176 = vmatprep.subr.mxu0 0.0
      %2177 = vmatpush1.msra.mxu0 0.0
      %2178 = vmatprep.subr.mxu0 0.0
      %2179 = vmatpush1.msra.mxu0 0.0
      %2180 = vmatprep.mubr.f32.mxu0 0.0
      %2181 = vmatmul.mubr.f32.gmra.mrb[0].mxu0 %v2114
      %v2182 = vpop.f32.mrb[0].mxu0
      %v2183 = vadd.f32 0.0, %v2182
      %v2184 = vpop.f32.mrb[0].mxu0
      %2185 = vdwg.mxu0
      %v2187 = vsel %vm2068, %v2108, 0
      %2189 = vmatprep.subr.mxu0 0.0
      %2190 = vmatpush1.msra.mxu0 %v1596
      %2191 = vmatprep.subr.mxu0 0.0
      %2192 = vmatpush1.msra.mxu0 0.0
      %2193 = vmatprep.subr.mxu0 0.0
      %2194 = vmatpush1.msra.mxu0 0.0
      %2195 = vmatprep.subr.mxu0 0.0
      %2196 = vmatpush1.msra.mxu0 0.0
      %2197 = vmatprep.subr.mxu0 0.0
      %2198 = vmatpush1.msra.mxu0 0.0
      %2199 = vmatprep.subr.mxu0 0.0
      %2200 = vmatpush1.msra.mxu0 0.0
      %2201 = vmatprep.subr.mxu0 0.0
      %2202 = vmatpush1.msra.mxu0 0.0
      %2203 = vmatprep.subr.mxu0 0.0
      %2204 = vmatpush1.msra.mxu0 0.0
      %2205 = vmatprep.subr.mxu0 0.0
      %2206 = vmatpush1.msra.mxu0 0.0
      %2207 = vmatprep.subr.mxu0 0.0
      %2208 = vmatpush1.msra.mxu0 0.0
      %2209 = vmatprep.subr.mxu0 0.0
      %2210 = vmatpush1.msra.mxu0 0.0
      %2211 = vmatprep.subr.mxu0 0.0
      %2212 = vmatpush1.msra.mxu0 0.0
      %2213 = vmatprep.subr.mxu0 0.0
      %2214 = vmatpush1.msra.mxu0 0.0
      %2215 = vmatprep.subr.mxu0 0.0
      %2216 = vmatpush1.msra.mxu0 0.0
      %2217 = vmatprep.subr.mxu0 0.0
      %2218 = vmatpush1.msra.mxu0 0.0
      %2219 = vmatprep.subr.mxu0 0.0
      %2220 = vmatpush1.msra.mxu0 0.0
      %2221 = vmatprep.subr.mxu0 0.0
      %2222 = vmatpush1.msra.mxu0 0.0
      %2223 = vmatprep.subr.mxu0 0.0
      %2224 = vmatpush1.msra.mxu0 0.0
      %2225 = vmatprep.subr.mxu0 0.0
      %2226 = vmatpush1.msra.mxu0 0.0
      %2227 = vmatprep.subr.mxu0 0.0
      %2228 = vmatpush1.msra.mxu0 0.0
      %2229 = vmatprep.subr.mxu0 0.0
      %2230 = vmatpush1.msra.mxu0 0.0
      %2231 = vmatprep.subr.mxu0 0.0
      %2232 = vmatpush1.msra.mxu0 0.0
      %2233 = vmatprep.subr.mxu0 0.0
      %2234 = vmatpush1.msra.mxu0 0.0
      %2235 = vmatprep.subr.mxu0 0.0
      %2236 = vmatpush1.msra.mxu0 0.0
      %2237 = vmatprep.subr.mxu0 0.0
      %2238 = vmatpush1.msra.mxu0 0.0
      %2239 = vmatprep.subr.mxu0 0.0
      %2240 = vmatpush1.msra.mxu0 0.0
      %2241 = vmatprep.subr.mxu0 0.0
      %2242 = vmatpush1.msra.mxu0 0.0
      %2243 = vmatprep.subr.mxu0 0.0
      %2244 = vmatpush1.msra.mxu0 0.0
      %2245 = vmatprep.subr.mxu0 0.0
      %2246 = vmatpush1.msra.mxu0 0.0
      %2247 = vmatprep.subr.mxu0 0.0
      %2248 = vmatpush1.msra.mxu0 0.0
      %2249 = vmatprep.subr.mxu0 0.0
      %2250 = vmatpush1.msra.mxu0 0.0
      %2251 = vmatprep.subr.mxu0 0.0
      %2252 = vmatpush1.msra.mxu0 0.0
      %2253 = vmatprep.mubr.f32.mxu0 0.0
      %2254 = vmatmul.mubr.f32.gmra.mrb[0].mxu0 %v2187
      %v2255 = vpop.f32.mrb[0].mxu0
      %v2256 = vadd.f32 0.0, %v2255
      %v2257 = vpop.f32.mrb[0].mxu0
      %2258 = vdwg.mxu0
      %v2260 = vsel %vm2068, %v2110, 0
      %2262 = vmatprep.subr.mxu0 0.0
      %2263 = vmatpush1.msra.mxu0 %v1666
      %2264 = vmatprep.subr.mxu0 0.0
      %2265 = vmatpush1.msra.mxu0 0.0
      %2266 = vmatprep.subr.mxu0 0.0
      %2267 = vmatpush1.msra.mxu0 0.0
      %2268 = vmatprep.subr.mxu0 0.0
      %2269 = vmatpush1.msra.mxu0 0.0
      %2270 = vmatprep.subr.mxu0 0.0
      %2271 = vmatpush1.msra.mxu0 0.0
      %2272 = vmatprep.subr.mxu0 0.0
      %2273 = vmatpush1.msra.mxu0 0.0
      %2274 = vmatprep.subr.mxu0 0.0
      %2275 = vmatpush1.msra.mxu0 0.0
      %2276 = vmatprep.subr.mxu0 0.0
      %2277 = vmatpush1.msra.mxu0 0.0
      %2278 = vmatprep.subr.mxu0 0.0
      %2279 = vmatpush1.msra.mxu0 0.0
      %2280 = vmatprep.subr.mxu0 0.0
      %2281 = vmatpush1.msra.mxu0 0.0
      %2282 = vmatprep.subr.mxu0 0.0
      %2283 = vmatpush1.msra.mxu0 0.0
      %2284 = vmatprep.subr.mxu0 0.0
      %2285 = vmatpush1.msra.mxu0 0.0
      %2286 = vmatprep.subr.mxu0 0.0
      %2287 = vmatpush1.msra.mxu0 0.0
      %2288 = vmatprep.subr.mxu0 0.0
      %2289 = vmatpush1.msra.mxu0 0.0
      %2290 = vmatprep.subr.mxu0 0.0
      %2291 = vmatpush1.msra.mxu0 0.0
      %2292 = vmatprep.subr.mxu0 0.0
      %2293 = vmatpush1.msra.mxu0 0.0
      %2294 = vmatprep.subr.mxu0 0.0
      %2295 = vmatpush1.msra.mxu0 0.0
      %2296 = vmatprep.subr.mxu0 0.0
      %2297 = vmatpush1.msra.mxu0 0.0
      %2298 = vmatprep.subr.mxu0 0.0
      %2299 = vmatpush1.msra.mxu0 0.0
      %2300 = vmatprep.subr.mxu0 0.0
      %2301 = vmatpush1.msra.mxu0 0.0
      %2302 = vmatprep.subr.mxu0 0.0
      %2303 = vmatpush1.msra.mxu0 0.0
      %2304 = vmatprep.subr.mxu0 0.0
      %2305 = vmatpush1.msra.mxu0 0.0
      %2306 = vmatprep.subr.mxu0 0.0
      %2307 = vmatpush1.msra.mxu0 0.0
      %2308 = vmatprep.subr.mxu0 0.0
      %2309 = vmatpush1.msra.mxu0 0.0
      %2310 = vmatprep.subr.mxu0 0.0
      %2311 = vmatpush1.msra.mxu0 0.0
      %2312 = vmatprep.subr.mxu0 0.0
      %2313 = vmatpush1.msra.mxu0 0.0
      %2314 = vmatprep.subr.mxu0 0.0
      %2315 = vmatpush1.msra.mxu0 0.0
      %2316 = vmatprep.subr.mxu0 0.0
      %2317 = vmatpush1.msra.mxu0 0.0
      %2318 = vmatprep.subr.mxu0 0.0
      %2319 = vmatpush1.msra.mxu0 0.0
      %2320 = vmatprep.subr.mxu0 0.0
      %2321 = vmatpush1.msra.mxu0 0.0
      %2322 = vmatprep.subr.mxu0 0.0
      %2323 = vmatpush1.msra.mxu0 0.0
      %2324 = vmatprep.subr.mxu0 0.0
      %2325 = vmatpush1.msra.mxu0 0.0
      %2326 = vmatprep.mubr.f32.mxu0 0.0
      %2327 = vmatmul.mubr.f32.gmra.mrb[0].mxu0 %v2260
      %v2328 = vpop.f32.mrb[0].mxu0
      %v2329 = vadd.f32 0.0, %v2328
      %v2330 = vpop.f32.mrb[0].mxu0
      %2331 = vdwg.mxu0
      %v2333 = vsel %vm2068, %v2112, 0
      %2335 = vmatprep.subr.mxu0 0.0
      %2336 = vmatpush1.msra.mxu0 %v1736
      %2337 = vmatprep.subr.mxu0 0.0
      %2338 = vmatpush1.msra.mxu0 0.0
      %2339 = vmatprep.subr.mxu0 0.0
      %2340 = vmatpush1.msra.mxu0 0.0
      %2341 = vmatprep.subr.mxu0 0.0
      %2342 = vmatpush1.msra.mxu0 0.0
      %2343 = vmatprep.subr.mxu0 0.0
      %2344 = vmatpush1.msra.mxu0 0.0
      %2345 = vmatprep.subr.mxu0 0.0
      %2346 = vmatpush1.msra.mxu0 0.0
      %2347 = vmatprep.subr.mxu0 0.0
      %2348 = vmatpush1.msra.mxu0 0.0
      %2349 = vmatprep.subr.mxu0 0.0
      %2350 = vmatpush1.msra.mxu0 0.0
      %2351 = vmatprep.subr.mxu0 0.0
      %2352 = vmatpush1.msra.mxu0 0.0
      %2353 = vmatprep.subr.mxu0 0.0
      %2354 = vmatpush1.msra.mxu0 0.0
      %2355 = vmatprep.subr.mxu0 0.0
      %2356 = vmatpush1.msra.mxu0 0.0
      %2357 = vmatprep.subr.mxu0 0.0
      %2358 = vmatpush1.msra.mxu0 0.0
      %2359 = vmatprep.subr.mxu0 0.0
      %2360 = vmatpush1.msra.mxu0 0.0
      %2361 = vmatprep.subr.mxu0 0.0
      %2362 = vmatpush1.msra.mxu0 0.0
      %2363 = vmatprep.subr.mxu0 0.0
      %2364 = vmatpush1.msra.mxu0 0.0
      %2365 = vmatprep.subr.mxu0 0.0
      %2366 = vmatpush1.msra.mxu0 0.0
      %2367 = vmatprep.subr.mxu0 0.0
      %2368 = vmatpush1.msra.mxu0 0.0
      %2369 = vmatprep.subr.mxu0 0.0
      %2370 = vmatpush1.msra.mxu0 0.0
      %2371 = vmatprep.subr.mxu0 0.0
      %2372 = vmatpush1.msra.mxu0 0.0
      %2373 = vmatprep.subr.mxu0 0.0
      %2374 = vmatpush1.msra.mxu0 0.0
      %2375 = vmatprep.subr.mxu0 0.0
      %2376 = vmatpush1.msra.mxu0 0.0
      %2377 = vmatprep.subr.mxu0 0.0
      %2378 = vmatpush1.msra.mxu0 0.0
      %2379 = vmatprep.subr.mxu0 0.0
      %2380 = vmatpush1.msra.mxu0 0.0
      %2381 = vmatprep.subr.mxu0 0.0
      %2382 = vmatpush1.msra.mxu0 0.0
      %2383 = vmatprep.subr.mxu0 0.0
      %2384 = vmatpush1.msra.mxu0 0.0
      %2385 = vmatprep.subr.mxu0 0.0
      %2386 = vmatpush1.msra.mxu0 0.0
      %2387 = vmatprep.subr.mxu0 0.0
      %2388 = vmatpush1.msra.mxu0 0.0
      %2389 = vmatprep.subr.mxu0 0.0
      %2390 = vmatpush1.msra.mxu0 0.0
      %2391 = vmatprep.subr.mxu0 0.0
      %2392 = vmatpush1.msra.mxu0 0.0
      %2393 = vmatprep.subr.mxu0 0.0
      %2394 = vmatpush1.msra.mxu0 0.0
      %2395 = vmatprep.subr.mxu0 0.0
      %2396 = vmatpush1.msra.mxu0 0.0
      %2397 = vmatprep.subr.mxu0 0.0
      %2398 = vmatpush1.msra.mxu0 0.0
      %2399 = vmatprep.mubr.f32.mxu0 0.0
      %2400 = vmatmul.mubr.f32.gmra.mrb[0].mxu0 %v2333
      %v2401 = vpop.f32.mrb[0].mxu0
      %v2402 = vadd.f32 0.0, %v2401
      %v2403 = vpop.f32.mrb[0].mxu0
      %2404 = vdwg.mxu0
      %v2406 = vsel %vm1755, %v2183, 0
      %2408 = vmatprep.subr.mxu0 0.0
      %2409 = vmatpush1.msra.mxu0 %v1739
      %2410 = vmatprep.subr.mxu0 0.0
      %2411 = vmatpush1.msra.mxu0 %v1740
      %2412 = vmatprep.subr.mxu0 0.0
      %2413 = vmatpush1.msra.mxu0 %v1741
      %2414 = vmatprep.subr.mxu0 0.0
      %2415 = vmatpush1.msra.mxu0 %v1742
      %2416 = vmatprep.subr.mxu0 0.0
      %2417 = vmatpush1.msra.mxu0 0.0
      %2418 = vmatprep.subr.mxu0 0.0
      %2419 = vmatpush1.msra.mxu0 0.0
      %2420 = vmatprep.subr.mxu0 0.0
      %2421 = vmatpush1.msra.mxu0 0.0
      %2422 = vmatprep.subr.mxu0 0.0
      %2423 = vmatpush1.msra.mxu0 0.0
      %2424 = vmatprep.subr.mxu0 0.0
      %2425 = vmatpush1.msra.mxu0 0.0
      %2426 = vmatprep.subr.mxu0 0.0
      %2427 = vmatpush1.msra.mxu0 0.0
      %2428 = vmatprep.subr.mxu0 0.0
      %2429 = vmatpush1.msra.mxu0 0.0
      %2430 = vmatprep.subr.mxu0 0.0
      %2431 = vmatpush1.msra.mxu0 0.0
      %2432 = vmatprep.subr.mxu0 0.0
      %2433 = vmatpush1.msra.mxu0 0.0
      %2434 = vmatprep.subr.mxu0 0.0
      %2435 = vmatpush1.msra.mxu0 0.0
      %2436 = vmatprep.subr.mxu0 0.0
      %2437 = vmatpush1.msra.mxu0 0.0
      %2438 = vmatprep.subr.mxu0 0.0
      %2439 = vmatpush1.msra.mxu0 0.0
      %2440 = vmatprep.subr.mxu0 0.0
      %2441 = vmatpush1.msra.mxu0 0.0
      %2442 = vmatprep.subr.mxu0 0.0
      %2443 = vmatpush1.msra.mxu0 0.0
      %2444 = vmatprep.subr.mxu0 0.0
      %2445 = vmatpush1.msra.mxu0 0.0
      %2446 = vmatprep.subr.mxu0 0.0
      %2447 = vmatpush1.msra.mxu0 0.0
      %2448 = vmatprep.subr.mxu0 0.0
      %2449 = vmatpush1.msra.mxu0 0.0
      %2450 = vmatprep.subr.mxu0 0.0
      %2451 = vmatpush1.msra.mxu0 0.0
      %2452 = vmatprep.subr.mxu0 0.0
      %2453 = vmatpush1.msra.mxu0 0.0
      %2454 = vmatprep.subr.mxu0 0.0
      %2455 = vmatpush1.msra.mxu0 0.0
      %2456 = vmatprep.subr.mxu0 0.0
      %2457 = vmatpush1.msra.mxu0 0.0
      %2458 = vmatprep.subr.mxu0 0.0
      %2459 = vmatpush1.msra.mxu0 0.0
      %2460 = vmatprep.subr.mxu0 0.0
      %2461 = vmatpush1.msra.mxu0 0.0
      %2462 = vmatprep.subr.mxu0 0.0
      %2463 = vmatpush1.msra.mxu0 0.0
      %2464 = vmatprep.subr.mxu0 0.0
      %2465 = vmatpush1.msra.mxu0 0.0
      %2466 = vmatprep.subr.mxu0 0.0
      %2467 = vmatpush1.msra.mxu0 0.0
      %2468 = vmatprep.subr.mxu0 0.0
      %2469 = vmatpush1.msra.mxu0 0.0
      %2470 = vmatprep.subr.mxu0 0.0
      %2471 = vmatpush1.msra.mxu0 0.0
      %2472 = vmatprep.mubr.f32.mxu0 0.0
      %2473 = vmatmul.mubr.f32.gmra.mrb[0].mxu0 %v2406
      %v2474 = vpop.f32.mrb[0].mxu0
      %v2475 = vadd.f32 0.0, %v2474
      %v2476 = vpop.f32.mrb[0].mxu0
      %2477 = vdwg.mxu0
      %v2479 = vsel %vm1755, %v2256, 0
      %2481 = vmatprep.subr.mxu0 0.0
      %2482 = vmatpush1.msra.mxu0 %v1743
      %2483 = vmatprep.subr.mxu0 0.0
      %2484 = vmatpush1.msra.mxu0 %v1744
      %2485 = vmatprep.subr.mxu0 0.0
      %2486 = vmatpush1.msra.mxu0 %v1745
      %2487 = vmatprep.subr.mxu0 0.0
      %2488 = vmatpush1.msra.mxu0 %v1746
      %2489 = vmatprep.subr.mxu0 0.0
      %2490 = vmatpush1.msra.mxu0 0.0
      %2491 = vmatprep.subr.mxu0 0.0
      %2492 = vmatpush1.msra.mxu0 0.0
      %2493 = vmatprep.subr.mxu0 0.0
      %2494 = vmatpush1.msra.mxu0 0.0
      %2495 = vmatprep.subr.mxu0 0.0
      %2496 = vmatpush1.msra.mxu0 0.0
      %2497 = vmatprep.subr.mxu0 0.0
      %2498 = vmatpush1.msra.mxu0 0.0
      %2499 = vmatprep.subr.mxu0 0.0
      %2500 = vmatpush1.msra.mxu0 0.0
      %2501 = vmatprep.subr.mxu0 0.0
      %2502 = vmatpush1.msra.mxu0 0.0
      %2503 = vmatprep.subr.mxu0 0.0
      %2504 = vmatpush1.msra.mxu0 0.0
      %2505 = vmatprep.subr.mxu0 0.0
      %2506 = vmatpush1.msra.mxu0 0.0
      %2507 = vmatprep.subr.mxu0 0.0
      %2508 = vmatpush1.msra.mxu0 0.0
      %2509 = vmatprep.subr.mxu0 0.0
      %2510 = vmatpush1.msra.mxu0 0.0
      %2511 = vmatprep.subr.mxu0 0.0
      %2512 = vmatpush1.msra.mxu0 0.0
      %2513 = vmatprep.subr.mxu0 0.0
      %2514 = vmatpush1.msra.mxu0 0.0
      %2515 = vmatprep.subr.mxu0 0.0
      %2516 = vmatpush1.msra.mxu0 0.0
      %2517 = vmatprep.subr.mxu0 0.0
      %2518 = vmatpush1.msra.mxu0 0.0
      %2519 = vmatprep.subr.mxu0 0.0
      %2520 = vmatpush1.msra.mxu0 0.0
      %2521 = vmatprep.subr.mxu0 0.0
      %2522 = vmatpush1.msra.mxu0 0.0
      %2523 = vmatprep.subr.mxu0 0.0
      %2524 = vmatpush1.msra.mxu0 0.0
      %2525 = vmatprep.subr.mxu0 0.0
      %2526 = vmatpush1.msra.mxu0 0.0
      %2527 = vmatprep.subr.mxu0 0.0
      %2528 = vmatpush1.msra.mxu0 0.0
      %2529 = vmatprep.subr.mxu0 0.0
      %2530 = vmatpush1.msra.mxu0 0.0
      %2531 = vmatprep.subr.mxu0 0.0
      %2532 = vmatpush1.msra.mxu0 0.0
      %2533 = vmatprep.subr.mxu0 0.0
      %2534 = vmatpush1.msra.mxu0 0.0
      %2535 = vmatprep.subr.mxu0 0.0
      %2536 = vmatpush1.msra.mxu0 0.0
      %2537 = vmatprep.subr.mxu0 0.0
      %2538 = vmatpush1.msra.mxu0 0.0
      %2539 = vmatprep.subr.mxu0 0.0
      %2540 = vmatpush1.msra.mxu0 0.0
      %2541 = vmatprep.subr.mxu0 0.0
      %2542 = vmatpush1.msra.mxu0 0.0
      %2543 = vmatprep.subr.mxu0 0.0
      %2544 = vmatpush1.msra.mxu0 0.0
      %2545 = vmatprep.mubr.f32.mxu0 0.0
      %2546 = vmatmul.mubr.f32.gmra.mrb[0].mxu0 %v2479
      %v2547 = vpop.f32.mrb[0].mxu0
      %v2548 = vadd.f32 0.0, %v2547
      %v2549 = vpop.f32.mrb[0].mxu0
      %2550 = vdwg.mxu0
      %v2552 = vsel %vm1755, %v2329, 0
      %2554 = vmatprep.subr.mxu0 0.0
      %2555 = vmatpush1.msra.mxu0 %v1747
      %2556 = vmatprep.subr.mxu0 0.0
      %2557 = vmatpush1.msra.mxu0 %v1748
      %2558 = vmatprep.subr.mxu0 0.0
      %2559 = vmatpush1.msra.mxu0 %v1749
      %2560 = vmatprep.subr.mxu0 0.0
      %2561 = vmatpush1.msra.mxu0 %v1750
      %2562 = vmatprep.subr.mxu0 0.0
      %2563 = vmatpush1.msra.mxu0 0.0
      %2564 = vmatprep.subr.mxu0 0.0
      %2565 = vmatpush1.msra.mxu0 0.0
      %2566 = vmatprep.subr.mxu0 0.0
      %2567 = vmatpush1.msra.mxu0 0.0
      %2568 = vmatprep.subr.mxu0 0.0
      %2569 = vmatpush1.msra.mxu0 0.0
      %2570 = vmatprep.subr.mxu0 0.0
      %2571 = vmatpush1.msra.mxu0 0.0
      %2572 = vmatprep.subr.mxu0 0.0
      %2573 = vmatpush1.msra.mxu0 0.0
      %2574 = vmatprep.subr.mxu0 0.0
      %2575 = vmatpush1.msra.mxu0 0.0
      %2576 = vmatprep.subr.mxu0 0.0
      %2577 = vmatpush1.msra.mxu0 0.0
      %2578 = vmatprep.subr.mxu0 0.0
      %2579 = vmatpush1.msra.mxu0 0.0
      %2580 = vmatprep.subr.mxu0 0.0
      %2581 = vmatpush1.msra.mxu0 0.0
      %2582 = vmatprep.subr.mxu0 0.0
      %2583 = vmatpush1.msra.mxu0 0.0
      %2584 = vmatprep.subr.mxu0 0.0
      %2585 = vmatpush1.msra.mxu0 0.0
      %2586 = vmatprep.subr.mxu0 0.0
      %2587 = vmatpush1.msra.mxu0 0.0
      %2588 = vmatprep.subr.mxu0 0.0
      %2589 = vmatpush1.msra.mxu0 0.0
      %2590 = vmatprep.subr.mxu0 0.0
      %2591 = vmatpush1.msra.mxu0 0.0
      %2592 = vmatprep.subr.mxu0 0.0
      %2593 = vmatpush1.msra.mxu0 0.0
      %2594 = vmatprep.subr.mxu0 0.0
      %2595 = vmatpush1.msra.mxu0 0.0
      %2596 = vmatprep.subr.mxu0 0.0
      %2597 = vmatpush1.msra.mxu0 0.0
      %2598 = vmatprep.subr.mxu0 0.0
      %2599 = vmatpush1.msra.mxu0 0.0
      %2600 = vmatprep.subr.mxu0 0.0
      %2601 = vmatpush1.msra.mxu0 0.0
      %2602 = vmatprep.subr.mxu0 0.0
      %2603 = vmatpush1.msra.mxu0 0.0
      %2604 = vmatprep.subr.mxu0 0.0
      %2605 = vmatpush1.msra.mxu0 0.0
      %2606 = vmatprep.subr.mxu0 0.0
      %2607 = vmatpush1.msra.mxu0 0.0
      %2608 = vmatprep.subr.mxu0 0.0
      %2609 = vmatpush1.msra.mxu0 0.0
      %2610 = vmatprep.subr.mxu0 0.0
      %2611 = vmatpush1.msra.mxu0 0.0
      %2612 = vmatprep.subr.mxu0 0.0
      %2613 = vmatpush1.msra.mxu0 0.0
      %2614 = vmatprep.subr.mxu0 0.0
      %2615 = vmatpush1.msra.mxu0 0.0
      %2616 = vmatprep.subr.mxu0 0.0
      %2617 = vmatpush1.msra.mxu0 0.0
      %2618 = vmatprep.mubr.f32.mxu0 0.0
      %2619 = vmatmul.mubr.f32.gmra.mrb[0].mxu0 %v2552
      %v2620 = vpop.f32.mrb[0].mxu0
      %v2621 = vadd.f32 0.0, %v2620
      %v2622 = vpop.f32.mrb[0].mxu0
      %2623 = vdwg.mxu0
      %v2625 = vsel %vm1755, %v2402, 0
      %2627 = vmatprep.subr.mxu0 0.0
      %2628 = vmatpush1.msra.mxu0 %v1751
      %2629 = vmatprep.subr.mxu0 0.0
      %2630 = vmatpush1.msra.mxu0 %v1752
      %2631 = vmatprep.subr.mxu0 0.0
      %2632 = vmatpush1.msra.mxu0 %v1753
      %2633 = vmatprep.subr.mxu0 0.0
      %2634 = vmatpush1.msra.mxu0 %v1754
      %2635 = vmatprep.subr.mxu0 0.0
      %2636 = vmatpush1.msra.mxu0 0.0
      %2637 = vmatprep.subr.mxu0 0.0
      %2638 = vmatpush1.msra.mxu0 0.0
      %2639 = vmatprep.subr.mxu0 0.0
      %2640 = vmatpush1.msra.mxu0 0.0
      %2641 = vmatprep.subr.mxu0 0.0
      %2642 = vmatpush1.msra.mxu0 0.0
      %2643 = vmatprep.subr.mxu0 0.0
      %2644 = vmatpush1.msra.mxu0 0.0
      %2645 = vmatprep.subr.mxu0 0.0
      %2646 = vmatpush1.msra.mxu0 0.0
      %2647 = vmatprep.subr.mxu0 0.0
      %2648 = vmatpush1.msra.mxu0 0.0
      %2649 = vmatprep.subr.mxu0 0.0
      %2650 = vmatpush1.msra.mxu0 0.0
      %2651 = vmatprep.subr.mxu0 0.0
      %2652 = vmatpush1.msra.mxu0 0.0
      %2653 = vmatprep.subr.mxu0 0.0
      %2654 = vmatpush1.msra.mxu0 0.0
      %2655 = vmatprep.subr.mxu0 0.0
      %2656 = vmatpush1.msra.mxu0 0.0
      %2657 = vmatprep.subr.mxu0 0.0
      %2658 = vmatpush1.msra.mxu0 0.0
      %2659 = vmatprep.subr.mxu0 0.0
      %2660 = vmatpush1.msra.mxu0 0.0
      %2661 = vmatprep.subr.mxu0 0.0
      %2662 = vmatpush1.msra.mxu0 0.0
      %2663 = vmatprep.subr.mxu0 0.0
      %2664 = vmatpush1.msra.mxu0 0.0
      %2665 = vmatprep.subr.mxu0 0.0
      %2666 = vmatpush1.msra.mxu0 0.0
      %2667 = vmatprep.subr.mxu0 0.0
      %2668 = vmatpush1.msra.mxu0 0.0
      %2669 = vmatprep.subr.mxu0 0.0
      %2670 = vmatpush1.msra.mxu0 0.0
      %2671 = vmatprep.subr.mxu0 0.0
      %2672 = vmatpush1.msra.mxu0 0.0
      %2673 = vmatprep.subr.mxu0 0.0
      %2674 = vmatpush1.msra.mxu0 0.0
      %2675 = vmatprep.subr.mxu0 0.0
      %2676 = vmatpush1.msra.mxu0 0.0
      %2677 = vmatprep.subr.mxu0 0.0
      %2678 = vmatpush1.msra.mxu0 0.0
      %2679 = vmatprep.subr.mxu0 0.0
      %2680 = vmatpush1.msra.mxu0 0.0
      %2681 = vmatprep.subr.mxu0 0.0
      %2682 = vmatpush1.msra.mxu0 0.0
      %2683 = vmatprep.subr.mxu0 0.0
      %2684 = vmatpush1.msra.mxu0 0.0
      %2685 = vmatprep.subr.mxu0 0.0
      %2686 = vmatpush1.msra.mxu0 0.0
      %2687 = vmatprep.subr.mxu0 0.0
      %2688 = vmatpush1.msra.mxu0 0.0
      %2689 = vmatprep.subr.mxu0 0.0
      %2690 = vmatpush1.msra.mxu0 0.0
      %2691 = vmatprep.mubr.f32.mxu0 0.0
      %2692 = vmatmul.mubr.f32.gmra.mrb[0].mxu0 %v2625
      %v2693 = vpop.f32.mrb[0].mxu0
      %v2694 = vadd.f32 0.0, %v2693
      %v2695 = vpop.f32.mrb[0].mxu0
      %2696 = vdwg.mxu0
      %v2697 = vadd.f32 %v2475, %v2548
      %v2698 = vadd.f32 %v2697, %v2621
      %v2699 = vadd.f32 %v2698, %v2694
      %v2700 = vld [vmem:[%s6] sm:$0x1]
      %v2701 = vld [vmem:[%s7] sm:$0x1]
      %v2702 = vadd.f32 %v705, %v2699
      %v2703 = vmul.f32 %v2702, %v700
      %2704 = vadd.xlane.f32.xlu0 %v2703
      %v2705 = vpop.xlane.xlu0 %2704
      %v2706 = vmul.f32 %v2705, 0.03125
      %v2707 = vsub.f32 %v2702, %v2706
      %v2708 = vmul.f32 %v2707, %v700
      %v2709 = vmul.f32 %v2708, %v2708
      %2710 = vadd.xlane.f32.xlu0 %v2709
      %v2711 = vpop.xlane.xlu0 %2710
      %v2712 = vmul.f32 %v2711, 0.032258064
      %v2713 = vrsqrt.pop %v2712
      %v2714 = vmul.f32 %v2712, %v2713
      %vm2715 = vcmp.eq.f32.partialorder %v2712, inf
      %v2716 = vsel %vm2715, %v2712, %v2714
      %vm2717 = vcmp.eq.f32.partialorder %v2712, 0.0
      %v2718 = vand.u32 %v2712, 2147483648
      %v2719 = vsel %vm2717, %v2718, %v2716
      %v2721 = vlaneseq
      %v2722 = vshrl.u32 %v2721, 7
      %v2723 = vsub.s32 0, %v2722
      %v2724 = vrot.slane %v2700, %v2723
      %v2726 = vmul.f32 %v2724, %v2707
      %v2727 = vadd.f32 %v2719, 1e-06
      %v2728 = vrcp.pop %v2727
      %v2729 = vmul.f32 %v2726, %v2728
      %v2731 = vlaneseq
      %v2732 = vshrl.u32 %v2731, 7
      %v2733 = vsub.s32 0, %v2732
      %v2734 = vrot.slane %v2701, %v2733
      %v2736 = vadd.f32 %v2729, %v2734
      %v2737 = vld [vmem:[%s8] sm:$0xff]
      %v2738 = vld [vmem:[%s8 + $0x8] sm:$0xff]
      %v2739 = vld [vmem:[%s8 + $0x10] sm:$0xff]
      %v2740 = vld [vmem:[%s8 + $0x18] sm:$0xff]
      %v2741 = vld [vmem:[%s8 + $0x20] sm:$0xff]
      %v2742 = vld [vmem:[%s8 + $0x28] sm:$0xff]
      %v2743 = vld [vmem:[%s8 + $0x30] sm:$0xff]
      %v2744 = vld [vmem:[%s8 + $0x38] sm:$0xff]
      %v2745 = vld [vmem:[%s8 + $0x40] sm:$0xff]
      %v2746 = vld [vmem:[%s8 + $0x48] sm:$0xff]
      %v2747 = vld [vmem:[%s8 + $0x50] sm:$0xff]
      %v2748 = vld [vmem:[%s8 + $0x58] sm:$0xff]
      %v2749 = vld [vmem:[%s8 + $0x60] sm:$0xff]
      %v2750 = vld [vmem:[%s8 + $0x68] sm:$0xff]
      %v2751 = vld [vmem:[%s8 + $0x70] sm:$0xff]
      %v2752 = vld [vmem:[%s8 + $0x78] sm:$0xff]
      %v2753 = vld [vmem:[%s8 + $0x80] sm:$0xff]
      %v2754 = vld [vmem:[%s8 + $0x88] sm:$0xff]
      %v2755 = vld [vmem:[%s8 + $0x90] sm:$0xff]
      %v2756 = vld [vmem:[%s8 + $0x98] sm:$0xff]
      %v2757 = vld [vmem:[%s8 + $0xa0] sm:$0xff]
      %v2758 = vld [vmem:[%s8 + $0xa8] sm:$0xff]
      %v2759 = vld [vmem:[%s8 + $0xb0] sm:$0xff]
      %v2760 = vld [vmem:[%s8 + $0xb8] sm:$0xff]
      %v2761 = vld [vmem:[%s8 + $0xc0] sm:$0xff]
      %v2762 = vld [vmem:[%s8 + $0xc8] sm:$0xff]
      %v2763 = vld [vmem:[%s8 + $0xd0] sm:$0xff]
      %v2764 = vld [vmem:[%s8 + $0xd8] sm:$0xff]
      %v2765 = vld [vmem:[%s8 + $0xe0] sm:$0xff]
      %v2766 = vld [vmem:[%s8 + $0xe8] sm:$0xff]
      %v2767 = vld [vmem:[%s8 + $0xf0] sm:$0xff]
      %v2768 = vld [vmem:[%s8 + $0xf8] sm:$0xff]
      %v2769 = vld [vmem:[%s8 + $0x100] sm:$0xff]
      %v2770 = vld [vmem:[%s8 + $0x108] sm:$0xff]
      %v2771 = vld [vmem:[%s8 + $0x110] sm:$0xff]
      %v2772 = vld [vmem:[%s8 + $0x118] sm:$0xff]
      %v2773 = vld [vmem:[%s8 + $0x120] sm:$0xff]
      %v2774 = vld [vmem:[%s8 + $0x128] sm:$0xff]
      %v2775 = vld [vmem:[%s8 + $0x130] sm:$0xff]
      %v2776 = vld [vmem:[%s8 + $0x138] sm:$0xff]
      %v2777 = vld [vmem:[%s8 + $0x140] sm:$0xff]
      %v2778 = vld [vmem:[%s8 + $0x148] sm:$0xff]
      %v2779 = vld [vmem:[%s8 + $0x150] sm:$0xff]
      %v2780 = vld [vmem:[%s8 + $0x158] sm:$0xff]
      %v2781 = vld [vmem:[%s8 + $0x160] sm:$0xff]
      %v2782 = vld [vmem:[%s8 + $0x168] sm:$0xff]
      %v2783 = vld [vmem:[%s8 + $0x170] sm:$0xff]
      %v2784 = vld [vmem:[%s8 + $0x178] sm:$0xff]
      %v2785 = vld [vmem:[%s8 + $0x180] sm:$0xff]
      %v2786 = vld [vmem:[%s8 + $0x188] sm:$0xff]
      %v2787 = vld [vmem:[%s8 + $0x190] sm:$0xff]
      %v2788 = vld [vmem:[%s8 + $0x198] sm:$0xff]
      %v2789 = vld [vmem:[%s8 + $0x1a0] sm:$0xff]
      %v2790 = vld [vmem:[%s8 + $0x1a8] sm:$0xff]
      %v2791 = vld [vmem:[%s8 + $0x1b0] sm:$0xff]
      %v2792 = vld [vmem:[%s8 + $0x1b8] sm:$0xff]
      %v2793 = vld [vmem:[%s8 + $0x1c0] sm:$0xff]
      %v2794 = vld [vmem:[%s8 + $0x1c8] sm:$0xff]
      %v2795 = vld [vmem:[%s8 + $0x1d0] sm:$0xff]
      %v2796 = vld [vmem:[%s8 + $0x1d8] sm:$0xff]
      %v2797 = vld [vmem:[%s8 + $0x1e0] sm:$0xff]
      %v2798 = vld [vmem:[%s8 + $0x1e8] sm:$0xff]
      %v2799 = vld [vmem:[%s8 + $0x1f0] sm:$0xff]
      %v2800 = vld [vmem:[%s8 + $0x1f8] sm:$0xff]
      %2801 = vmatprep.subr.mxu0 0.0
      %2802 = vmatpush1.msra.mxu0 %v2737
      %2803 = vmatprep.subr.mxu0 0.0
      %2804 = vmatpush1.msra.mxu0 %v2738
      %2805 = vmatprep.subr.mxu0 0.0
      %2806 = vmatpush1.msra.mxu0 %v2739
      %2807 = vmatprep.subr.mxu0 0.0
      %2808 = vmatpush1.msra.mxu0 %v2740
      %2809 = vmatprep.subr.mxu0 0.0
      %2810 = vmatpush1.msra.mxu0 %v2741
      %2811 = vmatprep.subr.mxu0 0.0
      %2812 = vmatpush1.msra.mxu0 %v2742
      %2813 = vmatprep.subr.mxu0 0.0
      %2814 = vmatpush1.msra.mxu0 %v2743
      %2815 = vmatprep.subr.mxu0 0.0
      %2816 = vmatpush1.msra.mxu0 %v2744
      %2817 = vmatprep.subr.mxu0 0.0
      %2818 = vmatpush1.msra.mxu0 %v2745
      %2819 = vmatprep.subr.mxu0 0.0
      %2820 = vmatpush1.msra.mxu0 %v2746
      %2821 = vmatprep.subr.mxu0 0.0
      %2822 = vmatpush1.msra.mxu0 %v2747
      %2823 = vmatprep.subr.mxu0 0.0
      %2824 = vmatpush1.msra.mxu0 %v2748
      %2825 = vmatprep.subr.mxu0 0.0
      %2826 = vmatpush1.msra.mxu0 %v2749
      %2827 = vmatprep.subr.mxu0 0.0
      %2828 = vmatpush1.msra.mxu0 %v2750
      %2829 = vmatprep.subr.mxu0 0.0
      %2830 = vmatpush1.msra.mxu0 %v2751
      %2831 = vmatprep.subr.mxu0 0.0
      %2832 = vmatpush1.msra.mxu0 %v2752
      %2833 = vmatprep.subr.mxu0 0.0
      %2834 = vmatpush1.msra.mxu0 0.0
      %2835 = vmatprep.subr.mxu0 0.0
      %2836 = vmatpush1.msra.mxu0 0.0
      %2837 = vmatprep.subr.mxu0 0.0
      %2838 = vmatpush1.msra.mxu0 0.0
      %2839 = vmatprep.subr.mxu0 0.0
      %2840 = vmatpush1.msra.mxu0 0.0
      %2841 = vmatprep.subr.mxu0 0.0
      %2842 = vmatpush1.msra.mxu0 0.0
      %2843 = vmatprep.subr.mxu0 0.0
      %2844 = vmatpush1.msra.mxu0 0.0
      %2845 = vmatprep.subr.mxu0 0.0
      %2846 = vmatpush1.msra.mxu0 0.0
      %2847 = vmatprep.subr.mxu0 0.0
      %2848 = vmatpush1.msra.mxu0 0.0
      %2849 = vmatprep.subr.mxu0 0.0
      %2850 = vmatpush1.msra.mxu0 0.0
      %2851 = vmatprep.subr.mxu0 0.0
      %2852 = vmatpush1.msra.mxu0 0.0
      %2853 = vmatprep.subr.mxu0 0.0
      %2854 = vmatpush1.msra.mxu0 0.0
      %2855 = vmatprep.subr.mxu0 0.0
      %2856 = vmatpush1.msra.mxu0 0.0
      %2857 = vmatprep.subr.mxu0 0.0
      %2858 = vmatpush1.msra.mxu0 0.0
      %2859 = vmatprep.subr.mxu0 0.0
      %2860 = vmatpush1.msra.mxu0 0.0
      %2861 = vmatprep.subr.mxu0 0.0
      %2862 = vmatpush1.msra.mxu0 0.0
      %2863 = vmatprep.subr.mxu0 0.0
      %2864 = vmatpush1.msra.mxu0 0.0
      %2865 = vmatprep.mubr.f32.mxu0 0.0
      %2866 = vmatmul.mubr.f32.gmra.mrb[0].mxu0 %v2736
      %v2867 = vpop.f32.mrb[0].mxu0
      %v2868 = vadd.f32 0.0, %v2867
      %v2869 = vpop.f32.mrb[0].mxu0
      %2870 = vdwg.mxu0
      %2871 = vmatprep.subr.mxu0 0.0
      %2872 = vmatpush1.msra.mxu0 %v2753
      %2873 = vmatprep.subr.mxu0 0.0
      %2874 = vmatpush1.msra.mxu0 %v2754
      %2875 = vmatprep.subr.mxu0 0.0
      %2876 = vmatpush1.msra.mxu0 %v2755
      %2877 = vmatprep.subr.mxu0 0.0
      %2878 = vmatpush1.msra.mxu0 %v2756
      %2879 = vmatprep.subr.mxu0 0.0
      %2880 = vmatpush1.msra.mxu0 %v2757
      %2881 = vmatprep.subr.mxu0 0.0
      %2882 = vmatpush1.msra.mxu0 %v2758
      %2883 = vmatprep.subr.mxu0 0.0
      %2884 = vmatpush1.msra.mxu0 %v2759
      %2885 = vmatprep.subr.mxu0 0.0
      %2886 = vmatpush1.msra.mxu0 %v2760
      %2887 = vmatprep.subr.mxu0 0.0
      %2888 = vmatpush1.msra.mxu0 %v2761
      %2889 = vmatprep.subr.mxu0 0.0
      %2890 = vmatpush1.msra.mxu0 %v2762
      %2891 = vmatprep.subr.mxu0 0.0
      %2892 = vmatpush1.msra.mxu0 %v2763
      %2893 = vmatprep.subr.mxu0 0.0
      %2894 = vmatpush1.msra.mxu0 %v2764
      %2895 = vmatprep.subr.mxu0 0.0
      %2896 = vmatpush1.msra.mxu0 %v2765
      %2897 = vmatprep.subr.mxu0 0.0
      %2898 = vmatpush1.msra.mxu0 %v2766
      %2899 = vmatprep.subr.mxu0 0.0
      %2900 = vmatpush1.msra.mxu0 %v2767
      %2901 = vmatprep.subr.mxu0 0.0
      %2902 = vmatpush1.msra.mxu0 %v2768
      %2903 = vmatprep.subr.mxu0 0.0
      %2904 = vmatpush1.msra.mxu0 0.0
      %2905 = vmatprep.subr.mxu0 0.0
      %2906 = vmatpush1.msra.mxu0 0.0
      %2907 = vmatprep.subr.mxu0 0.0
      %2908 = vmatpush1.msra.mxu0 0.0
      %2909 = vmatprep.subr.mxu0 0.0
      %2910 = vmatpush1.msra.mxu0 0.0
      %2911 = vmatprep.subr.mxu0 0.0
      %2912 = vmatpush1.msra.mxu0 0.0
      %2913 = vmatprep.subr.mxu0 0.0
      %2914 = vmatpush1.msra.mxu0 0.0
      %2915 = vmatprep.subr.mxu0 0.0
      %2916 = vmatpush1.msra.mxu0 0.0
      %2917 = vmatprep.subr.mxu0 0.0
      %2918 = vmatpush1.msra.mxu0 0.0
      %2919 = vmatprep.subr.mxu0 0.0
      %2920 = vmatpush1.msra.mxu0 0.0
      %2921 = vmatprep.subr.mxu0 0.0
      %2922 = vmatpush1.msra.mxu0 0.0
      %2923 = vmatprep.subr.mxu0 0.0
      %2924 = vmatpush1.msra.mxu0 0.0
      %2925 = vmatprep.subr.mxu0 0.0
      %2926 = vmatpush1.msra.mxu0 0.0
      %2927 = vmatprep.subr.mxu0 0.0
      %2928 = vmatpush1.msra.mxu0 0.0
      %2929 = vmatprep.subr.mxu0 0.0
      %2930 = vmatpush1.msra.mxu0 0.0
      %2931 = vmatprep.subr.mxu0 0.0
      %2932 = vmatpush1.msra.mxu0 0.0
      %2933 = vmatprep.subr.mxu0 0.0
      %2934 = vmatpush1.msra.mxu0 0.0
      %2935 = vmatprep.mubr.f32.mxu0 0.0
      %2936 = vmatmul.mubr.f32.gmra.mrb[0].mxu0 %v2736
      %v2937 = vpop.f32.mrb[0].mxu0
      %v2938 = vadd.f32 0.0, %v2937
      %v2939 = vpop.f32.mrb[0].mxu0
      %2940 = vdwg.mxu0
      %2941 = vmatprep.subr.mxu0 0.0
      %2942 = vmatpush1.msra.mxu0 %v2769
      %2943 = vmatprep.subr.mxu0 0.0
      %2944 = vmatpush1.msra.mxu0 %v2770
      %2945 = vmatprep.subr.mxu0 0.0
      %2946 = vmatpush1.msra.mxu0 %v2771
      %2947 = vmatprep.subr.mxu0 0.0
      %2948 = vmatpush1.msra.mxu0 %v2772
      %2949 = vmatprep.subr.mxu0 0.0
      %2950 = vmatpush1.msra.mxu0 %v2773
      %2951 = vmatprep.subr.mxu0 0.0
      %2952 = vmatpush1.msra.mxu0 %v2774
      %2953 = vmatprep.subr.mxu0 0.0
      %2954 = vmatpush1.msra.mxu0 %v2775
      %2955 = vmatprep.subr.mxu0 0.0
      %2956 = vmatpush1.msra.mxu0 %v2776
      %2957 = vmatprep.subr.mxu0 0.0
      %2958 = vmatpush1.msra.mxu0 %v2777
      %2959 = vmatprep.subr.mxu0 0.0
      %2960 = vmatpush1.msra.mxu0 %v2778
      %2961 = vmatprep.subr.mxu0 0.0
      %2962 = vmatpush1.msra.mxu0 %v2779
      %2963 = vmatprep.subr.mxu0 0.0
      %2964 = vmatpush1.msra.mxu0 %v2780
      %2965 = vmatprep.subr.mxu0 0.0
      %2966 = vmatpush1.msra.mxu0 %v2781
      %2967 = vmatprep.subr.mxu0 0.0
      %2968 = vmatpush1.msra.mxu0 %v2782
      %2969 = vmatprep.subr.mxu0 0.0
      %2970 = vmatpush1.msra.mxu0 %v2783
      %2971 = vmatprep.subr.mxu0 0.0
      %2972 = vmatpush1.msra.mxu0 %v2784
      %2973 = vmatprep.subr.mxu0 0.0
      %2974 = vmatpush1.msra.mxu0 0.0
      %2975 = vmatprep.subr.mxu0 0.0
      %2976 = vmatpush1.msra.mxu0 0.0
      %2977 = vmatprep.subr.mxu0 0.0
      %2978 = vmatpush1.msra.mxu0 0.0
      %2979 = vmatprep.subr.mxu0 0.0
      %2980 = vmatpush1.msra.mxu0 0.0
      %2981 = vmatprep.subr.mxu0 0.0
      %2982 = vmatpush1.msra.mxu0 0.0
      %2983 = vmatprep.subr.mxu0 0.0
      %2984 = vmatpush1.msra.mxu0 0.0
      %2985 = vmatprep.subr.mxu0 0.0
      %2986 = vmatpush1.msra.mxu0 0.0
      %2987 = vmatprep.subr.mxu0 0.0
      %2988 = vmatpush1.msra.mxu0 0.0
      %2989 = vmatprep.subr.mxu0 0.0
      %2990 = vmatpush1.msra.mxu0 0.0
      %2991 = vmatprep.subr.mxu0 0.0
      %2992 = vmatpush1.msra.mxu0 0.0
      %2993 = vmatprep.subr.mxu0 0.0
      %2994 = vmatpush1.msra.mxu0 0.0
      %2995 = vmatprep.subr.mxu0 0.0
      %2996 = vmatpush1.msra.mxu0 0.0
      %2997 = vmatprep.subr.mxu0 0.0
      %2998 = vmatpush1.msra.mxu0 0.0
      %2999 = vmatprep.subr.mxu0 0.0
      %3000 = vmatpush1.msra.mxu0 0.0
      %3001 = vmatprep.subr.mxu0 0.0
      %3002 = vmatpush1.msra.mxu0 0.0
      %3003 = vmatprep.subr.mxu0 0.0
      %3004 = vmatpush1.msra.mxu0 0.0
      %3005 = vmatprep.mubr.f32.mxu0 0.0
      %3006 = vmatmul.mubr.f32.gmra.mrb[0].mxu0 %v2736
      %v3007 = vpop.f32.mrb[0].mxu0
      %v3008 = vadd.f32 0.0, %v3007
      %v3009 = vpop.f32.mrb[0].mxu0
      %3010 = vdwg.mxu0
      %3011 = vmatprep.subr.mxu0 0.0
      %3012 = vmatpush1.msra.mxu0 %v2785
      %3013 = vmatprep.subr.mxu0 0.0
      %3014 = vmatpush1.msra.mxu0 %v2786
      %3015 = vmatprep.subr.mxu0 0.0
      %3016 = vmatpush1.msra.mxu0 %v2787
      %3017 = vmatprep.subr.mxu0 0.0
      %3018 = vmatpush1.msra.mxu0 %v2788
      %3019 = vmatprep.subr.mxu0 0.0
      %3020 = vmatpush1.msra.mxu0 %v2789
      %3021 = vmatprep.subr.mxu0 0.0
      %3022 = vmatpush1.msra.mxu0 %v2790
      %3023 = vmatprep.subr.mxu0 0.0
      %3024 = vmatpush1.msra.mxu0 %v2791
      %3025 = vmatprep.subr.mxu0 0.0
      %3026 = vmatpush1.msra.mxu0 %v2792
      %3027 = vmatprep.subr.mxu0 0.0
      %3028 = vmatpush1.msra.mxu0 %v2793
      %3029 = vmatprep.subr.mxu0 0.0
      %3030 = vmatpush1.msra.mxu0 %v2794
      %3031 = vmatprep.subr.mxu0 0.0
      %3032 = vmatpush1.msra.mxu0 %v2795
      %3033 = vmatprep.subr.mxu0 0.0
      %3034 = vmatpush1.msra.mxu0 %v2796
      %3035 = vmatprep.subr.mxu0 0.0
      %3036 = vmatpush1.msra.mxu0 %v2797
      %3037 = vmatprep.subr.mxu0 0.0
      %3038 = vmatpush1.msra.mxu0 %v2798
      %3039 = vmatprep.subr.mxu0 0.0
      %3040 = vmatpush1.msra.mxu0 %v2799
      %3041 = vmatprep.subr.mxu0 0.0
      %3042 = vmatpush1.msra.mxu0 %v2800
      %3043 = vmatprep.subr.mxu0 0.0
      %3044 = vmatpush1.msra.mxu0 0.0
      %3045 = vmatprep.subr.mxu0 0.0
      %3046 = vmatpush1.msra.mxu0 0.0
      %3047 = vmatprep.subr.mxu0 0.0
      %3048 = vmatpush1.msra.mxu0 0.0
      %3049 = vmatprep.subr.mxu0 0.0
      %3050 = vmatpush1.msra.mxu0 0.0
      %3051 = vmatprep.subr.mxu0 0.0
      %3052 = vmatpush1.msra.mxu0 0.0
      %3053 = vmatprep.subr.mxu0 0.0
      %3054 = vmatpush1.msra.mxu0 0.0
      %3055 = vmatprep.subr.mxu0 0.0
      %3056 = vmatpush1.msra.mxu0 0.0
      %3057 = vmatprep.subr.mxu0 0.0
      %3058 = vmatpush1.msra.mxu0 0.0
      %3059 = vmatprep.subr.mxu0 0.0
      %3060 = vmatpush1.msra.mxu0 0.0
      %3061 = vmatprep.subr.mxu0 0.0
      %3062 = vmatpush1.msra.mxu0 0.0
      %3063 = vmatprep.subr.mxu0 0.0
      %3064 = vmatpush1.msra.mxu0 0.0
      %3065 = vmatprep.subr.mxu0 0.0
      %3066 = vmatpush1.msra.mxu0 0.0
      %3067 = vmatprep.subr.mxu0 0.0
      %3068 = vmatpush1.msra.mxu0 0.0
      %3069 = vmatprep.subr.mxu0 0.0
      %3070 = vmatpush1.msra.mxu0 0.0
      %3071 = vmatprep.subr.mxu0 0.0
      %3072 = vmatpush1.msra.mxu0 0.0
      %3073 = vmatprep.subr.mxu0 0.0
      %3074 = vmatpush1.msra.mxu0 0.0
      %3075 = vmatprep.mubr.f32.mxu0 0.0
      %3076 = vmatmul.mubr.f32.gmra.mrb[0].mxu0 %v2736
      %v3077 = vpop.f32.mrb[0].mxu0
      %v3078 = vadd.f32 0.0, %v3077
      %v3079 = vpop.f32.mrb[0].mxu0
      %3080 = vdwg.mxu0
      %v3081 = vld [vmem:[%s9] sm:$0xff]
      %v3082 = vld [vmem:[%s9 + $0x8] sm:$0xff]
      %v3083 = vld [vmem:[%s9 + $0x10] sm:$0xff]
      %v3084 = vld [vmem:[%s9 + $0x18] sm:$0xff]
      %v3085 = vld [vmem:[%s9 + $0x20] sm:$0xff]
      %v3086 = vld [vmem:[%s9 + $0x28] sm:$0xff]
      %v3087 = vld [vmem:[%s9 + $0x30] sm:$0xff]
      %v3088 = vld [vmem:[%s9 + $0x38] sm:$0xff]
      %v3089 = vld [vmem:[%s9 + $0x40] sm:$0xff]
      %v3090 = vld [vmem:[%s9 + $0x48] sm:$0xff]
      %v3091 = vld [vmem:[%s9 + $0x50] sm:$0xff]
      %v3092 = vld [vmem:[%s9 + $0x58] sm:$0xff]
      %v3093 = vld [vmem:[%s9 + $0x60] sm:$0xff]
      %v3094 = vld [vmem:[%s9 + $0x68] sm:$0xff]
      %v3095 = vld [vmem:[%s9 + $0x70] sm:$0xff]
      %v3096 = vld [vmem:[%s9 + $0x78] sm:$0xff]
      %v3097 = vld [vmem:[%s9 + $0x80] sm:$0xff]
      %v3098 = vld [vmem:[%s9 + $0x88] sm:$0xff]
      %v3099 = vld [vmem:[%s9 + $0x90] sm:$0xff]
      %v3100 = vld [vmem:[%s9 + $0x98] sm:$0xff]
      %v3101 = vld [vmem:[%s9 + $0xa0] sm:$0xff]
      %v3102 = vld [vmem:[%s9 + $0xa8] sm:$0xff]
      %v3103 = vld [vmem:[%s9 + $0xb0] sm:$0xff]
      %v3104 = vld [vmem:[%s9 + $0xb8] sm:$0xff]
      %v3105 = vld [vmem:[%s9 + $0xc0] sm:$0xff]
      %v3106 = vld [vmem:[%s9 + $0xc8] sm:$0xff]
      %v3107 = vld [vmem:[%s9 + $0xd0] sm:$0xff]
      %v3108 = vld [vmem:[%s9 + $0xd8] sm:$0xff]
      %v3109 = vld [vmem:[%s9 + $0xe0] sm:$0xff]
      %v3110 = vld [vmem:[%s9 + $0xe8] sm:$0xff]
      %v3111 = vld [vmem:[%s9 + $0xf0] sm:$0xff]
      %v3112 = vld [vmem:[%s9 + $0xf8] sm:$0xff]
      %v3113 = vld [vmem:[%s9 + $0x100] sm:$0xff]
      %v3114 = vld [vmem:[%s9 + $0x108] sm:$0xff]
      %v3115 = vld [vmem:[%s9 + $0x110] sm:$0xff]
      %v3116 = vld [vmem:[%s9 + $0x118] sm:$0xff]
      %v3117 = vld [vmem:[%s9 + $0x120] sm:$0xff]
      %v3118 = vld [vmem:[%s9 + $0x128] sm:$0xff]
      %v3119 = vld [vmem:[%s9 + $0x130] sm:$0xff]
      %v3120 = vld [vmem:[%s9 + $0x138] sm:$0xff]
      %v3121 = vld [vmem:[%s9 + $0x140] sm:$0xff]
      %v3122 = vld [vmem:[%s9 + $0x148] sm:$0xff]
      %v3123 = vld [vmem:[%s9 + $0x150] sm:$0xff]
      %v3124 = vld [vmem:[%s9 + $0x158] sm:$0xff]
      %v3125 = vld [vmem:[%s9 + $0x160] sm:$0xff]
      %v3126 = vld [vmem:[%s9 + $0x168] sm:$0xff]
      %v3127 = vld [vmem:[%s9 + $0x170] sm:$0xff]
      %v3128 = vld [vmem:[%s9 + $0x178] sm:$0xff]
      %v3129 = vld [vmem:[%s9 + $0x180] sm:$0xff]
      %v3130 = vld [vmem:[%s9 + $0x188] sm:$0xff]
      %v3131 = vld [vmem:[%s9 + $0x190] sm:$0xff]
      %v3132 = vld [vmem:[%s9 + $0x198] sm:$0xff]
      %v3133 = vld [vmem:[%s9 + $0x1a0] sm:$0xff]
      %v3134 = vld [vmem:[%s9 + $0x1a8] sm:$0xff]
      %v3135 = vld [vmem:[%s9 + $0x1b0] sm:$0xff]
      %v3136 = vld [vmem:[%s9 + $0x1b8] sm:$0xff]
      %v3137 = vld [vmem:[%s9 + $0x1c0] sm:$0xff]
      %v3138 = vld [vmem:[%s9 + $0x1c8] sm:$0xff]
      %v3139 = vld [vmem:[%s9 + $0x1d0] sm:$0xff]
      %v3140 = vld [vmem:[%s9 + $0x1d8] sm:$0xff]
      %v3141 = vld [vmem:[%s9 + $0x1e0] sm:$0xff]
      %v3142 = vld [vmem:[%s9 + $0x1e8] sm:$0xff]
      %v3143 = vld [vmem:[%s9 + $0x1f0] sm:$0xff]
      %v3144 = vld [vmem:[%s9 + $0x1f8] sm:$0xff]
      %3145 = vmatprep.subr.mxu0 0.0
      %3146 = vmatpush1.msra.mxu0 %v3081
      %3147 = vmatprep.subr.mxu0 0.0
      %3148 = vmatpush1.msra.mxu0 %v3082
      %3149 = vmatprep.subr.mxu0 0.0
      %3150 = vmatpush1.msra.mxu0 %v3083
      %3151 = vmatprep.subr.mxu0 0.0
      %3152 = vmatpush1.msra.mxu0 %v3084
      %3153 = vmatprep.subr.mxu0 0.0
      %3154 = vmatpush1.msra.mxu0 %v3085
      %3155 = vmatprep.subr.mxu0 0.0
      %3156 = vmatpush1.msra.mxu0 %v3086
      %3157 = vmatprep.subr.mxu0 0.0
      %3158 = vmatpush1.msra.mxu0 %v3087
      %3159 = vmatprep.subr.mxu0 0.0
      %3160 = vmatpush1.msra.mxu0 %v3088
      %3161 = vmatprep.subr.mxu0 0.0
      %3162 = vmatpush1.msra.mxu0 %v3089
      %3163 = vmatprep.subr.mxu0 0.0
      %3164 = vmatpush1.msra.mxu0 %v3090
      %3165 = vmatprep.subr.mxu0 0.0
      %3166 = vmatpush1.msra.mxu0 %v3091
      %3167 = vmatprep.subr.mxu0 0.0
      %3168 = vmatpush1.msra.mxu0 %v3092
      %3169 = vmatprep.subr.mxu0 0.0
      %3170 = vmatpush1.msra.mxu0 %v3093
      %3171 = vmatprep.subr.mxu0 0.0
      %3172 = vmatpush1.msra.mxu0 %v3094
      %3173 = vmatprep.subr.mxu0 0.0
      %3174 = vmatpush1.msra.mxu0 %v3095
      %3175 = vmatprep.subr.mxu0 0.0
      %3176 = vmatpush1.msra.mxu0 %v3096
      %3177 = vmatprep.subr.mxu0 0.0
      %3178 = vmatpush1.msra.mxu0 0.0
      %3179 = vmatprep.subr.mxu0 0.0
      %3180 = vmatpush1.msra.mxu0 0.0
      %3181 = vmatprep.subr.mxu0 0.0
      %3182 = vmatpush1.msra.mxu0 0.0
      %3183 = vmatprep.subr.mxu0 0.0
      %3184 = vmatpush1.msra.mxu0 0.0
      %3185 = vmatprep.subr.mxu0 0.0
      %3186 = vmatpush1.msra.mxu0 0.0
      %3187 = vmatprep.subr.mxu0 0.0
      %3188 = vmatpush1.msra.mxu0 0.0
      %3189 = vmatprep.subr.mxu0 0.0
      %3190 = vmatpush1.msra.mxu0 0.0
      %3191 = vmatprep.subr.mxu0 0.0
      %3192 = vmatpush1.msra.mxu0 0.0
      %3193 = vmatprep.subr.mxu0 0.0
      %3194 = vmatpush1.msra.mxu0 0.0
      %3195 = vmatprep.subr.mxu0 0.0
      %3196 = vmatpush1.msra.mxu0 0.0
      %3197 = vmatprep.subr.mxu0 0.0
      %3198 = vmatpush1.msra.mxu0 0.0
      %3199 = vmatprep.subr.mxu0 0.0
      %3200 = vmatpush1.msra.mxu0 0.0
      %3201 = vmatprep.subr.mxu0 0.0
      %3202 = vmatpush1.msra.mxu0 0.0
      %3203 = vmatprep.subr.mxu0 0.0
      %3204 = vmatpush1.msra.mxu0 0.0
      %3205 = vmatprep.subr.mxu0 0.0
      %3206 = vmatpush1.msra.mxu0 0.0
      %3207 = vmatprep.subr.mxu0 0.0
      %3208 = vmatpush1.msra.mxu0 0.0
      %3209 = vmatprep.mubr.f32.mxu0 0.0
      %3210 = vmatmul.mubr.f32.gmra.mrb[0].mxu0 %v706
      %v3211 = vpop.f32.mrb[0].mxu0
      %v3212 = vadd.f32 0.0, %v3211
      %v3213 = vpop.f32.mrb[0].mxu0
      %3214 = vdwg.mxu0
      %3215 = vmatprep.subr.mxu0 0.0
      %3216 = vmatpush1.msra.mxu0 %v3097
      %3217 = vmatprep.subr.mxu0 0.0
      %3218 = vmatpush1.msra.mxu0 %v3098
      %3219 = vmatprep.subr.mxu0 0.0
      %3220 = vmatpush1.msra.mxu0 %v3099
      %3221 = vmatprep.subr.mxu0 0.0
      %3222 = vmatpush1.msra.mxu0 %v3100
      %3223 = vmatprep.subr.mxu0 0.0
      %3224 = vmatpush1.msra.mxu0 %v3101
      %3225 = vmatprep.subr.mxu0 0.0
      %3226 = vmatpush1.msra.mxu0 %v3102
      %3227 = vmatprep.subr.mxu0 0.0
      %3228 = vmatpush1.msra.mxu0 %v3103
      %3229 = vmatprep.subr.mxu0 0.0
      %3230 = vmatpush1.msra.mxu0 %v3104
      %3231 = vmatprep.subr.mxu0 0.0
      %3232 = vmatpush1.msra.mxu0 %v3105
      %3233 = vmatprep.subr.mxu0 0.0
      %3234 = vmatpush1.msra.mxu0 %v3106
      %3235 = vmatprep.subr.mxu0 0.0
      %3236 = vmatpush1.msra.mxu0 %v3107
      %3237 = vmatprep.subr.mxu0 0.0
      %3238 = vmatpush1.msra.mxu0 %v3108
      %3239 = vmatprep.subr.mxu0 0.0
      %3240 = vmatpush1.msra.mxu0 %v3109
      %3241 = vmatprep.subr.mxu0 0.0
      %3242 = vmatpush1.msra.mxu0 %v3110
      %3243 = vmatprep.subr.mxu0 0.0
      %3244 = vmatpush1.msra.mxu0 %v3111
      %3245 = vmatprep.subr.mxu0 0.0
      %3246 = vmatpush1.msra.mxu0 %v3112
      %3247 = vmatprep.subr.mxu0 0.0
      %3248 = vmatpush1.msra.mxu0 0.0
      %3249 = vmatprep.subr.mxu0 0.0
      %3250 = vmatpush1.msra.mxu0 0.0
      %3251 = vmatprep.subr.mxu0 0.0
      %3252 = vmatpush1.msra.mxu0 0.0
      %3253 = vmatprep.subr.mxu0 0.0
      %3254 = vmatpush1.msra.mxu0 0.0
      %3255 = vmatprep.subr.mxu0 0.0
      %3256 = vmatpush1.msra.mxu0 0.0
      %3257 = vmatprep.subr.mxu0 0.0
      %3258 = vmatpush1.msra.mxu0 0.0
      %3259 = vmatprep.subr.mxu0 0.0
      %3260 = vmatpush1.msra.mxu0 0.0
      %3261 = vmatprep.subr.mxu0 0.0
      %3262 = vmatpush1.msra.mxu0 0.0
      %3263 = vmatprep.subr.mxu0 0.0
      %3264 = vmatpush1.msra.mxu0 0.0
      %3265 = vmatprep.subr.mxu0 0.0
      %3266 = vmatpush1.msra.mxu0 0.0
      %3267 = vmatprep.subr.mxu0 0.0
      %3268 = vmatpush1.msra.mxu0 0.0
      %3269 = vmatprep.subr.mxu0 0.0
      %3270 = vmatpush1.msra.mxu0 0.0
      %3271 = vmatprep.subr.mxu0 0.0
      %3272 = vmatpush1.msra.mxu0 0.0
      %3273 = vmatprep.subr.mxu0 0.0
      %3274 = vmatpush1.msra.mxu0 0.0
      %3275 = vmatprep.subr.mxu0 0.0
      %3276 = vmatpush1.msra.mxu0 0.0
      %3277 = vmatprep.subr.mxu0 0.0
      %3278 = vmatpush1.msra.mxu0 0.0
      %3279 = vmatprep.mubr.f32.mxu0 0.0
      %3280 = vmatmul.mubr.f32.gmra.mrb[0].mxu0 %v706
      %v3281 = vpop.f32.mrb[0].mxu0
      %v3282 = vadd.f32 0.0, %v3281
      %v3283 = vpop.f32.mrb[0].mxu0
      %3284 = vdwg.mxu0
      %3285 = vmatprep.subr.mxu0 0.0
      %3286 = vmatpush1.msra.mxu0 %v3113
      %3287 = vmatprep.subr.mxu0 0.0
      %3288 = vmatpush1.msra.mxu0 %v3114
      %3289 = vmatprep.subr.mxu0 0.0
      %3290 = vmatpush1.msra.mxu0 %v3115
      %3291 = vmatprep.subr.mxu0 0.0
      %3292 = vmatpush1.msra.mxu0 %v3116
      %3293 = vmatprep.subr.mxu0 0.0
      %3294 = vmatpush1.msra.mxu0 %v3117
      %3295 = vmatprep.subr.mxu0 0.0
      %3296 = vmatpush1.msra.mxu0 %v3118
      %3297 = vmatprep.subr.mxu0 0.0
      %3298 = vmatpush1.msra.mxu0 %v3119
      %3299 = vmatprep.subr.mxu0 0.0
      %3300 = vmatpush1.msra.mxu0 %v3120
      %3301 = vmatprep.subr.mxu0 0.0
      %3302 = vmatpush1.msra.mxu0 %v3121
      %3303 = vmatprep.subr.mxu0 0.0
      %3304 = vmatpush1.msra.mxu0 %v3122
      %3305 = vmatprep.subr.mxu0 0.0
      %3306 = vmatpush1.msra.mxu0 %v3123
      %3307 = vmatprep.subr.mxu0 0.0
      %3308 = vmatpush1.msra.mxu0 %v3124
      %3309 = vmatprep.subr.mxu0 0.0
      %3310 = vmatpush1.msra.mxu0 %v3125
      %3311 = vmatprep.subr.mxu0 0.0
      %3312 = vmatpush1.msra.mxu0 %v3126
      %3313 = vmatprep.subr.mxu0 0.0
      %3314 = vmatpush1.msra.mxu0 %v3127
      %3315 = vmatprep.subr.mxu0 0.0
      %3316 = vmatpush1.msra.mxu0 %v3128
      %3317 = vmatprep.subr.mxu0 0.0
      %3318 = vmatpush1.msra.mxu0 0.0
      %3319 = vmatprep.subr.mxu0 0.0
      %3320 = vmatpush1.msra.mxu0 0.0
      %3321 = vmatprep.subr.mxu0 0.0
      %3322 = vmatpush1.msra.mxu0 0.0
      %3323 = vmatprep.subr.mxu0 0.0
      %3324 = vmatpush1.msra.mxu0 0.0
      %3325 = vmatprep.subr.mxu0 0.0
      %3326 = vmatpush1.msra.mxu0 0.0
      %3327 = vmatprep.subr.mxu0 0.0
      %3328 = vmatpush1.msra.mxu0 0.0
      %3329 = vmatprep.subr.mxu0 0.0
      %3330 = vmatpush1.msra.mxu0 0.0
      %3331 = vmatprep.subr.mxu0 0.0
      %3332 = vmatpush1.msra.mxu0 0.0
      %3333 = vmatprep.subr.mxu0 0.0
      %3334 = vmatpush1.msra.mxu0 0.0
      %3335 = vmatprep.subr.mxu0 0.0
      %3336 = vmatpush1.msra.mxu0 0.0
      %3337 = vmatprep.subr.mxu0 0.0
      %3338 = vmatpush1.msra.mxu0 0.0
      %3339 = vmatprep.subr.mxu0 0.0
      %3340 = vmatpush1.msra.mxu0 0.0
      %3341 = vmatprep.subr.mxu0 0.0
      %3342 = vmatpush1.msra.mxu0 0.0
      %3343 = vmatprep.subr.mxu0 0.0
      %3344 = vmatpush1.msra.mxu0 0.0
      %3345 = vmatprep.subr.mxu0 0.0
      %3346 = vmatpush1.msra.mxu0 0.0
      %3347 = vmatprep.subr.mxu0 0.0
      %3348 = vmatpush1.msra.mxu0 0.0
      %3349 = vmatprep.mubr.f32.mxu0 0.0
      %3350 = vmatmul.mubr.f32.gmra.mrb[0].mxu0 %v706
      %v3351 = vpop.f32.mrb[0].mxu0
      %v3352 = vadd.f32 0.0, %v3351
      %v3353 = vpop.f32.mrb[0].mxu0
      %3354 = vdwg.mxu0
      %3355 = vmatprep.subr.mxu0 0.0
      %3356 = vmatpush1.msra.mxu0 %v3129
      %3357 = vmatprep.subr.mxu0 0.0
      %3358 = vmatpush1.msra.mxu0 %v3130
      %3359 = vmatprep.subr.mxu0 0.0
      %3360 = vmatpush1.msra.mxu0 %v3131
      %3361 = vmatprep.subr.mxu0 0.0
      %3362 = vmatpush1.msra.mxu0 %v3132
      %3363 = vmatprep.subr.mxu0 0.0
      %3364 = vmatpush1.msra.mxu0 %v3133
      %3365 = vmatprep.subr.mxu0 0.0
      %3366 = vmatpush1.msra.mxu0 %v3134
      %3367 = vmatprep.subr.mxu0 0.0
      %3368 = vmatpush1.msra.mxu0 %v3135
      %3369 = vmatprep.subr.mxu0 0.0
      %3370 = vmatpush1.msra.mxu0 %v3136
      %3371 = vmatprep.subr.mxu0 0.0
      %3372 = vmatpush1.msra.mxu0 %v3137
      %3373 = vmatprep.subr.mxu0 0.0
      %3374 = vmatpush1.msra.mxu0 %v3138
      %3375 = vmatprep.subr.mxu0 0.0
      %3376 = vmatpush1.msra.mxu0 %v3139
      %3377 = vmatprep.subr.mxu0 0.0
      %3378 = vmatpush1.msra.mxu0 %v3140
      %3379 = vmatprep.subr.mxu0 0.0
      %3380 = vmatpush1.msra.mxu0 %v3141
      %3381 = vmatprep.subr.mxu0 0.0
      %3382 = vmatpush1.msra.mxu0 %v3142
      %3383 = vmatprep.subr.mxu0 0.0
      %3384 = vmatpush1.msra.mxu0 %v3143
      %3385 = vmatprep.subr.mxu0 0.0
      %3386 = vmatpush1.msra.mxu0 %v3144
      %3387 = vmatprep.subr.mxu0 0.0
      %3388 = vmatpush1.msra.mxu0 0.0
      %3389 = vmatprep.subr.mxu0 0.0
      %3390 = vmatpush1.msra.mxu0 0.0
      %3391 = vmatprep.subr.mxu0 0.0
      %3392 = vmatpush1.msra.mxu0 0.0
      %3393 = vmatprep.subr.mxu0 0.0
      %3394 = vmatpush1.msra.mxu0 0.0
      %3395 = vmatprep.subr.mxu0 0.0
      %3396 = vmatpush1.msra.mxu0 0.0
      %3397 = vmatprep.subr.mxu0 0.0
      %3398 = vmatpush1.msra.mxu0 0.0
      %3399 = vmatprep.subr.mxu0 0.0
      %3400 = vmatpush1.msra.mxu0 0.0
      %3401 = vmatprep.subr.mxu0 0.0
      %3402 = vmatpush1.msra.mxu0 0.0
      %3403 = vmatprep.subr.mxu0 0.0
      %3404 = vmatpush1.msra.mxu0 0.0
      %3405 = vmatprep.subr.mxu0 0.0
      %3406 = vmatpush1.msra.mxu0 0.0
      %3407 = vmatprep.subr.mxu0 0.0
      %3408 = vmatpush1.msra.mxu0 0.0
      %3409 = vmatprep.subr.mxu0 0.0
      %3410 = vmatpush1.msra.mxu0 0.0
      %3411 = vmatprep.subr.mxu0 0.0
      %3412 = vmatpush1.msra.mxu0 0.0
      %3413 = vmatprep.subr.mxu0 0.0
      %3414 = vmatpush1.msra.mxu0 0.0
      %3415 = vmatprep.subr.mxu0 0.0
      %3416 = vmatpush1.msra.mxu0 0.0
      %3417 = vmatprep.subr.mxu0 0.0
      %3418 = vmatpush1.msra.mxu0 0.0
      %3419 = vmatprep.mubr.f32.mxu0 0.0
      %3420 = vmatmul.mubr.f32.gmra.mrb[0].mxu0 %v706
      %v3421 = vpop.f32.mrb[0].mxu0
      %v3422 = vadd.f32 0.0, %v3421
      %v3423 = vpop.f32.mrb[0].mxu0
      %3424 = vdwg.mxu0
      %v3425 = vld [vmem:[%s10] sm:$0xff]
      %v3426 = vld [vmem:[%s10 + $0x8] sm:$0xff]
      %v3427 = vld [vmem:[%s10 + $0x10] sm:$0xff]
      %v3428 = vld [vmem:[%s10 + $0x18] sm:$0xff]
      %v3429 = vld [vmem:[%s10 + $0x20] sm:$0xff]
      %v3430 = vld [vmem:[%s10 + $0x28] sm:$0xff]
      %v3431 = vld [vmem:[%s10 + $0x30] sm:$0xff]
      %v3432 = vld [vmem:[%s10 + $0x38] sm:$0xff]
      %v3433 = vld [vmem:[%s10 + $0x40] sm:$0xff]
      %v3434 = vld [vmem:[%s10 + $0x48] sm:$0xff]
      %v3435 = vld [vmem:[%s10 + $0x50] sm:$0xff]
      %v3436 = vld [vmem:[%s10 + $0x58] sm:$0xff]
      %v3437 = vld [vmem:[%s10 + $0x60] sm:$0xff]
      %v3438 = vld [vmem:[%s10 + $0x68] sm:$0xff]
      %v3439 = vld [vmem:[%s10 + $0x70] sm:$0xff]
      %v3440 = vld [vmem:[%s10 + $0x78] sm:$0xff]
      %v3441 = vld [vmem:[%s10 + $0x80] sm:$0xff]
      %v3442 = vld [vmem:[%s10 + $0x88] sm:$0xff]
      %v3443 = vld [vmem:[%s10 + $0x90] sm:$0xff]
      %v3444 = vld [vmem:[%s10 + $0x98] sm:$0xff]
      %v3445 = vld [vmem:[%s10 + $0xa0] sm:$0xff]
      %v3446 = vld [vmem:[%s10 + $0xa8] sm:$0xff]
      %v3447 = vld [vmem:[%s10 + $0xb0] sm:$0xff]
      %v3448 = vld [vmem:[%s10 + $0xb8] sm:$0xff]
      %v3449 = vld [vmem:[%s10 + $0xc0] sm:$0xff]
      %v3450 = vld [vmem:[%s10 + $0xc8] sm:$0xff]
      %v3451 = vld [vmem:[%s10 + $0xd0] sm:$0xff]
      %v3452 = vld [vmem:[%s10 + $0xd8] sm:$0xff]
      %v3453 = vld [vmem:[%s10 + $0xe0] sm:$0xff]
      %v3454 = vld [vmem:[%s10 + $0xe8] sm:$0xff]
      %v3455 = vld [vmem:[%s10 + $0xf0] sm:$0xff]
      %v3456 = vld [vmem:[%s10 + $0xf8] sm:$0xff]
      %v3457 = vld [vmem:[%s10 + $0x100] sm:$0xff]
      %v3458 = vld [vmem:[%s10 + $0x108] sm:$0xff]
      %v3459 = vld [vmem:[%s10 + $0x110] sm:$0xff]
      %v3460 = vld [vmem:[%s10 + $0x118] sm:$0xff]
      %v3461 = vld [vmem:[%s10 + $0x120] sm:$0xff]
      %v3462 = vld [vmem:[%s10 + $0x128] sm:$0xff]
      %v3463 = vld [vmem:[%s10 + $0x130] sm:$0xff]
      %v3464 = vld [vmem:[%s10 + $0x138] sm:$0xff]
      %v3465 = vld [vmem:[%s10 + $0x140] sm:$0xff]
      %v3466 = vld [vmem:[%s10 + $0x148] sm:$0xff]
      %v3467 = vld [vmem:[%s10 + $0x150] sm:$0xff]
      %v3468 = vld [vmem:[%s10 + $0x158] sm:$0xff]
      %v3469 = vld [vmem:[%s10 + $0x160] sm:$0xff]
      %v3470 = vld [vmem:[%s10 + $0x168] sm:$0xff]
      %v3471 = vld [vmem:[%s10 + $0x170] sm:$0xff]
      %v3472 = vld [vmem:[%s10 + $0x178] sm:$0xff]
      %v3473 = vld [vmem:[%s10 + $0x180] sm:$0xff]
      %v3474 = vld [vmem:[%s10 + $0x188] sm:$0xff]
      %v3475 = vld [vmem:[%s10 + $0x190] sm:$0xff]
      %v3476 = vld [vmem:[%s10 + $0x198] sm:$0xff]
      %v3477 = vld [vmem:[%s10 + $0x1a0] sm:$0xff]
      %v3478 = vld [vmem:[%s10 + $0x1a8] sm:$0xff]
      %v3479 = vld [vmem:[%s10 + $0x1b0] sm:$0xff]
      %v3480 = vld [vmem:[%s10 + $0x1b8] sm:$0xff]
      %v3481 = vld [vmem:[%s10 + $0x1c0] sm:$0xff]
      %v3482 = vld [vmem:[%s10 + $0x1c8] sm:$0xff]
      %v3483 = vld [vmem:[%s10 + $0x1d0] sm:$0xff]
      %v3484 = vld [vmem:[%s10 + $0x1d8] sm:$0xff]
      %v3485 = vld [vmem:[%s10 + $0x1e0] sm:$0xff]
      %v3486 = vld [vmem:[%s10 + $0x1e8] sm:$0xff]
      %v3487 = vld [vmem:[%s10 + $0x1f0] sm:$0xff]
      %v3488 = vld [vmem:[%s10 + $0x1f8] sm:$0xff]
      %3489 = vmatprep.subr.mxu0 0.0
      %3490 = vmatpush1.msra.mxu0 %v3425
      %3491 = vmatprep.subr.mxu0 0.0
      %3492 = vmatpush1.msra.mxu0 %v3426
      %3493 = vmatprep.subr.mxu0 0.0
      %3494 = vmatpush1.msra.mxu0 %v3427
      %3495 = vmatprep.subr.mxu0 0.0
      %3496 = vmatpush1.msra.mxu0 %v3428
      %3497 = vmatprep.subr.mxu0 0.0
      %3498 = vmatpush1.msra.mxu0 %v3429
      %3499 = vmatprep.subr.mxu0 0.0
      %3500 = vmatpush1.msra.mxu0 %v3430
      %3501 = vmatprep.subr.mxu0 0.0
      %3502 = vmatpush1.msra.mxu0 %v3431
      %3503 = vmatprep.subr.mxu0 0.0
      %3504 = vmatpush1.msra.mxu0 %v3432
      %3505 = vmatprep.subr.mxu0 0.0
      %3506 = vmatpush1.msra.mxu0 %v3433
      %3507 = vmatprep.subr.mxu0 0.0
      %3508 = vmatpush1.msra.mxu0 %v3434
      %3509 = vmatprep.subr.mxu0 0.0
      %3510 = vmatpush1.msra.mxu0 %v3435
      %3511 = vmatprep.subr.mxu0 0.0
      %3512 = vmatpush1.msra.mxu0 %v3436
      %3513 = vmatprep.subr.mxu0 0.0
      %3514 = vmatpush1.msra.mxu0 %v3437
      %3515 = vmatprep.subr.mxu0 0.0
      %3516 = vmatpush1.msra.mxu0 %v3438
      %3517 = vmatprep.subr.mxu0 0.0
      %3518 = vmatpush1.msra.mxu0 %v3439
      %3519 = vmatprep.subr.mxu0 0.0
      %3520 = vmatpush1.msra.mxu0 %v3440
      %3521 = vmatprep.subr.mxu0 0.0
      %3522 = vmatpush1.msra.mxu0 0.0
      %3523 = vmatprep.subr.mxu0 0.0
      %3524 = vmatpush1.msra.mxu0 0.0
      %3525 = vmatprep.subr.mxu0 0.0
      %3526 = vmatpush1.msra.mxu0 0.0
      %3527 = vmatprep.subr.mxu0 0.0
      %3528 = vmatpush1.msra.mxu0 0.0
      %3529 = vmatprep.subr.mxu0 0.0
      %3530 = vmatpush1.msra.mxu0 0.0
      %3531 = vmatprep.subr.mxu0 0.0
      %3532 = vmatpush1.msra.mxu0 0.0
      %3533 = vmatprep.subr.mxu0 0.0
      %3534 = vmatpush1.msra.mxu0 0.0
      %3535 = vmatprep.subr.mxu0 0.0
      %3536 = vmatpush1.msra.mxu0 0.0
      %3537 = vmatprep.subr.mxu0 0.0
      %3538 = vmatpush1.msra.mxu0 0.0
      %3539 = vmatprep.subr.mxu0 0.0
      %3540 = vmatpush1.msra.mxu0 0.0
      %3541 = vmatprep.subr.mxu0 0.0
      %3542 = vmatpush1.msra.mxu0 0.0
      %3543 = vmatprep.subr.mxu0 0.0
      %3544 = vmatpush1.msra.mxu0 0.0
      %3545 = vmatprep.subr.mxu0 0.0
      %3546 = vmatpush1.msra.mxu0 0.0
      %3547 = vmatprep.subr.mxu0 0.0
      %3548 = vmatpush1.msra.mxu0 0.0
      %3549 = vmatprep.subr.mxu0 0.0
      %3550 = vmatpush1.msra.mxu0 0.0
      %3551 = vmatprep.subr.mxu0 0.0
      %3552 = vmatpush1.msra.mxu0 0.0
      %3553 = vmatprep.mubr.f32.mxu0 0.0
      %3554 = vmatmul.mubr.f32.gmra.mrb[0].mxu0 %v706
      %v3555 = vpop.f32.mrb[0].mxu0
      %v3556 = vadd.f32 0.0, %v3555
      %v3557 = vpop.f32.mrb[0].mxu0
      %3558 = vdwg.mxu0
      %3559 = vmatprep.subr.mxu0 0.0
      %3560 = vmatpush1.msra.mxu0 %v3441
      %3561 = vmatprep.subr.mxu0 0.0
      %3562 = vmatpush1.msra.mxu0 %v3442
      %3563 = vmatprep.subr.mxu0 0.0
      %3564 = vmatpush1.msra.mxu0 %v3443
      %3565 = vmatprep.subr.mxu0 0.0
      %3566 = vmatpush1.msra.mxu0 %v3444
      %3567 = vmatprep.subr.mxu0 0.0
      %3568 = vmatpush1.msra.mxu0 %v3445
      %3569 = vmatprep.subr.mxu0 0.0
      %3570 = vmatpush1.msra.mxu0 %v3446
      %3571 = vmatprep.subr.mxu0 0.0
      %3572 = vmatpush1.msra.mxu0 %v3447
      %3573 = vmatprep.subr.mxu0 0.0
      %3574 = vmatpush1.msra.mxu0 %v3448
      %3575 = vmatprep.subr.mxu0 0.0
      %3576 = vmatpush1.msra.mxu0 %v3449
      %3577 = vmatprep.subr.mxu0 0.0
      %3578 = vmatpush1.msra.mxu0 %v3450
      %3579 = vmatprep.subr.mxu0 0.0
      %3580 = vmatpush1.msra.mxu0 %v3451
      %3581 = vmatprep.subr.mxu0 0.0
      %3582 = vmatpush1.msra.mxu0 %v3452
      %3583 = vmatprep.subr.mxu0 0.0
      %3584 = vmatpush1.msra.mxu0 %v3453
      %3585 = vmatprep.subr.mxu0 0.0
      %3586 = vmatpush1.msra.mxu0 %v3454
      %3587 = vmatprep.subr.mxu0 0.0
      %3588 = vmatpush1.msra.mxu0 %v3455
      %3589 = vmatprep.subr.mxu0 0.0
      %3590 = vmatpush1.msra.mxu0 %v3456
      %3591 = vmatprep.subr.mxu0 0.0
      %3592 = vmatpush1.msra.mxu0 0.0
      %3593 = vmatprep.subr.mxu0 0.0
      %3594 = vmatpush1.msra.mxu0 0.0
      %3595 = vmatprep.subr.mxu0 0.0
      %3596 = vmatpush1.msra.mxu0 0.0
      %3597 = vmatprep.subr.mxu0 0.0
      %3598 = vmatpush1.msra.mxu0 0.0
      %3599 = vmatprep.subr.mxu0 0.0
      %3600 = vmatpush1.msra.mxu0 0.0
      %3601 = vmatprep.subr.mxu0 0.0
      %3602 = vmatpush1.msra.mxu0 0.0
      %3603 = vmatprep.subr.mxu0 0.0
      %3604 = vmatpush1.msra.mxu0 0.0
      %3605 = vmatprep.subr.mxu0 0.0
      %3606 = vmatpush1.msra.mxu0 0.0
      %3607 = vmatprep.subr.mxu0 0.0
      %3608 = vmatpush1.msra.mxu0 0.0
      %3609 = vmatprep.subr.mxu0 0.0
      %3610 = vmatpush1.msra.mxu0 0.0
      %3611 = vmatprep.subr.mxu0 0.0
      %3612 = vmatpush1.msra.mxu0 0.0
      %3613 = vmatprep.subr.mxu0 0.0
      %3614 = vmatpush1.msra.mxu0 0.0
      %3615 = vmatprep.subr.mxu0 0.0
      %3616 = vmatpush1.msra.mxu0 0.0
      %3617 = vmatprep.subr.mxu0 0.0
      %3618 = vmatpush1.msra.mxu0 0.0
      %3619 = vmatprep.subr.mxu0 0.0
      %3620 = vmatpush1.msra.mxu0 0.0
      %3621 = vmatprep.subr.mxu0 0.0
      %3622 = vmatpush1.msra.mxu0 0.0
      %3623 = vmatprep.mubr.f32.mxu0 0.0
      %3624 = vmatmul.mubr.f32.gmra.mrb[0].mxu0 %v706
      %v3625 = vpop.f32.mrb[0].mxu0
      %v3626 = vadd.f32 0.0, %v3625
      %v3627 = vpop.f32.mrb[0].mxu0
      %3628 = vdwg.mxu0
      %3629 = vmatprep.subr.mxu0 0.0
      %3630 = vmatpush1.msra.mxu0 %v3457
      %3631 = vmatprep.subr.mxu0 0.0
      %3632 = vmatpush1.msra.mxu0 %v3458
      %3633 = vmatprep.subr.mxu0 0.0
      %3634 = vmatpush1.msra.mxu0 %v3459
      %3635 = vmatprep.subr.mxu0 0.0
      %3636 = vmatpush1.msra.mxu0 %v3460
      %3637 = vmatprep.subr.mxu0 0.0
      %3638 = vmatpush1.msra.mxu0 %v3461
      %3639 = vmatprep.subr.mxu0 0.0
      %3640 = vmatpush1.msra.mxu0 %v3462
      %3641 = vmatprep.subr.mxu0 0.0
      %3642 = vmatpush1.msra.mxu0 %v3463
      %3643 = vmatprep.subr.mxu0 0.0
      %3644 = vmatpush1.msra.mxu0 %v3464
      %3645 = vmatprep.subr.mxu0 0.0
      %3646 = vmatpush1.msra.mxu0 %v3465
      %3647 = vmatprep.subr.mxu0 0.0
      %3648 = vmatpush1.msra.mxu0 %v3466
      %3649 = vmatprep.subr.mxu0 0.0
      %3650 = vmatpush1.msra.mxu0 %v3467
      %3651 = vmatprep.subr.mxu0 0.0
      %3652 = vmatpush1.msra.mxu0 %v3468
      %3653 = vmatprep.subr.mxu0 0.0
      %3654 = vmatpush1.msra.mxu0 %v3469
      %3655 = vmatprep.subr.mxu0 0.0
      %3656 = vmatpush1.msra.mxu0 %v3470
      %3657 = vmatprep.subr.mxu0 0.0
      %3658 = vmatpush1.msra.mxu0 %v3471
      %3659 = vmatprep.subr.mxu0 0.0
      %3660 = vmatpush1.msra.mxu0 %v3472
      %3661 = vmatprep.subr.mxu0 0.0
      %3662 = vmatpush1.msra.mxu0 0.0
      %3663 = vmatprep.subr.mxu0 0.0
      %3664 = vmatpush1.msra.mxu0 0.0
      %3665 = vmatprep.subr.mxu0 0.0
      %3666 = vmatpush1.msra.mxu0 0.0
      %3667 = vmatprep.subr.mxu0 0.0
      %3668 = vmatpush1.msra.mxu0 0.0
      %3669 = vmatprep.subr.mxu0 0.0
      %3670 = vmatpush1.msra.mxu0 0.0
      %3671 = vmatprep.subr.mxu0 0.0
      %3672 = vmatpush1.msra.mxu0 0.0
      %3673 = vmatprep.subr.mxu0 0.0
      %3674 = vmatpush1.msra.mxu0 0.0
      %3675 = vmatprep.subr.mxu0 0.0
      %3676 = vmatpush1.msra.mxu0 0.0
      %3677 = vmatprep.subr.mxu0 0.0
      %3678 = vmatpush1.msra.mxu0 0.0
      %3679 = vmatprep.subr.mxu0 0.0
      %3680 = vmatpush1.msra.mxu0 0.0
      %3681 = vmatprep.subr.mxu0 0.0
      %3682 = vmatpush1.msra.mxu0 0.0
      %3683 = vmatprep.subr.mxu0 0.0
      %3684 = vmatpush1.msra.mxu0 0.0
      %3685 = vmatprep.subr.mxu0 0.0
      %3686 = vmatpush1.msra.mxu0 0.0
      %3687 = vmatprep.subr.mxu0 0.0
      %3688 = vmatpush1.msra.mxu0 0.0
      %3689 = vmatprep.subr.mxu0 0.0
      %3690 = vmatpush1.msra.mxu0 0.0
      %3691 = vmatprep.subr.mxu0 0.0
      %3692 = vmatpush1.msra.mxu0 0.0
      %3693 = vmatprep.mubr.f32.mxu0 0.0
      %3694 = vmatmul.mubr.f32.gmra.mrb[0].mxu0 %v706
      %v3695 = vpop.f32.mrb[0].mxu0
      %v3696 = vadd.f32 0.0, %v3695
      %v3697 = vpop.f32.mrb[0].mxu0
      %3698 = vdwg.mxu0
      %3699 = vmatprep.subr.mxu0 0.0
      %3700 = vmatpush1.msra.mxu0 %v3473
      %3701 = vmatprep.subr.mxu0 0.0
      %3702 = vmatpush1.msra.mxu0 %v3474
      %3703 = vmatprep.subr.mxu0 0.0
      %3704 = vmatpush1.msra.mxu0 %v3475
      %3705 = vmatprep.subr.mxu0 0.0
      %3706 = vmatpush1.msra.mxu0 %v3476
      %3707 = vmatprep.subr.mxu0 0.0
      %3708 = vmatpush1.msra.mxu0 %v3477
      %3709 = vmatprep.subr.mxu0 0.0
      %3710 = vmatpush1.msra.mxu0 %v3478
      %3711 = vmatprep.subr.mxu0 0.0
      %3712 = vmatpush1.msra.mxu0 %v3479
      %3713 = vmatprep.subr.mxu0 0.0
      %3714 = vmatpush1.msra.mxu0 %v3480
      %3715 = vmatprep.subr.mxu0 0.0
      %3716 = vmatpush1.msra.mxu0 %v3481
      %3717 = vmatprep.subr.mxu0 0.0
      %3718 = vmatpush1.msra.mxu0 %v3482
      %3719 = vmatprep.subr.mxu0 0.0
      %3720 = vmatpush1.msra.mxu0 %v3483
      %3721 = vmatprep.subr.mxu0 0.0
      %3722 = vmatpush1.msra.mxu0 %v3484
      %3723 = vmatprep.subr.mxu0 0.0
      %3724 = vmatpush1.msra.mxu0 %v3485
      %3725 = vmatprep.subr.mxu0 0.0
      %3726 = vmatpush1.msra.mxu0 %v3486
      %3727 = vmatprep.subr.mxu0 0.0
      %3728 = vmatpush1.msra.mxu0 %v3487
      %3729 = vmatprep.subr.mxu0 0.0
      %3730 = vmatpush1.msra.mxu0 %v3488
      %3731 = vmatprep.subr.mxu0 0.0
      %3732 = vmatpush1.msra.mxu0 0.0
      %3733 = vmatprep.subr.mxu0 0.0
      %3734 = vmatpush1.msra.mxu0 0.0
      %3735 = vmatprep.subr.mxu0 0.0
      %3736 = vmatpush1.msra.mxu0 0.0
      %3737 = vmatprep.subr.mxu0 0.0
      %3738 = vmatpush1.msra.mxu0 0.0
      %3739 = vmatprep.subr.mxu0 0.0
      %3740 = vmatpush1.msra.mxu0 0.0
      %3741 = vmatprep.subr.mxu0 0.0
      %3742 = vmatpush1.msra.mxu0 0.0
      %3743 = vmatprep.subr.mxu0 0.0
      %3744 = vmatpush1.msra.mxu0 0.0
      %3745 = vmatprep.subr.mxu0 0.0
      %3746 = vmatpush1.msra.mxu0 0.0
      %3747 = vmatprep.subr.mxu0 0.0
      %3748 = vmatpush1.msra.mxu0 0.0
      %3749 = vmatprep.subr.mxu0 0.0
      %3750 = vmatpush1.msra.mxu0 0.0
      %3751 = vmatprep.subr.mxu0 0.0
      %3752 = vmatpush1.msra.mxu0 0.0
      %3753 = vmatprep.subr.mxu0 0.0
      %3754 = vmatpush1.msra.mxu0 0.0
      %3755 = vmatprep.subr.mxu0 0.0
      %3756 = vmatpush1.msra.mxu0 0.0
      %3757 = vmatprep.subr.mxu0 0.0
      %3758 = vmatpush1.msra.mxu0 0.0
      %3759 = vmatprep.subr.mxu0 0.0
      %3760 = vmatpush1.msra.mxu0 0.0
      %3761 = vmatprep.subr.mxu0 0.0
      %3762 = vmatpush1.msra.mxu0 0.0
      %3763 = vmatprep.mubr.f32.mxu0 0.0
      %3764 = vmatmul.mubr.f32.gmra.mrb[0].mxu0 %v706
      %v3765 = vpop.f32.mrb[0].mxu0
      %v3766 = vadd.f32 0.0, %v3765
      %v3767 = vpop.f32.mrb[0].mxu0
      %3768 = vdwg.mxu0
      %v3769 = vld [vmem:[%s11] sm:$0xff]
      %v3770 = vld [vmem:[%s11 + $0x8] sm:$0xff]
      %v3771 = vld [vmem:[%s11 + $0x10] sm:$0xff]
      %v3772 = vld [vmem:[%s11 + $0x18] sm:$0xff]
      %v3773 = vld [vmem:[%s11 + $0x20] sm:$0xff]
      %v3774 = vld [vmem:[%s11 + $0x28] sm:$0xff]
      %v3775 = vld [vmem:[%s11 + $0x30] sm:$0xff]
      %v3776 = vld [vmem:[%s11 + $0x38] sm:$0xff]
      %v3777 = vld [vmem:[%s11 + $0x40] sm:$0xff]
      %v3778 = vld [vmem:[%s11 + $0x48] sm:$0xff]
      %v3779 = vld [vmem:[%s11 + $0x50] sm:$0xff]
      %v3780 = vld [vmem:[%s11 + $0x58] sm:$0xff]
      %v3781 = vld [vmem:[%s11 + $0x60] sm:$0xff]
      %v3782 = vld [vmem:[%s11 + $0x68] sm:$0xff]
      %v3783 = vld [vmem:[%s11 + $0x70] sm:$0xff]
      %v3784 = vld [vmem:[%s11 + $0x78] sm:$0xff]
      %v3786 = vsel %vm1755, %v2868, 0
      %v3789 = vsel %vm1755, %v3212, 0
      %3791 = vmatprep.subr.mxu0 0.0
      %3792 = vmatpush1.xpose.msra.mxu0 %v3789
      %3793 = vmatprep.subr.mxu0 0.0
      %3794 = vmatpush1.xpose.msra.mxu0 0.0
      %3795 = vmatprep.subr.mxu0 0.0
      %3796 = vmatpush1.xpose.msra.mxu0 0.0
      %3797 = vmatprep.subr.mxu0 0.0
      %3798 = vmatpush1.xpose.msra.mxu0 0.0
      %3799 = vmatprep.subr.mxu0 0.0
      %3800 = vmatpush1.xpose.msra.mxu0 0.0
      %3801 = vmatprep.subr.mxu0 0.0
      %3802 = vmatpush1.xpose.msra.mxu0 0.0
      %3803 = vmatprep.subr.mxu0 0.0
      %3804 = vmatpush1.xpose.msra.mxu0 0.0
      %3805 = vmatprep.subr.mxu0 0.0
      %3806 = vmatpush1.xpose.msra.mxu0 0.0
      %3807 = vmatprep.subr.mxu0 0.0
      %3808 = vmatpush1.xpose.msra.mxu0 0.0
      %3809 = vmatprep.subr.mxu0 0.0
      %3810 = vmatpush1.xpose.msra.mxu0 0.0
      %3811 = vmatprep.subr.mxu0 0.0
      %3812 = vmatpush1.xpose.msra.mxu0 0.0
      %3813 = vmatprep.subr.mxu0 0.0
      %3814 = vmatpush1.xpose.msra.mxu0 0.0
      %3815 = vmatprep.subr.mxu0 0.0
      %3816 = vmatpush1.xpose.msra.mxu0 0.0
      %3817 = vmatprep.subr.mxu0 0.0
      %3818 = vmatpush1.xpose.msra.mxu0 0.0
      %3819 = vmatprep.subr.mxu0 0.0
      %3820 = vmatpush1.xpose.msra.mxu0 0.0
      %3821 = vmatprep.subr.mxu0 0.0
      %3822 = vmatpush1.xpose.msra.mxu0 0.0
      %3823 = vmatprep.subr.mxu0 0.0
      %3824 = vmatpush1.xpose.msra.mxu0 0.0
      %3825 = vmatprep.subr.mxu0 0.0
      %3826 = vmatpush1.xpose.msra.mxu0 0.0
      %3827 = vmatprep.subr.mxu0 0.0
      %3828 = vmatpush1.xpose.msra.mxu0 0.0
      %3829 = vmatprep.subr.mxu0 0.0
      %3830 = vmatpush1.xpose.msra.mxu0 0.0
      %3831 = vmatprep.subr.mxu0 0.0
      %3832 = vmatpush1.xpose.msra.mxu0 0.0
      %3833 = vmatprep.subr.mxu0 0.0
      %3834 = vmatpush1.xpose.msra.mxu0 0.0
      %3835 = vmatprep.subr.mxu0 0.0
      %3836 = vmatpush1.xpose.msra.mxu0 0.0
      %3837 = vmatprep.subr.mxu0 0.0
      %3838 = vmatpush1.xpose.msra.mxu0 0.0
      %3839 = vmatprep.subr.mxu0 0.0
      %3840 = vmatpush1.xpose.msra.mxu0 0.0
      %3841 = vmatprep.subr.mxu0 0.0
      %3842 = vmatpush1.xpose.msra.mxu0 0.0
      %3843 = vmatprep.subr.mxu0 0.0
      %3844 = vmatpush1.xpose.msra.mxu0 0.0
      %3845 = vmatprep.subr.mxu0 0.0
      %3846 = vmatpush1.xpose.msra.mxu0 0.0
      %3847 = vmatprep.subr.mxu0 0.0
      %3848 = vmatpush1.xpose.msra.mxu0 0.0
      %3849 = vmatprep.subr.mxu0 0.0
      %3850 = vmatpush1.xpose.msra.mxu0 0.0
      %3851 = vmatprep.subr.mxu0 0.0
      %3852 = vmatpush1.xpose.msra.mxu0 0.0
      %3853 = vmatprep.subr.mxu0 0.0
      %3854 = vmatpush1.xpose.msra.mxu0 0.0
      %3855 = vmatprep.mubr.f32.mxu0 0.0
      %3856 = vmatmul.mubr.f32.gmra.mrb[0].mxu0 %v3786
      %v3857 = vpop.f32.mrb[0].mxu0
      %v3858 = vadd.f32 0.0, %v3857
      %v3859 = vpop.f32.mrb[0].mxu0
      %3860 = vdwg.mxu0
      %v3862 = vsel %vm1755, %v2938, 0
      %v3865 = vsel %vm1755, %v3282, 0
      %3867 = vmatprep.subr.mxu0 0.0
      %3868 = vmatpush1.xpose.msra.mxu0 %v3865
      %3869 = vmatprep.subr.mxu0 0.0
      %3870 = vmatpush1.xpose.msra.mxu0 0.0
      %3871 = vmatprep.subr.mxu0 0.0
      %3872 = vmatpush1.xpose.msra.mxu0 0.0
      %3873 = vmatprep.subr.mxu0 0.0
      %3874 = vmatpush1.xpose.msra.mxu0 0.0
      %3875 = vmatprep.subr.mxu0 0.0
      %3876 = vmatpush1.xpose.msra.mxu0 0.0
      %3877 = vmatprep.subr.mxu0 0.0
      %3878 = vmatpush1.xpose.msra.mxu0 0.0
      %3879 = vmatprep.subr.mxu0 0.0
      %3880 = vmatpush1.xpose.msra.mxu0 0.0
      %3881 = vmatprep.subr.mxu0 0.0
      %3882 = vmatpush1.xpose.msra.mxu0 0.0
      %3883 = vmatprep.subr.mxu0 0.0
      %3884 = vmatpush1.xpose.msra.mxu0 0.0
      %3885 = vmatprep.subr.mxu0 0.0
      %3886 = vmatpush1.xpose.msra.mxu0 0.0
      %3887 = vmatprep.subr.mxu0 0.0
      %3888 = vmatpush1.xpose.msra.mxu0 0.0
      %3889 = vmatprep.subr.mxu0 0.0
      %3890 = vmatpush1.xpose.msra.mxu0 0.0
      %3891 = vmatprep.subr.mxu0 0.0
      %3892 = vmatpush1.xpose.msra.mxu0 0.0
      %3893 = vmatprep.subr.mxu0 0.0
      %3894 = vmatpush1.xpose.msra.mxu0 0.0
      %3895 = vmatprep.subr.mxu0 0.0
      %3896 = vmatpush1.xpose.msra.mxu0 0.0
      %3897 = vmatprep.subr.mxu0 0.0
      %3898 = vmatpush1.xpose.msra.mxu0 0.0
      %3899 = vmatprep.subr.mxu0 0.0
      %3900 = vmatpush1.xpose.msra.mxu0 0.0
      %3901 = vmatprep.subr.mxu0 0.0
      %3902 = vmatpush1.xpose.msra.mxu0 0.0
      %3903 = vmatprep.subr.mxu0 0.0
      %3904 = vmatpush1.xpose.msra.mxu0 0.0
      %3905 = vmatprep.subr.mxu0 0.0
      %3906 = vmatpush1.xpose.msra.mxu0 0.0
      %3907 = vmatprep.subr.mxu0 0.0
      %3908 = vmatpush1.xpose.msra.mxu0 0.0
      %3909 = vmatprep.subr.mxu0 0.0
      %3910 = vmatpush1.xpose.msra.mxu0 0.0
      %3911 = vmatprep.subr.mxu0 0.0
      %3912 = vmatpush1.xpose.msra.mxu0 0.0
      %3913 = vmatprep.subr.mxu0 0.0
      %3914 = vmatpush1.xpose.msra.mxu0 0.0
      %3915 = vmatprep.subr.mxu0 0.0
      %3916 = vmatpush1.xpose.msra.mxu0 0.0
      %3917 = vmatprep.subr.mxu0 0.0
      %3918 = vmatpush1.xpose.msra.mxu0 0.0
      %3919 = vmatprep.subr.mxu0 0.0
      %3920 = vmatpush1.xpose.msra.mxu0 0.0
      %3921 = vmatprep.subr.mxu0 0.0
      %3922 = vmatpush1.xpose.msra.mxu0 0.0
      %3923 = vmatprep.subr.mxu0 0.0
      %3924 = vmatpush1.xpose.msra.mxu0 0.0
      %3925 = vmatprep.subr.mxu0 0.0
      %3926 = vmatpush1.xpose.msra.mxu0 0.0
      %3927 = vmatprep.subr.mxu0 0.0
      %3928 = vmatpush1.xpose.msra.mxu0 0.0
      %3929 = vmatprep.subr.mxu0 0.0
      %3930 = vmatpush1.xpose.msra.mxu0 0.0
      %3931 = vmatprep.mubr.f32.mxu0 0.0
      %3932 = vmatmul.mubr.f32.gmra.mrb[0].mxu0 %v3862
      %v3933 = vpop.f32.mrb[0].mxu0
      %v3934 = vadd.f32 0.0, %v3933
      %v3935 = vpop.f32.mrb[0].mxu0
      %3936 = vdwg.mxu0
      %v3938 = vsel %vm1755, %v3008, 0
      %v3941 = vsel %vm1755, %v3352, 0
      %3943 = vmatprep.subr.mxu0 0.0
      %3944 = vmatpush1.xpose.msra.mxu0 %v3941
      %3945 = vmatprep.subr.mxu0 0.0
      %3946 = vmatpush1.xpose.msra.mxu0 0.0
      %3947 = vmatprep.subr.mxu0 0.0
      %3948 = vmatpush1.xpose.msra.mxu0 0.0
      %3949 = vmatprep.subr.mxu0 0.0
      %3950 = vmatpush1.xpose.msra.mxu0 0.0
      %3951 = vmatprep.subr.mxu0 0.0
      %3952 = vmatpush1.xpose.msra.mxu0 0.0
      %3953 = vmatprep.subr.mxu0 0.0
      %3954 = vmatpush1.xpose.msra.mxu0 0.0
      %3955 = vmatprep.subr.mxu0 0.0
      %3956 = vmatpush1.xpose.msra.mxu0 0.0
      %3957 = vmatprep.subr.mxu0 0.0
      %3958 = vmatpush1.xpose.msra.mxu0 0.0
      %3959 = vmatprep.subr.mxu0 0.0
      %3960 = vmatpush1.xpose.msra.mxu0 0.0
      %3961 = vmatprep.subr.mxu0 0.0
      %3962 = vmatpush1.xpose.msra.mxu0 0.0
      %3963 = vmatprep.subr.mxu0 0.0
      %3964 = vmatpush1.xpose.msra.mxu0 0.0
      %3965 = vmatprep.subr.mxu0 0.0
      %3966 = vmatpush1.xpose.msra.mxu0 0.0
      %3967 = vmatprep.subr.mxu0 0.0
      %3968 = vmatpush1.xpose.msra.mxu0 0.0
      %3969 = vmatprep.subr.mxu0 0.0
      %3970 = vmatpush1.xpose.msra.mxu0 0.0
      %3971 = vmatprep.subr.mxu0 0.0
      %3972 = vmatpush1.xpose.msra.mxu0 0.0
      %3973 = vmatprep.subr.mxu0 0.0
      %3974 = vmatpush1.xpose.msra.mxu0 0.0
      %3975 = vmatprep.subr.mxu0 0.0
      %3976 = vmatpush1.xpose.msra.mxu0 0.0
      %3977 = vmatprep.subr.mxu0 0.0
      %3978 = vmatpush1.xpose.msra.mxu0 0.0
      %3979 = vmatprep.subr.mxu0 0.0
      %3980 = vmatpush1.xpose.msra.mxu0 0.0
      %3981 = vmatprep.subr.mxu0 0.0
      %3982 = vmatpush1.xpose.msra.mxu0 0.0
      %3983 = vmatprep.subr.mxu0 0.0
      %3984 = vmatpush1.xpose.msra.mxu0 0.0
      %3985 = vmatprep.subr.mxu0 0.0
      %3986 = vmatpush1.xpose.msra.mxu0 0.0
      %3987 = vmatprep.subr.mxu0 0.0
      %3988 = vmatpush1.xpose.msra.mxu0 0.0
      %3989 = vmatprep.subr.mxu0 0.0
      %3990 = vmatpush1.xpose.msra.mxu0 0.0
      %3991 = vmatprep.subr.mxu0 0.0
      %3992 = vmatpush1.xpose.msra.mxu0 0.0
      %3993 = vmatprep.subr.mxu0 0.0
      %3994 = vmatpush1.xpose.msra.mxu0 0.0
      %3995 = vmatprep.subr.mxu0 0.0
      %3996 = vmatpush1.xpose.msra.mxu0 0.0
      %3997 = vmatprep.subr.mxu0 0.0
      %3998 = vmatpush1.xpose.msra.mxu0 0.0
      %3999 = vmatprep.subr.mxu0 0.0
      %4000 = vmatpush1.xpose.msra.mxu0 0.0
      %4001 = vmatprep.subr.mxu0 0.0
      %4002 = vmatpush1.xpose.msra.mxu0 0.0
      %4003 = vmatprep.subr.mxu0 0.0
      %4004 = vmatpush1.xpose.msra.mxu0 0.0
      %4005 = vmatprep.subr.mxu0 0.0
      %4006 = vmatpush1.xpose.msra.mxu0 0.0
      %4007 = vmatprep.mubr.f32.mxu0 0.0
      %4008 = vmatmul.mubr.f32.gmra.mrb[0].mxu0 %v3938
      %v4009 = vpop.f32.mrb[0].mxu0
      %v4010 = vadd.f32 0.0, %v4009
      %v4011 = vpop.f32.mrb[0].mxu0
      %4012 = vdwg.mxu0
      %v4014 = vsel %vm1755, %v3078, 0
      %v4017 = vsel %vm1755, %v3422, 0
      %4019 = vmatprep.subr.mxu0 0.0
      %4020 = vmatpush1.xpose.msra.mxu0 %v4017
      %4021 = vmatprep.subr.mxu0 0.0
      %4022 = vmatpush1.xpose.msra.mxu0 0.0
      %4023 = vmatprep.subr.mxu0 0.0
      %4024 = vmatpush1.xpose.msra.mxu0 0.0
      %4025 = vmatprep.subr.mxu0 0.0
      %4026 = vmatpush1.xpose.msra.mxu0 0.0
      %4027 = vmatprep.subr.mxu0 0.0
      %4028 = vmatpush1.xpose.msra.mxu0 0.0
      %4029 = vmatprep.subr.mxu0 0.0
      %4030 = vmatpush1.xpose.msra.mxu0 0.0
      %4031 = vmatprep.subr.mxu0 0.0
      %4032 = vmatpush1.xpose.msra.mxu0 0.0
      %4033 = vmatprep.subr.mxu0 0.0
      %4034 = vmatpush1.xpose.msra.mxu0 0.0
      %4035 = vmatprep.subr.mxu0 0.0
      %4036 = vmatpush1.xpose.msra.mxu0 0.0
      %4037 = vmatprep.subr.mxu0 0.0
      %4038 = vmatpush1.xpose.msra.mxu0 0.0
      %4039 = vmatprep.subr.mxu0 0.0
      %4040 = vmatpush1.xpose.msra.mxu0 0.0
      %4041 = vmatprep.subr.mxu0 0.0
      %4042 = vmatpush1.xpose.msra.mxu0 0.0
      %4043 = vmatprep.subr.mxu0 0.0
      %4044 = vmatpush1.xpose.msra.mxu0 0.0
      %4045 = vmatprep.subr.mxu0 0.0
      %4046 = vmatpush1.xpose.msra.mxu0 0.0
      %4047 = vmatprep.subr.mxu0 0.0
      %4048 = vmatpush1.xpose.msra.mxu0 0.0
      %4049 = vmatprep.subr.mxu0 0.0
      %4050 = vmatpush1.xpose.msra.mxu0 0.0
      %4051 = vmatprep.subr.mxu0 0.0
      %4052 = vmatpush1.xpose.msra.mxu0 0.0
      %4053 = vmatprep.subr.mxu0 0.0
      %4054 = vmatpush1.xpose.msra.mxu0 0.0
      %4055 = vmatprep.subr.mxu0 0.0
      %4056 = vmatpush1.xpose.msra.mxu0 0.0
      %4057 = vmatprep.subr.mxu0 0.0
      %4058 = vmatpush1.xpose.msra.mxu0 0.0
      %4059 = vmatprep.subr.mxu0 0.0
      %4060 = vmatpush1.xpose.msra.mxu0 0.0
      %4061 = vmatprep.subr.mxu0 0.0
      %4062 = vmatpush1.xpose.msra.mxu0 0.0
      %4063 = vmatprep.subr.mxu0 0.0
      %4064 = vmatpush1.xpose.msra.mxu0 0.0
      %4065 = vmatprep.subr.mxu0 0.0
      %4066 = vmatpush1.xpose.msra.mxu0 0.0
      %4067 = vmatprep.subr.mxu0 0.0
      %4068 = vmatpush1.xpose.msra.mxu0 0.0
      %4069 = vmatprep.subr.mxu0 0.0
      %4070 = vmatpush1.xpose.msra.mxu0 0.0
      %4071 = vmatprep.subr.mxu0 0.0
      %4072 = vmatpush1.xpose.msra.mxu0 0.0
      %4073 = vmatprep.subr.mxu0 0.0
      %4074 = vmatpush1.xpose.msra.mxu0 0.0
      %4075 = vmatprep.subr.mxu0 0.0
      %4076 = vmatpush1.xpose.msra.mxu0 0.0
      %4077 = vmatprep.subr.mxu0 0.0
      %4078 = vmatpush1.xpose.msra.mxu0 0.0
      %4079 = vmatprep.subr.mxu0 0.0
      %4080 = vmatpush1.xpose.msra.mxu0 0.0
      %4081 = vmatprep.subr.mxu0 0.0
      %4082 = vmatpush1.xpose.msra.mxu0 0.0
      %4083 = vmatprep.mubr.f32.mxu0 0.0
      %4084 = vmatmul.mubr.f32.gmra.mrb[0].mxu0 %v4014
      %v4085 = vpop.f32.mrb[0].mxu0
      %v4086 = vadd.f32 0.0, %v4085
      %v4087 = vpop.f32.mrb[0].mxu0
      %4088 = vdwg.mxu0
      %v4089 = vmul.f32 %v3858, 0.17677669
      %v4090 = vmul.f32 %v3934, 0.17677669
      %v4091 = vmul.f32 %v4010, 0.17677669
      %v4092 = vmul.f32 %v4086, 0.17677669
      %v4093 = vsel %vm2068, %v4089, -inf
      %4094 = vmax.xlane.f32.xlu0 %v4093
      %v4095 = vpop.xlane.xlu0 %4094
      %v4096 = vsel %vm2068, %v4090, -inf
      %4097 = vmax.xlane.f32.xlu0 %v4096
      %v4098 = vpop.xlane.xlu0 %4097
      %v4099 = vsel %vm2068, %v4091, -inf
      %4100 = vmax.xlane.f32.xlu0 %v4099
      %v4101 = vpop.xlane.xlu0 %4100
      %v4102 = vsel %vm2068, %v4092, -inf
      %4103 = vmax.xlane.f32.xlu0 %v4102
      %v4104 = vpop.xlane.xlu0 %4103
      %v4105 = vsub.f32 %v4089, %v4095
      %v4106 = vsub.f32 %v4090, %v4098
      %v4107 = vsub.f32 %v4091, %v4101
      %v4108 = vsub.f32 %v4092, %v4104
      %v4109 = vmul.f32 %v4105, 1.442695
      %v4110 = vpow.pop %v4109
      %v4111 = vmul.f32 %v4106, 1.442695
      %v4112 = vpow.pop %v4111
      %v4113 = vmul.f32 %v4107, 1.442695
      %v4114 = vpow.pop %v4113
      %v4115 = vmul.f32 %v4108, 1.442695
      %v4116 = vpow.pop %v4115
      %v4117 = vsel %vm2068, %v4110, 0.0
      %4118 = vadd.xlane.f32.xlu0 %v4117
      %v4119 = vpop.xlane.xlu0 %4118
      %v4120 = vsel %vm2068, %v4112, 0.0
      %4121 = vadd.xlane.f32.xlu0 %v4120
      %v4122 = vpop.xlane.xlu0 %4121
      %v4123 = vsel %vm2068, %v4114, 0.0
      %4124 = vadd.xlane.f32.xlu0 %v4123
      %v4125 = vpop.xlane.xlu0 %4124
      %v4126 = vsel %vm2068, %v4116, 0.0
      %4127 = vadd.xlane.f32.xlu0 %v4126
      %v4128 = vpop.xlane.xlu0 %4127
      %v4129 = vrcp.pop %v4119
      %v4130 = vmul.f32 %v4110, %v4129
      %v4131 = vrcp.pop %v4122
      %v4132 = vmul.f32 %v4112, %v4131
      %v4133 = vrcp.pop %v4125
      %v4134 = vmul.f32 %v4114, %v4133
      %v4135 = vrcp.pop %v4128
      %v4136 = vmul.f32 %v4116, %v4135
      %v4138 = vsel %vm2068, %v4130, 0
      %4140 = vmatprep.subr.mxu0 0.0
      %4141 = vmatpush1.msra.mxu0 %v3556
      %4142 = vmatprep.subr.mxu0 0.0
      %4143 = vmatpush1.msra.mxu0 0.0
      %4144 = vmatprep.subr.mxu0 0.0
      %4145 = vmatpush1.msra.mxu0 0.0
      %4146 = vmatprep.subr.mxu0 0.0
      %4147 = vmatpush1.msra.mxu0 0.0
      %4148 = vmatprep.subr.mxu0 0.0
      %4149 = vmatpush1.msra.mxu0 0.0
      %4150 = vmatprep.subr.mxu0 0.0
      %4151 = vmatpush1.msra.mxu0 0.0
      %4152 = vmatprep.subr.mxu0 0.0
      %4153 = vmatpush1.msra.mxu0 0.0
      %4154 = vmatprep.subr.mxu0 0.0
      %4155 = vmatpush1.msra.mxu0 0.0
      %4156 = vmatprep.subr.mxu0 0.0
      %4157 = vmatpush1.msra.mxu0 0.0
      %4158 = vmatprep.subr.mxu0 0.0
      %4159 = vmatpush1.msra.mxu0 0.0
      %4160 = vmatprep.subr.mxu0 0.0
      %4161 = vmatpush1.msra.mxu0 0.0
      %4162 = vmatprep.subr.mxu0 0.0
      %4163 = vmatpush1.msra.mxu0 0.0
      %4164 = vmatprep.subr.mxu0 0.0
      %4165 = vmatpush1.msra.mxu0 0.0
      %4166 = vmatprep.subr.mxu0 0.0
      %4167 = vmatpush1.msra.mxu0 0.0
      %4168 = vmatprep.subr.mxu0 0.0
      %4169 = vmatpush1.msra.mxu0 0.0
      %4170 = vmatprep.subr.mxu0 0.0
      %4171 = vmatpush1.msra.mxu0 0.0
      %4172 = vmatprep.subr.mxu0 0.0
      %4173 = vmatpush1.msra.mxu0 0.0
      %4174 = vmatprep.subr.mxu0 0.0
      %4175 = vmatpush1.msra.mxu0 0.0
      %4176 = vmatprep.subr.mxu0 0.0
      %4177 = vmatpush1.msra.mxu0 0.0
      %4178 = vmatprep.subr.mxu0 0.0
      %4179 = vmatpush1.msra.mxu0 0.0
      %4180 = vmatprep.subr.mxu0 0.0
      %4181 = vmatpush1.msra.mxu0 0.0
      %4182 = vmatprep.subr.mxu0 0.0
      %4183 = vmatpush1.msra.mxu0 0.0
      %4184 = vmatprep.subr.mxu0 0.0
      %4185 = vmatpush1.msra.mxu0 0.0
      %4186 = vmatprep.subr.mxu0 0.0
      %4187 = vmatpush1.msra.mxu0 0.0
      %4188 = vmatprep.subr.mxu0 0.0
      %4189 = vmatpush1.msra.mxu0 0.0
      %4190 = vmatprep.subr.mxu0 0.0
      %4191 = vmatpush1.msra.mxu0 0.0
      %4192 = vmatprep.subr.mxu0 0.0
      %4193 = vmatpush1.msra.mxu0 0.0
      %4194 = vmatprep.subr.mxu0 0.0
      %4195 = vmatpush1.msra.mxu0 0.0
      %4196 = vmatprep.subr.mxu0 0.0
      %4197 = vmatpush1.msra.mxu0 0.0
      %4198 = vmatprep.subr.mxu0 0.0
      %4199 = vmatpush1.msra.mxu0 0.0
      %4200 = vmatprep.subr.mxu0 0.0
      %4201 = vmatpush1.msra.mxu0 0.0
      %4202 = vmatprep.subr.mxu0 0.0
      %4203 = vmatpush1.msra.mxu0 0.0
      %4204 = vmatprep.mubr.f32.mxu0 0.0
      %4205 = vmatmul.mubr.f32.gmra.mrb[0].mxu0 %v4138
      %v4206 = vpop.f32.mrb[0].mxu0
      %v4207 = vadd.f32 0.0, %v4206
      %v4208 = vpop.f32.mrb[0].mxu0
      %4209 = vdwg.mxu0
      %v4211 = vsel %vm2068, %v4132, 0
      %4213 = vmatprep.subr.mxu0 0.0
      %4214 = vmatpush1.msra.mxu0 %v3626
      %4215 = vmatprep.subr.mxu0 0.0
      %4216 = vmatpush1.msra.mxu0 0.0
      %4217 = vmatprep.subr.mxu0 0.0
      %4218 = vmatpush1.msra.mxu0 0.0
      %4219 = vmatprep.subr.mxu0 0.0
      %4220 = vmatpush1.msra.mxu0 0.0
      %4221 = vmatprep.subr.mxu0 0.0
      %4222 = vmatpush1.msra.mxu0 0.0
      %4223 = vmatprep.subr.mxu0 0.0
      %4224 = vmatpush1.msra.mxu0 0.0
      %4225 = vmatprep.subr.mxu0 0.0
      %4226 = vmatpush1.msra.mxu0 0.0
      %4227 = vmatprep.subr.mxu0 0.0
      %4228 = vmatpush1.msra.mxu0 0.0
      %4229 = vmatprep.subr.mxu0 0.0
      %4230 = vmatpush1.msra.mxu0 0.0
      %4231 = vmatprep.subr.mxu0 0.0
      %4232 = vmatpush1.msra.mxu0 0.0
      %4233 = vmatprep.subr.mxu0 0.0
      %4234 = vmatpush1.msra.mxu0 0.0
      %4235 = vmatprep.subr.mxu0 0.0
      %4236 = vmatpush1.msra.mxu0 0.0
      %4237 = vmatprep.subr.mxu0 0.0
      %4238 = vmatpush1.msra.mxu0 0.0
      %4239 = vmatprep.subr.mxu0 0.0
      %4240 = vmatpush1.msra.mxu0 0.0
      %4241 = vmatprep.subr.mxu0 0.0
      %4242 = vmatpush1.msra.mxu0 0.0
      %4243 = vmatprep.subr.mxu0 0.0
      %4244 = vmatpush1.msra.mxu0 0.0
      %4245 = vmatprep.subr.mxu0 0.0
      %4246 = vmatpush1.msra.mxu0 0.0
      %4247 = vmatprep.subr.mxu0 0.0
      %4248 = vmatpush1.msra.mxu0 0.0
      %4249 = vmatprep.subr.mxu0 0.0
      %4250 = vmatpush1.msra.mxu0 0.0
      %4251 = vmatprep.subr.mxu0 0.0
      %4252 = vmatpush1.msra.mxu0 0.0
      %4253 = vmatprep.subr.mxu0 0.0
      %4254 = vmatpush1.msra.mxu0 0.0
      %4255 = vmatprep.subr.mxu0 0.0
      %4256 = vmatpush1.msra.mxu0 0.0
      %4257 = vmatprep.subr.mxu0 0.0
      %4258 = vmatpush1.msra.mxu0 0.0
      %4259 = vmatprep.subr.mxu0 0.0
      %4260 = vmatpush1.msra.mxu0 0.0
      %4261 = vmatprep.subr.mxu0 0.0
      %4262 = vmatpush1.msra.mxu0 0.0
      %4263 = vmatprep.subr.mxu0 0.0
      %4264 = vmatpush1.msra.mxu0 0.0
      %4265 = vmatprep.subr.mxu0 0.0
      %4266 = vmatpush1.msra.mxu0 0.0
      %4267 = vmatprep.subr.mxu0 0.0
      %4268 = vmatpush1.msra.mxu0 0.0
      %4269 = vmatprep.subr.mxu0 0.0
      %4270 = vmatpush1.msra.mxu0 0.0
      %4271 = vmatprep.subr.mxu0 0.0
      %4272 = vmatpush1.msra.mxu0 0.0
      %4273 = vmatprep.subr.mxu0 0.0
      %4274 = vmatpush1.msra.mxu0 0.0
      %4275 = vmatprep.subr.mxu0 0.0
      %4276 = vmatpush1.msra.mxu0 0.0
      %4277 = vmatprep.mubr.f32.mxu0 0.0
      %4278 = vmatmul.mubr.f32.gmra.mrb[0].mxu0 %v4211
      %v4279 = vpop.f32.mrb[0].mxu0
      %v4280 = vadd.f32 0.0, %v4279
      %v4281 = vpop.f32.mrb[0].mxu0
      %4282 = vdwg.mxu0
      %v4284 = vsel %vm2068, %v4134, 0
      %4286 = vmatprep.subr.mxu0 0.0
      %4287 = vmatpush1.msra.mxu0 %v3696
      %4288 = vmatprep.subr.mxu0 0.0
      %4289 = vmatpush1.msra.mxu0 0.0
      %4290 = vmatprep.subr.mxu0 0.0
      %4291 = vmatpush1.msra.mxu0 0.0
      %4292 = vmatprep.subr.mxu0 0.0
      %4293 = vmatpush1.msra.mxu0 0.0
      %4294 = vmatprep.subr.mxu0 0.0
      %4295 = vmatpush1.msra.mxu0 0.0
      %4296 = vmatprep.subr.mxu0 0.0
      %4297 = vmatpush1.msra.mxu0 0.0
      %4298 = vmatprep.subr.mxu0 0.0
      %4299 = vmatpush1.msra.mxu0 0.0
      %4300 = vmatprep.subr.mxu0 0.0
      %4301 = vmatpush1.msra.mxu0 0.0
      %4302 = vmatprep.subr.mxu0 0.0
      %4303 = vmatpush1.msra.mxu0 0.0
      %4304 = vmatprep.subr.mxu0 0.0
      %4305 = vmatpush1.msra.mxu0 0.0
      %4306 = vmatprep.subr.mxu0 0.0
      %4307 = vmatpush1.msra.mxu0 0.0
      %4308 = vmatprep.subr.mxu0 0.0
      %4309 = vmatpush1.msra.mxu0 0.0
      %4310 = vmatprep.subr.mxu0 0.0
      %4311 = vmatpush1.msra.mxu0 0.0
      %4312 = vmatprep.subr.mxu0 0.0
      %4313 = vmatpush1.msra.mxu0 0.0
      %4314 = vmatprep.subr.mxu0 0.0
      %4315 = vmatpush1.msra.mxu0 0.0
      %4316 = vmatprep.subr.mxu0 0.0
      %4317 = vmatpush1.msra.mxu0 0.0
      %4318 = vmatprep.subr.mxu0 0.0
      %4319 = vmatpush1.msra.mxu0 0.0
      %4320 = vmatprep.subr.mxu0 0.0
      %4321 = vmatpush1.msra.mxu0 0.0
      %4322 = vmatprep.subr.mxu0 0.0
      %4323 = vmatpush1.msra.mxu0 0.0
      %4324 = vmatprep.subr.mxu0 0.0
      %4325 = vmatpush1.msra.mxu0 0.0
      %4326 = vmatprep.subr.mxu0 0.0
      %4327 = vmatpush1.msra.mxu0 0.0
      %4328 = vmatprep.subr.mxu0 0.0
      %4329 = vmatpush1.msra.mxu0 0.0
      %4330 = vmatprep.subr.mxu0 0.0
      %4331 = vmatpush1.msra.mxu0 0.0
      %4332 = vmatprep.subr.mxu0 0.0
      %4333 = vmatpush1.msra.mxu0 0.0
      %4334 = vmatprep.subr.mxu0 0.0
      %4335 = vmatpush1.msra.mxu0 0.0
      %4336 = vmatprep.subr.mxu0 0.0
      %4337 = vmatpush1.msra.mxu0 0.0
      %4338 = vmatprep.subr.mxu0 0.0
      %4339 = vmatpush1.msra.mxu0 0.0
      %4340 = vmatprep.subr.mxu0 0.0
      %4341 = vmatpush1.msra.mxu0 0.0
      %4342 = vmatprep.subr.mxu0 0.0
      %4343 = vmatpush1.msra.mxu0 0.0
      %4344 = vmatprep.subr.mxu0 0.0
      %4345 = vmatpush1.msra.mxu0 0.0
      %4346 = vmatprep.subr.mxu0 0.0
      %4347 = vmatpush1.msra.mxu0 0.0
      %4348 = vmatprep.subr.mxu0 0.0
      %4349 = vmatpush1.msra.mxu0 0.0
      %4350 = vmatprep.mubr.f32.mxu0 0.0
      %4351 = vmatmul.mubr.f32.gmra.mrb[0].mxu0 %v4284
      %v4352 = vpop.f32.mrb[0].mxu0
      %v4353 = vadd.f32 0.0, %v4352
      %v4354 = vpop.f32.mrb[0].mxu0
      %4355 = vdwg.mxu0
      %v4357 = vsel %vm2068, %v4136, 0
      %4359 = vmatprep.subr.mxu0 0.0
      %4360 = vmatpush1.msra.mxu0 %v3766
      %4361 = vmatprep.subr.mxu0 0.0
      %4362 = vmatpush1.msra.mxu0 0.0
      %4363 = vmatprep.subr.mxu0 0.0
      %4364 = vmatpush1.msra.mxu0 0.0
      %4365 = vmatprep.subr.mxu0 0.0
      %4366 = vmatpush1.msra.mxu0 0.0
      %4367 = vmatprep.subr.mxu0 0.0
      %4368 = vmatpush1.msra.mxu0 0.0
      %4369 = vmatprep.subr.mxu0 0.0
      %4370 = vmatpush1.msra.mxu0 0.0
      %4371 = vmatprep.subr.mxu0 0.0
      %4372 = vmatpush1.msra.mxu0 0.0
      %4373 = vmatprep.subr.mxu0 0.0
      %4374 = vmatpush1.msra.mxu0 0.0
      %4375 = vmatprep.subr.mxu0 0.0
      %4376 = vmatpush1.msra.mxu0 0.0
      %4377 = vmatprep.subr.mxu0 0.0
      %4378 = vmatpush1.msra.mxu0 0.0
      %4379 = vmatprep.subr.mxu0 0.0
      %4380 = vmatpush1.msra.mxu0 0.0
      %4381 = vmatprep.subr.mxu0 0.0
      %4382 = vmatpush1.msra.mxu0 0.0
      %4383 = vmatprep.subr.mxu0 0.0
      %4384 = vmatpush1.msra.mxu0 0.0
      %4385 = vmatprep.subr.mxu0 0.0
      %4386 = vmatpush1.msra.mxu0 0.0
      %4387 = vmatprep.subr.mxu0 0.0
      %4388 = vmatpush1.msra.mxu0 0.0
      %4389 = vmatprep.subr.mxu0 0.0
      %4390 = vmatpush1.msra.mxu0 0.0
      %4391 = vmatprep.subr.mxu0 0.0
      %4392 = vmatpush1.msra.mxu0 0.0
      %4393 = vmatprep.subr.mxu0 0.0
      %4394 = vmatpush1.msra.mxu0 0.0
      %4395 = vmatprep.subr.mxu0 0.0
      %4396 = vmatpush1.msra.mxu0 0.0
      %4397 = vmatprep.subr.mxu0 0.0
      %4398 = vmatpush1.msra.mxu0 0.0
      %4399 = vmatprep.subr.mxu0 0.0
      %4400 = vmatpush1.msra.mxu0 0.0
      %4401 = vmatprep.subr.mxu0 0.0
      %4402 = vmatpush1.msra.mxu0 0.0
      %4403 = vmatprep.subr.mxu0 0.0
      %4404 = vmatpush1.msra.mxu0 0.0
      %4405 = vmatprep.subr.mxu0 0.0
      %4406 = vmatpush1.msra.mxu0 0.0
      %4407 = vmatprep.subr.mxu0 0.0
      %4408 = vmatpush1.msra.mxu0 0.0
      %4409 = vmatprep.subr.mxu0 0.0
      %4410 = vmatpush1.msra.mxu0 0.0
      %4411 = vmatprep.subr.mxu0 0.0
      %4412 = vmatpush1.msra.mxu0 0.0
      %4413 = vmatprep.subr.mxu0 0.0
      %4414 = vmatpush1.msra.mxu0 0.0
      %4415 = vmatprep.subr.mxu0 0.0
      %4416 = vmatpush1.msra.mxu0 0.0
      %4417 = vmatprep.subr.mxu0 0.0
      %4418 = vmatpush1.msra.mxu0 0.0
      %4419 = vmatprep.subr.mxu0 0.0
      %4420 = vmatpush1.msra.mxu0 0.0
      %4421 = vmatprep.subr.mxu0 0.0
      %4422 = vmatpush1.msra.mxu0 0.0
      %4423 = vmatprep.mubr.f32.mxu0 0.0
      %4424 = vmatmul.mubr.f32.gmra.mrb[0].mxu0 %v4357
      %v4425 = vpop.f32.mrb[0].mxu0
      %v4426 = vadd.f32 0.0, %v4425
      %v4427 = vpop.f32.mrb[0].mxu0
      %4428 = vdwg.mxu0
      %v4430 = vsel %vm1755, %v4207, 0
      %4432 = vmatprep.subr.mxu0 0.0
      %4433 = vmatpush1.msra.mxu0 %v3769
      %4434 = vmatprep.subr.mxu0 0.0
      %4435 = vmatpush1.msra.mxu0 %v3770
      %4436 = vmatprep.subr.mxu0 0.0
      %4437 = vmatpush1.msra.mxu0 %v3771
      %4438 = vmatprep.subr.mxu0 0.0
      %4439 = vmatpush1.msra.mxu0 %v3772
      %4440 = vmatprep.subr.mxu0 0.0
      %4441 = vmatpush1.msra.mxu0 0.0
      %4442 = vmatprep.subr.mxu0 0.0
      %4443 = vmatpush1.msra.mxu0 0.0
      %4444 = vmatprep.subr.mxu0 0.0
      %4445 = vmatpush1.msra.mxu0 0.0
      %4446 = vmatprep.subr.mxu0 0.0
      %4447 = vmatpush1.msra.mxu0 0.0
      %4448 = vmatprep.subr.mxu0 0.0
      %4449 = vmatpush1.msra.mxu0 0.0
      %4450 = vmatprep.subr.mxu0 0.0
      %4451 = vmatpush1.msra.mxu0 0.0
      %4452 = vmatprep.subr.mxu0 0.0
      %4453 = vmatpush1.msra.mxu0 0.0
      %4454 = vmatprep.subr.mxu0 0.0
      %4455 = vmatpush1.msra.mxu0 0.0
      %4456 = vmatprep.subr.mxu0 0.0
      %4457 = vmatpush1.msra.mxu0 0.0
      %4458 = vmatprep.subr.mxu0 0.0
      %4459 = vmatpush1.msra.mxu0 0.0
      %4460 = vmatprep.subr.mxu0 0.0
      %4461 = vmatpush1.msra.mxu0 0.0
      %4462 = vmatprep.subr.mxu0 0.0
      %4463 = vmatpush1.msra.mxu0 0.0
      %4464 = vmatprep.subr.mxu0 0.0
      %4465 = vmatpush1.msra.mxu0 0.0
      %4466 = vmatprep.subr.mxu0 0.0
      %4467 = vmatpush1.msra.mxu0 0.0
      %4468 = vmatprep.subr.mxu0 0.0
      %4469 = vmatpush1.msra.mxu0 0.0
      %4470 = vmatprep.subr.mxu0 0.0
      %4471 = vmatpush1.msra.mxu0 0.0
      %4472 = vmatprep.subr.mxu0 0.0
      %4473 = vmatpush1.msra.mxu0 0.0
      %4474 = vmatprep.subr.mxu0 0.0
      %4475 = vmatpush1.msra.mxu0 0.0
      %4476 = vmatprep.subr.mxu0 0.0
      %4477 = vmatpush1.msra.mxu0 0.0
      %4478 = vmatprep.subr.mxu0 0.0
      %4479 = vmatpush1.msra.mxu0 0.0
      %4480 = vmatprep.subr.mxu0 0.0
      %4481 = vmatpush1.msra.mxu0 0.0
      %4482 = vmatprep.subr.mxu0 0.0
      %4483 = vmatpush1.msra.mxu0 0.0
      %4484 = vmatprep.subr.mxu0 0.0
      %4485 = vmatpush1.msra.mxu0 0.0
      %4486 = vmatprep.subr.mxu0 0.0
      %4487 = vmatpush1.msra.mxu0 0.0
      %4488 = vmatprep.subr.mxu0 0.0
      %4489 = vmatpush1.msra.mxu0 0.0
      %4490 = vmatprep.subr.mxu0 0.0
      %4491 = vmatpush1.msra.mxu0 0.0
      %4492 = vmatprep.subr.mxu0 0.0
      %4493 = vmatpush1.msra.mxu0 0.0
      %4494 = vmatprep.subr.mxu0 0.0
      %4495 = vmatpush1.msra.mxu0 0.0
      %4496 = vmatprep.mubr.f32.mxu0 0.0
      %4497 = vmatmul.mubr.f32.gmra.mrb[0].mxu0 %v4430
      %v4498 = vpop.f32.mrb[0].mxu0
      %v4499 = vadd.f32 0.0, %v4498
      %v4500 = vpop.f32.mrb[0].mxu0
      %4501 = vdwg.mxu0
      %v4503 = vsel %vm1755, %v4280, 0
      %4505 = vmatprep.subr.mxu0 0.0
      %4506 = vmatpush1.msra.mxu0 %v3773
      %4507 = vmatprep.subr.mxu0 0.0
      %4508 = vmatpush1.msra.mxu0 %v3774
      %4509 = vmatprep.subr.mxu0 0.0
      %4510 = vmatpush1.msra.mxu0 %v3775
      %4511 = vmatprep.subr.mxu0 0.0
      %4512 = vmatpush1.msra.mxu0 %v3776
      %4513 = vmatprep.subr.mxu0 0.0
      %4514 = vmatpush1.msra.mxu0 0.0
      %4515 = vmatprep.subr.mxu0 0.0
      %4516 = vmatpush1.msra.mxu0 0.0
      %4517 = vmatprep.subr.mxu0 0.0
      %4518 = vmatpush1.msra.mxu0 0.0
      %4519 = vmatprep.subr.mxu0 0.0
      %4520 = vmatpush1.msra.mxu0 0.0
      %4521 = vmatprep.subr.mxu0 0.0
      %4522 = vmatpush1.msra.mxu0 0.0
      %4523 = vmatprep.subr.mxu0 0.0
      %4524 = vmatpush1.msra.mxu0 0.0
      %4525 = vmatprep.subr.mxu0 0.0
      %4526 = vmatpush1.msra.mxu0 0.0
      %4527 = vmatprep.subr.mxu0 0.0
      %4528 = vmatpush1.msra.mxu0 0.0
      %4529 = vmatprep.subr.mxu0 0.0
      %4530 = vmatpush1.msra.mxu0 0.0
      %4531 = vmatprep.subr.mxu0 0.0
      %4532 = vmatpush1.msra.mxu0 0.0
      %4533 = vmatprep.subr.mxu0 0.0
      %4534 = vmatpush1.msra.mxu0 0.0
      %4535 = vmatprep.subr.mxu0 0.0
      %4536 = vmatpush1.msra.mxu0 0.0
      %4537 = vmatprep.subr.mxu0 0.0
      %4538 = vmatpush1.msra.mxu0 0.0
      %4539 = vmatprep.subr.mxu0 0.0
      %4540 = vmatpush1.msra.mxu0 0.0
      %4541 = vmatprep.subr.mxu0 0.0
      %4542 = vmatpush1.msra.mxu0 0.0
      %4543 = vmatprep.subr.mxu0 0.0
      %4544 = vmatpush1.msra.mxu0 0.0
      %4545 = vmatprep.subr.mxu0 0.0
      %4546 = vmatpush1.msra.mxu0 0.0
      %4547 = vmatprep.subr.mxu0 0.0
      %4548 = vmatpush1.msra.mxu0 0.0
      %4549 = vmatprep.subr.mxu0 0.0
      %4550 = vmatpush1.msra.mxu0 0.0
      %4551 = vmatprep.subr.mxu0 0.0
      %4552 = vmatpush1.msra.mxu0 0.0
      %4553 = vmatprep.subr.mxu0 0.0
      %4554 = vmatpush1.msra.mxu0 0.0
      %4555 = vmatprep.subr.mxu0 0.0
      %4556 = vmatpush1.msra.mxu0 0.0
      %4557 = vmatprep.subr.mxu0 0.0
      %4558 = vmatpush1.msra.mxu0 0.0
      %4559 = vmatprep.subr.mxu0 0.0
      %4560 = vmatpush1.msra.mxu0 0.0
      %4561 = vmatprep.subr.mxu0 0.0
      %4562 = vmatpush1.msra.mxu0 0.0
      %4563 = vmatprep.subr.mxu0 0.0
      %4564 = vmatpush1.msra.mxu0 0.0
      %4565 = vmatprep.subr.mxu0 0.0
      %4566 = vmatpush1.msra.mxu0 0.0
      %4567 = vmatprep.subr.mxu0 0.0
      %4568 = vmatpush1.msra.mxu0 0.0
      %4569 = vmatprep.mubr.f32.mxu0 0.0
      %4570 = vmatmul.mubr.f32.gmra.mrb[0].mxu0 %v4503
      %v4571 = vpop.f32.mrb[0].mxu0
      %v4572 = vadd.f32 0.0, %v4571
      %v4573 = vpop.f32.mrb[0].mxu0
      %4574 = vdwg.mxu0
      %v4576 = vsel %vm1755, %v4353, 0
      %4578 = vmatprep.subr.mxu0 0.0
      %4579 = vmatpush1.msra.mxu0 %v3777
      %4580 = vmatprep.subr.mxu0 0.0
      %4581 = vmatpush1.msra.mxu0 %v3778
      %4582 = vmatprep.subr.mxu0 0.0
      %4583 = vmatpush1.msra.mxu0 %v3779
      %4584 = vmatprep.subr.mxu0 0.0
      %4585 = vmatpush1.msra.mxu0 %v3780
      %4586 = vmatprep.subr.mxu0 0.0
      %4587 = vmatpush1.msra.mxu0 0.0
      %4588 = vmatprep.subr.mxu0 0.0
      %4589 = vmatpush1.msra.mxu0 0.0
      %4590 = vmatprep.subr.mxu0 0.0
      %4591 = vmatpush1.msra.mxu0 0.0
      %4592 = vmatprep.subr.mxu0 0.0
      %4593 = vmatpush1.msra.mxu0 0.0
      %4594 = vmatprep.subr.mxu0 0.0
      %4595 = vmatpush1.msra.mxu0 0.0
      %4596 = vmatprep.subr.mxu0 0.0
      %4597 = vmatpush1.msra.mxu0 0.0
      %4598 = vmatprep.subr.mxu0 0.0
      %4599 = vmatpush1.msra.mxu0 0.0
      %4600 = vmatprep.subr.mxu0 0.0
      %4601 = vmatpush1.msra.mxu0 0.0
      %4602 = vmatprep.subr.mxu0 0.0
      %4603 = vmatpush1.msra.mxu0 0.0
      %4604 = vmatprep.subr.mxu0 0.0
      %4605 = vmatpush1.msra.mxu0 0.0
      %4606 = vmatprep.subr.mxu0 0.0
      %4607 = vmatpush1.msra.mxu0 0.0
      %4608 = vmatprep.subr.mxu0 0.0
      %4609 = vmatpush1.msra.mxu0 0.0
      %4610 = vmatprep.subr.mxu0 0.0
      %4611 = vmatpush1.msra.mxu0 0.0
      %4612 = vmatprep.subr.mxu0 0.0
      %4613 = vmatpush1.msra.mxu0 0.0
      %4614 = vmatprep.subr.mxu0 0.0
      %4615 = vmatpush1.msra.mxu0 0.0
      %4616 = vmatprep.subr.mxu0 0.0
      %4617 = vmatpush1.msra.mxu0 0.0
      %4618 = vmatprep.subr.mxu0 0.0
      %4619 = vmatpush1.msra.mxu0 0.0
      %4620 = vmatprep.subr.mxu0 0.0
      %4621 = vmatpush1.msra.mxu0 0.0
      %4622 = vmatprep.subr.mxu0 0.0
      %4623 = vmatpush1.msra.mxu0 0.0
      %4624 = vmatprep.subr.mxu0 0.0
      %4625 = vmatpush1.msra.mxu0 0.0
      %4626 = vmatprep.subr.mxu0 0.0
      %4627 = vmatpush1.msra.mxu0 0.0
      %4628 = vmatprep.subr.mxu0 0.0
      %4629 = vmatpush1.msra.mxu0 0.0
      %4630 = vmatprep.subr.mxu0 0.0
      %4631 = vmatpush1.msra.mxu0 0.0
      %4632 = vmatprep.subr.mxu0 0.0
      %4633 = vmatpush1.msra.mxu0 0.0
      %4634 = vmatprep.subr.mxu0 0.0
      %4635 = vmatpush1.msra.mxu0 0.0
      %4636 = vmatprep.subr.mxu0 0.0
      %4637 = vmatpush1.msra.mxu0 0.0
      %4638 = vmatprep.subr.mxu0 0.0
      %4639 = vmatpush1.msra.mxu0 0.0
      %4640 = vmatprep.subr.mxu0 0.0
      %4641 = vmatpush1.msra.mxu0 0.0
      %4642 = vmatprep.mubr.f32.mxu0 0.0
      %4643 = vmatmul.mubr.f32.gmra.mrb[0].mxu0 %v4576
      %v4644 = vpop.f32.mrb[0].mxu0
      %v4645 = vadd.f32 0.0, %v4644
      %v4646 = vpop.f32.mrb[0].mxu0
      %4647 = vdwg.mxu0
      %v4649 = vsel %vm1755, %v4426, 0
      %4651 = vmatprep.subr.mxu0 0.0
      %4652 = vmatpush1.msra.mxu0 %v3781
      %4653 = vmatprep.subr.mxu0 0.0
      %4654 = vmatpush1.msra.mxu0 %v3782
      %4655 = vmatprep.subr.mxu0 0.0
      %4656 = vmatpush1.msra.mxu0 %v3783
      %4657 = vmatprep.subr.mxu0 0.0
      %4658 = vmatpush1.msra.mxu0 %v3784
      %4659 = vmatprep.subr.mxu0 0.0
      %4660 = vmatpush1.msra.mxu0 0.0
      %4661 = vmatprep.subr.mxu0 0.0
      %4662 = vmatpush1.msra.mxu0 0.0
      %4663 = vmatprep.subr.mxu0 0.0
      %4664 = vmatpush1.msra.mxu0 0.0
      %4665 = vmatprep.subr.mxu0 0.0
      %4666 = vmatpush1.msra.mxu0 0.0
      %4667 = vmatprep.subr.mxu0 0.0
      %4668 = vmatpush1.msra.mxu0 0.0
      %4669 = vmatprep.subr.mxu0 0.0
      %4670 = vmatpush1.msra.mxu0 0.0
      %4671 = vmatprep.subr.mxu0 0.0
      %4672 = vmatpush1.msra.mxu0 0.0
      %4673 = vmatprep.subr.mxu0 0.0
      %4674 = vmatpush1.msra.mxu0 0.0
      %4675 = vmatprep.subr.mxu0 0.0
      %4676 = vmatpush1.msra.mxu0 0.0
      %4677 = vmatprep.subr.mxu0 0.0
      %4678 = vmatpush1.msra.mxu0 0.0
      %4679 = vmatprep.subr.mxu0 0.0
      %4680 = vmatpush1.msra.mxu0 0.0
      %4681 = vmatprep.subr.mxu0 0.0
      %4682 = vmatpush1.msra.mxu0 0.0
      %4683 = vmatprep.subr.mxu0 0.0
      %4684 = vmatpush1.msra.mxu0 0.0
      %4685 = vmatprep.subr.mxu0 0.0
      %4686 = vmatpush1.msra.mxu0 0.0
      %4687 = vmatprep.subr.mxu0 0.0
      %4688 = vmatpush1.msra.mxu0 0.0
      %4689 = vmatprep.subr.mxu0 0.0
      %4690 = vmatpush1.msra.mxu0 0.0
      %4691 = vmatprep.subr.mxu0 0.0
      %4692 = vmatpush1.msra.mxu0 0.0
      %4693 = vmatprep.subr.mxu0 0.0
      %4694 = vmatpush1.msra.mxu0 0.0
      %4695 = vmatprep.subr.mxu0 0.0
      %4696 = vmatpush1.msra.mxu0 0.0
      %4697 = vmatprep.subr.mxu0 0.0
      %4698 = vmatpush1.msra.mxu0 0.0
      %4699 = vmatprep.subr.mxu0 0.0
      %4700 = vmatpush1.msra.mxu0 0.0
      %4701 = vmatprep.subr.mxu0 0.0
      %4702 = vmatpush1.msra.mxu0 0.0
      %4703 = vmatprep.subr.mxu0 0.0
      %4704 = vmatpush1.msra.mxu0 0.0
      %4705 = vmatprep.subr.mxu0 0.0
      %4706 = vmatpush1.msra.mxu0 0.0
      %4707 = vmatprep.subr.mxu0 0.0
      %4708 = vmatpush1.msra.mxu0 0.0
      %4709 = vmatprep.subr.mxu0 0.0
      %4710 = vmatpush1.msra.mxu0 0.0
      %4711 = vmatprep.subr.mxu0 0.0
      %4712 = vmatpush1.msra.mxu0 0.0
      %4713 = vmatprep.subr.mxu0 0.0
      %4714 = vmatpush1.msra.mxu0 0.0
      %4715 = vmatprep.mubr.f32.mxu0 0.0
      %4716 = vmatmul.mubr.f32.gmra.mrb[0].mxu0 %v4649
      %v4717 = vpop.f32.mrb[0].mxu0
      %v4718 = vadd.f32 0.0, %v4717
      %v4719 = vpop.f32.mrb[0].mxu0
      %4720 = vdwg.mxu0
      %v4721 = vadd.f32 %v4499, %v4572
      %v4722 = vadd.f32 %v4721, %v4645
      %v4723 = vadd.f32 %v4722, %v4718
      %v4724 = vld [vmem:[%s12] sm:$0x1]
      %v4725 = vld [vmem:[%s13] sm:$0x1]
      %v4726 = vadd.f32 %v2736, %v4723
      %v4727 = vmul.f32 %v4726, %v700
      %4728 = vadd.xlane.f32.xlu0 %v4727
      %v4729 = vpop.xlane.xlu0 %4728
      %v4730 = vmul.f32 %v4729, 0.03125
      %v4731 = vsub.f32 %v4726, %v4730
      %v4732 = vmul.f32 %v4731, %v700
      %v4733 = vmul.f32 %v4732, %v4732
      %4734 = vadd.xlane.f32.xlu0 %v4733
      %v4735 = vpop.xlane.xlu0 %4734
      %v4736 = vmul.f32 %v4735, 0.032258064
      %v4737 = vrsqrt.pop %v4736
      %v4738 = vmul.f32 %v4736, %v4737
      %vm4739 = vcmp.eq.f32.partialorder %v4736, inf
      %v4740 = vsel %vm4739, %v4736, %v4738
      %vm4741 = vcmp.eq.f32.partialorder %v4736, 0.0
      %v4742 = vand.u32 %v4736, 2147483648
      %v4743 = vsel %vm4741, %v4742, %v4740
      %v4745 = vlaneseq
      %v4746 = vshrl.u32 %v4745, 7
      %v4747 = vsub.s32 0, %v4746
      %v4748 = vrot.slane %v4724, %v4747
      %v4750 = vmul.f32 %v4748, %v4731
      %v4751 = vadd.f32 %v4743, 1e-06
      %v4752 = vrcp.pop %v4751
      %v4753 = vmul.f32 %v4750, %v4752
      %v4755 = vlaneseq
      %v4756 = vshrl.u32 %v4755, 7
      %v4757 = vsub.s32 0, %v4756
      %v4758 = vrot.slane %v4725, %v4757
      %v4760 = vadd.f32 %v4753, %v4758
      %v4761 = vld [vmem:[%s14] sm:$0xff]
      %v4762 = vld [vmem:[%s14 + $0x8] sm:$0xff]
      %v4763 = vld [vmem:[%s14 + $0x10] sm:$0xff]
      %v4764 = vld [vmem:[%s14 + $0x18] sm:$0xff]
      %v4765 = vld [vmem:[%s14 + $0x20] sm:$0xff]
      %v4766 = vld [vmem:[%s14 + $0x28] sm:$0xff]
      %v4767 = vld [vmem:[%s14 + $0x30] sm:$0xff]
      %v4768 = vld [vmem:[%s14 + $0x38] sm:$0xff]
      %v4769 = vld [vmem:[%s14 + $0x40] sm:$0xff]
      %v4770 = vld [vmem:[%s14 + $0x48] sm:$0xff]
      %v4771 = vld [vmem:[%s14 + $0x50] sm:$0xff]
      %v4772 = vld [vmem:[%s14 + $0x58] sm:$0xff]
      %v4773 = vld [vmem:[%s14 + $0x60] sm:$0xff]
      %v4774 = vld [vmem:[%s14 + $0x68] sm:$0xff]
      %v4775 = vld [vmem:[%s14 + $0x70] sm:$0xff]
      %v4776 = vld [vmem:[%s14 + $0x78] sm:$0xff]
      %v4777 = vld [vmem:[%s15] sm:$0x1]
      %v4779 = vlaneseq
      %v4780 = vshrl.u32 %v4779, 7
      %v4781 = vsub.s32 0, %v4780
      %v4782 = vrot.slane %v4777, %v4781
      %4784 = vmatprep.subr.mxu0 0.0
      %4785 = vmatpush1.msra.mxu0 %v4761
      %4786 = vmatprep.subr.mxu0 0.0
      %4787 = vmatpush1.msra.mxu0 %v4762
      %4788 = vmatprep.subr.mxu0 0.0
      %4789 = vmatpush1.msra.mxu0 %v4763
      %4790 = vmatprep.subr.mxu0 0.0
      %4791 = vmatpush1.msra.mxu0 %v4764
      %4792 = vmatprep.subr.mxu0 0.0
      %4793 = vmatpush1.msra.mxu0 %v4765
      %4794 = vmatprep.subr.mxu0 0.0
      %4795 = vmatpush1.msra.mxu0 %v4766
      %4796 = vmatprep.subr.mxu0 0.0
      %4797 = vmatpush1.msra.mxu0 %v4767
      %4798 = vmatprep.subr.mxu0 0.0
      %4799 = vmatpush1.msra.mxu0 %v4768
      %4800 = vmatprep.subr.mxu0 0.0
      %4801 = vmatpush1.msra.mxu0 %v4769
      %4802 = vmatprep.subr.mxu0 0.0
      %4803 = vmatpush1.msra.mxu0 %v4770
      %4804 = vmatprep.subr.mxu0 0.0
      %4805 = vmatpush1.msra.mxu0 %v4771
      %4806 = vmatprep.subr.mxu0 0.0
      %4807 = vmatpush1.msra.mxu0 %v4772
      %4808 = vmatprep.subr.mxu0 0.0
      %4809 = vmatpush1.msra.mxu0 %v4773
      %4810 = vmatprep.subr.mxu0 0.0
      %4811 = vmatpush1.msra.mxu0 %v4774
      %4812 = vmatprep.subr.mxu0 0.0
      %4813 = vmatpush1.msra.mxu0 %v4775
      %4814 = vmatprep.subr.mxu0 0.0
      %4815 = vmatpush1.msra.mxu0 %v4776
      %4816 = vmatprep.subr.mxu0 0.0
      %4817 = vmatpush1.msra.mxu0 0.0
      %4818 = vmatprep.subr.mxu0 0.0
      %4819 = vmatpush1.msra.mxu0 0.0
      %4820 = vmatprep.subr.mxu0 0.0
      %4821 = vmatpush1.msra.mxu0 0.0
      %4822 = vmatprep.subr.mxu0 0.0
      %4823 = vmatpush1.msra.mxu0 0.0
      %4824 = vmatprep.subr.mxu0 0.0
      %4825 = vmatpush1.msra.mxu0 0.0
      %4826 = vmatprep.subr.mxu0 0.0
      %4827 = vmatpush1.msra.mxu0 0.0
      %4828 = vmatprep.subr.mxu0 0.0
      %4829 = vmatpush1.msra.mxu0 0.0
      %4830 = vmatprep.subr.mxu0 0.0
      %4831 = vmatpush1.msra.mxu0 0.0
      %4832 = vmatprep.subr.mxu0 0.0
      %4833 = vmatpush1.msra.mxu0 0.0
      %4834 = vmatprep.subr.mxu0 0.0
      %4835 = vmatpush1.msra.mxu0 0.0
      %4836 = vmatprep.subr.mxu0 0.0
      %4837 = vmatpush1.msra.mxu0 0.0
      %4838 = vmatprep.subr.mxu0 0.0
      %4839 = vmatpush1.msra.mxu0 0.0
      %4840 = vmatprep.subr.mxu0 0.0
      %4841 = vmatpush1.msra.mxu0 0.0
      %4842 = vmatprep.subr.mxu0 0.0
      %4843 = vmatpush1.msra.mxu0 0.0
      %4844 = vmatprep.subr.mxu0 0.0
      %4845 = vmatpush1.msra.mxu0 0.0
      %4846 = vmatprep.subr.mxu0 0.0
      %4847 = vmatpush1.msra.mxu0 0.0
      %4848 = vmatprep.mubr.f32.mxu0 0.0
      %4849 = vmatmul.mubr.f32.gmra.mrb[0].mxu0 %v4760
      %v4850 = vpop.f32.mrb[0].mxu0
      %v4851 = vadd.f32 %v4782, %v4850
      %v4852 = vpop.f32.mrb[0].mxu0
      %4853 = vdwg.mxu0
      %v4854 = vmax.f32 %v4851, 0.0
      %v4855 = vld [vmem:[%s16] sm:$0xff]
      %v4856 = vld [vmem:[%s16 + $0x8] sm:$0xff]
      %v4857 = vld [vmem:[%s16 + $0x10] sm:$0xff]
      %v4858 = vld [vmem:[%s16 + $0x18] sm:$0xff]
      %v4859 = vld [vmem:[%s16 + $0x20] sm:$0xff]
      %v4860 = vld [vmem:[%s16 + $0x28] sm:$0xff]
      %v4861 = vld [vmem:[%s16 + $0x30] sm:$0xff]
      %v4862 = vld [vmem:[%s16 + $0x38] sm:$0xff]
      %v4863 = vld [vmem:[%s16 + $0x40] sm:$0xff]
      %v4864 = vld [vmem:[%s16 + $0x48] sm:$0xff]
      %v4865 = vld [vmem:[%s16 + $0x50] sm:$0xff]
      %v4866 = vld [vmem:[%s16 + $0x58] sm:$0xff]
      %v4867 = vld [vmem:[%s16 + $0x60] sm:$0xff]
      %v4868 = vld [vmem:[%s16 + $0x68] sm:$0xff]
      %v4869 = vld [vmem:[%s16 + $0x70] sm:$0xff]
      %v4870 = vld [vmem:[%s16 + $0x78] sm:$0xff]
      %v4871 = vld [vmem:[%s17] sm:$0x1]
      %v4873 = vlaneseq
      %v4874 = vshrl.u32 %v4873, 7
      %v4875 = vsub.s32 0, %v4874
      %v4876 = vrot.slane %v4871, %v4875
      %4878 = vmatprep.subr.mxu0 0.0
      %4879 = vmatpush1.msra.mxu0 %v4855
      %4880 = vmatprep.subr.mxu0 0.0
      %4881 = vmatpush1.msra.mxu0 %v4856
      %4882 = vmatprep.subr.mxu0 0.0
      %4883 = vmatpush1.msra.mxu0 %v4857
      %4884 = vmatprep.subr.mxu0 0.0
      %4885 = vmatpush1.msra.mxu0 %v4858
      %4886 = vmatprep.subr.mxu0 0.0
      %4887 = vmatpush1.msra.mxu0 %v4859
      %4888 = vmatprep.subr.mxu0 0.0
      %4889 = vmatpush1.msra.mxu0 %v4860
      %4890 = vmatprep.subr.mxu0 0.0
      %4891 = vmatpush1.msra.mxu0 %v4861
      %4892 = vmatprep.subr.mxu0 0.0
      %4893 = vmatpush1.msra.mxu0 %v4862
      %4894 = vmatprep.subr.mxu0 0.0
      %4895 = vmatpush1.msra.mxu0 %v4863
      %4896 = vmatprep.subr.mxu0 0.0
      %4897 = vmatpush1.msra.mxu0 %v4864
      %4898 = vmatprep.subr.mxu0 0.0
      %4899 = vmatpush1.msra.mxu0 %v4865
      %4900 = vmatprep.subr.mxu0 0.0
      %4901 = vmatpush1.msra.mxu0 %v4866
      %4902 = vmatprep.subr.mxu0 0.0
      %4903 = vmatpush1.msra.mxu0 %v4867
      %4904 = vmatprep.subr.mxu0 0.0
      %4905 = vmatpush1.msra.mxu0 %v4868
      %4906 = vmatprep.subr.mxu0 0.0
      %4907 = vmatpush1.msra.mxu0 %v4869
      %4908 = vmatprep.subr.mxu0 0.0
      %4909 = vmatpush1.msra.mxu0 %v4870
      %4910 = vmatprep.subr.mxu0 0.0
      %4911 = vmatpush1.msra.mxu0 0.0
      %4912 = vmatprep.subr.mxu0 0.0
      %4913 = vmatpush1.msra.mxu0 0.0
      %4914 = vmatprep.subr.mxu0 0.0
      %4915 = vmatpush1.msra.mxu0 0.0
      %4916 = vmatprep.subr.mxu0 0.0
      %4917 = vmatpush1.msra.mxu0 0.0
      %4918 = vmatprep.subr.mxu0 0.0
      %4919 = vmatpush1.msra.mxu0 0.0
      %4920 = vmatprep.subr.mxu0 0.0
      %4921 = vmatpush1.msra.mxu0 0.0
      %4922 = vmatprep.subr.mxu0 0.0
      %4923 = vmatpush1.msra.mxu0 0.0
      %4924 = vmatprep.subr.mxu0 0.0
      %4925 = vmatpush1.msra.mxu0 0.0
      %4926 = vmatprep.subr.mxu0 0.0
      %4927 = vmatpush1.msra.mxu0 0.0
      %4928 = vmatprep.subr.mxu0 0.0
      %4929 = vmatpush1.msra.mxu0 0.0
      %4930 = vmatprep.subr.mxu0 0.0
      %4931 = vmatpush1.msra.mxu0 0.0
      %4932 = vmatprep.subr.mxu0 0.0
      %4933 = vmatpush1.msra.mxu0 0.0
      %4934 = vmatprep.subr.mxu0 0.0
      %4935 = vmatpush1.msra.mxu0 0.0
      %4936 = vmatprep.subr.mxu0 0.0
      %4937 = vmatpush1.msra.mxu0 0.0
      %4938 = vmatprep.subr.mxu0 0.0
      %4939 = vmatpush1.msra.mxu0 0.0
      %4940 = vmatprep.subr.mxu0 0.0
      %4941 = vmatpush1.msra.mxu0 0.0
      %4942 = vmatprep.mubr.f32.mxu0 0.0
      %4943 = vmatmul.mubr.f32.gmra.mrb[0].mxu0 %v4854
      %v4944 = vpop.f32.mrb[0].mxu0
      %v4945 = vadd.f32 %v4876, %v4944
      %v4946 = vpop.f32.mrb[0].mxu0
      %4947 = vdwg.mxu0
      %v4948 = vld [vmem:[%s18] sm:$0x1]
      %v4949 = vld [vmem:[%s19] sm:$0x1]
      %v4950 = vadd.f32 %v4760, %v4945
      %v4951 = vmul.f32 %v4950, %v700
      %4952 = vadd.xlane.f32.xlu0 %v4951
      %v4953 = vpop.xlane.xlu0 %4952
      %v4954 = vmul.f32 %v4953, 0.03125
      %v4955 = vsub.f32 %v4950, %v4954
      %v4956 = vmul.f32 %v4955, %v700
      %v4957 = vmul.f32 %v4956, %v4956
      %4958 = vadd.xlane.f32.xlu0 %v4957
      %v4959 = vpop.xlane.xlu0 %4958
      %v4960 = vmul.f32 %v4959, 0.032258064
      %v4961 = vrsqrt.pop %v4960
      %v4962 = vmul.f32 %v4960, %v4961
      %vm4963 = vcmp.eq.f32.partialorder %v4960, inf
      %v4964 = vsel %vm4963, %v4960, %v4962
      %vm4965 = vcmp.eq.f32.partialorder %v4960, 0.0
      %v4966 = vand.u32 %v4960, 2147483648
      %v4967 = vsel %vm4965, %v4966, %v4964
      %v4969 = vlaneseq
      %v4970 = vshrl.u32 %v4969, 7
      %v4971 = vsub.s32 0, %v4970
      %v4972 = vrot.slane %v4948, %v4971
      %v4974 = vmul.f32 %v4972, %v4955
      %v4975 = vadd.f32 %v4967, 1e-06
      %v4976 = vrcp.pop %v4975
      %v4977 = vmul.f32 %v4974, %v4976
      %v4979 = vlaneseq
      %v4980 = vshrl.u32 %v4979, 7
      %v4981 = vsub.s32 0, %v4980
      %v4982 = vrot.slane %v4949, %v4981
      %v4984 = vadd.f32 %v4977, %v4982
      %s4985 = scalar_lea.vmem %s2, 512
      %v4986 = vld [vmem:[%s4985] sm:$0xff]
      %v4987 = vld [vmem:[%s4985 + $0x8] sm:$0xff]
      %v4988 = vld [vmem:[%s4985 + $0x10] sm:$0xff]
      %v4989 = vld [vmem:[%s4985 + $0x18] sm:$0xff]
      %v4990 = vld [vmem:[%s4985 + $0x20] sm:$0xff]
      %v4991 = vld [vmem:[%s4985 + $0x28] sm:$0xff]
      %v4992 = vld [vmem:[%s4985 + $0x30] sm:$0xff]
      %v4993 = vld [vmem:[%s4985 + $0x38] sm:$0xff]
      %v4994 = vld [vmem:[%s4985 + $0x40] sm:$0xff]
      %v4995 = vld [vmem:[%s4985 + $0x48] sm:$0xff]
      %v4996 = vld [vmem:[%s4985 + $0x50] sm:$0xff]
      %v4997 = vld [vmem:[%s4985 + $0x58] sm:$0xff]
      %v4998 = vld [vmem:[%s4985 + $0x60] sm:$0xff]
      %v4999 = vld [vmem:[%s4985 + $0x68] sm:$0xff]
      %v5000 = vld [vmem:[%s4985 + $0x70] sm:$0xff]
      %v5001 = vld [vmem:[%s4985 + $0x78] sm:$0xff]
      %v5002 = vld [vmem:[%s4985 + $0x80] sm:$0xff]
      %v5003 = vld [vmem:[%s4985 + $0x88] sm:$0xff]
      %v5004 = vld [vmem:[%s4985 + $0x90] sm:$0xff]
      %v5005 = vld [vmem:[%s4985 + $0x98] sm:$0xff]
      %v5006 = vld [vmem:[%s4985 + $0xa0] sm:$0xff]
      %v5007 = vld [vmem:[%s4985 + $0xa8] sm:$0xff]
      %v5008 = vld [vmem:[%s4985 + $0xb0] sm:$0xff]
      %v5009 = vld [vmem:[%s4985 + $0xb8] sm:$0xff]
      %v5010 = vld [vmem:[%s4985 + $0xc0] sm:$0xff]
      %v5011 = vld [vmem:[%s4985 + $0xc8] sm:$0xff]
      %v5012 = vld [vmem:[%s4985 + $0xd0] sm:$0xff]
      %v5013 = vld [vmem:[%s4985 + $0xd8] sm:$0xff]
      %v5014 = vld [vmem:[%s4985 + $0xe0] sm:$0xff]
      %v5015 = vld [vmem:[%s4985 + $0xe8] sm:$0xff]
      %v5016 = vld [vmem:[%s4985 + $0xf0] sm:$0xff]
      %v5017 = vld [vmem:[%s4985 + $0xf8] sm:$0xff]
      %v5018 = vld [vmem:[%s4985 + $0x100] sm:$0xff]
      %v5019 = vld [vmem:[%s4985 + $0x108] sm:$0xff]
      %v5020 = vld [vmem:[%s4985 + $0x110] sm:$0xff]
      %v5021 = vld [vmem:[%s4985 + $0x118] sm:$0xff]
      %v5022 = vld [vmem:[%s4985 + $0x120] sm:$0xff]
      %v5023 = vld [vmem:[%s4985 + $0x128] sm:$0xff]
      %v5024 = vld [vmem:[%s4985 + $0x130] sm:$0xff]
      %v5025 = vld [vmem:[%s4985 + $0x138] sm:$0xff]
      %v5026 = vld [vmem:[%s4985 + $0x140] sm:$0xff]
      %v5027 = vld [vmem:[%s4985 + $0x148] sm:$0xff]
      %v5028 = vld [vmem:[%s4985 + $0x150] sm:$0xff]
      %v5029 = vld [vmem:[%s4985 + $0x158] sm:$0xff]
      %v5030 = vld [vmem:[%s4985 + $0x160] sm:$0xff]
      %v5031 = vld [vmem:[%s4985 + $0x168] sm:$0xff]
      %v5032 = vld [vmem:[%s4985 + $0x170] sm:$0xff]
      %v5033 = vld [vmem:[%s4985 + $0x178] sm:$0xff]
      %v5034 = vld [vmem:[%s4985 + $0x180] sm:$0xff]
      %v5035 = vld [vmem:[%s4985 + $0x188] sm:$0xff]
      %v5036 = vld [vmem:[%s4985 + $0x190] sm:$0xff]
      %v5037 = vld [vmem:[%s4985 + $0x198] sm:$0xff]
      %v5038 = vld [vmem:[%s4985 + $0x1a0] sm:$0xff]
      %v5039 = vld [vmem:[%s4985 + $0x1a8] sm:$0xff]
      %v5040 = vld [vmem:[%s4985 + $0x1b0] sm:$0xff]
      %v5041 = vld [vmem:[%s4985 + $0x1b8] sm:$0xff]
      %v5042 = vld [vmem:[%s4985 + $0x1c0] sm:$0xff]
      %v5043 = vld [vmem:[%s4985 + $0x1c8] sm:$0xff]
      %v5044 = vld [vmem:[%s4985 + $0x1d0] sm:$0xff]
      %v5045 = vld [vmem:[%s4985 + $0x1d8] sm:$0xff]
      %v5046 = vld [vmem:[%s4985 + $0x1e0] sm:$0xff]
      %v5047 = vld [vmem:[%s4985 + $0x1e8] sm:$0xff]
      %v5048 = vld [vmem:[%s4985 + $0x1f0] sm:$0xff]
      %v5049 = vld [vmem:[%s4985 + $0x1f8] sm:$0xff]
      %5050 = vmatprep.subr.mxu0 0.0
      %5051 = vmatpush1.msra.mxu0 %v4986
      %5052 = vmatprep.subr.mxu0 0.0
      %5053 = vmatpush1.msra.mxu0 %v4987
      %5054 = vmatprep.subr.mxu0 0.0
      %5055 = vmatpush1.msra.mxu0 %v4988
      %5056 = vmatprep.subr.mxu0 0.0
      %5057 = vmatpush1.msra.mxu0 %v4989
      %5058 = vmatprep.subr.mxu0 0.0
      %5059 = vmatpush1.msra.mxu0 %v4990
      %5060 = vmatprep.subr.mxu0 0.0
      %5061 = vmatpush1.msra.mxu0 %v4991
      %5062 = vmatprep.subr.mxu0 0.0
      %5063 = vmatpush1.msra.mxu0 %v4992
      %5064 = vmatprep.subr.mxu0 0.0
      %5065 = vmatpush1.msra.mxu0 %v4993
      %5066 = vmatprep.subr.mxu0 0.0
      %5067 = vmatpush1.msra.mxu0 %v4994
      %5068 = vmatprep.subr.mxu0 0.0
      %5069 = vmatpush1.msra.mxu0 %v4995
      %5070 = vmatprep.subr.mxu0 0.0
      %5071 = vmatpush1.msra.mxu0 %v4996
      %5072 = vmatprep.subr.mxu0 0.0
      %5073 = vmatpush1.msra.mxu0 %v4997
      %5074 = vmatprep.subr.mxu0 0.0
      %5075 = vmatpush1.msra.mxu0 %v4998
      %5076 = vmatprep.subr.mxu0 0.0
      %5077 = vmatpush1.msra.mxu0 %v4999
      %5078 = vmatprep.subr.mxu0 0.0
      %5079 = vmatpush1.msra.mxu0 %v5000
      %5080 = vmatprep.subr.mxu0 0.0
      %5081 = vmatpush1.msra.mxu0 %v5001
      %5082 = vmatprep.subr.mxu0 0.0
      %5083 = vmatpush1.msra.mxu0 0.0
      %5084 = vmatprep.subr.mxu0 0.0
      %5085 = vmatpush1.msra.mxu0 0.0
      %5086 = vmatprep.subr.mxu0 0.0
      %5087 = vmatpush1.msra.mxu0 0.0
      %5088 = vmatprep.subr.mxu0 0.0
      %5089 = vmatpush1.msra.mxu0 0.0
      %5090 = vmatprep.subr.mxu0 0.0
      %5091 = vmatpush1.msra.mxu0 0.0
      %5092 = vmatprep.subr.mxu0 0.0
      %5093 = vmatpush1.msra.mxu0 0.0
      %5094 = vmatprep.subr.mxu0 0.0
      %5095 = vmatpush1.msra.mxu0 0.0
      %5096 = vmatprep.subr.mxu0 0.0
      %5097 = vmatpush1.msra.mxu0 0.0
      %5098 = vmatprep.subr.mxu0 0.0
      %5099 = vmatpush1.msra.mxu0 0.0
      %5100 = vmatprep.subr.mxu0 0.0
      %5101 = vmatpush1.msra.mxu0 0.0
      %5102 = vmatprep.subr.mxu0 0.0
      %5103 = vmatpush1.msra.mxu0 0.0
      %5104 = vmatprep.subr.mxu0 0.0
      %5105 = vmatpush1.msra.mxu0 0.0
      %5106 = vmatprep.subr.mxu0 0.0
      %5107 = vmatpush1.msra.mxu0 0.0
      %5108 = vmatprep.subr.mxu0 0.0
      %5109 = vmatpush1.msra.mxu0 0.0
      %5110 = vmatprep.subr.mxu0 0.0
      %5111 = vmatpush1.msra.mxu0 0.0
      %5112 = vmatprep.subr.mxu0 0.0
      %5113 = vmatpush1.msra.mxu0 0.0
      %5114 = vmatprep.mubr.f32.mxu0 0.0
      %5115 = vmatmul.mubr.f32.gmra.mrb[0].mxu0 %v4984
      %v5116 = vpop.f32.mrb[0].mxu0
      %v5117 = vadd.f32 0.0, %v5116
      %v5118 = vpop.f32.mrb[0].mxu0
      %5119 = vdwg.mxu0
      %5120 = vmatprep.subr.mxu0 0.0
      %5121 = vmatpush1.msra.mxu0 %v5002
      %5122 = vmatprep.subr.mxu0 0.0
      %5123 = vmatpush1.msra.mxu0 %v5003
      %5124 = vmatprep.subr.mxu0 0.0
      %5125 = vmatpush1.msra.mxu0 %v5004
      %5126 = vmatprep.subr.mxu0 0.0
      %5127 = vmatpush1.msra.mxu0 %v5005
      %5128 = vmatprep.subr.mxu0 0.0
      %5129 = vmatpush1.msra.mxu0 %v5006
      %5130 = vmatprep.subr.mxu0 0.0
      %5131 = vmatpush1.msra.mxu0 %v5007
      %5132 = vmatprep.subr.mxu0 0.0
      %5133 = vmatpush1.msra.mxu0 %v5008
      %5134 = vmatprep.subr.mxu0 0.0
      %5135 = vmatpush1.msra.mxu0 %v5009
      %5136 = vmatprep.subr.mxu0 0.0
      %5137 = vmatpush1.msra.mxu0 %v5010
      %5138 = vmatprep.subr.mxu0 0.0
      %5139 = vmatpush1.msra.mxu0 %v5011
      %5140 = vmatprep.subr.mxu0 0.0
      %5141 = vmatpush1.msra.mxu0 %v5012
      %5142 = vmatprep.subr.mxu0 0.0
      %5143 = vmatpush1.msra.mxu0 %v5013
      %5144 = vmatprep.subr.mxu0 0.0
      %5145 = vmatpush1.msra.mxu0 %v5014
      %5146 = vmatprep.subr.mxu0 0.0
      %5147 = vmatpush1.msra.mxu0 %v5015
      %5148 = vmatprep.subr.mxu0 0.0
      %5149 = vmatpush1.msra.mxu0 %v5016
      %5150 = vmatprep.subr.mxu0 0.0
      %5151 = vmatpush1.msra.mxu0 %v5017
      %5152 = vmatprep.subr.mxu0 0.0
      %5153 = vmatpush1.msra.mxu0 0.0
      %5154 = vmatprep.subr.mxu0 0.0
      %5155 = vmatpush1.msra.mxu0 0.0
      %5156 = vmatprep.subr.mxu0 0.0
      %5157 = vmatpush1.msra.mxu0 0.0
      %5158 = vmatprep.subr.mxu0 0.0
      %5159 = vmatpush1.msra.mxu0 0.0
      %5160 = vmatprep.subr.mxu0 0.0
      %5161 = vmatpush1.msra.mxu0 0.0
      %5162 = vmatprep.subr.mxu0 0.0
      %5163 = vmatpush1.msra.mxu0 0.0
      %5164 = vmatprep.subr.mxu0 0.0
      %5165 = vmatpush1.msra.mxu0 0.0
      %5166 = vmatprep.subr.mxu0 0.0
      %5167 = vmatpush1.msra.mxu0 0.0
      %5168 = vmatprep.subr.mxu0 0.0
      %5169 = vmatpush1.msra.mxu0 0.0
      %5170 = vmatprep.subr.mxu0 0.0
      %5171 = vmatpush1.msra.mxu0 0.0
      %5172 = vmatprep.subr.mxu0 0.0
      %5173 = vmatpush1.msra.mxu0 0.0
      %5174 = vmatprep.subr.mxu0 0.0
      %5175 = vmatpush1.msra.mxu0 0.0
      %5176 = vmatprep.subr.mxu0 0.0
      %5177 = vmatpush1.msra.mxu0 0.0
      %5178 = vmatprep.subr.mxu0 0.0
      %5179 = vmatpush1.msra.mxu0 0.0
      %5180 = vmatprep.subr.mxu0 0.0
      %5181 = vmatpush1.msra.mxu0 0.0
      %5182 = vmatprep.subr.mxu0 0.0
      %5183 = vmatpush1.msra.mxu0 0.0
      %5184 = vmatprep.mubr.f32.mxu0 0.0
      %5185 = vmatmul.mubr.f32.gmra.mrb[0].mxu0 %v4984
      %v5186 = vpop.f32.mrb[0].mxu0
      %v5187 = vadd.f32 0.0, %v5186
      %v5188 = vpop.f32.mrb[0].mxu0
      %5189 = vdwg.mxu0
      %5190 = vmatprep.subr.mxu0 0.0
      %5191 = vmatpush1.msra.mxu0 %v5018
      %5192 = vmatprep.subr.mxu0 0.0
      %5193 = vmatpush1.msra.mxu0 %v5019
      %5194 = vmatprep.subr.mxu0 0.0
      %5195 = vmatpush1.msra.mxu0 %v5020
      %5196 = vmatprep.subr.mxu0 0.0
      %5197 = vmatpush1.msra.mxu0 %v5021
      %5198 = vmatprep.subr.mxu0 0.0
      %5199 = vmatpush1.msra.mxu0 %v5022
      %5200 = vmatprep.subr.mxu0 0.0
      %5201 = vmatpush1.msra.mxu0 %v5023
      %5202 = vmatprep.subr.mxu0 0.0
      %5203 = vmatpush1.msra.mxu0 %v5024
      %5204 = vmatprep.subr.mxu0 0.0
      %5205 = vmatpush1.msra.mxu0 %v5025
      %5206 = vmatprep.subr.mxu0 0.0
      %5207 = vmatpush1.msra.mxu0 %v5026
      %5208 = vmatprep.subr.mxu0 0.0
      %5209 = vmatpush1.msra.mxu0 %v5027
      %5210 = vmatprep.subr.mxu0 0.0
      %5211 = vmatpush1.msra.mxu0 %v5028
      %5212 = vmatprep.subr.mxu0 0.0
      %5213 = vmatpush1.msra.mxu0 %v5029
      %5214 = vmatprep.subr.mxu0 0.0
      %5215 = vmatpush1.msra.mxu0 %v5030
      %5216 = vmatprep.subr.mxu0 0.0
      %5217 = vmatpush1.msra.mxu0 %v5031
      %5218 = vmatprep.subr.mxu0 0.0
      %5219 = vmatpush1.msra.mxu0 %v5032
      %5220 = vmatprep.subr.mxu0 0.0
      %5221 = vmatpush1.msra.mxu0 %v5033
      %5222 = vmatprep.subr.mxu0 0.0
      %5223 = vmatpush1.msra.mxu0 0.0
      %5224 = vmatprep.subr.mxu0 0.0
      %5225 = vmatpush1.msra.mxu0 0.0
      %5226 = vmatprep.subr.mxu0 0.0
      %5227 = vmatpush1.msra.mxu0 0.0
      %5228 = vmatprep.subr.mxu0 0.0
      %5229 = vmatpush1.msra.mxu0 0.0
      %5230 = vmatprep.subr.mxu0 0.0
      %5231 = vmatpush1.msra.mxu0 0.0
      %5232 = vmatprep.subr.mxu0 0.0
      %5233 = vmatpush1.msra.mxu0 0.0
      %5234 = vmatprep.subr.mxu0 0.0
      %5235 = vmatpush1.msra.mxu0 0.0
      %5236 = vmatprep.subr.mxu0 0.0
      %5237 = vmatpush1.msra.mxu0 0.0
      %5238 = vmatprep.subr.mxu0 0.0
      %5239 = vmatpush1.msra.mxu0 0.0
      %5240 = vmatprep.subr.mxu0 0.0
      %5241 = vmatpush1.msra.mxu0 0.0
      %5242 = vmatprep.subr.mxu0 0.0
      %5243 = vmatpush1.msra.mxu0 0.0
      %5244 = vmatprep.subr.mxu0 0.0
      %5245 = vmatpush1.msra.mxu0 0.0
      %5246 = vmatprep.subr.mxu0 0.0
      %5247 = vmatpush1.msra.mxu0 0.0
      %5248 = vmatprep.subr.mxu0 0.0
      %5249 = vmatpush1.msra.mxu0 0.0
      %5250 = vmatprep.subr.mxu0 0.0
      %5251 = vmatpush1.msra.mxu0 0.0
      %5252 = vmatprep.subr.mxu0 0.0
      %5253 = vmatpush1.msra.mxu0 0.0
      %5254 = vmatprep.mubr.f32.mxu0 0.0
      %5255 = vmatmul.mubr.f32.gmra.mrb[0].mxu0 %v4984
      %v5256 = vpop.f32.mrb[0].mxu0
      %v5257 = vadd.f32 0.0, %v5256
      %v5258 = vpop.f32.mrb[0].mxu0
      %5259 = vdwg.mxu0
      %5260 = vmatprep.subr.mxu0 0.0
      %5261 = vmatpush1.msra.mxu0 %v5034
      %5262 = vmatprep.subr.mxu0 0.0
      %5263 = vmatpush1.msra.mxu0 %v5035
      %5264 = vmatprep.subr.mxu0 0.0
      %5265 = vmatpush1.msra.mxu0 %v5036
      %5266 = vmatprep.subr.mxu0 0.0
      %5267 = vmatpush1.msra.mxu0 %v5037
      %5268 = vmatprep.subr.mxu0 0.0
      %5269 = vmatpush1.msra.mxu0 %v5038
      %5270 = vmatprep.subr.mxu0 0.0
      %5271 = vmatpush1.msra.mxu0 %v5039
      %5272 = vmatprep.subr.mxu0 0.0
      %5273 = vmatpush1.msra.mxu0 %v5040
      %5274 = vmatprep.subr.mxu0 0.0
      %5275 = vmatpush1.msra.mxu0 %v5041
      %5276 = vmatprep.subr.mxu0 0.0
      %5277 = vmatpush1.msra.mxu0 %v5042
      %5278 = vmatprep.subr.mxu0 0.0
      %5279 = vmatpush1.msra.mxu0 %v5043
      %5280 = vmatprep.subr.mxu0 0.0
      %5281 = vmatpush1.msra.mxu0 %v5044
      %5282 = vmatprep.subr.mxu0 0.0
      %5283 = vmatpush1.msra.mxu0 %v5045
      %5284 = vmatprep.subr.mxu0 0.0
      %5285 = vmatpush1.msra.mxu0 %v5046
      %5286 = vmatprep.subr.mxu0 0.0
      %5287 = vmatpush1.msra.mxu0 %v5047
      %5288 = vmatprep.subr.mxu0 0.0
      %5289 = vmatpush1.msra.mxu0 %v5048
      %5290 = vmatprep.subr.mxu0 0.0
      %5291 = vmatpush1.msra.mxu0 %v5049
      %5292 = vmatprep.subr.mxu0 0.0
      %5293 = vmatpush1.msra.mxu0 0.0
      %5294 = vmatprep.subr.mxu0 0.0
      %5295 = vmatpush1.msra.mxu0 0.0
      %5296 = vmatprep.subr.mxu0 0.0
      %5297 = vmatpush1.msra.mxu0 0.0
      %5298 = vmatprep.subr.mxu0 0.0
      %5299 = vmatpush1.msra.mxu0 0.0
      %5300 = vmatprep.subr.mxu0 0.0
      %5301 = vmatpush1.msra.mxu0 0.0
      %5302 = vmatprep.subr.mxu0 0.0
      %5303 = vmatpush1.msra.mxu0 0.0
      %5304 = vmatprep.subr.mxu0 0.0
      %5305 = vmatpush1.msra.mxu0 0.0
      %5306 = vmatprep.subr.mxu0 0.0
      %5307 = vmatpush1.msra.mxu0 0.0
      %5308 = vmatprep.subr.mxu0 0.0
      %5309 = vmatpush1.msra.mxu0 0.0
      %5310 = vmatprep.subr.mxu0 0.0
      %5311 = vmatpush1.msra.mxu0 0.0
      %5312 = vmatprep.subr.mxu0 0.0
      %5313 = vmatpush1.msra.mxu0 0.0
      %5314 = vmatprep.subr.mxu0 0.0
      %5315 = vmatpush1.msra.mxu0 0.0
      %5316 = vmatprep.subr.mxu0 0.0
      %5317 = vmatpush1.msra.mxu0 0.0
      %5318 = vmatprep.subr.mxu0 0.0
      %5319 = vmatpush1.msra.mxu0 0.0
      %5320 = vmatprep.subr.mxu0 0.0
      %5321 = vmatpush1.msra.mxu0 0.0
      %5322 = vmatprep.subr.mxu0 0.0
      %5323 = vmatpush1.msra.mxu0 0.0
      %5324 = vmatprep.mubr.f32.mxu0 0.0
      %5325 = vmatmul.mubr.f32.gmra.mrb[0].mxu0 %v4984
      %v5326 = vpop.f32.mrb[0].mxu0
      %v5327 = vadd.f32 0.0, %v5326
      %v5328 = vpop.f32.mrb[0].mxu0
      %5329 = vdwg.mxu0
      %s5330 = scalar_lea.vmem %s3, 512
      %v5331 = vld [vmem:[%s5330] sm:$0xff]
      %v5332 = vld [vmem:[%s5330 + $0x8] sm:$0xff]
      %v5333 = vld [vmem:[%s5330 + $0x10] sm:$0xff]
      %v5334 = vld [vmem:[%s5330 + $0x18] sm:$0xff]
      %v5335 = vld [vmem:[%s5330 + $0x20] sm:$0xff]
      %v5336 = vld [vmem:[%s5330 + $0x28] sm:$0xff]
      %v5337 = vld [vmem:[%s5330 + $0x30] sm:$0xff]
      %v5338 = vld [vmem:[%s5330 + $0x38] sm:$0xff]
      %v5339 = vld [vmem:[%s5330 + $0x40] sm:$0xff]
      %v5340 = vld [vmem:[%s5330 + $0x48] sm:$0xff]
      %v5341 = vld [vmem:[%s5330 + $0x50] sm:$0xff]
      %v5342 = vld [vmem:[%s5330 + $0x58] sm:$0xff]
      %v5343 = vld [vmem:[%s5330 + $0x60] sm:$0xff]
      %v5344 = vld [vmem:[%s5330 + $0x68] sm:$0xff]
      %v5345 = vld [vmem:[%s5330 + $0x70] sm:$0xff]
      %v5346 = vld [vmem:[%s5330 + $0x78] sm:$0xff]
      %v5347 = vld [vmem:[%s5330 + $0x80] sm:$0xff]
      %v5348 = vld [vmem:[%s5330 + $0x88] sm:$0xff]
      %v5349 = vld [vmem:[%s5330 + $0x90] sm:$0xff]
      %v5350 = vld [vmem:[%s5330 + $0x98] sm:$0xff]
      %v5351 = vld [vmem:[%s5330 + $0xa0] sm:$0xff]
      %v5352 = vld [vmem:[%s5330 + $0xa8] sm:$0xff]
      %v5353 = vld [vmem:[%s5330 + $0xb0] sm:$0xff]
      %v5354 = vld [vmem:[%s5330 + $0xb8] sm:$0xff]
      %v5355 = vld [vmem:[%s5330 + $0xc0] sm:$0xff]
      %v5356 = vld [vmem:[%s5330 + $0xc8] sm:$0xff]
      %v5357 = vld [vmem:[%s5330 + $0xd0] sm:$0xff]
      %v5358 = vld [vmem:[%s5330 + $0xd8] sm:$0xff]
      %v5359 = vld [vmem:[%s5330 + $0xe0] sm:$0xff]
      %v5360 = vld [vmem:[%s5330 + $0xe8] sm:$0xff]
      %v5361 = vld [vmem:[%s5330 + $0xf0] sm:$0xff]
      %v5362 = vld [vmem:[%s5330 + $0xf8] sm:$0xff]
      %v5363 = vld [vmem:[%s5330 + $0x100] sm:$0xff]
      %v5364 = vld [vmem:[%s5330 + $0x108] sm:$0xff]
      %v5365 = vld [vmem:[%s5330 + $0x110] sm:$0xff]
      %v5366 = vld [vmem:[%s5330 + $0x118] sm:$0xff]
      %v5367 = vld [vmem:[%s5330 + $0x120] sm:$0xff]
      %v5368 = vld [vmem:[%s5330 + $0x128] sm:$0xff]
      %v5369 = vld [vmem:[%s5330 + $0x130] sm:$0xff]
      %v5370 = vld [vmem:[%s5330 + $0x138] sm:$0xff]
      %v5371 = vld [vmem:[%s5330 + $0x140] sm:$0xff]
      %v5372 = vld [vmem:[%s5330 + $0x148] sm:$0xff]
      %v5373 = vld [vmem:[%s5330 + $0x150] sm:$0xff]
      %v5374 = vld [vmem:[%s5330 + $0x158] sm:$0xff]
      %v5375 = vld [vmem:[%s5330 + $0x160] sm:$0xff]
      %v5376 = vld [vmem:[%s5330 + $0x168] sm:$0xff]
      %v5377 = vld [vmem:[%s5330 + $0x170] sm:$0xff]
      %v5378 = vld [vmem:[%s5330 + $0x178] sm:$0xff]
      %v5379 = vld [vmem:[%s5330 + $0x180] sm:$0xff]
      %v5380 = vld [vmem:[%s5330 + $0x188] sm:$0xff]
      %v5381 = vld [vmem:[%s5330 + $0x190] sm:$0xff]
      %v5382 = vld [vmem:[%s5330 + $0x198] sm:$0xff]
      %v5383 = vld [vmem:[%s5330 + $0x1a0] sm:$0xff]
      %v5384 = vld [vmem:[%s5330 + $0x1a8] sm:$0xff]
      %v5385 = vld [vmem:[%s5330 + $0x1b0] sm:$0xff]
      %v5386 = vld [vmem:[%s5330 + $0x1b8] sm:$0xff]
      %v5387 = vld [vmem:[%s5330 + $0x1c0] sm:$0xff]
      %v5388 = vld [vmem:[%s5330 + $0x1c8] sm:$0xff]
      %v5389 = vld [vmem:[%s5330 + $0x1d0] sm:$0xff]
      %v5390 = vld [vmem:[%s5330 + $0x1d8] sm:$0xff]
      %v5391 = vld [vmem:[%s5330 + $0x1e0] sm:$0xff]
      %v5392 = vld [vmem:[%s5330 + $0x1e8] sm:$0xff]
      %v5393 = vld [vmem:[%s5330 + $0x1f0] sm:$0xff]
      %v5394 = vld [vmem:[%s5330 + $0x1f8] sm:$0xff]
      %5395 = vmatprep.subr.mxu0 0.0
      %5396 = vmatpush1.msra.mxu0 %v5331
      %5397 = vmatprep.subr.mxu0 0.0
      %5398 = vmatpush1.msra.mxu0 %v5332
      %5399 = vmatprep.subr.mxu0 0.0
      %5400 = vmatpush1.msra.mxu0 %v5333
      %5401 = vmatprep.subr.mxu0 0.0
      %5402 = vmatpush1.msra.mxu0 %v5334
      %5403 = vmatprep.subr.mxu0 0.0
      %5404 = vmatpush1.msra.mxu0 %v5335
      %5405 = vmatprep.subr.mxu0 0.0
      %5406 = vmatpush1.msra.mxu0 %v5336
      %5407 = vmatprep.subr.mxu0 0.0
      %5408 = vmatpush1.msra.mxu0 %v5337
      %5409 = vmatprep.subr.mxu0 0.0
      %5410 = vmatpush1.msra.mxu0 %v5338
      %5411 = vmatprep.subr.mxu0 0.0
      %5412 = vmatpush1.msra.mxu0 %v5339
      %5413 = vmatprep.subr.mxu0 0.0
      %5414 = vmatpush1.msra.mxu0 %v5340
      %5415 = vmatprep.subr.mxu0 0.0
      %5416 = vmatpush1.msra.mxu0 %v5341
      %5417 = vmatprep.subr.mxu0 0.0
      %5418 = vmatpush1.msra.mxu0 %v5342
      %5419 = vmatprep.subr.mxu0 0.0
      %5420 = vmatpush1.msra.mxu0 %v5343
      %5421 = vmatprep.subr.mxu0 0.0
      %5422 = vmatpush1.msra.mxu0 %v5344
      %5423 = vmatprep.subr.mxu0 0.0
      %5424 = vmatpush1.msra.mxu0 %v5345
      %5425 = vmatprep.subr.mxu0 0.0
      %5426 = vmatpush1.msra.mxu0 %v5346
      %5427 = vmatprep.subr.mxu0 0.0
      %5428 = vmatpush1.msra.mxu0 0.0
      %5429 = vmatprep.subr.mxu0 0.0
      %5430 = vmatpush1.msra.mxu0 0.0
      %5431 = vmatprep.subr.mxu0 0.0
      %5432 = vmatpush1.msra.mxu0 0.0
      %5433 = vmatprep.subr.mxu0 0.0
      %5434 = vmatpush1.msra.mxu0 0.0
      %5435 = vmatprep.subr.mxu0 0.0
      %5436 = vmatpush1.msra.mxu0 0.0
      %5437 = vmatprep.subr.mxu0 0.0
      %5438 = vmatpush1.msra.mxu0 0.0
      %5439 = vmatprep.subr.mxu0 0.0
      %5440 = vmatpush1.msra.mxu0 0.0
      %5441 = vmatprep.subr.mxu0 0.0
      %5442 = vmatpush1.msra.mxu0 0.0
      %5443 = vmatprep.subr.mxu0 0.0
      %5444 = vmatpush1.msra.mxu0 0.0
      %5445 = vmatprep.subr.mxu0 0.0
      %5446 = vmatpush1.msra.mxu0 0.0
      %5447 = vmatprep.subr.mxu0 0.0
      %5448 = vmatpush1.msra.mxu0 0.0
      %5449 = vmatprep.subr.mxu0 0.0
      %5450 = vmatpush1.msra.mxu0 0.0
      %5451 = vmatprep.subr.mxu0 0.0
      %5452 = vmatpush1.msra.mxu0 0.0
      %5453 = vmatprep.subr.mxu0 0.0
      %5454 = vmatpush1.msra.mxu0 0.0
      %5455 = vmatprep.subr.mxu0 0.0
      %5456 = vmatpush1.msra.mxu0 0.0
      %5457 = vmatprep.subr.mxu0 0.0
      %5458 = vmatpush1.msra.mxu0 0.0
      %5459 = vmatprep.mubr.f32.mxu0 0.0
      %5460 = vmatmul.mubr.f32.gmra.mrb[0].mxu0 %v4984
      %v5461 = vpop.f32.mrb[0].mxu0
      %v5462 = vadd.f32 0.0, %v5461
      %v5463 = vpop.f32.mrb[0].mxu0
      %5464 = vdwg.mxu0
      %5465 = vmatprep.subr.mxu0 0.0
      %5466 = vmatpush1.msra.mxu0 %v5347
      %5467 = vmatprep.subr.mxu0 0.0
      %5468 = vmatpush1.msra.mxu0 %v5348
      %5469 = vmatprep.subr.mxu0 0.0
      %5470 = vmatpush1.msra.mxu0 %v5349
      %5471 = vmatprep.subr.mxu0 0.0
      %5472 = vmatpush1.msra.mxu0 %v5350
      %5473 = vmatprep.subr.mxu0 0.0
      %5474 = vmatpush1.msra.mxu0 %v5351
      %5475 = vmatprep.subr.mxu0 0.0
      %5476 = vmatpush1.msra.mxu0 %v5352
      %5477 = vmatprep.subr.mxu0 0.0
      %5478 = vmatpush1.msra.mxu0 %v5353
      %5479 = vmatprep.subr.mxu0 0.0
      %5480 = vmatpush1.msra.mxu0 %v5354
      %5481 = vmatprep.subr.mxu0 0.0
      %5482 = vmatpush1.msra.mxu0 %v5355
      %5483 = vmatprep.subr.mxu0 0.0
      %5484 = vmatpush1.msra.mxu0 %v5356
      %5485 = vmatprep.subr.mxu0 0.0
      %5486 = vmatpush1.msra.mxu0 %v5357
      %5487 = vmatprep.subr.mxu0 0.0
      %5488 = vmatpush1.msra.mxu0 %v5358
      %5489 = vmatprep.subr.mxu0 0.0
      %5490 = vmatpush1.msra.mxu0 %v5359
      %5491 = vmatprep.subr.mxu0 0.0
      %5492 = vmatpush1.msra.mxu0 %v5360
      %5493 = vmatprep.subr.mxu0 0.0
      %5494 = vmatpush1.msra.mxu0 %v5361
      %5495 = vmatprep.subr.mxu0 0.0
      %5496 = vmatpush1.msra.mxu0 %v5362
      %5497 = vmatprep.subr.mxu0 0.0
      %5498 = vmatpush1.msra.mxu0 0.0
      %5499 = vmatprep.subr.mxu0 0.0
      %5500 = vmatpush1.msra.mxu0 0.0
      %5501 = vmatprep.subr.mxu0 0.0
      %5502 = vmatpush1.msra.mxu0 0.0
      %5503 = vmatprep.subr.mxu0 0.0
      %5504 = vmatpush1.msra.mxu0 0.0
      %5505 = vmatprep.subr.mxu0 0.0
      %5506 = vmatpush1.msra.mxu0 0.0
      %5507 = vmatprep.subr.mxu0 0.0
      %5508 = vmatpush1.msra.mxu0 0.0
      %5509 = vmatprep.subr.mxu0 0.0
      %5510 = vmatpush1.msra.mxu0 0.0
      %5511 = vmatprep.subr.mxu0 0.0
      %5512 = vmatpush1.msra.mxu0 0.0
      %5513 = vmatprep.subr.mxu0 0.0
      %5514 = vmatpush1.msra.mxu0 0.0
      %5515 = vmatprep.subr.mxu0 0.0
      %5516 = vmatpush1.msra.mxu0 0.0
      %5517 = vmatprep.subr.mxu0 0.0
      %5518 = vmatpush1.msra.mxu0 0.0
      %5519 = vmatprep.subr.mxu0 0.0
      %5520 = vmatpush1.msra.mxu0 0.0
      %5521 = vmatprep.subr.mxu0 0.0
      %5522 = vmatpush1.msra.mxu0 0.0
      %5523 = vmatprep.subr.mxu0 0.0
      %5524 = vmatpush1.msra.mxu0 0.0
      %5525 = vmatprep.subr.mxu0 0.0
      %5526 = vmatpush1.msra.mxu0 0.0
      %5527 = vmatprep.subr.mxu0 0.0
      %5528 = vmatpush1.msra.mxu0 0.0
      %5529 = vmatprep.mubr.f32.mxu0 0.0
      %5530 = vmatmul.mubr.f32.gmra.mrb[0].mxu0 %v4984
      %v5531 = vpop.f32.mrb[0].mxu0
      %v5532 = vadd.f32 0.0, %v5531
      %v5533 = vpop.f32.mrb[0].mxu0
      %5534 = vdwg.mxu0
      %5535 = vmatprep.subr.mxu0 0.0
      %5536 = vmatpush1.msra.mxu0 %v5363
      %5537 = vmatprep.subr.mxu0 0.0
      %5538 = vmatpush1.msra.mxu0 %v5364
      %5539 = vmatprep.subr.mxu0 0.0
      %5540 = vmatpush1.msra.mxu0 %v5365
      %5541 = vmatprep.subr.mxu0 0.0
      %5542 = vmatpush1.msra.mxu0 %v5366
      %5543 = vmatprep.subr.mxu0 0.0
      %5544 = vmatpush1.msra.mxu0 %v5367
      %5545 = vmatprep.subr.mxu0 0.0
      %5546 = vmatpush1.msra.mxu0 %v5368
      %5547 = vmatprep.subr.mxu0 0.0
      %5548 = vmatpush1.msra.mxu0 %v5369
      %5549 = vmatprep.subr.mxu0 0.0
      %5550 = vmatpush1.msra.mxu0 %v5370
      %5551 = vmatprep.subr.mxu0 0.0
      %5552 = vmatpush1.msra.mxu0 %v5371
      %5553 = vmatprep.subr.mxu0 0.0
      %5554 = vmatpush1.msra.mxu0 %v5372
      %5555 = vmatprep.subr.mxu0 0.0
      %5556 = vmatpush1.msra.mxu0 %v5373
      %5557 = vmatprep.subr.mxu0 0.0
      %5558 = vmatpush1.msra.mxu0 %v5374
      %5559 = vmatprep.subr.mxu0 0.0
      %5560 = vmatpush1.msra.mxu0 %v5375
      %5561 = vmatprep.subr.mxu0 0.0
      %5562 = vmatpush1.msra.mxu0 %v5376
      %5563 = vmatprep.subr.mxu0 0.0
      %5564 = vmatpush1.msra.mxu0 %v5377
      %5565 = vmatprep.subr.mxu0 0.0
      %5566 = vmatpush1.msra.mxu0 %v5378
      %5567 = vmatprep.subr.mxu0 0.0
      %5568 = vmatpush1.msra.mxu0 0.0
      %5569 = vmatprep.subr.mxu0 0.0
      %5570 = vmatpush1.msra.mxu0 0.0
      %5571 = vmatprep.subr.mxu0 0.0
      %5572 = vmatpush1.msra.mxu0 0.0
      %5573 = vmatprep.subr.mxu0 0.0
      %5574 = vmatpush1.msra.mxu0 0.0
      %5575 = vmatprep.subr.mxu0 0.0
      %5576 = vmatpush1.msra.mxu0 0.0
      %5577 = vmatprep.subr.mxu0 0.0
      %5578 = vmatpush1.msra.mxu0 0.0
      %5579 = vmatprep.subr.mxu0 0.0
      %5580 = vmatpush1.msra.mxu0 0.0
      %5581 = vmatprep.subr.mxu0 0.0
      %5582 = vmatpush1.msra.mxu0 0.0
      %5583 = vmatprep.subr.mxu0 0.0
      %5584 = vmatpush1.msra.mxu0 0.0
      %5585 = vmatprep.subr.mxu0 0.0
      %5586 = vmatpush1.msra.mxu0 0.0
      %5587 = vmatprep.subr.mxu0 0.0
      %5588 = vmatpush1.msra.mxu0 0.0
      %5589 = vmatprep.subr.mxu0 0.0
      %5590 = vmatpush1.msra.mxu0 0.0
      %5591 = vmatprep.subr.mxu0 0.0
      %5592 = vmatpush1.msra.mxu0 0.0
      %5593 = vmatprep.subr.mxu0 0.0
      %5594 = vmatpush1.msra.mxu0 0.0
      %5595 = vmatprep.subr.mxu0 0.0
      %5596 = vmatpush1.msra.mxu0 0.0
      %5597 = vmatprep.subr.mxu0 0.0
      %5598 = vmatpush1.msra.mxu0 0.0
      %5599 = vmatprep.mubr.f32.mxu0 0.0
      %5600 = vmatmul.mubr.f32.gmra.mrb[0].mxu0 %v4984
      %v5601 = vpop.f32.mrb[0].mxu0
      %v5602 = vadd.f32 0.0, %v5601
      %v5603 = vpop.f32.mrb[0].mxu0
      %5604 = vdwg.mxu0
      %5605 = vmatprep.subr.mxu0 0.0
      %5606 = vmatpush1.msra.mxu0 %v5379
      %5607 = vmatprep.subr.mxu0 0.0
      %5608 = vmatpush1.msra.mxu0 %v5380
      %5609 = vmatprep.subr.mxu0 0.0
      %5610 = vmatpush1.msra.mxu0 %v5381
      %5611 = vmatprep.subr.mxu0 0.0
      %5612 = vmatpush1.msra.mxu0 %v5382
      %5613 = vmatprep.subr.mxu0 0.0
      %5614 = vmatpush1.msra.mxu0 %v5383
      %5615 = vmatprep.subr.mxu0 0.0
      %5616 = vmatpush1.msra.mxu0 %v5384
      %5617 = vmatprep.subr.mxu0 0.0
      %5618 = vmatpush1.msra.mxu0 %v5385
      %5619 = vmatprep.subr.mxu0 0.0
      %5620 = vmatpush1.msra.mxu0 %v5386
      %5621 = vmatprep.subr.mxu0 0.0
      %5622 = vmatpush1.msra.mxu0 %v5387
      %5623 = vmatprep.subr.mxu0 0.0
      %5624 = vmatpush1.msra.mxu0 %v5388
      %5625 = vmatprep.subr.mxu0 0.0
      %5626 = vmatpush1.msra.mxu0 %v5389
      %5627 = vmatprep.subr.mxu0 0.0
      %5628 = vmatpush1.msra.mxu0 %v5390
      %5629 = vmatprep.subr.mxu0 0.0
      %5630 = vmatpush1.msra.mxu0 %v5391
      %5631 = vmatprep.subr.mxu0 0.0
      %5632 = vmatpush1.msra.mxu0 %v5392
      %5633 = vmatprep.subr.mxu0 0.0
      %5634 = vmatpush1.msra.mxu0 %v5393
      %5635 = vmatprep.subr.mxu0 0.0
      %5636 = vmatpush1.msra.mxu0 %v5394
      %5637 = vmatprep.subr.mxu0 0.0
      %5638 = vmatpush1.msra.mxu0 0.0
      %5639 = vmatprep.subr.mxu0 0.0
      %5640 = vmatpush1.msra.mxu0 0.0
      %5641 = vmatprep.subr.mxu0 0.0
      %5642 = vmatpush1.msra.mxu0 0.0
      %5643 = vmatprep.subr.mxu0 0.0
      %5644 = vmatpush1.msra.mxu0 0.0
      %5645 = vmatprep.subr.mxu0 0.0
      %5646 = vmatpush1.msra.mxu0 0.0
      %5647 = vmatprep.subr.mxu0 0.0
      %5648 = vmatpush1.msra.mxu0 0.0
      %5649 = vmatprep.subr.mxu0 0.0
      %5650 = vmatpush1.msra.mxu0 0.0
      %5651 = vmatprep.subr.mxu0 0.0
      %5652 = vmatpush1.msra.mxu0 0.0
      %5653 = vmatprep.subr.mxu0 0.0
      %5654 = vmatpush1.msra.mxu0 0.0
      %5655 = vmatprep.subr.mxu0 0.0
      %5656 = vmatpush1.msra.mxu0 0.0
      %5657 = vmatprep.subr.mxu0 0.0
      %5658 = vmatpush1.msra.mxu0 0.0
      %5659 = vmatprep.subr.mxu0 0.0
      %5660 = vmatpush1.msra.mxu0 0.0
      %5661 = vmatprep.subr.mxu0 0.0
      %5662 = vmatpush1.msra.mxu0 0.0
      %5663 = vmatprep.subr.mxu0 0.0
      %5664 = vmatpush1.msra.mxu0 0.0
      %5665 = vmatprep.subr.mxu0 0.0
      %5666 = vmatpush1.msra.mxu0 0.0
      %5667 = vmatprep.subr.mxu0 0.0
      %5668 = vmatpush1.msra.mxu0 0.0
      %5669 = vmatprep.mubr.f32.mxu0 0.0
      %5670 = vmatmul.mubr.f32.gmra.mrb[0].mxu0 %v4984
      %v5671 = vpop.f32.mrb[0].mxu0
      %v5672 = vadd.f32 0.0, %v5671
      %v5673 = vpop.f32.mrb[0].mxu0
      %5674 = vdwg.mxu0
      %s5675 = scalar_lea.vmem %s4, 512
      %v5676 = vld [vmem:[%s5675] sm:$0xff]
      %v5677 = vld [vmem:[%s5675 + $0x8] sm:$0xff]
      %v5678 = vld [vmem:[%s5675 + $0x10] sm:$0xff]
      %v5679 = vld [vmem:[%s5675 + $0x18] sm:$0xff]
      %v5680 = vld [vmem:[%s5675 + $0x20] sm:$0xff]
      %v5681 = vld [vmem:[%s5675 + $0x28] sm:$0xff]
      %v5682 = vld [vmem:[%s5675 + $0x30] sm:$0xff]
      %v5683 = vld [vmem:[%s5675 + $0x38] sm:$0xff]
      %v5684 = vld [vmem:[%s5675 + $0x40] sm:$0xff]
      %v5685 = vld [vmem:[%s5675 + $0x48] sm:$0xff]
      %v5686 = vld [vmem:[%s5675 + $0x50] sm:$0xff]
      %v5687 = vld [vmem:[%s5675 + $0x58] sm:$0xff]
      %v5688 = vld [vmem:[%s5675 + $0x60] sm:$0xff]
      %v5689 = vld [vmem:[%s5675 + $0x68] sm:$0xff]
      %v5690 = vld [vmem:[%s5675 + $0x70] sm:$0xff]
      %v5691 = vld [vmem:[%s5675 + $0x78] sm:$0xff]
      %v5692 = vld [vmem:[%s5675 + $0x80] sm:$0xff]
      %v5693 = vld [vmem:[%s5675 + $0x88] sm:$0xff]
      %v5694 = vld [vmem:[%s5675 + $0x90] sm:$0xff]
      %v5695 = vld [vmem:[%s5675 + $0x98] sm:$0xff]
      %v5696 = vld [vmem:[%s5675 + $0xa0] sm:$0xff]
      %v5697 = vld [vmem:[%s5675 + $0xa8] sm:$0xff]
      %v5698 = vld [vmem:[%s5675 + $0xb0] sm:$0xff]
      %v5699 = vld [vmem:[%s5675 + $0xb8] sm:$0xff]
      %v5700 = vld [vmem:[%s5675 + $0xc0] sm:$0xff]
      %v5701 = vld [vmem:[%s5675 + $0xc8] sm:$0xff]
      %v5702 = vld [vmem:[%s5675 + $0xd0] sm:$0xff]
      %v5703 = vld [vmem:[%s5675 + $0xd8] sm:$0xff]
      %v5704 = vld [vmem:[%s5675 + $0xe0] sm:$0xff]
      %v5705 = vld [vmem:[%s5675 + $0xe8] sm:$0xff]
      %v5706 = vld [vmem:[%s5675 + $0xf0] sm:$0xff]
      %v5707 = vld [vmem:[%s5675 + $0xf8] sm:$0xff]
      %v5708 = vld [vmem:[%s5675 + $0x100] sm:$0xff]
      %v5709 = vld [vmem:[%s5675 + $0x108] sm:$0xff]
      %v5710 = vld [vmem:[%s5675 + $0x110] sm:$0xff]
      %v5711 = vld [vmem:[%s5675 + $0x118] sm:$0xff]
      %v5712 = vld [vmem:[%s5675 + $0x120] sm:$0xff]
      %v5713 = vld [vmem:[%s5675 + $0x128] sm:$0xff]
      %v5714 = vld [vmem:[%s5675 + $0x130] sm:$0xff]
      %v5715 = vld [vmem:[%s5675 + $0x138] sm:$0xff]
      %v5716 = vld [vmem:[%s5675 + $0x140] sm:$0xff]
      %v5717 = vld [vmem:[%s5675 + $0x148] sm:$0xff]
      %v5718 = vld [vmem:[%s5675 + $0x150] sm:$0xff]
      %v5719 = vld [vmem:[%s5675 + $0x158] sm:$0xff]
      %v5720 = vld [vmem:[%s5675 + $0x160] sm:$0xff]
      %v5721 = vld [vmem:[%s5675 + $0x168] sm:$0xff]
      %v5722 = vld [vmem:[%s5675 + $0x170] sm:$0xff]
      %v5723 = vld [vmem:[%s5675 + $0x178] sm:$0xff]
      %v5724 = vld [vmem:[%s5675 + $0x180] sm:$0xff]
      %v5725 = vld [vmem:[%s5675 + $0x188] sm:$0xff]
      %v5726 = vld [vmem:[%s5675 + $0x190] sm:$0xff]
      %v5727 = vld [vmem:[%s5675 + $0x198] sm:$0xff]
      %v5728 = vld [vmem:[%s5675 + $0x1a0] sm:$0xff]
      %v5729 = vld [vmem:[%s5675 + $0x1a8] sm:$0xff]
      %v5730 = vld [vmem:[%s5675 + $0x1b0] sm:$0xff]
      %v5731 = vld [vmem:[%s5675 + $0x1b8] sm:$0xff]
      %v5732 = vld [vmem:[%s5675 + $0x1c0] sm:$0xff]
      %v5733 = vld [vmem:[%s5675 + $0x1c8] sm:$0xff]
      %v5734 = vld [vmem:[%s5675 + $0x1d0] sm:$0xff]
      %v5735 = vld [vmem:[%s5675 + $0x1d8] sm:$0xff]
      %v5736 = vld [vmem:[%s5675 + $0x1e0] sm:$0xff]
      %v5737 = vld [vmem:[%s5675 + $0x1e8] sm:$0xff]
      %v5738 = vld [vmem:[%s5675 + $0x1f0] sm:$0xff]
      %v5739 = vld [vmem:[%s5675 + $0x1f8] sm:$0xff]
      %5740 = vmatprep.subr.mxu0 0.0
      %5741 = vmatpush1.msra.mxu0 %v5676
      %5742 = vmatprep.subr.mxu0 0.0
      %5743 = vmatpush1.msra.mxu0 %v5677
      %5744 = vmatprep.subr.mxu0 0.0
      %5745 = vmatpush1.msra.mxu0 %v5678
      %5746 = vmatprep.subr.mxu0 0.0
      %5747 = vmatpush1.msra.mxu0 %v5679
      %5748 = vmatprep.subr.mxu0 0.0
      %5749 = vmatpush1.msra.mxu0 %v5680
      %5750 = vmatprep.subr.mxu0 0.0
      %5751 = vmatpush1.msra.mxu0 %v5681
      %5752 = vmatprep.subr.mxu0 0.0
      %5753 = vmatpush1.msra.mxu0 %v5682
      %5754 = vmatprep.subr.mxu0 0.0
      %5755 = vmatpush1.msra.mxu0 %v5683
      %5756 = vmatprep.subr.mxu0 0.0
      %5757 = vmatpush1.msra.mxu0 %v5684
      %5758 = vmatprep.subr.mxu0 0.0
      %5759 = vmatpush1.msra.mxu0 %v5685
      %5760 = vmatprep.subr.mxu0 0.0
      %5761 = vmatpush1.msra.mxu0 %v5686
      %5762 = vmatprep.subr.mxu0 0.0
      %5763 = vmatpush1.msra.mxu0 %v5687
      %5764 = vmatprep.subr.mxu0 0.0
      %5765 = vmatpush1.msra.mxu0 %v5688
      %5766 = vmatprep.subr.mxu0 0.0
      %5767 = vmatpush1.msra.mxu0 %v5689
      %5768 = vmatprep.subr.mxu0 0.0
      %5769 = vmatpush1.msra.mxu0 %v5690
      %5770 = vmatprep.subr.mxu0 0.0
      %5771 = vmatpush1.msra.mxu0 %v5691
      %5772 = vmatprep.subr.mxu0 0.0
      %5773 = vmatpush1.msra.mxu0 0.0
      %5774 = vmatprep.subr.mxu0 0.0
      %5775 = vmatpush1.msra.mxu0 0.0
      %5776 = vmatprep.subr.mxu0 0.0
      %5777 = vmatpush1.msra.mxu0 0.0
      %5778 = vmatprep.subr.mxu0 0.0
      %5779 = vmatpush1.msra.mxu0 0.0
      %5780 = vmatprep.subr.mxu0 0.0
      %5781 = vmatpush1.msra.mxu0 0.0
      %5782 = vmatprep.subr.mxu0 0.0
      %5783 = vmatpush1.msra.mxu0 0.0
      %5784 = vmatprep.subr.mxu0 0.0
      %5785 = vmatpush1.msra.mxu0 0.0
      %5786 = vmatprep.subr.mxu0 0.0
      %5787 = vmatpush1.msra.mxu0 0.0
      %5788 = vmatprep.subr.mxu0 0.0
      %5789 = vmatpush1.msra.mxu0 0.0
      %5790 = vmatprep.subr.mxu0 0.0
      %5791 = vmatpush1.msra.mxu0 0.0
      %5792 = vmatprep.subr.mxu0 0.0
      %5793 = vmatpush1.msra.mxu0 0.0
      %5794 = vmatprep.subr.mxu0 0.0
      %5795 = vmatpush1.msra.mxu0 0.0
      %5796 = vmatprep.subr.mxu0 0.0
      %5797 = vmatpush1.msra.mxu0 0.0
      %5798 = vmatprep.subr.mxu0 0.0
      %5799 = vmatpush1.msra.mxu0 0.0
      %5800 = vmatprep.subr.mxu0 0.0
      %5801 = vmatpush1.msra.mxu0 0.0
      %5802 = vmatprep.subr.mxu0 0.0
      %5803 = vmatpush1.msra.mxu0 0.0
      %5804 = vmatprep.mubr.f32.mxu0 0.0
      %5805 = vmatmul.mubr.f32.gmra.mrb[0].mxu0 %v4984
      %v5806 = vpop.f32.mrb[0].mxu0
      %v5807 = vadd.f32 0.0, %v5806
      %v5808 = vpop.f32.mrb[0].mxu0
      %5809 = vdwg.mxu0
      %5810 = vmatprep.subr.mxu0 0.0
      %5811 = vmatpush1.msra.mxu0 %v5692
      %5812 = vmatprep.subr.mxu0 0.0
      %5813 = vmatpush1.msra.mxu0 %v5693
      %5814 = vmatprep.subr.mxu0 0.0
      %5815 = vmatpush1.msra.mxu0 %v5694
      %5816 = vmatprep.subr.mxu0 0.0
      %5817 = vmatpush1.msra.mxu0 %v5695
      %5818 = vmatprep.subr.mxu0 0.0
      %5819 = vmatpush1.msra.mxu0 %v5696
      %5820 = vmatprep.subr.mxu0 0.0
      %5821 = vmatpush1.msra.mxu0 %v5697
      %5822 = vmatprep.subr.mxu0 0.0
      %5823 = vmatpush1.msra.mxu0 %v5698
      %5824 = vmatprep.subr.mxu0 0.0
      %5825 = vmatpush1.msra.mxu0 %v5699
      %5826 = vmatprep.subr.mxu0 0.0
      %5827 = vmatpush1.msra.mxu0 %v5700
      %5828 = vmatprep.subr.mxu0 0.0
      %5829 = vmatpush1.msra.mxu0 %v5701
      %5830 = vmatprep.subr.mxu0 0.0
      %5831 = vmatpush1.msra.mxu0 %v5702
      %5832 = vmatprep.subr.mxu0 0.0
      %5833 = vmatpush1.msra.mxu0 %v5703
      %5834 = vmatprep.subr.mxu0 0.0
      %5835 = vmatpush1.msra.mxu0 %v5704
      %5836 = vmatprep.subr.mxu0 0.0
      %5837 = vmatpush1.msra.mxu0 %v5705
      %5838 = vmatprep.subr.mxu0 0.0
      %5839 = vmatpush1.msra.mxu0 %v5706
      %5840 = vmatprep.subr.mxu0 0.0
      %5841 = vmatpush1.msra.mxu0 %v5707
      %5842 = vmatprep.subr.mxu0 0.0
      %5843 = vmatpush1.msra.mxu0 0.0
      %5844 = vmatprep.subr.mxu0 0.0
      %5845 = vmatpush1.msra.mxu0 0.0
      %5846 = vmatprep.subr.mxu0 0.0
      %5847 = vmatpush1.msra.mxu0 0.0
      %5848 = vmatprep.subr.mxu0 0.0
      %5849 = vmatpush1.msra.mxu0 0.0
      %5850 = vmatprep.subr.mxu0 0.0
      %5851 = vmatpush1.msra.mxu0 0.0
      %5852 = vmatprep.subr.mxu0 0.0
      %5853 = vmatpush1.msra.mxu0 0.0
      %5854 = vmatprep.subr.mxu0 0.0
      %5855 = vmatpush1.msra.mxu0 0.0
      %5856 = vmatprep.subr.mxu0 0.0
      %5857 = vmatpush1.msra.mxu0 0.0
      %5858 = vmatprep.subr.mxu0 0.0
      %5859 = vmatpush1.msra.mxu0 0.0
      %5860 = vmatprep.subr.mxu0 0.0
      %5861 = vmatpush1.msra.mxu0 0.0
      %5862 = vmatprep.subr.mxu0 0.0
      %5863 = vmatpush1.msra.mxu0 0.0
      %5864 = vmatprep.subr.mxu0 0.0
      %5865 = vmatpush1.msra.mxu0 0.0
      %5866 = vmatprep.subr.mxu0 0.0
      %5867 = vmatpush1.msra.mxu0 0.0
      %5868 = vmatprep.subr.mxu0 0.0
      %5869 = vmatpush1.msra.mxu0 0.0
      %5870 = vmatprep.subr.mxu0 0.0
      %5871 = vmatpush1.msra.mxu0 0.0
      %5872 = vmatprep.subr.mxu0 0.0
      %5873 = vmatpush1.msra.mxu0 0.0
      %5874 = vmatprep.mubr.f32.mxu0 0.0
      %5875 = vmatmul.mubr.f32.gmra.mrb[0].mxu0 %v4984
      %v5876 = vpop.f32.mrb[0].mxu0
      %v5877 = vadd.f32 0.0, %v5876
      %v5878 = vpop.f32.mrb[0].mxu0
      %5879 = vdwg.mxu0
      %5880 = vmatprep.subr.mxu0 0.0
      %5881 = vmatpush1.msra.mxu0 %v5708
      %5882 = vmatprep.subr.mxu0 0.0
      %5883 = vmatpush1.msra.mxu0 %v5709
      %5884 = vmatprep.subr.mxu0 0.0
      %5885 = vmatpush1.msra.mxu0 %v5710
      %5886 = vmatprep.subr.mxu0 0.0
      %5887 = vmatpush1.msra.mxu0 %v5711
      %5888 = vmatprep.subr.mxu0 0.0
      %5889 = vmatpush1.msra.mxu0 %v5712
      %5890 = vmatprep.subr.mxu0 0.0
      %5891 = vmatpush1.msra.mxu0 %v5713
      %5892 = vmatprep.subr.mxu0 0.0
      %5893 = vmatpush1.msra.mxu0 %v5714
      %5894 = vmatprep.subr.mxu0 0.0
      %5895 = vmatpush1.msra.mxu0 %v5715
      %5896 = vmatprep.subr.mxu0 0.0
      %5897 = vmatpush1.msra.mxu0 %v5716
      %5898 = vmatprep.subr.mxu0 0.0
      %5899 = vmatpush1.msra.mxu0 %v5717
      %5900 = vmatprep.subr.mxu0 0.0
      %5901 = vmatpush1.msra.mxu0 %v5718
      %5902 = vmatprep.subr.mxu0 0.0
      %5903 = vmatpush1.msra.mxu0 %v5719
      %5904 = vmatprep.subr.mxu0 0.0
      %5905 = vmatpush1.msra.mxu0 %v5720
      %5906 = vmatprep.subr.mxu0 0.0
      %5907 = vmatpush1.msra.mxu0 %v5721
      %5908 = vmatprep.subr.mxu0 0.0
      %5909 = vmatpush1.msra.mxu0 %v5722
      %5910 = vmatprep.subr.mxu0 0.0
      %5911 = vmatpush1.msra.mxu0 %v5723
      %5912 = vmatprep.subr.mxu0 0.0
      %5913 = vmatpush1.msra.mxu0 0.0
      %5914 = vmatprep.subr.mxu0 0.0
      %5915 = vmatpush1.msra.mxu0 0.0
      %5916 = vmatprep.subr.mxu0 0.0
      %5917 = vmatpush1.msra.mxu0 0.0
      %5918 = vmatprep.subr.mxu0 0.0
      %5919 = vmatpush1.msra.mxu0 0.0
      %5920 = vmatprep.subr.mxu0 0.0
      %5921 = vmatpush1.msra.mxu0 0.0
      %5922 = vmatprep.subr.mxu0 0.0
      %5923 = vmatpush1.msra.mxu0 0.0
      %5924 = vmatprep.subr.mxu0 0.0
      %5925 = vmatpush1.msra.mxu0 0.0
      %5926 = vmatprep.subr.mxu0 0.0
      %5927 = vmatpush1.msra.mxu0 0.0
      %5928 = vmatprep.subr.mxu0 0.0
      %5929 = vmatpush1.msra.mxu0 0.0
      %5930 = vmatprep.subr.mxu0 0.0
      %5931 = vmatpush1.msra.mxu0 0.0
      %5932 = vmatprep.subr.mxu0 0.0
      %5933 = vmatpush1.msra.mxu0 0.0
      %5934 = vmatprep.subr.mxu0 0.0
      %5935 = vmatpush1.msra.mxu0 0.0
      %5936 = vmatprep.subr.mxu0 0.0
      %5937 = vmatpush1.msra.mxu0 0.0
      %5938 = vmatprep.subr.mxu0 0.0
      %5939 = vmatpush1.msra.mxu0 0.0
      %5940 = vmatprep.subr.mxu0 0.0
      %5941 = vmatpush1.msra.mxu0 0.0
      %5942 = vmatprep.subr.mxu0 0.0
      %5943 = vmatpush1.msra.mxu0 0.0
      %5944 = vmatprep.mubr.f32.mxu0 0.0
      %5945 = vmatmul.mubr.f32.gmra.mrb[0].mxu0 %v4984
      %v5946 = vpop.f32.mrb[0].mxu0
      %v5947 = vadd.f32 0.0, %v5946
      %v5948 = vpop.f32.mrb[0].mxu0
      %5949 = vdwg.mxu0
      %5950 = vmatprep.subr.mxu0 0.0
      %5951 = vmatpush1.msra.mxu0 %v5724
      %5952 = vmatprep.subr.mxu0 0.0
      %5953 = vmatpush1.msra.mxu0 %v5725
      %5954 = vmatprep.subr.mxu0 0.0
      %5955 = vmatpush1.msra.mxu0 %v5726
      %5956 = vmatprep.subr.mxu0 0.0
      %5957 = vmatpush1.msra.mxu0 %v5727
      %5958 = vmatprep.subr.mxu0 0.0
      %5959 = vmatpush1.msra.mxu0 %v5728
      %5960 = vmatprep.subr.mxu0 0.0
      %5961 = vmatpush1.msra.mxu0 %v5729
      %5962 = vmatprep.subr.mxu0 0.0
      %5963 = vmatpush1.msra.mxu0 %v5730
      %5964 = vmatprep.subr.mxu0 0.0
      %5965 = vmatpush1.msra.mxu0 %v5731
      %5966 = vmatprep.subr.mxu0 0.0
      %5967 = vmatpush1.msra.mxu0 %v5732
      %5968 = vmatprep.subr.mxu0 0.0
      %5969 = vmatpush1.msra.mxu0 %v5733
      %5970 = vmatprep.subr.mxu0 0.0
      %5971 = vmatpush1.msra.mxu0 %v5734
      %5972 = vmatprep.subr.mxu0 0.0
      %5973 = vmatpush1.msra.mxu0 %v5735
      %5974 = vmatprep.subr.mxu0 0.0
      %5975 = vmatpush1.msra.mxu0 %v5736
      %5976 = vmatprep.subr.mxu0 0.0
      %5977 = vmatpush1.msra.mxu0 %v5737
      %5978 = vmatprep.subr.mxu0 0.0
      %5979 = vmatpush1.msra.mxu0 %v5738
      %5980 = vmatprep.subr.mxu0 0.0
      %5981 = vmatpush1.msra.mxu0 %v5739
      %5982 = vmatprep.subr.mxu0 0.0
      %5983 = vmatpush1.msra.mxu0 0.0
      %5984 = vmatprep.subr.mxu0 0.0
      %5985 = vmatpush1.msra.mxu0 0.0
      %5986 = vmatprep.subr.mxu0 0.0
      %5987 = vmatpush1.msra.mxu0 0.0
      %5988 = vmatprep.subr.mxu0 0.0
      %5989 = vmatpush1.msra.mxu0 0.0
      %5990 = vmatprep.subr.mxu0 0.0
      %5991 = vmatpush1.msra.mxu0 0.0
      %5992 = vmatprep.subr.mxu0 0.0
      %5993 = vmatpush1.msra.mxu0 0.0
      %5994 = vmatprep.subr.mxu0 0.0
      %5995 = vmatpush1.msra.mxu0 0.0
      %5996 = vmatprep.subr.mxu0 0.0
      %5997 = vmatpush1.msra.mxu0 0.0
      %5998 = vmatprep.subr.mxu0 0.0
      %5999 = vmatpush1.msra.mxu0 0.0
      %6000 = vmatprep.subr.mxu0 0.0
      %6001 = vmatpush1.msra.mxu0 0.0
      %6002 = vmatprep.subr.mxu0 0.0
      %6003 = vmatpush1.msra.mxu0 0.0
      %6004 = vmatprep.subr.mxu0 0.0
      %6005 = vmatpush1.msra.mxu0 0.0
      %6006 = vmatprep.subr.mxu0 0.0
      %6007 = vmatpush1.msra.mxu0 0.0
      %6008 = vmatprep.subr.mxu0 0.0
      %6009 = vmatpush1.msra.mxu0 0.0
      %6010 = vmatprep.subr.mxu0 0.0
      %6011 = vmatpush1.msra.mxu0 0.0
      %6012 = vmatprep.subr.mxu0 0.0
      %6013 = vmatpush1.msra.mxu0 0.0
      %6014 = vmatprep.mubr.f32.mxu0 0.0
      %6015 = vmatmul.mubr.f32.gmra.mrb[0].mxu0 %v4984
      %v6016 = vpop.f32.mrb[0].mxu0
      %v6017 = vadd.f32 0.0, %v6016
      %v6018 = vpop.f32.mrb[0].mxu0
      %6019 = vdwg.mxu0
      %s6020 = scalar_lea.vmem %s5, 128
      %v6021 = vld [vmem:[%s6020] sm:$0xff]
      %v6022 = vld [vmem:[%s6020 + $0x8] sm:$0xff]
      %v6023 = vld [vmem:[%s6020 + $0x10] sm:$0xff]
      %v6024 = vld [vmem:[%s6020 + $0x18] sm:$0xff]
      %v6025 = vld [vmem:[%s6020 + $0x20] sm:$0xff]
      %v6026 = vld [vmem:[%s6020 + $0x28] sm:$0xff]
      %v6027 = vld [vmem:[%s6020 + $0x30] sm:$0xff]
      %v6028 = vld [vmem:[%s6020 + $0x38] sm:$0xff]
      %v6029 = vld [vmem:[%s6020 + $0x40] sm:$0xff]
      %v6030 = vld [vmem:[%s6020 + $0x48] sm:$0xff]
      %v6031 = vld [vmem:[%s6020 + $0x50] sm:$0xff]
      %v6032 = vld [vmem:[%s6020 + $0x58] sm:$0xff]
      %v6033 = vld [vmem:[%s6020 + $0x60] sm:$0xff]
      %v6034 = vld [vmem:[%s6020 + $0x68] sm:$0xff]
      %v6035 = vld [vmem:[%s6020 + $0x70] sm:$0xff]
      %v6036 = vld [vmem:[%s6020 + $0x78] sm:$0xff]
      %v6038 = vsel %vm1755, %v5117, 0
      %v6041 = vsel %vm1755, %v5462, 0
      %6043 = vmatprep.subr.mxu0 0.0
      %6044 = vmatpush1.xpose.msra.mxu0 %v6041
      %6045 = vmatprep.subr.mxu0 0.0
      %6046 = vmatpush1.xpose.msra.mxu0 0.0
      %6047 = vmatprep.subr.mxu0 0.0
      %6048 = vmatpush1.xpose.msra.mxu0 0.0
      %6049 = vmatprep.subr.mxu0 0.0
      %6050 = vmatpush1.xpose.msra.mxu0 0.0
      %6051 = vmatprep.subr.mxu0 0.0
      %6052 = vmatpush1.xpose.msra.mxu0 0.0
      %6053 = vmatprep.subr.mxu0 0.0
      %6054 = vmatpush1.xpose.msra.mxu0 0.0
      %6055 = vmatprep.subr.mxu0 0.0
      %6056 = vmatpush1.xpose.msra.mxu0 0.0
      %6057 = vmatprep.subr.mxu0 0.0
      %6058 = vmatpush1.xpose.msra.mxu0 0.0
      %6059 = vmatprep.subr.mxu0 0.0
      %6060 = vmatpush1.xpose.msra.mxu0 0.0
      %6061 = vmatprep.subr.mxu0 0.0
      %6062 = vmatpush1.xpose.msra.mxu0 0.0
      %6063 = vmatprep.subr.mxu0 0.0
      %6064 = vmatpush1.xpose.msra.mxu0 0.0
      %6065 = vmatprep.subr.mxu0 0.0
      %6066 = vmatpush1.xpose.msra.mxu0 0.0
      %6067 = vmatprep.subr.mxu0 0.0
      %6068 = vmatpush1.xpose.msra.mxu0 0.0
      %6069 = vmatprep.subr.mxu0 0.0
      %6070 = vmatpush1.xpose.msra.mxu0 0.0
      %6071 = vmatprep.subr.mxu0 0.0
      %6072 = vmatpush1.xpose.msra.mxu0 0.0
      %6073 = vmatprep.subr.mxu0 0.0
      %6074 = vmatpush1.xpose.msra.mxu0 0.0
      %6075 = vmatprep.subr.mxu0 0.0
      %6076 = vmatpush1.xpose.msra.mxu0 0.0
      %6077 = vmatprep.subr.mxu0 0.0
      %6078 = vmatpush1.xpose.msra.mxu0 0.0
      %6079 = vmatprep.subr.mxu0 0.0
      %6080 = vmatpush1.xpose.msra.mxu0 0.0
      %6081 = vmatprep.subr.mxu0 0.0
      %6082 = vmatpush1.xpose.msra.mxu0 0.0
      %6083 = vmatprep.subr.mxu0 0.0
      %6084 = vmatpush1.xpose.msra.mxu0 0.0
      %6085 = vmatprep.subr.mxu0 0.0
      %6086 = vmatpush1.xpose.msra.mxu0 0.0
      %6087 = vmatprep.subr.mxu0 0.0
      %6088 = vmatpush1.xpose.msra.mxu0 0.0
      %6089 = vmatprep.subr.mxu0 0.0
      %6090 = vmatpush1.xpose.msra.mxu0 0.0
      %6091 = vmatprep.subr.mxu0 0.0
      %6092 = vmatpush1.xpose.msra.mxu0 0.0
      %6093 = vmatprep.subr.mxu0 0.0
      %6094 = vmatpush1.xpose.msra.mxu0 0.0
      %6095 = vmatprep.subr.mxu0 0.0
      %6096 = vmatpush1.xpose.msra.mxu0 0.0
      %6097 = vmatprep.subr.mxu0 0.0
      %6098 = vmatpush1.xpose.msra.mxu0 0.0
      %6099 = vmatprep.subr.mxu0 0.0
      %6100 = vmatpush1.xpose.msra.mxu0 0.0
      %6101 = vmatprep.subr.mxu0 0.0
      %6102 = vmatpush1.xpose.msra.mxu0 0.0
      %6103 = vmatprep.subr.mxu0 0.0
      %6104 = vmatpush1.xpose.msra.mxu0 0.0
      %6105 = vmatprep.subr.mxu0 0.0
      %6106 = vmatpush1.xpose.msra.mxu0 0.0
      %6107 = vmatprep.mubr.f32.mxu0 0.0
      %6108 = vmatmul.mubr.f32.gmra.mrb[0].mxu0 %v6038
      %v6109 = vpop.f32.mrb[0].mxu0
      %v6110 = vadd.f32 0.0, %v6109
      %v6111 = vpop.f32.mrb[0].mxu0
      %6112 = vdwg.mxu0
      %v6114 = vsel %vm1755, %v5187, 0
      %v6117 = vsel %vm1755, %v5532, 0
      %6119 = vmatprep.subr.mxu0 0.0
      %6120 = vmatpush1.xpose.msra.mxu0 %v6117
      %6121 = vmatprep.subr.mxu0 0.0
      %6122 = vmatpush1.xpose.msra.mxu0 0.0
      %6123 = vmatprep.subr.mxu0 0.0
      %6124 = vmatpush1.xpose.msra.mxu0 0.0
      %6125 = vmatprep.subr.mxu0 0.0
      %6126 = vmatpush1.xpose.msra.mxu0 0.0
      %6127 = vmatprep.subr.mxu0 0.0
      %6128 = vmatpush1.xpose.msra.mxu0 0.0
      %6129 = vmatprep.subr.mxu0 0.0
      %6130 = vmatpush1.xpose.msra.mxu0 0.0
      %6131 = vmatprep.subr.mxu0 0.0
      %6132 = vmatpush1.xpose.msra.mxu0 0.0
      %6133 = vmatprep.subr.mxu0 0.0
      %6134 = vmatpush1.xpose.msra.mxu0 0.0
      %6135 = vmatprep.subr.mxu0 0.0
      %6136 = vmatpush1.xpose.msra.mxu0 0.0
      %6137 = vmatprep.subr.mxu0 0.0
      %6138 = vmatpush1.xpose.msra.mxu0 0.0
      %6139 = vmatprep.subr.mxu0 0.0
      %6140 = vmatpush1.xpose.msra.mxu0 0.0
      %6141 = vmatprep.subr.mxu0 0.0
      %6142 = vmatpush1.xpose.msra.mxu0 0.0
      %6143 = vmatprep.subr.mxu0 0.0
      %6144 = vmatpush1.xpose.msra.mxu0 0.0
      %6145 = vmatprep.subr.mxu0 0.0
      %6146 = vmatpush1.xpose.msra.mxu0 0.0
      %6147 = vmatprep.subr.mxu0 0.0
      %6148 = vmatpush1.xpose.msra.mxu0 0.0
      %6149 = vmatprep.subr.mxu0 0.0
      %6150 = vmatpush1.xpose.msra.mxu0 0.0
      %6151 = vmatprep.subr.mxu0 0.0
      %6152 = vmatpush1.xpose.msra.mxu0 0.0
      %6153 = vmatprep.subr.mxu0 0.0
      %6154 = vmatpush1.xpose.msra.mxu0 0.0
      %6155 = vmatprep.subr.mxu0 0.0
      %6156 = vmatpush1.xpose.msra.mxu0 0.0
      %6157 = vmatprep.subr.mxu0 0.0
      %6158 = vmatpush1.xpose.msra.mxu0 0.0
      %6159 = vmatprep.subr.mxu0 0.0
      %6160 = vmatpush1.xpose.msra.mxu0 0.0
      %6161 = vmatprep.subr.mxu0 0.0
      %6162 = vmatpush1.xpose.msra.mxu0 0.0
      %6163 = vmatprep.subr.mxu0 0.0
      %6164 = vmatpush1.xpose.msra.mxu0 0.0
      %6165 = vmatprep.subr.mxu0 0.0
      %6166 = vmatpush1.xpose.msra.mxu0 0.0
      %6167 = vmatprep.subr.mxu0 0.0
      %6168 = vmatpush1.xpose.msra.mxu0 0.0
      %6169 = vmatprep.subr.mxu0 0.0
      %6170 = vmatpush1.xpose.msra.mxu0 0.0
      %6171 = vmatprep.subr.mxu0 0.0
      %6172 = vmatpush1.xpose.msra.mxu0 0.0
      %6173 = vmatprep.subr.mxu0 0.0
      %6174 = vmatpush1.xpose.msra.mxu0 0.0
      %6175 = vmatprep.subr.mxu0 0.0
      %6176 = vmatpush1.xpose.msra.mxu0 0.0
      %6177 = vmatprep.subr.mxu0 0.0
      %6178 = vmatpush1.xpose.msra.mxu0 0.0
      %6179 = vmatprep.subr.mxu0 0.0
      %6180 = vmatpush1.xpose.msra.mxu0 0.0
      %6181 = vmatprep.subr.mxu0 0.0
      %6182 = vmatpush1.xpose.msra.mxu0 0.0
      %6183 = vmatprep.mubr.f32.mxu0 0.0
      %6184 = vmatmul.mubr.f32.gmra.mrb[0].mxu0 %v6114
      %v6185 = vpop.f32.mrb[0].mxu0
      %v6186 = vadd.f32 0.0, %v6185
      %v6187 = vpop.f32.mrb[0].mxu0
      %6188 = vdwg.mxu0
      %v6190 = vsel %vm1755, %v5257, 0
      %v6193 = vsel %vm1755, %v5602, 0
      %6195 = vmatprep.subr.mxu0 0.0
      %6196 = vmatpush1.xpose.msra.mxu0 %v6193
      %6197 = vmatprep.subr.mxu0 0.0
      %6198 = vmatpush1.xpose.msra.mxu0 0.0
      %6199 = vmatprep.subr.mxu0 0.0
      %6200 = vmatpush1.xpose.msra.mxu0 0.0
      %6201 = vmatprep.subr.mxu0 0.0
      %6202 = vmatpush1.xpose.msra.mxu0 0.0
      %6203 = vmatprep.subr.mxu0 0.0
      %6204 = vmatpush1.xpose.msra.mxu0 0.0
      %6205 = vmatprep.subr.mxu0 0.0
      %6206 = vmatpush1.xpose.msra.mxu0 0.0
      %6207 = vmatprep.subr.mxu0 0.0
      %6208 = vmatpush1.xpose.msra.mxu0 0.0
      %6209 = vmatprep.subr.mxu0 0.0
      %6210 = vmatpush1.xpose.msra.mxu0 0.0
      %6211 = vmatprep.subr.mxu0 0.0
      %6212 = vmatpush1.xpose.msra.mxu0 0.0
      %6213 = vmatprep.subr.mxu0 0.0
      %6214 = vmatpush1.xpose.msra.mxu0 0.0
      %6215 = vmatprep.subr.mxu0 0.0
      %6216 = vmatpush1.xpose.msra.mxu0 0.0
      %6217 = vmatprep.subr.mxu0 0.0
      %6218 = vmatpush1.xpose.msra.mxu0 0.0
      %6219 = vmatprep.subr.mxu0 0.0
      %6220 = vmatpush1.xpose.msra.mxu0 0.0
      %6221 = vmatprep.subr.mxu0 0.0
      %6222 = vmatpush1.xpose.msra.mxu0 0.0
      %6223 = vmatprep.subr.mxu0 0.0
      %6224 = vmatpush1.xpose.msra.mxu0 0.0
      %6225 = vmatprep.subr.mxu0 0.0
      %6226 = vmatpush1.xpose.msra.mxu0 0.0
      %6227 = vmatprep.subr.mxu0 0.0
      %6228 = vmatpush1.xpose.msra.mxu0 0.0
      %6229 = vmatprep.subr.mxu0 0.0
      %6230 = vmatpush1.xpose.msra.mxu0 0.0
      %6231 = vmatprep.subr.mxu0 0.0
      %6232 = vmatpush1.xpose.msra.mxu0 0.0
      %6233 = vmatprep.subr.mxu0 0.0
      %6234 = vmatpush1.xpose.msra.mxu0 0.0
      %6235 = vmatprep.subr.mxu0 0.0
      %6236 = vmatpush1.xpose.msra.mxu0 0.0
      %6237 = vmatprep.subr.mxu0 0.0
      %6238 = vmatpush1.xpose.msra.mxu0 0.0
      %6239 = vmatprep.subr.mxu0 0.0
      %6240 = vmatpush1.xpose.msra.mxu0 0.0
      %6241 = vmatprep.subr.mxu0 0.0
      %6242 = vmatpush1.xpose.msra.mxu0 0.0
      %6243 = vmatprep.subr.mxu0 0.0
      %6244 = vmatpush1.xpose.msra.mxu0 0.0
      %6245 = vmatprep.subr.mxu0 0.0
      %6246 = vmatpush1.xpose.msra.mxu0 0.0
      %6247 = vmatprep.subr.mxu0 0.0
      %6248 = vmatpush1.xpose.msra.mxu0 0.0
      %6249 = vmatprep.subr.mxu0 0.0
      %6250 = vmatpush1.xpose.msra.mxu0 0.0
      %6251 = vmatprep.subr.mxu0 0.0
      %6252 = vmatpush1.xpose.msra.mxu0 0.0
      %6253 = vmatprep.subr.mxu0 0.0
      %6254 = vmatpush1.xpose.msra.mxu0 0.0
      %6255 = vmatprep.subr.mxu0 0.0
      %6256 = vmatpush1.xpose.msra.mxu0 0.0
      %6257 = vmatprep.subr.mxu0 0.0
      %6258 = vmatpush1.xpose.msra.mxu0 0.0
      %6259 = vmatprep.mubr.f32.mxu0 0.0
      %6260 = vmatmul.mubr.f32.gmra.mrb[0].mxu0 %v6190
      %v6261 = vpop.f32.mrb[0].mxu0
      %v6262 = vadd.f32 0.0, %v6261
      %v6263 = vpop.f32.mrb[0].mxu0
      %6264 = vdwg.mxu0
      %v6266 = vsel %vm1755, %v5327, 0
      %v6269 = vsel %vm1755, %v5672, 0
      %6271 = vmatprep.subr.mxu0 0.0
      %6272 = vmatpush1.xpose.msra.mxu0 %v6269
      %6273 = vmatprep.subr.mxu0 0.0
      %6274 = vmatpush1.xpose.msra.mxu0 0.0
      %6275 = vmatprep.subr.mxu0 0.0
      %6276 = vmatpush1.xpose.msra.mxu0 0.0
      %6277 = vmatprep.subr.mxu0 0.0
      %6278 = vmatpush1.xpose.msra.mxu0 0.0
      %6279 = vmatprep.subr.mxu0 0.0
      %6280 = vmatpush1.xpose.msra.mxu0 0.0
      %6281 = vmatprep.subr.mxu0 0.0
      %6282 = vmatpush1.xpose.msra.mxu0 0.0
      %6283 = vmatprep.subr.mxu0 0.0
      %6284 = vmatpush1.xpose.msra.mxu0 0.0
      %6285 = vmatprep.subr.mxu0 0.0
      %6286 = vmatpush1.xpose.msra.mxu0 0.0
      %6287 = vmatprep.subr.mxu0 0.0
      %6288 = vmatpush1.xpose.msra.mxu0 0.0
      %6289 = vmatprep.subr.mxu0 0.0
      %6290 = vmatpush1.xpose.msra.mxu0 0.0
      %6291 = vmatprep.subr.mxu0 0.0
      %6292 = vmatpush1.xpose.msra.mxu0 0.0
      %6293 = vmatprep.subr.mxu0 0.0
      %6294 = vmatpush1.xpose.msra.mxu0 0.0
      %6295 = vmatprep.subr.mxu0 0.0
      %6296 = vmatpush1.xpose.msra.mxu0 0.0
      %6297 = vmatprep.subr.mxu0 0.0
      %6298 = vmatpush1.xpose.msra.mxu0 0.0
      %6299 = vmatprep.subr.mxu0 0.0
      %6300 = vmatpush1.xpose.msra.mxu0 0.0
      %6301 = vmatprep.subr.mxu0 0.0
      %6302 = vmatpush1.xpose.msra.mxu0 0.0
      %6303 = vmatprep.subr.mxu0 0.0
      %6304 = vmatpush1.xpose.msra.mxu0 0.0
      %6305 = vmatprep.subr.mxu0 0.0
      %6306 = vmatpush1.xpose.msra.mxu0 0.0
      %6307 = vmatprep.subr.mxu0 0.0
      %6308 = vmatpush1.xpose.msra.mxu0 0.0
      %6309 = vmatprep.subr.mxu0 0.0
      %6310 = vmatpush1.xpose.msra.mxu0 0.0
      %6311 = vmatprep.subr.mxu0 0.0
      %6312 = vmatpush1.xpose.msra.mxu0 0.0
      %6313 = vmatprep.subr.mxu0 0.0
      %6314 = vmatpush1.xpose.msra.mxu0 0.0
      %6315 = vmatprep.subr.mxu0 0.0
      %6316 = vmatpush1.xpose.msra.mxu0 0.0
      %6317 = vmatprep.subr.mxu0 0.0
      %6318 = vmatpush1.xpose.msra.mxu0 0.0
      %6319 = vmatprep.subr.mxu0 0.0
      %6320 = vmatpush1.xpose.msra.mxu0 0.0
      %6321 = vmatprep.subr.mxu0 0.0
      %6322 = vmatpush1.xpose.msra.mxu0 0.0
      %6323 = vmatprep.subr.mxu0 0.0
      %6324 = vmatpush1.xpose.msra.mxu0 0.0
      %6325 = vmatprep.subr.mxu0 0.0
      %6326 = vmatpush1.xpose.msra.mxu0 0.0
      %6327 = vmatprep.subr.mxu0 0.0
      %6328 = vmatpush1.xpose.msra.mxu0 0.0
      %6329 = vmatprep.subr.mxu0 0.0
      %6330 = vmatpush1.xpose.msra.mxu0 0.0
      %6331 = vmatprep.subr.mxu0 0.0
      %6332 = vmatpush1.xpose.msra.mxu0 0.0
      %6333 = vmatprep.subr.mxu0 0.0
      %6334 = vmatpush1.xpose.msra.mxu0 0.0
      %6335 = vmatprep.mubr.f32.mxu0 0.0
      %6336 = vmatmul.mubr.f32.gmra.mrb[0].mxu0 %v6266
      %v6337 = vpop.f32.mrb[0].mxu0
      %v6338 = vadd.f32 0.0, %v6337
      %v6339 = vpop.f32.mrb[0].mxu0
      %6340 = vdwg.mxu0
      %v6341 = vsub.f32 %v6110, %v704
      %v6342 = vsub.f32 %v6186, %v704
      %v6343 = vsub.f32 %v6262, %v704
      %v6344 = vsub.f32 %v6338, %v704
      %v6345 = vmul.f32 %v6341, 0.17677669
      %v6346 = vmul.f32 %v6342, 0.17677669
      %v6347 = vmul.f32 %v6343, 0.17677669
      %v6348 = vmul.f32 %v6344, 0.17677669
      %v6349 = vsel %vm2068, %v6345, -inf
      %6350 = vmax.xlane.f32.xlu0 %v6349
      %v6351 = vpop.xlane.xlu0 %6350
      %v6352 = vsel %vm2068, %v6346, -inf
      %6353 = vmax.xlane.f32.xlu0 %v6352
      %v6354 = vpop.xlane.xlu0 %6353
      %v6355 = vsel %vm2068, %v6347, -inf
      %6356 = vmax.xlane.f32.xlu0 %v6355
      %v6357 = vpop.xlane.xlu0 %6356
      %v6358 = vsel %vm2068, %v6348, -inf
      %6359 = vmax.xlane.f32.xlu0 %v6358
      %v6360 = vpop.xlane.xlu0 %6359
      %v6361 = vsub.f32 %v6345, %v6351
      %v6362 = vsub.f32 %v6346, %v6354
      %v6363 = vsub.f32 %v6347, %v6357
      %v6364 = vsub.f32 %v6348, %v6360
      %v6365 = vmul.f32 %v6361, 1.442695
      %v6366 = vpow.pop %v6365
      %v6367 = vmul.f32 %v6362, 1.442695
      %v6368 = vpow.pop %v6367
      %v6369 = vmul.f32 %v6363, 1.442695
      %v6370 = vpow.pop %v6369
      %v6371 = vmul.f32 %v6364, 1.442695
      %v6372 = vpow.pop %v6371
      %v6373 = vsel %vm2068, %v6366, 0.0
      %6374 = vadd.xlane.f32.xlu0 %v6373
      %v6375 = vpop.xlane.xlu0 %6374
      %v6376 = vsel %vm2068, %v6368, 0.0
      %6377 = vadd.xlane.f32.xlu0 %v6376
      %v6378 = vpop.xlane.xlu0 %6377
      %v6379 = vsel %vm2068, %v6370, 0.0
      %6380 = vadd.xlane.f32.xlu0 %v6379
      %v6381 = vpop.xlane.xlu0 %6380
      %v6382 = vsel %vm2068, %v6372, 0.0
      %6383 = vadd.xlane.f32.xlu0 %v6382
      %v6384 = vpop.xlane.xlu0 %6383
      %v6385 = vrcp.pop %v6375
      %v6386 = vmul.f32 %v6366, %v6385
      %v6387 = vrcp.pop %v6378
      %v6388 = vmul.f32 %v6368, %v6387
      %v6389 = vrcp.pop %v6381
      %v6390 = vmul.f32 %v6370, %v6389
      %v6391 = vrcp.pop %v6384
      %v6392 = vmul.f32 %v6372, %v6391
      %v6394 = vsel %vm2068, %v6386, 0
      %6396 = vmatprep.subr.mxu0 0.0
      %6397 = vmatpush1.msra.mxu0 %v5807
      %6398 = vmatprep.subr.mxu0 0.0
      %6399 = vmatpush1.msra.mxu0 0.0
      %6400 = vmatprep.subr.mxu0 0.0
      %6401 = vmatpush1.msra.mxu0 0.0
      %6402 = vmatprep.subr.mxu0 0.0
      %6403 = vmatpush1.msra.mxu0 0.0
      %6404 = vmatprep.subr.mxu0 0.0
      %6405 = vmatpush1.msra.mxu0 0.0
      %6406 = vmatprep.subr.mxu0 0.0
      %6407 = vmatpush1.msra.mxu0 0.0
      %6408 = vmatprep.subr.mxu0 0.0
      %6409 = vmatpush1.msra.mxu0 0.0
      %6410 = vmatprep.subr.mxu0 0.0
      %6411 = vmatpush1.msra.mxu0 0.0
      %6412 = vmatprep.subr.mxu0 0.0
      %6413 = vmatpush1.msra.mxu0 0.0
      %6414 = vmatprep.subr.mxu0 0.0
      %6415 = vmatpush1.msra.mxu0 0.0
      %6416 = vmatprep.subr.mxu0 0.0
      %6417 = vmatpush1.msra.mxu0 0.0
      %6418 = vmatprep.subr.mxu0 0.0
      %6419 = vmatpush1.msra.mxu0 0.0
      %6420 = vmatprep.subr.mxu0 0.0
      %6421 = vmatpush1.msra.mxu0 0.0
      %6422 = vmatprep.subr.mxu0 0.0
      %6423 = vmatpush1.msra.mxu0 0.0
      %6424 = vmatprep.subr.mxu0 0.0
      %6425 = vmatpush1.msra.mxu0 0.0
      %6426 = vmatprep.subr.mxu0 0.0
      %6427 = vmatpush1.msra.mxu0 0.0
      %6428 = vmatprep.subr.mxu0 0.0
      %6429 = vmatpush1.msra.mxu0 0.0
      %6430 = vmatprep.subr.mxu0 0.0
      %6431 = vmatpush1.msra.mxu0 0.0
      %6432 = vmatprep.subr.mxu0 0.0
      %6433 = vmatpush1.msra.mxu0 0.0
      %6434 = vmatprep.subr.mxu0 0.0
      %6435 = vmatpush1.msra.mxu0 0.0
      %6436 = vmatprep.subr.mxu0 0.0
      %6437 = vmatpush1.msra.mxu0 0.0
      %6438 = vmatprep.subr.mxu0 0.0
      %6439 = vmatpush1.msra.mxu0 0.0
      %6440 = vmatprep.subr.mxu0 0.0
      %6441 = vmatpush1.msra.mxu0 0.0
      %6442 = vmatprep.subr.mxu0 0.0
      %6443 = vmatpush1.msra.mxu0 0.0
      %6444 = vmatprep.subr.mxu0 0.0
      %6445 = vmatpush1.msra.mxu0 0.0
      %6446 = vmatprep.subr.mxu0 0.0
      %6447 = vmatpush1.msra.mxu0 0.0
      %6448 = vmatprep.subr.mxu0 0.0
      %6449 = vmatpush1.msra.mxu0 0.0
      %6450 = vmatprep.subr.mxu0 0.0
      %6451 = vmatpush1.msra.mxu0 0.0
      %6452 = vmatprep.subr.mxu0 0.0
      %6453 = vmatpush1.msra.mxu0 0.0
      %6454 = vmatprep.subr.mxu0 0.0
      %6455 = vmatpush1.msra.mxu0 0.0
      %6456 = vmatprep.subr.mxu0 0.0
      %6457 = vmatpush1.msra.mxu0 0.0
      %6458 = vmatprep.subr.mxu0 0.0
      %6459 = vmatpush1.msra.mxu0 0.0
      %6460 = vmatprep.mubr.f32.mxu0 0.0
      %6461 = vmatmul.mubr.f32.gmra.mrb[0].mxu0 %v6394
      %v6462 = vpop.f32.mrb[0].mxu0
      %v6463 = vadd.f32 0.0, %v6462
      %v6464 = vpop.f32.mrb[0].mxu0
      %6465 = vdwg.mxu0
      %v6467 = vsel %vm2068, %v6388, 0
      %6469 = vmatprep.subr.mxu0 0.0
      %6470 = vmatpush1.msra.mxu0 %v5877
      %6471 = vmatprep.subr.mxu0 0.0
      %6472 = vmatpush1.msra.mxu0 0.0
      %6473 = vmatprep.subr.mxu0 0.0
      %6474 = vmatpush1.msra.mxu0 0.0
      %6475 = vmatprep.subr.mxu0 0.0
      %6476 = vmatpush1.msra.mxu0 0.0
      %6477 = vmatprep.subr.mxu0 0.0
      %6478 = vmatpush1.msra.mxu0 0.0
      %6479 = vmatprep.subr.mxu0 0.0
      %6480 = vmatpush1.msra.mxu0 0.0
      %6481 = vmatprep.subr.mxu0 0.0
      %6482 = vmatpush1.msra.mxu0 0.0
      %6483 = vmatprep.subr.mxu0 0.0
      %6484 = vmatpush1.msra.mxu0 0.0
      %6485 = vmatprep.subr.mxu0 0.0
      %6486 = vmatpush1.msra.mxu0 0.0
      %6487 = vmatprep.subr.mxu0 0.0
      %6488 = vmatpush1.msra.mxu0 0.0
      %6489 = vmatprep.subr.mxu0 0.0
      %6490 = vmatpush1.msra.mxu0 0.0
      %6491 = vmatprep.subr.mxu0 0.0
      %6492 = vmatpush1.msra.mxu0 0.0
      %6493 = vmatprep.subr.mxu0 0.0
      %6494 = vmatpush1.msra.mxu0 0.0
      %6495 = vmatprep.subr.mxu0 0.0
      %6496 = vmatpush1.msra.mxu0 0.0
      %6497 = vmatprep.subr.mxu0 0.0
      %6498 = vmatpush1.msra.mxu0 0.0
      %6499 = vmatprep.subr.mxu0 0.0
      %6500 = vmatpush1.msra.mxu0 0.0
      %6501 = vmatprep.subr.mxu0 0.0
      %6502 = vmatpush1.msra.mxu0 0.0
      %6503 = vmatprep.subr.mxu0 0.0
      %6504 = vmatpush1.msra.mxu0 0.0
      %6505 = vmatprep.subr.mxu0 0.0
      %6506 = vmatpush1.msra.mxu0 0.0
      %6507 = vmatprep.subr.mxu0 0.0
      %6508 = vmatpush1.msra.mxu0 0.0
      %6509 = vmatprep.subr.mxu0 0.0
      %6510 = vmatpush1.msra.mxu0 0.0
      %6511 = vmatprep.subr.mxu0 0.0
      %6512 = vmatpush1.msra.mxu0 0.0
      %6513 = vmatprep.subr.mxu0 0.0
      %6514 = vmatpush1.msra.mxu0 0.0
      %6515 = vmatprep.subr.mxu0 0.0
      %6516 = vmatpush1.msra.mxu0 0.0
      %6517 = vmatprep.subr.mxu0 0.0
      %6518 = vmatpush1.msra.mxu0 0.0
      %6519 = vmatprep.subr.mxu0 0.0
      %6520 = vmatpush1.msra.mxu0 0.0
      %6521 = vmatprep.subr.mxu0 0.0
      %6522 = vmatpush1.msra.mxu0 0.0
      %6523 = vmatprep.subr.mxu0 0.0
      %6524 = vmatpush1.msra.mxu0 0.0
      %6525 = vmatprep.subr.mxu0 0.0
      %6526 = vmatpush1.msra.mxu0 0.0
      %6527 = vmatprep.subr.mxu0 0.0
      %6528 = vmatpush1.msra.mxu0 0.0
      %6529 = vmatprep.subr.mxu0 0.0
      %6530 = vmatpush1.msra.mxu0 0.0
      %6531 = vmatprep.subr.mxu0 0.0
      %6532 = vmatpush1.msra.mxu0 0.0
      %6533 = vmatprep.mubr.f32.mxu0 0.0
      %6534 = vmatmul.mubr.f32.gmra.mrb[0].mxu0 %v6467
      %v6535 = vpop.f32.mrb[0].mxu0
      %v6536 = vadd.f32 0.0, %v6535
      %v6537 = vpop.f32.mrb[0].mxu0
      %6538 = vdwg.mxu0
      %v6540 = vsel %vm2068, %v6390, 0
      %6542 = vmatprep.subr.mxu0 0.0
      %6543 = vmatpush1.msra.mxu0 %v5947
      %6544 = vmatprep.subr.mxu0 0.0
      %6545 = vmatpush1.msra.mxu0 0.0
      %6546 = vmatprep.subr.mxu0 0.0
      %6547 = vmatpush1.msra.mxu0 0.0
      %6548 = vmatprep.subr.mxu0 0.0
      %6549 = vmatpush1.msra.mxu0 0.0
      %6550 = vmatprep.subr.mxu0 0.0
      %6551 = vmatpush1.msra.mxu0 0.0
      %6552 = vmatprep.subr.mxu0 0.0
      %6553 = vmatpush1.msra.mxu0 0.0
      %6554 = vmatprep.subr.mxu0 0.0
      %6555 = vmatpush1.msra.mxu0 0.0
      %6556 = vmatprep.subr.mxu0 0.0
      %6557 = vmatpush1.msra.mxu0 0.0
      %6558 = vmatprep.subr.mxu0 0.0
      %6559 = vmatpush1.msra.mxu0 0.0
      %6560 = vmatprep.subr.mxu0 0.0
      %6561 = vmatpush1.msra.mxu0 0.0
      %6562 = vmatprep.subr.mxu0 0.0
      %6563 = vmatpush1.msra.mxu0 0.0
      %6564 = vmatprep.subr.mxu0 0.0
      %6565 = vmatpush1.msra.mxu0 0.0
      %6566 = vmatprep.subr.mxu0 0.0
      %6567 = vmatpush1.msra.mxu0 0.0
      %6568 = vmatprep.subr.mxu0 0.0
      %6569 = vmatpush1.msra.mxu0 0.0
      %6570 = vmatprep.subr.mxu0 0.0
      %6571 = vmatpush1.msra.mxu0 0.0
      %6572 = vmatprep.subr.mxu0 0.0
      %6573 = vmatpush1.msra.mxu0 0.0
      %6574 = vmatprep.subr.mxu0 0.0
      %6575 = vmatpush1.msra.mxu0 0.0
      %6576 = vmatprep.subr.mxu0 0.0
      %6577 = vmatpush1.msra.mxu0 0.0
      %6578 = vmatprep.subr.mxu0 0.0
      %6579 = vmatpush1.msra.mxu0 0.0
      %6580 = vmatprep.subr.mxu0 0.0
      %6581 = vmatpush1.msra.mxu0 0.0
      %6582 = vmatprep.subr.mxu0 0.0
      %6583 = vmatpush1.msra.mxu0 0.0
      %6584 = vmatprep.subr.mxu0 0.0
      %6585 = vmatpush1.msra.mxu0 0.0
      %6586 = vmatprep.subr.mxu0 0.0
      %6587 = vmatpush1.msra.mxu0 0.0
      %6588 = vmatprep.subr.mxu0 0.0
      %6589 = vmatpush1.msra.mxu0 0.0
      %6590 = vmatprep.subr.mxu0 0.0
      %6591 = vmatpush1.msra.mxu0 0.0
      %6592 = vmatprep.subr.mxu0 0.0
      %6593 = vmatpush1.msra.mxu0 0.0
      %6594 = vmatprep.subr.mxu0 0.0
      %6595 = vmatpush1.msra.mxu0 0.0
      %6596 = vmatprep.subr.mxu0 0.0
      %6597 = vmatpush1.msra.mxu0 0.0
      %6598 = vmatprep.subr.mxu0 0.0
      %6599 = vmatpush1.msra.mxu0 0.0
      %6600 = vmatprep.subr.mxu0 0.0
      %6601 = vmatpush1.msra.mxu0 0.0
      %6602 = vmatprep.subr.mxu0 0.0
      %6603 = vmatpush1.msra.mxu0 0.0
      %6604 = vmatprep.subr.mxu0 0.0
      %6605 = vmatpush1.msra.mxu0 0.0
      %6606 = vmatprep.mubr.f32.mxu0 0.0
      %6607 = vmatmul.mubr.f32.gmra.mrb[0].mxu0 %v6540
      %v6608 = vpop.f32.mrb[0].mxu0
      %v6609 = vadd.f32 0.0, %v6608
      %v6610 = vpop.f32.mrb[0].mxu0
      %6611 = vdwg.mxu0
      %v6613 = vsel %vm2068, %v6392, 0
      %6615 = vmatprep.subr.mxu0 0.0
      %6616 = vmatpush1.msra.mxu0 %v6017
      %6617 = vmatprep.subr.mxu0 0.0
      %6618 = vmatpush1.msra.mxu0 0.0
      %6619 = vmatprep.subr.mxu0 0.0
      %6620 = vmatpush1.msra.mxu0 0.0
      %6621 = vmatprep.subr.mxu0 0.0
      %6622 = vmatpush1.msra.mxu0 0.0
      %6623 = vmatprep.subr.mxu0 0.0
      %6624 = vmatpush1.msra.mxu0 0.0
      %6625 = vmatprep.subr.mxu0 0.0
      %6626 = vmatpush1.msra.mxu0 0.0
      %6627 = vmatprep.subr.mxu0 0.0
      %6628 = vmatpush1.msra.mxu0 0.0
      %6629 = vmatprep.subr.mxu0 0.0
      %6630 = vmatpush1.msra.mxu0 0.0
      %6631 = vmatprep.subr.mxu0 0.0
      %6632 = vmatpush1.msra.mxu0 0.0
      %6633 = vmatprep.subr.mxu0 0.0
      %6634 = vmatpush1.msra.mxu0 0.0
      %6635 = vmatprep.subr.mxu0 0.0
      %6636 = vmatpush1.msra.mxu0 0.0
      %6637 = vmatprep.subr.mxu0 0.0
      %6638 = vmatpush1.msra.mxu0 0.0
      %6639 = vmatprep.subr.mxu0 0.0
      %6640 = vmatpush1.msra.mxu0 0.0
      %6641 = vmatprep.subr.mxu0 0.0
      %6642 = vmatpush1.msra.mxu0 0.0
      %6643 = vmatprep.subr.mxu0 0.0
      %6644 = vmatpush1.msra.mxu0 0.0
      %6645 = vmatprep.subr.mxu0 0.0
      %6646 = vmatpush1.msra.mxu0 0.0
      %6647 = vmatprep.subr.mxu0 0.0
      %6648 = vmatpush1.msra.mxu0 0.0
      %6649 = vmatprep.subr.mxu0 0.0
      %6650 = vmatpush1.msra.mxu0 0.0
      %6651 = vmatprep.subr.mxu0 0.0
      %6652 = vmatpush1.msra.mxu0 0.0
      %6653 = vmatprep.subr.mxu0 0.0
      %6654 = vmatpush1.msra.mxu0 0.0
      %6655 = vmatprep.subr.mxu0 0.0
      %6656 = vmatpush1.msra.mxu0 0.0
      %6657 = vmatprep.subr.mxu0 0.0
      %6658 = vmatpush1.msra.mxu0 0.0
      %6659 = vmatprep.subr.mxu0 0.0
      %6660 = vmatpush1.msra.mxu0 0.0
      %6661 = vmatprep.subr.mxu0 0.0
      %6662 = vmatpush1.msra.mxu0 0.0
      %6663 = vmatprep.subr.mxu0 0.0
      %6664 = vmatpush1.msra.mxu0 0.0
      %6665 = vmatprep.subr.mxu0 0.0
      %6666 = vmatpush1.msra.mxu0 0.0
      %6667 = vmatprep.subr.mxu0 0.0
      %6668 = vmatpush1.msra.mxu0 0.0
      %6669 = vmatprep.subr.mxu0 0.0
      %6670 = vmatpush1.msra.mxu0 0.0
      %6671 = vmatprep.subr.mxu0 0.0
      %6672 = vmatpush1.msra.mxu0 0.0
      %6673 = vmatprep.subr.mxu0 0.0
      %6674 = vmatpush1.msra.mxu0 0.0
      %6675 = vmatprep.subr.mxu0 0.0
      %6676 = vmatpush1.msra.mxu0 0.0
      %6677 = vmatprep.subr.mxu0 0.0
      %6678 = vmatpush1.msra.mxu0 0.0
      %6679 = vmatprep.mubr.f32.mxu0 0.0
      %6680 = vmatmul.mubr.f32.gmra.mrb[0].mxu0 %v6613
      %v6681 = vpop.f32.mrb[0].mxu0
      %v6682 = vadd.f32 0.0, %v6681
      %v6683 = vpop.f32.mrb[0].mxu0
      %6684 = vdwg.mxu0
      %v6686 = vsel %vm1755, %v6463, 0
      %6688 = vmatprep.subr.mxu0 0.0
      %6689 = vmatpush1.msra.mxu0 %v6021
      %6690 = vmatprep.subr.mxu0 0.0
      %6691 = vmatpush1.msra.mxu0 %v6022
      %6692 = vmatprep.subr.mxu0 0.0
      %6693 = vmatpush1.msra.mxu0 %v6023
      %6694 = vmatprep.subr.mxu0 0.0
      %6695 = vmatpush1.msra.mxu0 %v6024
      %6696 = vmatprep.subr.mxu0 0.0
      %6697 = vmatpush1.msra.mxu0 0.0
      %6698 = vmatprep.subr.mxu0 0.0
      %6699 = vmatpush1.msra.mxu0 0.0
      %6700 = vmatprep.subr.mxu0 0.0
      %6701 = vmatpush1.msra.mxu0 0.0
      %6702 = vmatprep.subr.mxu0 0.0
      %6703 = vmatpush1.msra.mxu0 0.0
      %6704 = vmatprep.subr.mxu0 0.0
      %6705 = vmatpush1.msra.mxu0 0.0
      %6706 = vmatprep.subr.mxu0 0.0
      %6707 = vmatpush1.msra.mxu0 0.0
      %6708 = vmatprep.subr.mxu0 0.0
      %6709 = vmatpush1.msra.mxu0 0.0
      %6710 = vmatprep.subr.mxu0 0.0
      %6711 = vmatpush1.msra.mxu0 0.0
      %6712 = vmatprep.subr.mxu0 0.0
      %6713 = vmatpush1.msra.mxu0 0.0
      %6714 = vmatprep.subr.mxu0 0.0
      %6715 = vmatpush1.msra.mxu0 0.0
      %6716 = vmatprep.subr.mxu0 0.0
      %6717 = vmatpush1.msra.mxu0 0.0
      %6718 = vmatprep.subr.mxu0 0.0
      %6719 = vmatpush1.msra.mxu0 0.0
      %6720 = vmatprep.subr.mxu0 0.0
      %6721 = vmatpush1.msra.mxu0 0.0
      %6722 = vmatprep.subr.mxu0 0.0
      %6723 = vmatpush1.msra.mxu0 0.0
      %6724 = vmatprep.subr.mxu0 0.0
      %6725 = vmatpush1.msra.mxu0 0.0
      %6726 = vmatprep.subr.mxu0 0.0
      %6727 = vmatpush1.msra.mxu0 0.0
      %6728 = vmatprep.subr.mxu0 0.0
      %6729 = vmatpush1.msra.mxu0 0.0
      %6730 = vmatprep.subr.mxu0 0.0
      %6731 = vmatpush1.msra.mxu0 0.0
      %6732 = vmatprep.subr.mxu0 0.0
      %6733 = vmatpush1.msra.mxu0 0.0
      %6734 = vmatprep.subr.mxu0 0.0
      %6735 = vmatpush1.msra.mxu0 0.0
      %6736 = vmatprep.subr.mxu0 0.0
      %6737 = vmatpush1.msra.mxu0 0.0
      %6738 = vmatprep.subr.mxu0 0.0
      %6739 = vmatpush1.msra.mxu0 0.0
      %6740 = vmatprep.subr.mxu0 0.0
      %6741 = vmatpush1.msra.mxu0 0.0
      %6742 = vmatprep.subr.mxu0 0.0
      %6743 = vmatpush1.msra.mxu0 0.0
      %6744 = vmatprep.subr.mxu0 0.0
      %6745 = vmatpush1.msra.mxu0 0.0
      %6746 = vmatprep.subr.mxu0 0.0
      %6747 = vmatpush1.msra.mxu0 0.0
      %6748 = vmatprep.subr.mxu0 0.0
      %6749 = vmatpush1.msra.mxu0 0.0
      %6750 = vmatprep.subr.mxu0 0.0
      %6751 = vmatpush1.msra.mxu0 0.0
      %6752 = vmatprep.mubr.f32.mxu0 0.0
      %6753 = vmatmul.mubr.f32.gmra.mrb[0].mxu0 %v6686
      %v6754 = vpop.f32.mrb[0].mxu0
      %v6755 = vadd.f32 0.0, %v6754
      %v6756 = vpop.f32.mrb[0].mxu0
      %6757 = vdwg.mxu0
      %v6759 = vsel %vm1755, %v6536, 0
      %6761 = vmatprep.subr.mxu0 0.0
      %6762 = vmatpush1.msra.mxu0 %v6025
      %6763 = vmatprep.subr.mxu0 0.0
      %6764 = vmatpush1.msra.mxu0 %v6026
      %6765 = vmatprep.subr.mxu0 0.0
      %6766 = vmatpush1.msra.mxu0 %v6027
      %6767 = vmatprep.subr.mxu0 0.0
      %6768 = vmatpush1.msra.mxu0 %v6028
      %6769 = vmatprep.subr.mxu0 0.0
      %6770 = vmatpush1.msra.mxu0 0.0
      %6771 = vmatprep.subr.mxu0 0.0
      %6772 = vmatpush1.msra.mxu0 0.0
      %6773 = vmatprep.subr.mxu0 0.0
      %6774 = vmatpush1.msra.mxu0 0.0
      %6775 = vmatprep.subr.mxu0 0.0
      %6776 = vmatpush1.msra.mxu0 0.0
      %6777 = vmatprep.subr.mxu0 0.0
      %6778 = vmatpush1.msra.mxu0 0.0
      %6779 = vmatprep.subr.mxu0 0.0
      %6780 = vmatpush1.msra.mxu0 0.0
      %6781 = vmatprep.subr.mxu0 0.0
      %6782 = vmatpush1.msra.mxu0 0.0
      %6783 = vmatprep.subr.mxu0 0.0
      %6784 = vmatpush1.msra.mxu0 0.0
      %6785 = vmatprep.subr.mxu0 0.0
      %6786 = vmatpush1.msra.mxu0 0.0
      %6787 = vmatprep.subr.mxu0 0.0
      %6788 = vmatpush1.msra.mxu0 0.0
      %6789 = vmatprep.subr.mxu0 0.0
      %6790 = vmatpush1.msra.mxu0 0.0
      %6791 = vmatprep.subr.mxu0 0.0
      %6792 = vmatpush1.msra.mxu0 0.0
      %6793 = vmatprep.subr.mxu0 0.0
      %6794 = vmatpush1.msra.mxu0 0.0
      %6795 = vmatprep.subr.mxu0 0.0
      %6796 = vmatpush1.msra.mxu0 0.0
      %6797 = vmatprep.subr.mxu0 0.0
      %6798 = vmatpush1.msra.mxu0 0.0
      %6799 = vmatprep.subr.mxu0 0.0
      %6800 = vmatpush1.msra.mxu0 0.0
      %6801 = vmatprep.subr.mxu0 0.0
      %6802 = vmatpush1.msra.mxu0 0.0
      %6803 = vmatprep.subr.mxu0 0.0
      %6804 = vmatpush1.msra.mxu0 0.0
      %6805 = vmatprep.subr.mxu0 0.0
      %6806 = vmatpush1.msra.mxu0 0.0
      %6807 = vmatprep.subr.mxu0 0.0
      %6808 = vmatpush1.msra.mxu0 0.0
      %6809 = vmatprep.subr.mxu0 0.0
      %6810 = vmatpush1.msra.mxu0 0.0
      %6811 = vmatprep.subr.mxu0 0.0
      %6812 = vmatpush1.msra.mxu0 0.0
      %6813 = vmatprep.subr.mxu0 0.0
      %6814 = vmatpush1.msra.mxu0 0.0
      %6815 = vmatprep.subr.mxu0 0.0
      %6816 = vmatpush1.msra.mxu0 0.0
      %6817 = vmatprep.subr.mxu0 0.0
      %6818 = vmatpush1.msra.mxu0 0.0
      %6819 = vmatprep.subr.mxu0 0.0
      %6820 = vmatpush1.msra.mxu0 0.0
      %6821 = vmatprep.subr.mxu0 0.0
      %6822 = vmatpush1.msra.mxu0 0.0
      %6823 = vmatprep.subr.mxu0 0.0
      %6824 = vmatpush1.msra.mxu0 0.0
      %6825 = vmatprep.mubr.f32.mxu0 0.0
      %6826 = vmatmul.mubr.f32.gmra.mrb[0].mxu0 %v6759
      %v6827 = vpop.f32.mrb[0].mxu0
      %v6828 = vadd.f32 0.0, %v6827
      %v6829 = vpop.f32.mrb[0].mxu0
      %6830 = vdwg.mxu0
      %v6832 = vsel %vm1755, %v6609, 0
      %6834 = vmatprep.subr.mxu0 0.0
      %6835 = vmatpush1.msra.mxu0 %v6029
      %6836 = vmatprep.subr.mxu0 0.0
      %6837 = vmatpush1.msra.mxu0 %v6030
      %6838 = vmatprep.subr.mxu0 0.0
      %6839 = vmatpush1.msra.mxu0 %v6031
      %6840 = vmatprep.subr.mxu0 0.0
      %6841 = vmatpush1.msra.mxu0 %v6032
      %6842 = vmatprep.subr.mxu0 0.0
      %6843 = vmatpush1.msra.mxu0 0.0
      %6844 = vmatprep.subr.mxu0 0.0
      %6845 = vmatpush1.msra.mxu0 0.0
      %6846 = vmatprep.subr.mxu0 0.0
      %6847 = vmatpush1.msra.mxu0 0.0
      %6848 = vmatprep.subr.mxu0 0.0
      %6849 = vmatpush1.msra.mxu0 0.0
      %6850 = vmatprep.subr.mxu0 0.0
      %6851 = vmatpush1.msra.mxu0 0.0
      %6852 = vmatprep.subr.mxu0 0.0
      %6853 = vmatpush1.msra.mxu0 0.0
      %6854 = vmatprep.subr.mxu0 0.0
      %6855 = vmatpush1.msra.mxu0 0.0
      %6856 = vmatprep.subr.mxu0 0.0
      %6857 = vmatpush1.msra.mxu0 0.0
      %6858 = vmatprep.subr.mxu0 0.0
      %6859 = vmatpush1.msra.mxu0 0.0
      %6860 = vmatprep.subr.mxu0 0.0
      %6861 = vmatpush1.msra.mxu0 0.0
      %6862 = vmatprep.subr.mxu0 0.0
      %6863 = vmatpush1.msra.mxu0 0.0
      %6864 = vmatprep.subr.mxu0 0.0
      %6865 = vmatpush1.msra.mxu0 0.0
      %6866 = vmatprep.subr.mxu0 0.0
      %6867 = vmatpush1.msra.mxu0 0.0
      %6868 = vmatprep.subr.mxu0 0.0
      %6869 = vmatpush1.msra.mxu0 0.0
      %6870 = vmatprep.subr.mxu0 0.0
      %6871 = vmatpush1.msra.mxu0 0.0
      %6872 = vmatprep.subr.mxu0 0.0
      %6873 = vmatpush1.msra.mxu0 0.0
      %6874 = vmatprep.subr.mxu0 0.0
      %6875 = vmatpush1.msra.mxu0 0.0
      %6876 = vmatprep.subr.mxu0 0.0
      %6877 = vmatpush1.msra.mxu0 0.0
      %6878 = vmatprep.subr.mxu0 0.0
      %6879 = vmatpush1.msra.mxu0 0.0
      %6880 = vmatprep.subr.mxu0 0.0
      %6881 = vmatpush1.msra.mxu0 0.0
      %6882 = vmatprep.subr.mxu0 0.0
      %6883 = vmatpush1.msra.mxu0 0.0
      %6884 = vmatprep.subr.mxu0 0.0
      %6885 = vmatpush1.msra.mxu0 0.0
      %6886 = vmatprep.subr.mxu0 0.0
      %6887 = vmatpush1.msra.mxu0 0.0
      %6888 = vmatprep.subr.mxu0 0.0
      %6889 = vmatpush1.msra.mxu0 0.0
      %6890 = vmatprep.subr.mxu0 0.0
      %6891 = vmatpush1.msra.mxu0 0.0
      %6892 = vmatprep.subr.mxu0 0.0
      %6893 = vmatpush1.msra.mxu0 0.0
      %6894 = vmatprep.subr.mxu0 0.0
      %6895 = vmatpush1.msra.mxu0 0.0
      %6896 = vmatprep.subr.mxu0 0.0
      %6897 = vmatpush1.msra.mxu0 0.0
      %6898 = vmatprep.mubr.f32.mxu0 0.0
      %6899 = vmatmul.mubr.f32.gmra.mrb[0].mxu0 %v6832
      %v6900 = vpop.f32.mrb[0].mxu0
      %v6901 = vadd.f32 0.0, %v6900
      %v6902 = vpop.f32.mrb[0].mxu0
      %6903 = vdwg.mxu0
      %v6905 = vsel %vm1755, %v6682, 0
      %6907 = vmatprep.subr.mxu0 0.0
      %6908 = vmatpush1.msra.mxu0 %v6033
      %6909 = vmatprep.subr.mxu0 0.0
      %6910 = vmatpush1.msra.mxu0 %v6034
      %6911 = vmatprep.subr.mxu0 0.0
      %6912 = vmatpush1.msra.mxu0 %v6035
      %6913 = vmatprep.subr.mxu0 0.0
      %6914 = vmatpush1.msra.mxu0 %v6036
      %6915 = vmatprep.subr.mxu0 0.0
      %6916 = vmatpush1.msra.mxu0 0.0
      %6917 = vmatprep.subr.mxu0 0.0
      %6918 = vmatpush1.msra.mxu0 0.0
      %6919 = vmatprep.subr.mxu0 0.0
      %6920 = vmatpush1.msra.mxu0 0.0
      %6921 = vmatprep.subr.mxu0 0.0
      %6922 = vmatpush1.msra.mxu0 0.0
      %6923 = vmatprep.subr.mxu0 0.0
      %6924 = vmatpush1.msra.mxu0 0.0
      %6925 = vmatprep.subr.mxu0 0.0
      %6926 = vmatpush1.msra.mxu0 0.0
      %6927 = vmatprep.subr.mxu0 0.0
      %6928 = vmatpush1.msra.mxu0 0.0
      %6929 = vmatprep.subr.mxu0 0.0
      %6930 = vmatpush1.msra.mxu0 0.0
      %6931 = vmatprep.subr.mxu0 0.0
      %6932 = vmatpush1.msra.mxu0 0.0
      %6933 = vmatprep.subr.mxu0 0.0
      %6934 = vmatpush1.msra.mxu0 0.0
      %6935 = vmatprep.subr.mxu0 0.0
      %6936 = vmatpush1.msra.mxu0 0.0
      %6937 = vmatprep.subr.mxu0 0.0
      %6938 = vmatpush1.msra.mxu0 0.0
      %6939 = vmatprep.subr.mxu0 0.0
      %6940 = vmatpush1.msra.mxu0 0.0
      %6941 = vmatprep.subr.mxu0 0.0
      %6942 = vmatpush1.msra.mxu0 0.0
      %6943 = vmatprep.subr.mxu0 0.0
      %6944 = vmatpush1.msra.mxu0 0.0
      %6945 = vmatprep.subr.mxu0 0.0
      %6946 = vmatpush1.msra.mxu0 0.0
      %6947 = vmatprep.subr.mxu0 0.0
      %6948 = vmatpush1.msra.mxu0 0.0
      %6949 = vmatprep.subr.mxu0 0.0
      %6950 = vmatpush1.msra.mxu0 0.0
      %6951 = vmatprep.subr.mxu0 0.0
      %6952 = vmatpush1.msra.mxu0 0.0
      %6953 = vmatprep.subr.mxu0 0.0
      %6954 = vmatpush1.msra.mxu0 0.0
      %6955 = vmatprep.subr.mxu0 0.0
      %6956 = vmatpush1.msra.mxu0 0.0
      %6957 = vmatprep.subr.mxu0 0.0
      %6958 = vmatpush1.msra.mxu0 0.0
      %6959 = vmatprep.subr.mxu0 0.0
      %6960 = vmatpush1.msra.mxu0 0.0
      %6961 = vmatprep.subr.mxu0 0.0
      %6962 = vmatpush1.msra.mxu0 0.0
      %6963 = vmatprep.subr.mxu0 0.0
      %6964 = vmatpush1.msra.mxu0 0.0
      %6965 = vmatprep.subr.mxu0 0.0
      %6966 = vmatpush1.msra.mxu0 0.0
      %6967 = vmatprep.subr.mxu0 0.0
      %6968 = vmatpush1.msra.mxu0 0.0
      %6969 = vmatprep.subr.mxu0 0.0
      %6970 = vmatpush1.msra.mxu0 0.0
      %6971 = vmatprep.mubr.f32.mxu0 0.0
      %6972 = vmatmul.mubr.f32.gmra.mrb[0].mxu0 %v6905
      %v6973 = vpop.f32.mrb[0].mxu0
      %v6974 = vadd.f32 0.0, %v6973
      %v6975 = vpop.f32.mrb[0].mxu0
      %6976 = vdwg.mxu0
      %v6977 = vadd.f32 %v6755, %v6828
      %v6978 = vadd.f32 %v6977, %v6901
      %v6979 = vadd.f32 %v6978, %v6974
      %s6980 = scalar_lea.vmem %s6, 1
      %v6981 = vld [vmem:[%s6980] sm:$0x1]
      %s6982 = scalar_lea.vmem %s7, 1
      %v6983 = vld [vmem:[%s6982] sm:$0x1]
      %v6984 = vadd.f32 %v4984, %v6979
      %v6985 = vmul.f32 %v6984, %v700
      %6986 = vadd.xlane.f32.xlu0 %v6985
      %v6987 = vpop.xlane.xlu0 %6986
      %v6988 = vmul.f32 %v6987, 0.03125
      %v6989 = vsub.f32 %v6984, %v6988
      %v6990 = vmul.f32 %v6989, %v700
      %v6991 = vmul.f32 %v6990, %v6990
      %6992 = vadd.xlane.f32.xlu0 %v6991
      %v6993 = vpop.xlane.xlu0 %6992
      %v6994 = vmul.f32 %v6993, 0.032258064
      %v6995 = vrsqrt.pop %v6994
      %v6996 = vmul.f32 %v6994, %v6995
      %vm6997 = vcmp.eq.f32.partialorder %v6994, inf
      %v6998 = vsel %vm6997, %v6994, %v6996
      %vm6999 = vcmp.eq.f32.partialorder %v6994, 0.0
      %v7000 = vand.u32 %v6994, 2147483648
      %v7001 = vsel %vm6999, %v7000, %v6998
      %v7003 = vlaneseq
      %v7004 = vshrl.u32 %v7003, 7
      %v7005 = vsub.s32 0, %v7004
      %v7006 = vrot.slane %v6981, %v7005
      %v7008 = vmul.f32 %v7006, %v6989
      %v7009 = vadd.f32 %v7001, 1e-06
      %v7010 = vrcp.pop %v7009
      %v7011 = vmul.f32 %v7008, %v7010
      %v7013 = vlaneseq
      %v7014 = vshrl.u32 %v7013, 7
      %v7015 = vsub.s32 0, %v7014
      %v7016 = vrot.slane %v6983, %v7015
      %v7018 = vadd.f32 %v7011, %v7016
      %s7019 = scalar_lea.vmem %s8, 512
      %v7020 = vld [vmem:[%s7019] sm:$0xff]
      %v7021 = vld [vmem:[%s7019 + $0x8] sm:$0xff]
      %v7022 = vld [vmem:[%s7019 + $0x10] sm:$0xff]
      %v7023 = vld [vmem:[%s7019 + $0x18] sm:$0xff]
      %v7024 = vld [vmem:[%s7019 + $0x20] sm:$0xff]
      %v7025 = vld [vmem:[%s7019 + $0x28] sm:$0xff]
      %v7026 = vld [vmem:[%s7019 + $0x30] sm:$0xff]
      %v7027 = vld [vmem:[%s7019 + $0x38] sm:$0xff]
      %v7028 = vld [vmem:[%s7019 + $0x40] sm:$0xff]
      %v7029 = vld [vmem:[%s7019 + $0x48] sm:$0xff]
      %v7030 = vld [vmem:[%s7019 + $0x50] sm:$0xff]
      %v7031 = vld [vmem:[%s7019 + $0x58] sm:$0xff]
      %v7032 = vld [vmem:[%s7019 + $0x60] sm:$0xff]
      %v7033 = vld [vmem:[%s7019 + $0x68] sm:$0xff]
      %v7034 = vld [vmem:[%s7019 + $0x70] sm:$0xff]
      %v7035 = vld [vmem:[%s7019 + $0x78] sm:$0xff]
      %v7036 = vld [vmem:[%s7019 + $0x80] sm:$0xff]
      %v7037 = vld [vmem:[%s7019 + $0x88] sm:$0xff]
      %v7038 = vld [vmem:[%s7019 + $0x90] sm:$0xff]
      %v7039 = vld [vmem:[%s7019 + $0x98] sm:$0xff]
      %v7040 = vld [vmem:[%s7019 + $0xa0] sm:$0xff]
      %v7041 = vld [vmem:[%s7019 + $0xa8] sm:$0xff]
      %v7042 = vld [vmem:[%s7019 + $0xb0] sm:$0xff]
      %v7043 = vld [vmem:[%s7019 + $0xb8] sm:$0xff]
      %v7044 = vld [vmem:[%s7019 + $0xc0] sm:$0xff]
      %v7045 = vld [vmem:[%s7019 + $0xc8] sm:$0xff]
      %v7046 = vld [vmem:[%s7019 + $0xd0] sm:$0xff]
      %v7047 = vld [vmem:[%s7019 + $0xd8] sm:$0xff]
      %v7048 = vld [vmem:[%s7019 + $0xe0] sm:$0xff]
      %v7049 = vld [vmem:[%s7019 + $0xe8] sm:$0xff]
      %v7050 = vld [vmem:[%s7019 + $0xf0] sm:$0xff]
      %v7051 = vld [vmem:[%s7019 + $0xf8] sm:$0xff]
      %v7052 = vld [vmem:[%s7019 + $0x100] sm:$0xff]
      %v7053 = vld [vmem:[%s7019 + $0x108] sm:$0xff]
      %v7054 = vld [vmem:[%s7019 + $0x110] sm:$0xff]
      %v7055 = vld [vmem:[%s7019 + $0x118] sm:$0xff]
      %v7056 = vld [vmem:[%s7019 + $0x120] sm:$0xff]
      %v7057 = vld [vmem:[%s7019 + $0x128] sm:$0xff]
      %v7058 = vld [vmem:[%s7019 + $0x130] sm:$0xff]
      %v7059 = vld [vmem:[%s7019 + $0x138] sm:$0xff]
      %v7060 = vld [vmem:[%s7019 + $0x140] sm:$0xff]
      %v7061 = vld [vmem:[%s7019 + $0x148] sm:$0xff]
      %v7062 = vld [vmem:[%s7019 + $0x150] sm:$0xff]
      %v7063 = vld [vmem:[%s7019 + $0x158] sm:$0xff]
      %v7064 = vld [vmem:[%s7019 + $0x160] sm:$0xff]
      %v7065 = vld [vmem:[%s7019 + $0x168] sm:$0xff]
      %v7066 = vld [vmem:[%s7019 + $0x170] sm:$0xff]
      %v7067 = vld [vmem:[%s7019 + $0x178] sm:$0xff]
      %v7068 = vld [vmem:[%s7019 + $0x180] sm:$0xff]
      %v7069 = vld [vmem:[%s7019 + $0x188] sm:$0xff]
      %v7070 = vld [vmem:[%s7019 + $0x190] sm:$0xff]
      %v7071 = vld [vmem:[%s7019 + $0x198] sm:$0xff]
      %v7072 = vld [vmem:[%s7019 + $0x1a0] sm:$0xff]
      %v7073 = vld [vmem:[%s7019 + $0x1a8] sm:$0xff]
      %v7074 = vld [vmem:[%s7019 + $0x1b0] sm:$0xff]
      %v7075 = vld [vmem:[%s7019 + $0x1b8] sm:$0xff]
      %v7076 = vld [vmem:[%s7019 + $0x1c0] sm:$0xff]
      %v7077 = vld [vmem:[%s7019 + $0x1c8] sm:$0xff]
      %v7078 = vld [vmem:[%s7019 + $0x1d0] sm:$0xff]
      %v7079 = vld [vmem:[%s7019 + $0x1d8] sm:$0xff]
      %v7080 = vld [vmem:[%s7019 + $0x1e0] sm:$0xff]
      %v7081 = vld [vmem:[%s7019 + $0x1e8] sm:$0xff]
      %v7082 = vld [vmem:[%s7019 + $0x1f0] sm:$0xff]
      %v7083 = vld [vmem:[%s7019 + $0x1f8] sm:$0xff]
      %7084 = vmatprep.subr.mxu0 0.0
      %7085 = vmatpush1.msra.mxu0 %v7020
      %7086 = vmatprep.subr.mxu0 0.0
      %7087 = vmatpush1.msra.mxu0 %v7021
      %7088 = vmatprep.subr.mxu0 0.0
      %7089 = vmatpush1.msra.mxu0 %v7022
      %7090 = vmatprep.subr.mxu0 0.0
      %7091 = vmatpush1.msra.mxu0 %v7023
      %7092 = vmatprep.subr.mxu0 0.0
      %7093 = vmatpush1.msra.mxu0 %v7024
      %7094 = vmatprep.subr.mxu0 0.0
      %7095 = vmatpush1.msra.mxu0 %v7025
      %7096 = vmatprep.subr.mxu0 0.0
      %7097 = vmatpush1.msra.mxu0 %v7026
      %7098 = vmatprep.subr.mxu0 0.0
      %7099 = vmatpush1.msra.mxu0 %v7027
      %7100 = vmatprep.subr.mxu0 0.0
      %7101 = vmatpush1.msra.mxu0 %v7028
      %7102 = vmatprep.subr.mxu0 0.0
      %7103 = vmatpush1.msra.mxu0 %v7029
      %7104 = vmatprep.subr.mxu0 0.0
      %7105 = vmatpush1.msra.mxu0 %v7030
      %7106 = vmatprep.subr.mxu0 0.0
      %7107 = vmatpush1.msra.mxu0 %v7031
      %7108 = vmatprep.subr.mxu0 0.0
      %7109 = vmatpush1.msra.mxu0 %v7032
      %7110 = vmatprep.subr.mxu0 0.0
      %7111 = vmatpush1.msra.mxu0 %v7033
      %7112 = vmatprep.subr.mxu0 0.0
      %7113 = vmatpush1.msra.mxu0 %v7034
      %7114 = vmatprep.subr.mxu0 0.0
      %7115 = vmatpush1.msra.mxu0 %v7035
      %7116 = vmatprep.subr.mxu0 0.0
      %7117 = vmatpush1.msra.mxu0 0.0
      %7118 = vmatprep.subr.mxu0 0.0
      %7119 = vmatpush1.msra.mxu0 0.0
      %7120 = vmatprep.subr.mxu0 0.0
      %7121 = vmatpush1.msra.mxu0 0.0
      %7122 = vmatprep.subr.mxu0 0.0
      %7123 = vmatpush1.msra.mxu0 0.0
      %7124 = vmatprep.subr.mxu0 0.0
      %7125 = vmatpush1.msra.mxu0 0.0
      %7126 = vmatprep.subr.mxu0 0.0
      %7127 = vmatpush1.msra.mxu0 0.0
      %7128 = vmatprep.subr.mxu0 0.0
      %7129 = vmatpush1.msra.mxu0 0.0
      %7130 = vmatprep.subr.mxu0 0.0
      %7131 = vmatpush1.msra.mxu0 0.0
      %7132 = vmatprep.subr.mxu0 0.0
      %7133 = vmatpush1.msra.mxu0 0.0
      %7134 = vmatprep.subr.mxu0 0.0
      %7135 = vmatpush1.msra.mxu0 0.0
      %7136 = vmatprep.subr.mxu0 0.0
      %7137 = vmatpush1.msra.mxu0 0.0
      %7138 = vmatprep.subr.mxu0 0.0
      %7139 = vmatpush1.msra.mxu0 0.0
      %7140 = vmatprep.subr.mxu0 0.0
      %7141 = vmatpush1.msra.mxu0 0.0
      %7142 = vmatprep.subr.mxu0 0.0
      %7143 = vmatpush1.msra.mxu0 0.0
      %7144 = vmatprep.subr.mxu0 0.0
      %7145 = vmatpush1.msra.mxu0 0.0
      %7146 = vmatprep.subr.mxu0 0.0
      %7147 = vmatpush1.msra.mxu0 0.0
      %7148 = vmatprep.mubr.f32.mxu0 0.0
      %7149 = vmatmul.mubr.f32.gmra.mrb[0].mxu0 %v7018
      %v7150 = vpop.f32.mrb[0].mxu0
      %v7151 = vadd.f32 0.0, %v7150
      %v7152 = vpop.f32.mrb[0].mxu0
      %7153 = vdwg.mxu0
      %7154 = vmatprep.subr.mxu0 0.0
      %7155 = vmatpush1.msra.mxu0 %v7036
      %7156 = vmatprep.subr.mxu0 0.0
      %7157 = vmatpush1.msra.mxu0 %v7037
      %7158 = vmatprep.subr.mxu0 0.0
      %7159 = vmatpush1.msra.mxu0 %v7038
      %7160 = vmatprep.subr.mxu0 0.0
      %7161 = vmatpush1.msra.mxu0 %v7039
      %7162 = vmatprep.subr.mxu0 0.0
      %7163 = vmatpush1.msra.mxu0 %v7040
      %7164 = vmatprep.subr.mxu0 0.0
      %7165 = vmatpush1.msra.mxu0 %v7041
      %7166 = vmatprep.subr.mxu0 0.0
      %7167 = vmatpush1.msra.mxu0 %v7042
      %7168 = vmatprep.subr.mxu0 0.0
      %7169 = vmatpush1.msra.mxu0 %v7043
      %7170 = vmatprep.subr.mxu0 0.0
      %7171 = vmatpush1.msra.mxu0 %v7044
      %7172 = vmatprep.subr.mxu0 0.0
      %7173 = vmatpush1.msra.mxu0 %v7045
      %7174 = vmatprep.subr.mxu0 0.0
      %7175 = vmatpush1.msra.mxu0 %v7046
      %7176 = vmatprep.subr.mxu0 0.0
      %7177 = vmatpush1.msra.mxu0 %v7047
      %7178 = vmatprep.subr.mxu0 0.0
      %7179 = vmatpush1.msra.mxu0 %v7048
      %7180 = vmatprep.subr.mxu0 0.0
      %7181 = vmatpush1.msra.mxu0 %v7049
      %7182 = vmatprep.subr.mxu0 0.0
      %7183 = vmatpush1.msra.mxu0 %v7050
      %7184 = vmatprep.subr.mxu0 0.0
      %7185 = vmatpush1.msra.mxu0 %v7051
      %7186 = vmatprep.subr.mxu0 0.0
      %7187 = vmatpush1.msra.mxu0 0.0
      %7188 = vmatprep.subr.mxu0 0.0
      %7189 = vmatpush1.msra.mxu0 0.0
      %7190 = vmatprep.subr.mxu0 0.0
      %7191 = vmatpush1.msra.mxu0 0.0
      %7192 = vmatprep.subr.mxu0 0.0
      %7193 = vmatpush1.msra.mxu0 0.0
      %7194 = vmatprep.subr.mxu0 0.0
      %7195 = vmatpush1.msra.mxu0 0.0
      %7196 = vmatprep.subr.mxu0 0.0
      %7197 = vmatpush1.msra.mxu0 0.0
      %7198 = vmatprep.subr.mxu0 0.0
      %7199 = vmatpush1.msra.mxu0 0.0
      %7200 = vmatprep.subr.mxu0 0.0
      %7201 = vmatpush1.msra.mxu0 0.0
      %7202 = vmatprep.subr.mxu0 0.0
      %7203 = vmatpush1.msra.mxu0 0.0
      %7204 = vmatprep.subr.mxu0 0.0
      %7205 = vmatpush1.msra.mxu0 0.0
      %7206 = vmatprep.subr.mxu0 0.0
      %7207 = vmatpush1.msra.mxu0 0.0
      %7208 = vmatprep.subr.mxu0 0.0
      %7209 = vmatpush1.msra.mxu0 0.0
      %7210 = vmatprep.subr.mxu0 0.0
      %7211 = vmatpush1.msra.mxu0 0.0
      %7212 = vmatprep.subr.mxu0 0.0
      %7213 = vmatpush1.msra.mxu0 0.0
      %7214 = vmatprep.subr.mxu0 0.0
      %7215 = vmatpush1.msra.mxu0 0.0
      %7216 = vmatprep.subr.mxu0 0.0
      %7217 = vmatpush1.msra.mxu0 0.0
      %7218 = vmatprep.mubr.f32.mxu0 0.0
      %7219 = vmatmul.mubr.f32.gmra.mrb[0].mxu0 %v7018
      %v7220 = vpop.f32.mrb[0].mxu0
      %v7221 = vadd.f32 0.0, %v7220
      %v7222 = vpop.f32.mrb[0].mxu0
      %7223 = vdwg.mxu0
      %7224 = vmatprep.subr.mxu0 0.0
      %7225 = vmatpush1.msra.mxu0 %v7052
      %7226 = vmatprep.subr.mxu0 0.0
      %7227 = vmatpush1.msra.mxu0 %v7053
      %7228 = vmatprep.subr.mxu0 0.0
      %7229 = vmatpush1.msra.mxu0 %v7054
      %7230 = vmatprep.subr.mxu0 0.0
      %7231 = vmatpush1.msra.mxu0 %v7055
      %7232 = vmatprep.subr.mxu0 0.0
      %7233 = vmatpush1.msra.mxu0 %v7056
      %7234 = vmatprep.subr.mxu0 0.0
      %7235 = vmatpush1.msra.mxu0 %v7057
      %7236 = vmatprep.subr.mxu0 0.0
      %7237 = vmatpush1.msra.mxu0 %v7058
      %7238 = vmatprep.subr.mxu0 0.0
      %7239 = vmatpush1.msra.mxu0 %v7059
      %7240 = vmatprep.subr.mxu0 0.0
      %7241 = vmatpush1.msra.mxu0 %v7060
      %7242 = vmatprep.subr.mxu0 0.0
      %7243 = vmatpush1.msra.mxu0 %v7061
      %7244 = vmatprep.subr.mxu0 0.0
      %7245 = vmatpush1.msra.mxu0 %v7062
      %7246 = vmatprep.subr.mxu0 0.0
      %7247 = vmatpush1.msra.mxu0 %v7063
      %7248 = vmatprep.subr.mxu0 0.0
      %7249 = vmatpush1.msra.mxu0 %v7064
      %7250 = vmatprep.subr.mxu0 0.0
      %7251 = vmatpush1.msra.mxu0 %v7065
      %7252 = vmatprep.subr.mxu0 0.0
      %7253 = vmatpush1.msra.mxu0 %v7066
      %7254 = vmatprep.subr.mxu0 0.0
      %7255 = vmatpush1.msra.mxu0 %v7067
      %7256 = vmatprep.subr.mxu0 0.0
      %7257 = vmatpush1.msra.mxu0 0.0
      %7258 = vmatprep.subr.mxu0 0.0
      %7259 = vmatpush1.msra.mxu0 0.0
      %7260 = vmatprep.subr.mxu0 0.0
      %7261 = vmatpush1.msra.mxu0 0.0
      %7262 = vmatprep.subr.mxu0 0.0
      %7263 = vmatpush1.msra.mxu0 0.0
      %7264 = vmatprep.subr.mxu0 0.0
      %7265 = vmatpush1.msra.mxu0 0.0
      %7266 = vmatprep.subr.mxu0 0.0
      %7267 = vmatpush1.msra.mxu0 0.0
      %7268 = vmatprep.subr.mxu0 0.0
      %7269 = vmatpush1.msra.mxu0 0.0
      %7270 = vmatprep.subr.mxu0 0.0
      %7271 = vmatpush1.msra.mxu0 0.0
      %7272 = vmatprep.subr.mxu0 0.0
      %7273 = vmatpush1.msra.mxu0 0.0
      %7274 = vmatprep.subr.mxu0 0.0
      %7275 = vmatpush1.msra.mxu0 0.0
      %7276 = vmatprep.subr.mxu0 0.0
      %7277 = vmatpush1.msra.mxu0 0.0
      %7278 = vmatprep.subr.mxu0 0.0
      %7279 = vmatpush1.msra.mxu0 0.0
      %7280 = vmatprep.subr.mxu0 0.0
      %7281 = vmatpush1.msra.mxu0 0.0
      %7282 = vmatprep.subr.mxu0 0.0
      %7283 = vmatpush1.msra.mxu0 0.0
      %7284 = vmatprep.subr.mxu0 0.0
      %7285 = vmatpush1.msra.mxu0 0.0
      %7286 = vmatprep.subr.mxu0 0.0
      %7287 = vmatpush1.msra.mxu0 0.0
      %7288 = vmatprep.mubr.f32.mxu0 0.0
      %7289 = vmatmul.mubr.f32.gmra.mrb[0].mxu0 %v7018
      %v7290 = vpop.f32.mrb[0].mxu0
      %v7291 = vadd.f32 0.0, %v7290
      %v7292 = vpop.f32.mrb[0].mxu0
      %7293 = vdwg.mxu0
      %7294 = vmatprep.subr.mxu0 0.0
      %7295 = vmatpush1.msra.mxu0 %v7068
      %7296 = vmatprep.subr.mxu0 0.0
      %7297 = vmatpush1.msra.mxu0 %v7069
      %7298 = vmatprep.subr.mxu0 0.0
      %7299 = vmatpush1.msra.mxu0 %v7070
      %7300 = vmatprep.subr.mxu0 0.0
      %7301 = vmatpush1.msra.mxu0 %v7071
      %7302 = vmatprep.subr.mxu0 0.0
      %7303 = vmatpush1.msra.mxu0 %v7072
      %7304 = vmatprep.subr.mxu0 0.0
      %7305 = vmatpush1.msra.mxu0 %v7073
      %7306 = vmatprep.subr.mxu0 0.0
      %7307 = vmatpush1.msra.mxu0 %v7074
      %7308 = vmatprep.subr.mxu0 0.0
      %7309 = vmatpush1.msra.mxu0 %v7075
      %7310 = vmatprep.subr.mxu0 0.0
      %7311 = vmatpush1.msra.mxu0 %v7076
      %7312 = vmatprep.subr.mxu0 0.0
      %7313 = vmatpush1.msra.mxu0 %v7077
      %7314 = vmatprep.subr.mxu0 0.0
      %7315 = vmatpush1.msra.mxu0 %v7078
      %7316 = vmatprep.subr.mxu0 0.0
      %7317 = vmatpush1.msra.mxu0 %v7079
      %7318 = vmatprep.subr.mxu0 0.0
      %7319 = vmatpush1.msra.mxu0 %v7080
      %7320 = vmatprep.subr.mxu0 0.0
      %7321 = vmatpush1.msra.mxu0 %v7081
      %7322 = vmatprep.subr.mxu0 0.0
      %7323 = vmatpush1.msra.mxu0 %v7082
      %7324 = vmatprep.subr.mxu0 0.0
      %7325 = vmatpush1.msra.mxu0 %v7083
      %7326 = vmatprep.subr.mxu0 0.0
      %7327 = vmatpush1.msra.mxu0 0.0
      %7328 = vmatprep.subr.mxu0 0.0
      %7329 = vmatpush1.msra.mxu0 0.0
      %7330 = vmatprep.subr.mxu0 0.0
      %7331 = vmatpush1.msra.mxu0 0.0
      %7332 = vmatprep.subr.mxu0 0.0
      %7333 = vmatpush1.msra.mxu0 0.0
      %7334 = vmatprep.subr.mxu0 0.0
      %7335 = vmatpush1.msra.mxu0 0.0
      %7336 = vmatprep.subr.mxu0 0.0
      %7337 = vmatpush1.msra.mxu0 0.0
      %7338 = vmatprep.subr.mxu0 0.0
      %7339 = vmatpush1.msra.mxu0 0.0
      %7340 = vmatprep.subr.mxu0 0.0
      %7341 = vmatpush1.msra.mxu0 0.0
      %7342 = vmatprep.subr.mxu0 0.0
      %7343 = vmatpush1.msra.mxu0 0.0
      %7344 = vmatprep.subr.mxu0 0.0
      %7345 = vmatpush1.msra.mxu0 0.0
      %7346 = vmatprep.subr.mxu0 0.0
      %7347 = vmatpush1.msra.mxu0 0.0
      %7348 = vmatprep.subr.mxu0 0.0
      %7349 = vmatpush1.msra.mxu0 0.0
      %7350 = vmatprep.subr.mxu0 0.0
      %7351 = vmatpush1.msra.mxu0 0.0
      %7352 = vmatprep.subr.mxu0 0.0
      %7353 = vmatpush1.msra.mxu0 0.0
      %7354 = vmatprep.subr.mxu0 0.0
      %7355 = vmatpush1.msra.mxu0 0.0
      %7356 = vmatprep.subr.mxu0 0.0
      %7357 = vmatpush1.msra.mxu0 0.0
      %7358 = vmatprep.mubr.f32.mxu0 0.0
      %7359 = vmatmul.mubr.f32.gmra.mrb[0].mxu0 %v7018
      %v7360 = vpop.f32.mrb[0].mxu0
      %v7361 = vadd.f32 0.0, %v7360
      %v7362 = vpop.f32.mrb[0].mxu0
      %7363 = vdwg.mxu0
      %s7364 = scalar_lea.vmem %s9, 512
      %v7365 = vld [vmem:[%s7364] sm:$0xff]
      %v7366 = vld [vmem:[%s7364 + $0x8] sm:$0xff]
      %v7367 = vld [vmem:[%s7364 + $0x10] sm:$0xff]
      %v7368 = vld [vmem:[%s7364 + $0x18] sm:$0xff]
      %v7369 = vld [vmem:[%s7364 + $0x20] sm:$0xff]
      %v7370 = vld [vmem:[%s7364 + $0x28] sm:$0xff]
      %v7371 = vld [vmem:[%s7364 + $0x30] sm:$0xff]
      %v7372 = vld [vmem:[%s7364 + $0x38] sm:$0xff]
      %v7373 = vld [vmem:[%s7364 + $0x40] sm:$0xff]
      %v7374 = vld [vmem:[%s7364 + $0x48] sm:$0xff]
      %v7375 = vld [vmem:[%s7364 + $0x50] sm:$0xff]
      %v7376 = vld [vmem:[%s7364 + $0x58] sm:$0xff]
      %v7377 = vld [vmem:[%s7364 + $0x60] sm:$0xff]
      %v7378 = vld [vmem:[%s7364 + $0x68] sm:$0xff]
      %v7379 = vld [vmem:[%s7364 + $0x70] sm:$0xff]
      %v7380 = vld [vmem:[%s7364 + $0x78] sm:$0xff]
      %v7381 = vld [vmem:[%s7364 + $0x80] sm:$0xff]
      %v7382 = vld [vmem:[%s7364 + $0x88] sm:$0xff]
      %v7383 = vld [vmem:[%s7364 + $0x90] sm:$0xff]
      %v7384 = vld [vmem:[%s7364 + $0x98] sm:$0xff]
      %v7385 = vld [vmem:[%s7364 + $0xa0] sm:$0xff]
      %v7386 = vld [vmem:[%s7364 + $0xa8] sm:$0xff]
      %v7387 = vld [vmem:[%s7364 + $0xb0] sm:$0xff]
      %v7388 = vld [vmem:[%s7364 + $0xb8] sm:$0xff]
      %v7389 = vld [vmem:[%s7364 + $0xc0] sm:$0xff]
      %v7390 = vld [vmem:[%s7364 + $0xc8] sm:$0xff]
      %v7391 = vld [vmem:[%s7364 + $0xd0] sm:$0xff]
      %v7392 = vld [vmem:[%s7364 + $0xd8] sm:$0xff]
      %v7393 = vld [vmem:[%s7364 + $0xe0] sm:$0xff]
      %v7394 = vld [vmem:[%s7364 + $0xe8] sm:$0xff]
      %v7395 = vld [vmem:[%s7364 + $0xf0] sm:$0xff]
      %v7396 = vld [vmem:[%s7364 + $0xf8] sm:$0xff]
      %v7397 = vld [vmem:[%s7364 + $0x100] sm:$0xff]
      %v7398 = vld [vmem:[%s7364 + $0x108] sm:$0xff]
      %v7399 = vld [vmem:[%s7364 + $0x110] sm:$0xff]
      %v7400 = vld [vmem:[%s7364 + $0x118] sm:$0xff]
      %v7401 = vld [vmem:[%s7364 + $0x120] sm:$0xff]
      %v7402 = vld [vmem:[%s7364 + $0x128] sm:$0xff]
      %v7403 = vld [vmem:[%s7364 + $0x130] sm:$0xff]
      %v7404 = vld [vmem:[%s7364 + $0x138] sm:$0xff]
      %v7405 = vld [vmem:[%s7364 + $0x140] sm:$0xff]
      %v7406 = vld [vmem:[%s7364 + $0x148] sm:$0xff]
      %v7407 = vld [vmem:[%s7364 + $0x150] sm:$0xff]
      %v7408 = vld [vmem:[%s7364 + $0x158] sm:$0xff]
      %v7409 = vld [vmem:[%s7364 + $0x160] sm:$0xff]
      %v7410 = vld [vmem:[%s7364 + $0x168] sm:$0xff]
      %v7411 = vld [vmem:[%s7364 + $0x170] sm:$0xff]
      %v7412 = vld [vmem:[%s7364 + $0x178] sm:$0xff]
      %v7413 = vld [vmem:[%s7364 + $0x180] sm:$0xff]
      %v7414 = vld [vmem:[%s7364 + $0x188] sm:$0xff]
      %v7415 = vld [vmem:[%s7364 + $0x190] sm:$0xff]
      %v7416 = vld [vmem:[%s7364 + $0x198] sm:$0xff]
      %v7417 = vld [vmem:[%s7364 + $0x1a0] sm:$0xff]
      %v7418 = vld [vmem:[%s7364 + $0x1a8] sm:$0xff]
      %v7419 = vld [vmem:[%s7364 + $0x1b0] sm:$0xff]
      %v7420 = vld [vmem:[%s7364 + $0x1b8] sm:$0xff]
      %v7421 = vld [vmem:[%s7364 + $0x1c0] sm:$0xff]
      %v7422 = vld [vmem:[%s7364 + $0x1c8] sm:$0xff]
      %v7423 = vld [vmem:[%s7364 + $0x1d0] sm:$0xff]
      %v7424 = vld [vmem:[%s7364 + $0x1d8] sm:$0xff]
      %v7425 = vld [vmem:[%s7364 + $0x1e0] sm:$0xff]
      %v7426 = vld [vmem:[%s7364 + $0x1e8] sm:$0xff]
      %v7427 = vld [vmem:[%s7364 + $0x1f0] sm:$0xff]
      %v7428 = vld [vmem:[%s7364 + $0x1f8] sm:$0xff]
      %7429 = vmatprep.subr.mxu0 0.0
      %7430 = vmatpush1.msra.mxu0 %v7365
      %7431 = vmatprep.subr.mxu0 0.0
      %7432 = vmatpush1.msra.mxu0 %v7366
      %7433 = vmatprep.subr.mxu0 0.0
      %7434 = vmatpush1.msra.mxu0 %v7367
      %7435 = vmatprep.subr.mxu0 0.0
      %7436 = vmatpush1.msra.mxu0 %v7368
      %7437 = vmatprep.subr.mxu0 0.0
      %7438 = vmatpush1.msra.mxu0 %v7369
      %7439 = vmatprep.subr.mxu0 0.0
      %7440 = vmatpush1.msra.mxu0 %v7370
      %7441 = vmatprep.subr.mxu0 0.0
      %7442 = vmatpush1.msra.mxu0 %v7371
      %7443 = vmatprep.subr.mxu0 0.0
      %7444 = vmatpush1.msra.mxu0 %v7372
      %7445 = vmatprep.subr.mxu0 0.0
      %7446 = vmatpush1.msra.mxu0 %v7373
      %7447 = vmatprep.subr.mxu0 0.0
      %7448 = vmatpush1.msra.mxu0 %v7374
      %7449 = vmatprep.subr.mxu0 0.0
      %7450 = vmatpush1.msra.mxu0 %v7375
      %7451 = vmatprep.subr.mxu0 0.0
      %7452 = vmatpush1.msra.mxu0 %v7376
      %7453 = vmatprep.subr.mxu0 0.0
      %7454 = vmatpush1.msra.mxu0 %v7377
      %7455 = vmatprep.subr.mxu0 0.0
      %7456 = vmatpush1.msra.mxu0 %v7378
      %7457 = vmatprep.subr.mxu0 0.0
      %7458 = vmatpush1.msra.mxu0 %v7379
      %7459 = vmatprep.subr.mxu0 0.0
      %7460 = vmatpush1.msra.mxu0 %v7380
      %7461 = vmatprep.subr.mxu0 0.0
      %7462 = vmatpush1.msra.mxu0 0.0
      %7463 = vmatprep.subr.mxu0 0.0
      %7464 = vmatpush1.msra.mxu0 0.0
      %7465 = vmatprep.subr.mxu0 0.0
      %7466 = vmatpush1.msra.mxu0 0.0
      %7467 = vmatprep.subr.mxu0 0.0
      %7468 = vmatpush1.msra.mxu0 0.0
      %7469 = vmatprep.subr.mxu0 0.0
      %7470 = vmatpush1.msra.mxu0 0.0
      %7471 = vmatprep.subr.mxu0 0.0
      %7472 = vmatpush1.msra.mxu0 0.0
      %7473 = vmatprep.subr.mxu0 0.0
      %7474 = vmatpush1.msra.mxu0 0.0
      %7475 = vmatprep.subr.mxu0 0.0
      %7476 = vmatpush1.msra.mxu0 0.0
      %7477 = vmatprep.subr.mxu0 0.0
      %7478 = vmatpush1.msra.mxu0 0.0
      %7479 = vmatprep.subr.mxu0 0.0
      %7480 = vmatpush1.msra.mxu0 0.0
      %7481 = vmatprep.subr.mxu0 0.0
      %7482 = vmatpush1.msra.mxu0 0.0
      %7483 = vmatprep.subr.mxu0 0.0
      %7484 = vmatpush1.msra.mxu0 0.0
      %7485 = vmatprep.subr.mxu0 0.0
      %7486 = vmatpush1.msra.mxu0 0.0
      %7487 = vmatprep.subr.mxu0 0.0
      %7488 = vmatpush1.msra.mxu0 0.0
      %7489 = vmatprep.subr.mxu0 0.0
      %7490 = vmatpush1.msra.mxu0 0.0
      %7491 = vmatprep.subr.mxu0 0.0
      %7492 = vmatpush1.msra.mxu0 0.0
      %7493 = vmatprep.mubr.f32.mxu0 0.0
      %7494 = vmatmul.mubr.f32.gmra.mrb[0].mxu0 %v706
      %v7495 = vpop.f32.mrb[0].mxu0
      %v7496 = vadd.f32 0.0, %v7495
      %v7497 = vpop.f32.mrb[0].mxu0
      %7498 = vdwg.mxu0
      %7499 = vmatprep.subr.mxu0 0.0
      %7500 = vmatpush1.msra.mxu0 %v7381
      %7501 = vmatprep.subr.mxu0 0.0
      %7502 = vmatpush1.msra.mxu0 %v7382
      %7503 = vmatprep.subr.mxu0 0.0
      %7504 = vmatpush1.msra.mxu0 %v7383
      %7505 = vmatprep.subr.mxu0 0.0
      %7506 = vmatpush1.msra.mxu0 %v7384
      %7507 = vmatprep.subr.mxu0 0.0
      %7508 = vmatpush1.msra.mxu0 %v7385
      %7509 = vmatprep.subr.mxu0 0.0
      %7510 = vmatpush1.msra.mxu0 %v7386
      %7511 = vmatprep.subr.mxu0 0.0
      %7512 = vmatpush1.msra.mxu0 %v7387
      %7513 = vmatprep.subr.mxu0 0.0
      %7514 = vmatpush1.msra.mxu0 %v7388
      %7515 = vmatprep.subr.mxu0 0.0
      %7516 = vmatpush1.msra.mxu0 %v7389
      %7517 = vmatprep.subr.mxu0 0.0
      %7518 = vmatpush1.msra.mxu0 %v7390
      %7519 = vmatprep.subr.mxu0 0.0
      %7520 = vmatpush1.msra.mxu0 %v7391
      %7521 = vmatprep.subr.mxu0 0.0
      %7522 = vmatpush1.msra.mxu0 %v7392
      %7523 = vmatprep.subr.mxu0 0.0
      %7524 = vmatpush1.msra.mxu0 %v7393
      %7525 = vmatprep.subr.mxu0 0.0
      %7526 = vmatpush1.msra.mxu0 %v7394
      %7527 = vmatprep.subr.mxu0 0.0
      %7528 = vmatpush1.msra.mxu0 %v7395
      %7529 = vmatprep.subr.mxu0 0.0
      %7530 = vmatpush1.msra.mxu0 %v7396
      %7531 = vmatprep.subr.mxu0 0.0
      %7532 = vmatpush1.msra.mxu0 0.0
      %7533 = vmatprep.subr.mxu0 0.0
      %7534 = vmatpush1.msra.mxu0 0.0
      %7535 = vmatprep.subr.mxu0 0.0
      %7536 = vmatpush1.msra.mxu0 0.0
      %7537 = vmatprep.subr.mxu0 0.0
      %7538 = vmatpush1.msra.mxu0 0.0
      %7539 = vmatprep.subr.mxu0 0.0
      %7540 = vmatpush1.msra.mxu0 0.0
      %7541 = vmatprep.subr.mxu0 0.0
      %7542 = vmatpush1.msra.mxu0 0.0
      %7543 = vmatprep.subr.mxu0 0.0
      %7544 = vmatpush1.msra.mxu0 0.0
      %7545 = vmatprep.subr.mxu0 0.0
      %7546 = vmatpush1.msra.mxu0 0.0
      %7547 = vmatprep.subr.mxu0 0.0
      %7548 = vmatpush1.msra.mxu0 0.0
      %7549 = vmatprep.subr.mxu0 0.0
      %7550 = vmatpush1.msra.mxu0 0.0
      %7551 = vmatprep.subr.mxu0 0.0
      %7552 = vmatpush1.msra.mxu0 0.0
      %7553 = vmatprep.subr.mxu0 0.0
      %7554 = vmatpush1.msra.mxu0 0.0
      %7555 = vmatprep.subr.mxu0 0.0
      %7556 = vmatpush1.msra.mxu0 0.0
      %7557 = vmatprep.subr.mxu0 0.0
      %7558 = vmatpush1.msra.mxu0 0.0
      %7559 = vmatprep.subr.mxu0 0.0
      %7560 = vmatpush1.msra.mxu0 0.0
      %7561 = vmatprep.subr.mxu0 0.0
      %7562 = vmatpush1.msra.mxu0 0.0
      %7563 = vmatprep.mubr.f32.mxu0 0.0
      %7564 = vmatmul.mubr.f32.gmra.mrb[0].mxu0 %v706
      %v7565 = vpop.f32.mrb[0].mxu0
      %v7566 = vadd.f32 0.0, %v7565
      %v7567 = vpop.f32.mrb[0].mxu0
      %7568 = vdwg.mxu0
      %7569 = vmatprep.subr.mxu0 0.0
      %7570 = vmatpush1.msra.mxu0 %v7397
      %7571 = vmatprep.subr.mxu0 0.0
      %7572 = vmatpush1.msra.mxu0 %v7398
      %7573 = vmatprep.subr.mxu0 0.0
      %7574 = vmatpush1.msra.mxu0 %v7399
      %7575 = vmatprep.subr.mxu0 0.0
      %7576 = vmatpush1.msra.mxu0 %v7400
      %7577 = vmatprep.subr.mxu0 0.0
      %7578 = vmatpush1.msra.mxu0 %v7401
      %7579 = vmatprep.subr.mxu0 0.0
      %7580 = vmatpush1.msra.mxu0 %v7402
      %7581 = vmatprep.subr.mxu0 0.0
      %7582 = vmatpush1.msra.mxu0 %v7403
      %7583 = vmatprep.subr.mxu0 0.0
      %7584 = vmatpush1.msra.mxu0 %v7404
      %7585 = vmatprep.subr.mxu0 0.0
      %7586 = vmatpush1.msra.mxu0 %v7405
      %7587 = vmatprep.subr.mxu0 0.0
      %7588 = vmatpush1.msra.mxu0 %v7406
      %7589 = vmatprep.subr.mxu0 0.0
      %7590 = vmatpush1.msra.mxu0 %v7407
      %7591 = vmatprep.subr.mxu0 0.0
      %7592 = vmatpush1.msra.mxu0 %v7408
      %7593 = vmatprep.subr.mxu0 0.0
      %7594 = vmatpush1.msra.mxu0 %v7409
      %7595 = vmatprep.subr.mxu0 0.0
      %7596 = vmatpush1.msra.mxu0 %v7410
      %7597 = vmatprep.subr.mxu0 0.0
      %7598 = vmatpush1.msra.mxu0 %v7411
      %7599 = vmatprep.subr.mxu0 0.0
      %7600 = vmatpush1.msra.mxu0 %v7412
      %7601 = vmatprep.subr.mxu0 0.0
      %7602 = vmatpush1.msra.mxu0 0.0
      %7603 = vmatprep.subr.mxu0 0.0
      %7604 = vmatpush1.msra.mxu0 0.0
      %7605 = vmatprep.subr.mxu0 0.0
      %7606 = vmatpush1.msra.mxu0 0.0
      %7607 = vmatprep.subr.mxu0 0.0
      %7608 = vmatpush1.msra.mxu0 0.0
      %7609 = vmatprep.subr.mxu0 0.0
      %7610 = vmatpush1.msra.mxu0 0.0
      %7611 = vmatprep.subr.mxu0 0.0
      %7612 = vmatpush1.msra.mxu0 0.0
      %7613 = vmatprep.subr.mxu0 0.0
      %7614 = vmatpush1.msra.mxu0 0.0
      %7615 = vmatprep.subr.mxu0 0.0
      %7616 = vmatpush1.msra.mxu0 0.0
      %7617 = vmatprep.subr.mxu0 0.0
      %7618 = vmatpush1.msra.mxu0 0.0
      %7619 = vmatprep.subr.mxu0 0.0
      %7620 = vmatpush1.msra.mxu0 0.0
      %7621 = vmatprep.subr.mxu0 0.0
      %7622 = vmatpush1.msra.mxu0 0.0
      %7623 = vmatprep.subr.mxu0 0.0
      %7624 = vmatpush1.msra.mxu0 0.0
      %7625 = vmatprep.subr.mxu0 0.0
      %7626 = vmatpush1.msra.mxu0 0.0
      %7627 = vmatprep.subr.mxu0 0.0
      %7628 = vmatpush1.msra.mxu0 0.0
      %7629 = vmatprep.subr.mxu0 0.0
      %7630 = vmatpush1.msra.mxu0 0.0
      %7631 = vmatprep.subr.mxu0 0.0
      %7632 = vmatpush1.msra.mxu0 0.0
      %7633 = vmatprep.mubr.f32.mxu0 0.0
      %7634 = vmatmul.mubr.f32.gmra.mrb[0].mxu0 %v706
      %v7635 = vpop.f32.mrb[0].mxu0
      %v7636 = vadd.f32 0.0, %v7635
      %v7637 = vpop.f32.mrb[0].mxu0
      %7638 = vdwg.mxu0
      %7639 = vmatprep.subr.mxu0 0.0
      %7640 = vmatpush1.msra.mxu0 %v7413
      %7641 = vmatprep.subr.mxu0 0.0
      %7642 = vmatpush1.msra.mxu0 %v7414
      %7643 = vmatprep.subr.mxu0 0.0
      %7644 = vmatpush1.msra.mxu0 %v7415
      %7645 = vmatprep.subr.mxu0 0.0
      %7646 = vmatpush1.msra.mxu0 %v7416
      %7647 = vmatprep.subr.mxu0 0.0
      %7648 = vmatpush1.msra.mxu0 %v7417
      %7649 = vmatprep.subr.mxu0 0.0
      %7650 = vmatpush1.msra.mxu0 %v7418
      %7651 = vmatprep.subr.mxu0 0.0
      %7652 = vmatpush1.msra.mxu0 %v7419
      %7653 = vmatprep.subr.mxu0 0.0
      %7654 = vmatpush1.msra.mxu0 %v7420
      %7655 = vmatprep.subr.mxu0 0.0
      %7656 = vmatpush1.msra.mxu0 %v7421
      %7657 = vmatprep.subr.mxu0 0.0
      %7658 = vmatpush1.msra.mxu0 %v7422
      %7659 = vmatprep.subr.mxu0 0.0
      %7660 = vmatpush1.msra.mxu0 %v7423
      %7661 = vmatprep.subr.mxu0 0.0
      %7662 = vmatpush1.msra.mxu0 %v7424
      %7663 = vmatprep.subr.mxu0 0.0
      %7664 = vmatpush1.msra.mxu0 %v7425
      %7665 = vmatprep.subr.mxu0 0.0
      %7666 = vmatpush1.msra.mxu0 %v7426
      %7667 = vmatprep.subr.mxu0 0.0
      %7668 = vmatpush1.msra.mxu0 %v7427
      %7669 = vmatprep.subr.mxu0 0.0
      %7670 = vmatpush1.msra.mxu0 %v7428
      %7671 = vmatprep.subr.mxu0 0.0
      %7672 = vmatpush1.msra.mxu0 0.0
      %7673 = vmatprep.subr.mxu0 0.0
      %7674 = vmatpush1.msra.mxu0 0.0
      %7675 = vmatprep.subr.mxu0 0.0
      %7676 = vmatpush1.msra.mxu0 0.0
      %7677 = vmatprep.subr.mxu0 0.0
      %7678 = vmatpush1.msra.mxu0 0.0
      %7679 = vmatprep.subr.mxu0 0.0
      %7680 = vmatpush1.msra.mxu0 0.0
      %7681 = vmatprep.subr.mxu0 0.0
      %7682 = vmatpush1.msra.mxu0 0.0
      %7683 = vmatprep.subr.mxu0 0.0
      %7684 = vmatpush1.msra.mxu0 0.0
      %7685 = vmatprep.subr.mxu0 0.0
      %7686 = vmatpush1.msra.mxu0 0.0
      %7687 = vmatprep.subr.mxu0 0.0
      %7688 = vmatpush1.msra.mxu0 0.0
      %7689 = vmatprep.subr.mxu0 0.0
      %7690 = vmatpush1.msra.mxu0 0.0
      %7691 = vmatprep.subr.mxu0 0.0
      %7692 = vmatpush1.msra.mxu0 0.0
      %7693 = vmatprep.subr.mxu0 0.0
      %7694 = vmatpush1.msra.mxu0 0.0
      %7695 = vmatprep.subr.mxu0 0.0
      %7696 = vmatpush1.msra.mxu0 0.0
      %7697 = vmatprep.subr.mxu0 0.0
      %7698 = vmatpush1.msra.mxu0 0.0
      %7699 = vmatprep.subr.mxu0 0.0
      %7700 = vmatpush1.msra.mxu0 0.0
      %7701 = vmatprep.subr.mxu0 0.0
      %7702 = vmatpush1.msra.mxu0 0.0
      %7703 = vmatprep.mubr.f32.mxu0 0.0
      %7704 = vmatmul.mubr.f32.gmra.mrb[0].mxu0 %v706
      %v7705 = vpop.f32.mrb[0].mxu0
      %v7706 = vadd.f32 0.0, %v7705
      %v7707 = vpop.f32.mrb[0].mxu0
      %7708 = vdwg.mxu0
      %s7709 = scalar_lea.vmem %s10, 512
      %v7710 = vld [vmem:[%s7709] sm:$0xff]
      %v7711 = vld [vmem:[%s7709 + $0x8] sm:$0xff]
      %v7712 = vld [vmem:[%s7709 + $0x10] sm:$0xff]
      %v7713 = vld [vmem:[%s7709 + $0x18] sm:$0xff]
      %v7714 = vld [vmem:[%s7709 + $0x20] sm:$0xff]
      %v7715 = vld [vmem:[%s7709 + $0x28] sm:$0xff]
      %v7716 = vld [vmem:[%s7709 + $0x30] sm:$0xff]
      %v7717 = vld [vmem:[%s7709 + $0x38] sm:$0xff]
      %v7718 = vld [vmem:[%s7709 + $0x40] sm:$0xff]
      %v7719 = vld [vmem:[%s7709 + $0x48] sm:$0xff]
      %v7720 = vld [vmem:[%s7709 + $0x50] sm:$0xff]
      %v7721 = vld [vmem:[%s7709 + $0x58] sm:$0xff]
      %v7722 = vld [vmem:[%s7709 + $0x60] sm:$0xff]
      %v7723 = vld [vmem:[%s7709 + $0x68] sm:$0xff]
      %v7724 = vld [vmem:[%s7709 + $0x70] sm:$0xff]
      %v7725 = vld [vmem:[%s7709 + $0x78] sm:$0xff]
      %v7726 = vld [vmem:[%s7709 + $0x80] sm:$0xff]
      %v7727 = vld [vmem:[%s7709 + $0x88] sm:$0xff]
      %v7728 = vld [vmem:[%s7709 + $0x90] sm:$0xff]
      %v7729 = vld [vmem:[%s7709 + $0x98] sm:$0xff]
      %v7730 = vld [vmem:[%s7709 + $0xa0] sm:$0xff]
      %v7731 = vld [vmem:[%s7709 + $0xa8] sm:$0xff]
      %v7732 = vld [vmem:[%s7709 + $0xb0] sm:$0xff]
      %v7733 = vld [vmem:[%s7709 + $0xb8] sm:$0xff]
      %v7734 = vld [vmem:[%s7709 + $0xc0] sm:$0xff]
      %v7735 = vld [vmem:[%s7709 + $0xc8] sm:$0xff]
      %v7736 = vld [vmem:[%s7709 + $0xd0] sm:$0xff]
      %v7737 = vld [vmem:[%s7709 + $0xd8] sm:$0xff]
      %v7738 = vld [vmem:[%s7709 + $0xe0] sm:$0xff]
      %v7739 = vld [vmem:[%s7709 + $0xe8] sm:$0xff]
      %v7740 = vld [vmem:[%s7709 + $0xf0] sm:$0xff]
      %v7741 = vld [vmem:[%s7709 + $0xf8] sm:$0xff]
      %v7742 = vld [vmem:[%s7709 + $0x100] sm:$0xff]
      %v7743 = vld [vmem:[%s7709 + $0x108] sm:$0xff]
      %v7744 = vld [vmem:[%s7709 + $0x110] sm:$0xff]
      %v7745 = vld [vmem:[%s7709 + $0x118] sm:$0xff]
      %v7746 = vld [vmem:[%s7709 + $0x120] sm:$0xff]
      %v7747 = vld [vmem:[%s7709 + $0x128] sm:$0xff]
      %v7748 = vld [vmem:[%s7709 + $0x130] sm:$0xff]
      %v7749 = vld [vmem:[%s7709 + $0x138] sm:$0xff]
      %v7750 = vld [vmem:[%s7709 + $0x140] sm:$0xff]
      %v7751 = vld [vmem:[%s7709 + $0x148] sm:$0xff]
      %v7752 = vld [vmem:[%s7709 + $0x150] sm:$0xff]
      %v7753 = vld [vmem:[%s7709 + $0x158] sm:$0xff]
      %v7754 = vld [vmem:[%s7709 + $0x160] sm:$0xff]
      %v7755 = vld [vmem:[%s7709 + $0x168] sm:$0xff]
      %v7756 = vld [vmem:[%s7709 + $0x170] sm:$0xff]
      %v7757 = vld [vmem:[%s7709 + $0x178] sm:$0xff]
      %v7758 = vld [vmem:[%s7709 + $0x180] sm:$0xff]
      %v7759 = vld [vmem:[%s7709 + $0x188] sm:$0xff]
      %v7760 = vld [vmem:[%s7709 + $0x190] sm:$0xff]
      %v7761 = vld [vmem:[%s7709 + $0x198] sm:$0xff]
      %v7762 = vld [vmem:[%s7709 + $0x1a0] sm:$0xff]
      %v7763 = vld [vmem:[%s7709 + $0x1a8] sm:$0xff]
      %v7764 = vld [vmem:[%s7709 + $0x1b0] sm:$0xff]
      %v7765 = vld [vmem:[%s7709 + $0x1b8] sm:$0xff]
      %v7766 = vld [vmem:[%s7709 + $0x1c0] sm:$0xff]
      %v7767 = vld [vmem:[%s7709 + $0x1c8] sm:$0xff]
      %v7768 = vld [vmem:[%s7709 + $0x1d0] sm:$0xff]
      %v7769 = vld [vmem:[%s7709 + $0x1d8] sm:$0xff]
      %v7770 = vld [vmem:[%s7709 + $0x1e0] sm:$0xff]
      %v7771 = vld [vmem:[%s7709 + $0x1e8] sm:$0xff]
      %v7772 = vld [vmem:[%s7709 + $0x1f0] sm:$0xff]
      %v7773 = vld [vmem:[%s7709 + $0x1f8] sm:$0xff]
      %7774 = vmatprep.subr.mxu0 0.0
      %7775 = vmatpush1.msra.mxu0 %v7710
      %7776 = vmatprep.subr.mxu0 0.0
      %7777 = vmatpush1.msra.mxu0 %v7711
      %7778 = vmatprep.subr.mxu0 0.0
      %7779 = vmatpush1.msra.mxu0 %v7712
      %7780 = vmatprep.subr.mxu0 0.0
      %7781 = vmatpush1.msra.mxu0 %v7713
      %7782 = vmatprep.subr.mxu0 0.0
      %7783 = vmatpush1.msra.mxu0 %v7714
      %7784 = vmatprep.subr.mxu0 0.0
      %7785 = vmatpush1.msra.mxu0 %v7715
      %7786 = vmatprep.subr.mxu0 0.0
      %7787 = vmatpush1.msra.mxu0 %v7716
      %7788 = vmatprep.subr.mxu0 0.0
      %7789 = vmatpush1.msra.mxu0 %v7717
      %7790 = vmatprep.subr.mxu0 0.0
      %7791 = vmatpush1.msra.mxu0 %v7718
      %7792 = vmatprep.subr.mxu0 0.0
      %7793 = vmatpush1.msra.mxu0 %v7719
      %7794 = vmatprep.subr.mxu0 0.0
      %7795 = vmatpush1.msra.mxu0 %v7720
      %7796 = vmatprep.subr.mxu0 0.0
      %7797 = vmatpush1.msra.mxu0 %v7721
      %7798 = vmatprep.subr.mxu0 0.0
      %7799 = vmatpush1.msra.mxu0 %v7722
      %7800 = vmatprep.subr.mxu0 0.0
      %7801 = vmatpush1.msra.mxu0 %v7723
      %7802 = vmatprep.subr.mxu0 0.0
      %7803 = vmatpush1.msra.mxu0 %v7724
      %7804 = vmatprep.subr.mxu0 0.0
      %7805 = vmatpush1.msra.mxu0 %v7725
      %7806 = vmatprep.subr.mxu0 0.0
      %7807 = vmatpush1.msra.mxu0 0.0
      %7808 = vmatprep.subr.mxu0 0.0
      %7809 = vmatpush1.msra.mxu0 0.0
      %7810 = vmatprep.subr.mxu0 0.0
      %7811 = vmatpush1.msra.mxu0 0.0
      %7812 = vmatprep.subr.mxu0 0.0
      %7813 = vmatpush1.msra.mxu0 0.0
      %7814 = vmatprep.subr.mxu0 0.0
      %7815 = vmatpush1.msra.mxu0 0.0
      %7816 = vmatprep.subr.mxu0 0.0
      %7817 = vmatpush1.msra.mxu0 0.0
      %7818 = vmatprep.subr.mxu0 0.0
      %7819 = vmatpush1.msra.mxu0 0.0
      %7820 = vmatprep.subr.mxu0 0.0
      %7821 = vmatpush1.msra.mxu0 0.0
      %7822 = vmatprep.subr.mxu0 0.0
      %7823 = vmatpush1.msra.mxu0 0.0
      %7824 = vmatprep.subr.mxu0 0.0
      %7825 = vmatpush1.msra.mxu0 0.0
      %7826 = vmatprep.subr.mxu0 0.0
      %7827 = vmatpush1.msra.mxu0 0.0
      %7828 = vmatprep.subr.mxu0 0.0
      %7829 = vmatpush1.msra.mxu0 0.0
      %7830 = vmatprep.subr.mxu0 0.0
      %7831 = vmatpush1.msra.mxu0 0.0
      %7832 = vmatprep.subr.mxu0 0.0
      %7833 = vmatpush1.msra.mxu0 0.0
      %7834 = vmatprep.subr.mxu0 0.0
      %7835 = vmatpush1.msra.mxu0 0.0
      %7836 = vmatprep.subr.mxu0 0.0
      %7837 = vmatpush1.msra.mxu0 0.0
      %7838 = vmatprep.mubr.f32.mxu0 0.0
      %7839 = vmatmul.mubr.f32.gmra.mrb[0].mxu0 %v706
      %v7840 = vpop.f32.mrb[0].mxu0
      %v7841 = vadd.f32 0.0, %v7840
      %v7842 = vpop.f32.mrb[0].mxu0
      %7843 = vdwg.mxu0
      %7844 = vmatprep.subr.mxu0 0.0
      %7845 = vmatpush1.msra.mxu0 %v7726
      %7846 = vmatprep.subr.mxu0 0.0
      %7847 = vmatpush1.msra.mxu0 %v7727
      %7848 = vmatprep.subr.mxu0 0.0
      %7849 = vmatpush1.msra.mxu0 %v7728
      %7850 = vmatprep.subr.mxu0 0.0
      %7851 = vmatpush1.msra.mxu0 %v7729
      %7852 = vmatprep.subr.mxu0 0.0
      %7853 = vmatpush1.msra.mxu0 %v7730
      %7854 = vmatprep.subr.mxu0 0.0
      %7855 = vmatpush1.msra.mxu0 %v7731
      %7856 = vmatprep.subr.mxu0 0.0
      %7857 = vmatpush1.msra.mxu0 %v7732
      %7858 = vmatprep.subr.mxu0 0.0
      %7859 = vmatpush1.msra.mxu0 %v7733
      %7860 = vmatprep.subr.mxu0 0.0
      %7861 = vmatpush1.msra.mxu0 %v7734
      %7862 = vmatprep.subr.mxu0 0.0
      %7863 = vmatpush1.msra.mxu0 %v7735
      %7864 = vmatprep.subr.mxu0 0.0
      %7865 = vmatpush1.msra.mxu0 %v7736
      %7866 = vmatprep.subr.mxu0 0.0
      %7867 = vmatpush1.msra.mxu0 %v7737
      %7868 = vmatprep.subr.mxu0 0.0
      %7869 = vmatpush1.msra.mxu0 %v7738
      %7870 = vmatprep.subr.mxu0 0.0
      %7871 = vmatpush1.msra.mxu0 %v7739
      %7872 = vmatprep.subr.mxu0 0.0
      %7873 = vmatpush1.msra.mxu0 %v7740
      %7874 = vmatprep.subr.mxu0 0.0
      %7875 = vmatpush1.msra.mxu0 %v7741
      %7876 = vmatprep.subr.mxu0 0.0
      %7877 = vmatpush1.msra.mxu0 0.0
      %7878 = vmatprep.subr.mxu0 0.0
      %7879 = vmatpush1.msra.mxu0 0.0
      %7880 = vmatprep.subr.mxu0 0.0
      %7881 = vmatpush1.msra.mxu0 0.0
      %7882 = vmatprep.subr.mxu0 0.0
      %7883 = vmatpush1.msra.mxu0 0.0
      %7884 = vmatprep.subr.mxu0 0.0
      %7885 = vmatpush1.msra.mxu0 0.0
      %7886 = vmatprep.subr.mxu0 0.0
      %7887 = vmatpush1.msra.mxu0 0.0
      %7888 = vmatprep.subr.mxu0 0.0
      %7889 = vmatpush1.msra.mxu0 0.0
      %7890 = vmatprep.subr.mxu0 0.0
      %7891 = vmatpush1.msra.mxu0 0.0
      %7892 = vmatprep.subr.mxu0 0.0
      %7893 = vmatpush1.msra.mxu0 0.0
      %7894 = vmatprep.subr.mxu0 0.0
      %7895 = vmatpush1.msra.mxu0 0.0
      %7896 = vmatprep.subr.mxu0 0.0
      %7897 = vmatpush1.msra.mxu0 0.0
      %7898 = vmatprep.subr.mxu0 0.0
      %7899 = vmatpush1.msra.mxu0 0.0
      %7900 = vmatprep.subr.mxu0 0.0
      %7901 = vmatpush1.msra.mxu0 0.0
      %7902 = vmatprep.subr.mxu0 0.0
      %7903 = vmatpush1.msra.mxu0 0.0
      %7904 = vmatprep.subr.mxu0 0.0
      %7905 = vmatpush1.msra.mxu0 0.0
      %7906 = vmatprep.subr.mxu0 0.0
      %7907 = vmatpush1.msra.mxu0 0.0
      %7908 = vmatprep.mubr.f32.mxu0 0.0
      %7909 = vmatmul.mubr.f32.gmra.mrb[0].mxu0 %v706
      %v7910 = vpop.f32.mrb[0].mxu0
      %v7911 = vadd.f32 0.0, %v7910
      %v7912 = vpop.f32.mrb[0].mxu0
      %7913 = vdwg.mxu0
      %7914 = vmatprep.subr.mxu0 0.0
      %7915 = vmatpush1.msra.mxu0 %v7742
      %7916 = vmatprep.subr.mxu0 0.0
      %7917 = vmatpush1.msra.mxu0 %v7743
      %7918 = vmatprep.subr.mxu0 0.0
      %7919 = vmatpush1.msra.mxu0 %v7744
      %7920 = vmatprep.subr.mxu0 0.0
      %7921 = vmatpush1.msra.mxu0 %v7745
      %7922 = vmatprep.subr.mxu0 0.0
      %7923 = vmatpush1.msra.mxu0 %v7746
      %7924 = vmatprep.subr.mxu0 0.0
      %7925 = vmatpush1.msra.mxu0 %v7747
      %7926 = vmatprep.subr.mxu0 0.0
      %7927 = vmatpush1.msra.mxu0 %v7748
      %7928 = vmatprep.subr.mxu0 0.0
      %7929 = vmatpush1.msra.mxu0 %v7749
      %7930 = vmatprep.subr.mxu0 0.0
      %7931 = vmatpush1.msra.mxu0 %v7750
      %7932 = vmatprep.subr.mxu0 0.0
      %7933 = vmatpush1.msra.mxu0 %v7751
      %7934 = vmatprep.subr.mxu0 0.0
      %7935 = vmatpush1.msra.mxu0 %v7752
      %7936 = vmatprep.subr.mxu0 0.0
      %7937 = vmatpush1.msra.mxu0 %v7753
      %7938 = vmatprep.subr.mxu0 0.0
      %7939 = vmatpush1.msra.mxu0 %v7754
      %7940 = vmatprep.subr.mxu0 0.0
      %7941 = vmatpush1.msra.mxu0 %v7755
      %7942 = vmatprep.subr.mxu0 0.0
      %7943 = vmatpush1.msra.mxu0 %v7756
      %7944 = vmatprep.subr.mxu0 0.0
      %7945 = vmatpush1.msra.mxu0 %v7757
      %7946 = vmatprep.subr.mxu0 0.0
      %7947 = vmatpush1.msra.mxu0 0.0
      %7948 = vmatprep.subr.mxu0 0.0
      %7949 = vmatpush1.msra.mxu0 0.0
      %7950 = vmatprep.subr.mxu0 0.0
      %7951 = vmatpush1.msra.mxu0 0.0
      %7952 = vmatprep.subr.mxu0 0.0
      %7953 = vmatpush1.msra.mxu0 0.0
      %7954 = vmatprep.subr.mxu0 0.0
      %7955 = vmatpush1.msra.mxu0 0.0
      %7956 = vmatprep.subr.mxu0 0.0
      %7957 = vmatpush1.msra.mxu0 0.0
      %7958 = vmatprep.subr.mxu0 0.0
      %7959 = vmatpush1.msra.mxu0 0.0
      %7960 = vmatprep.subr.mxu0 0.0
      %7961 = vmatpush1.msra.mxu0 0.0
      %7962 = vmatprep.subr.mxu0 0.0
      %7963 = vmatpush1.msra.mxu0 0.0
      %7964 = vmatprep.subr.mxu0 0.0
      %7965 = vmatpush1.msra.mxu0 0.0
      %7966 = vmatprep.subr.mxu0 0.0
      %7967 = vmatpush1.msra.mxu0 0.0
      %7968 = vmatprep.subr.mxu0 0.0
      %7969 = vmatpush1.msra.mxu0 0.0
      %7970 = vmatprep.subr.mxu0 0.0
      %7971 = vmatpush1.msra.mxu0 0.0
      %7972 = vmatprep.subr.mxu0 0.0
      %7973 = vmatpush1.msra.mxu0 0.0
      %7974 = vmatprep.subr.mxu0 0.0
      %7975 = vmatpush1.msra.mxu0 0.0
      %7976 = vmatprep.subr.mxu0 0.0
      %7977 = vmatpush1.msra.mxu0 0.0
      %7978 = vmatprep.mubr.f32.mxu0 0.0
      %7979 = vmatmul.mubr.f32.gmra.mrb[0].mxu0 %v706
      %v7980 = vpop.f32.mrb[0].mxu0
      %v7981 = vadd.f32 0.0, %v7980
      %v7982 = vpop.f32.mrb[0].mxu0
      %7983 = vdwg.mxu0
      %7984 = vmatprep.subr.mxu0 0.0
      %7985 = vmatpush1.msra.mxu0 %v7758
      %7986 = vmatprep.subr.mxu0 0.0
      %7987 = vmatpush1.msra.mxu0 %v7759
      %7988 = vmatprep.subr.mxu0 0.0
      %7989 = vmatpush1.msra.mxu0 %v7760
      %7990 = vmatprep.subr.mxu0 0.0
      %7991 = vmatpush1.msra.mxu0 %v7761
      %7992 = vmatprep.subr.mxu0 0.0
      %7993 = vmatpush1.msra.mxu0 %v7762
      %7994 = vmatprep.subr.mxu0 0.0
      %7995 = vmatpush1.msra.mxu0 %v7763
      %7996 = vmatprep.subr.mxu0 0.0
      %7997 = vmatpush1.msra.mxu0 %v7764
      %7998 = vmatprep.subr.mxu0 0.0
      %7999 = vmatpush1.msra.mxu0 %v7765
      %8000 = vmatprep.subr.mxu0 0.0
      %8001 = vmatpush1.msra.mxu0 %v7766
      %8002 = vmatprep.subr.mxu0 0.0
      %8003 = vmatpush1.msra.mxu0 %v7767
      %8004 = vmatprep.subr.mxu0 0.0
      %8005 = vmatpush1.msra.mxu0 %v7768
      %8006 = vmatprep.subr.mxu0 0.0
      %8007 = vmatpush1.msra.mxu0 %v7769
      %8008 = vmatprep.subr.mxu0 0.0
      %8009 = vmatpush1.msra.mxu0 %v7770
      %8010 = vmatprep.subr.mxu0 0.0
      %8011 = vmatpush1.msra.mxu0 %v7771
      %8012 = vmatprep.subr.mxu0 0.0
      %8013 = vmatpush1.msra.mxu0 %v7772
      %8014 = vmatprep.subr.mxu0 0.0
      %8015 = vmatpush1.msra.mxu0 %v7773
      %8016 = vmatprep.subr.mxu0 0.0
      %8017 = vmatpush1.msra.mxu0 0.0
      %8018 = vmatprep.subr.mxu0 0.0
      %8019 = vmatpush1.msra.mxu0 0.0
      %8020 = vmatprep.subr.mxu0 0.0
      %8021 = vmatpush1.msra.mxu0 0.0
      %8022 = vmatprep.subr.mxu0 0.0
      %8023 = vmatpush1.msra.mxu0 0.0
      %8024 = vmatprep.subr.mxu0 0.0
      %8025 = vmatpush1.msra.mxu0 0.0
      %8026 = vmatprep.subr.mxu0 0.0
      %8027 = vmatpush1.msra.mxu0 0.0
      %8028 = vmatprep.subr.mxu0 0.0
      %8029 = vmatpush1.msra.mxu0 0.0
      %8030 = vmatprep.subr.mxu0 0.0
      %8031 = vmatpush1.msra.mxu0 0.0
      %8032 = vmatprep.subr.mxu0 0.0
      %8033 = vmatpush1.msra.mxu0 0.0
      %8034 = vmatprep.subr.mxu0 0.0
      %8035 = vmatpush1.msra.mxu0 0.0
      %8036 = vmatprep.subr.mxu0 0.0
      %8037 = vmatpush1.msra.mxu0 0.0
      %8038 = vmatprep.subr.mxu0 0.0
      %8039 = vmatpush1.msra.mxu0 0.0
      %8040 = vmatprep.subr.mxu0 0.0
      %8041 = vmatpush1.msra.mxu0 0.0
      %8042 = vmatprep.subr.mxu0 0.0
      %8043 = vmatpush1.msra.mxu0 0.0
      %8044 = vmatprep.subr.mxu0 0.0
      %8045 = vmatpush1.msra.mxu0 0.0
      %8046 = vmatprep.subr.mxu0 0.0
      %8047 = vmatpush1.msra.mxu0 0.0
      %8048 = vmatprep.mubr.f32.mxu0 0.0
      %8049 = vmatmul.mubr.f32.gmra.mrb[0].mxu0 %v706
      %v8050 = vpop.f32.mrb[0].mxu0
      %v8051 = vadd.f32 0.0, %v8050
      %v8052 = vpop.f32.mrb[0].mxu0
      %8053 = vdwg.mxu0
      %s8054 = scalar_lea.vmem %s11, 128
      %v8055 = vld [vmem:[%s8054] sm:$0xff]
      %v8056 = vld [vmem:[%s8054 + $0x8] sm:$0xff]
      %v8057 = vld [vmem:[%s8054 + $0x10] sm:$0xff]
      %v8058 = vld [vmem:[%s8054 + $0x18] sm:$0xff]
      %v8059 = vld [vmem:[%s8054 + $0x20] sm:$0xff]
      %v8060 = vld [vmem:[%s8054 + $0x28] sm:$0xff]
      %v8061 = vld [vmem:[%s8054 + $0x30] sm:$0xff]
      %v8062 = vld [vmem:[%s8054 + $0x38] sm:$0xff]
      %v8063 = vld [vmem:[%s8054 + $0x40] sm:$0xff]
      %v8064 = vld [vmem:[%s8054 + $0x48] sm:$0xff]
      %v8065 = vld [vmem:[%s8054 + $0x50] sm:$0xff]
      %v8066 = vld [vmem:[%s8054 + $0x58] sm:$0xff]
      %v8067 = vld [vmem:[%s8054 + $0x60] sm:$0xff]
      %v8068 = vld [vmem:[%s8054 + $0x68] sm:$0xff]
      %v8069 = vld [vmem:[%s8054 + $0x70] sm:$0xff]
      %v8070 = vld [vmem:[%s8054 + $0x78] sm:$0xff]
      %v8072 = vsel %vm1755, %v7151, 0
      %v8075 = vsel %vm1755, %v7496, 0
      %8077 = vmatprep.subr.mxu0 0.0
      %8078 = vmatpush1.xpose.msra.mxu0 %v8075
      %8079 = vmatprep.subr.mxu0 0.0
      %8080 = vmatpush1.xpose.msra.mxu0 0.0
      %8081 = vmatprep.subr.mxu0 0.0
      %8082 = vmatpush1.xpose.msra.mxu0 0.0
      %8083 = vmatprep.subr.mxu0 0.0
      %8084 = vmatpush1.xpose.msra.mxu0 0.0
      %8085 = vmatprep.subr.mxu0 0.0
      %8086 = vmatpush1.xpose.msra.mxu0 0.0
      %8087 = vmatprep.subr.mxu0 0.0
      %8088 = vmatpush1.xpose.msra.mxu0 0.0
      %8089 = vmatprep.subr.mxu0 0.0
      %8090 = vmatpush1.xpose.msra.mxu0 0.0
      %8091 = vmatprep.subr.mxu0 0.0
      %8092 = vmatpush1.xpose.msra.mxu0 0.0
      %8093 = vmatprep.subr.mxu0 0.0
      %8094 = vmatpush1.xpose.msra.mxu0 0.0
      %8095 = vmatprep.subr.mxu0 0.0
      %8096 = vmatpush1.xpose.msra.mxu0 0.0
      %8097 = vmatprep.subr.mxu0 0.0
      %8098 = vmatpush1.xpose.msra.mxu0 0.0
      %8099 = vmatprep.subr.mxu0 0.0
      %8100 = vmatpush1.xpose.msra.mxu0 0.0
      %8101 = vmatprep.subr.mxu0 0.0
      %8102 = vmatpush1.xpose.msra.mxu0 0.0
      %8103 = vmatprep.subr.mxu0 0.0
      %8104 = vmatpush1.xpose.msra.mxu0 0.0
      %8105 = vmatprep.subr.mxu0 0.0
      %8106 = vmatpush1.xpose.msra.mxu0 0.0
      %8107 = vmatprep.subr.mxu0 0.0
      %8108 = vmatpush1.xpose.msra.mxu0 0.0
      %8109 = vmatprep.subr.mxu0 0.0
      %8110 = vmatpush1.xpose.msra.mxu0 0.0
      %8111 = vmatprep.subr.mxu0 0.0
      %8112 = vmatpush1.xpose.msra.mxu0 0.0
      %8113 = vmatprep.subr.mxu0 0.0
      %8114 = vmatpush1.xpose.msra.mxu0 0.0
      %8115 = vmatprep.subr.mxu0 0.0
      %8116 = vmatpush1.xpose.msra.mxu0 0.0
      %8117 = vmatprep.subr.mxu0 0.0
      %8118 = vmatpush1.xpose.msra.mxu0 0.0
      %8119 = vmatprep.subr.mxu0 0.0
      %8120 = vmatpush1.xpose.msra.mxu0 0.0
      %8121 = vmatprep.subr.mxu0 0.0
      %8122 = vmatpush1.xpose.msra.mxu0 0.0
      %8123 = vmatprep.subr.mxu0 0.0
      %8124 = vmatpush1.xpose.msra.mxu0 0.0
      %8125 = vmatprep.subr.mxu0 0.0
      %8126 = vmatpush1.xpose.msra.mxu0 0.0
      %8127 = vmatprep.subr.mxu0 0.0
      %8128 = vmatpush1.xpose.msra.mxu0 0.0
      %8129 = vmatprep.subr.mxu0 0.0
      %8130 = vmatpush1.xpose.msra.mxu0 0.0
      %8131 = vmatprep.subr.mxu0 0.0
      %8132 = vmatpush1.xpose.msra.mxu0 0.0
      %8133 = vmatprep.subr.mxu0 0.0
      %8134 = vmatpush1.xpose.msra.mxu0 0.0
      %8135 = vmatprep.subr.mxu0 0.0
      %8136 = vmatpush1.xpose.msra.mxu0 0.0
      %8137 = vmatprep.subr.mxu0 0.0
      %8138 = vmatpush1.xpose.msra.mxu0 0.0
      %8139 = vmatprep.subr.mxu0 0.0
      %8140 = vmatpush1.xpose.msra.mxu0 0.0
      %8141 = vmatprep.mubr.f32.mxu0 0.0
      %8142 = vmatmul.mubr.f32.gmra.mrb[0].mxu0 %v8072
      %v8143 = vpop.f32.mrb[0].mxu0
      %v8144 = vadd.f32 0.0, %v8143
      %v8145 = vpop.f32.mrb[0].mxu0
      %8146 = vdwg.mxu0
      %v8148 = vsel %vm1755, %v7221, 0
      %v8151 = vsel %vm1755, %v7566, 0
      %8153 = vmatprep.subr.mxu0 0.0
      %8154 = vmatpush1.xpose.msra.mxu0 %v8151
      %8155 = vmatprep.subr.mxu0 0.0
      %8156 = vmatpush1.xpose.msra.mxu0 0.0
      %8157 = vmatprep.subr.mxu0 0.0
      %8158 = vmatpush1.xpose.msra.mxu0 0.0
      %8159 = vmatprep.subr.mxu0 0.0
      %8160 = vmatpush1.xpose.msra.mxu0 0.0
      %8161 = vmatprep.subr.mxu0 0.0
      %8162 = vmatpush1.xpose.msra.mxu0 0.0
      %8163 = vmatprep.subr.mxu0 0.0
      %8164 = vmatpush1.xpose.msra.mxu0 0.0
      %8165 = vmatprep.subr.mxu0 0.0
      %8166 = vmatpush1.xpose.msra.mxu0 0.0
      %8167 = vmatprep.subr.mxu0 0.0
      %8168 = vmatpush1.xpose.msra.mxu0 0.0
      %8169 = vmatprep.subr.mxu0 0.0
      %8170 = vmatpush1.xpose.msra.mxu0 0.0
      %8171 = vmatprep.subr.mxu0 0.0
      %8172 = vmatpush1.xpose.msra.mxu0 0.0
      %8173 = vmatprep.subr.mxu0 0.0
      %8174 = vmatpush1.xpose.msra.mxu0 0.0
      %8175 = vmatprep.subr.mxu0 0.0
      %8176 = vmatpush1.xpose.msra.mxu0 0.0
      %8177 = vmatprep.subr.mxu0 0.0
      %8178 = vmatpush1.xpose.msra.mxu0 0.0
      %8179 = vmatprep.subr.mxu0 0.0
      %8180 = vmatpush1.xpose.msra.mxu0 0.0
      %8181 = vmatprep.subr.mxu0 0.0
      %8182 = vmatpush1.xpose.msra.mxu0 0.0
      %8183 = vmatprep.subr.mxu0 0.0
      %8184 = vmatpush1.xpose.msra.mxu0 0.0
      %8185 = vmatprep.subr.mxu0 0.0
      %8186 = vmatpush1.xpose.msra.mxu0 0.0
      %8187 = vmatprep.subr.mxu0 0.0
      %8188 = vmatpush1.xpose.msra.mxu0 0.0
      %8189 = vmatprep.subr.mxu0 0.0
      %8190 = vmatpush1.xpose.msra.mxu0 0.0
      %8191 = vmatprep.subr.mxu0 0.0
      %8192 = vmatpush1.xpose.msra.mxu0 0.0
      %8193 = vmatprep.subr.mxu0 0.0
      %8194 = vmatpush1.xpose.msra.mxu0 0.0
      %8195 = vmatprep.subr.mxu0 0.0
      %8196 = vmatpush1.xpose.msra.mxu0 0.0
      %8197 = vmatprep.subr.mxu0 0.0
      %8198 = vmatpush1.xpose.msra.mxu0 0.0
      %8199 = vmatprep.subr.mxu0 0.0
      %8200 = vmatpush1.xpose.msra.mxu0 0.0
      %8201 = vmatprep.subr.mxu0 0.0
      %8202 = vmatpush1.xpose.msra.mxu0 0.0
      %8203 = vmatprep.subr.mxu0 0.0
      %8204 = vmatpush1.xpose.msra.mxu0 0.0
      %8205 = vmatprep.subr.mxu0 0.0
      %8206 = vmatpush1.xpose.msra.mxu0 0.0
      %8207 = vmatprep.subr.mxu0 0.0
      %8208 = vmatpush1.xpose.msra.mxu0 0.0
      %8209 = vmatprep.subr.mxu0 0.0
      %8210 = vmatpush1.xpose.msra.mxu0 0.0
      %8211 = vmatprep.subr.mxu0 0.0
      %8212 = vmatpush1.xpose.msra.mxu0 0.0
      %8213 = vmatprep.subr.mxu0 0.0
      %8214 = vmatpush1.xpose.msra.mxu0 0.0
      %8215 = vmatprep.subr.mxu0 0.0
      %8216 = vmatpush1.xpose.msra.mxu0 0.0
      %8217 = vmatprep.mubr.f32.mxu0 0.0
      %8218 = vmatmul.mubr.f32.gmra.mrb[0].mxu0 %v8148
      %v8219 = vpop.f32.mrb[0].mxu0
      %v8220 = vadd.f32 0.0, %v8219
      %v8221 = vpop.f32.mrb[0].mxu0
      %8222 = vdwg.mxu0
      %v8224 = vsel %vm1755, %v7291, 0
      %v8227 = vsel %vm1755, %v7636, 0
      %8229 = vmatprep.subr.mxu0 0.0
      %8230 = vmatpush1.xpose.msra.mxu0 %v8227
      %8231 = vmatprep.subr.mxu0 0.0
      %8232 = vmatpush1.xpose.msra.mxu0 0.0
      %8233 = vmatprep.subr.mxu0 0.0
      %8234 = vmatpush1.xpose.msra.mxu0 0.0
      %8235 = vmatprep.subr.mxu0 0.0
      %8236 = vmatpush1.xpose.msra.mxu0 0.0
      %8237 = vmatprep.subr.mxu0 0.0
      %8238 = vmatpush1.xpose.msra.mxu0 0.0
      %8239 = vmatprep.subr.mxu0 0.0
      %8240 = vmatpush1.xpose.msra.mxu0 0.0
      %8241 = vmatprep.subr.mxu0 0.0
      %8242 = vmatpush1.xpose.msra.mxu0 0.0
      %8243 = vmatprep.subr.mxu0 0.0
      %8244 = vmatpush1.xpose.msra.mxu0 0.0
      %8245 = vmatprep.subr.mxu0 0.0
      %8246 = vmatpush1.xpose.msra.mxu0 0.0
      %8247 = vmatprep.subr.mxu0 0.0
      %8248 = vmatpush1.xpose.msra.mxu0 0.0
      %8249 = vmatprep.subr.mxu0 0.0
      %8250 = vmatpush1.xpose.msra.mxu0 0.0
      %8251 = vmatprep.subr.mxu0 0.0
      %8252 = vmatpush1.xpose.msra.mxu0 0.0
      %8253 = vmatprep.subr.mxu0 0.0
      %8254 = vmatpush1.xpose.msra.mxu0 0.0
      %8255 = vmatprep.subr.mxu0 0.0
      %8256 = vmatpush1.xpose.msra.mxu0 0.0
      %8257 = vmatprep.subr.mxu0 0.0
      %8258 = vmatpush1.xpose.msra.mxu0 0.0
      %8259 = vmatprep.subr.mxu0 0.0
      %8260 = vmatpush1.xpose.msra.mxu0 0.0
      %8261 = vmatprep.subr.mxu0 0.0
      %8262 = vmatpush1.xpose.msra.mxu0 0.0
      %8263 = vmatprep.subr.mxu0 0.0
      %8264 = vmatpush1.xpose.msra.mxu0 0.0
      %8265 = vmatprep.subr.mxu0 0.0
      %8266 = vmatpush1.xpose.msra.mxu0 0.0
      %8267 = vmatprep.subr.mxu0 0.0
      %8268 = vmatpush1.xpose.msra.mxu0 0.0
      %8269 = vmatprep.subr.mxu0 0.0
      %8270 = vmatpush1.xpose.msra.mxu0 0.0
      %8271 = vmatprep.subr.mxu0 0.0
      %8272 = vmatpush1.xpose.msra.mxu0 0.0
      %8273 = vmatprep.subr.mxu0 0.0
      %8274 = vmatpush1.xpose.msra.mxu0 0.0
      %8275 = vmatprep.subr.mxu0 0.0
      %8276 = vmatpush1.xpose.msra.mxu0 0.0
      %8277 = vmatprep.subr.mxu0 0.0
      %8278 = vmatpush1.xpose.msra.mxu0 0.0
      %8279 = vmatprep.subr.mxu0 0.0
      %8280 = vmatpush1.xpose.msra.mxu0 0.0
      %8281 = vmatprep.subr.mxu0 0.0
      %8282 = vmatpush1.xpose.msra.mxu0 0.0
      %8283 = vmatprep.subr.mxu0 0.0
      %8284 = vmatpush1.xpose.msra.mxu0 0.0
      %8285 = vmatprep.subr.mxu0 0.0
      %8286 = vmatpush1.xpose.msra.mxu0 0.0
      %8287 = vmatprep.subr.mxu0 0.0
      %8288 = vmatpush1.xpose.msra.mxu0 0.0
      %8289 = vmatprep.subr.mxu0 0.0
      %8290 = vmatpush1.xpose.msra.mxu0 0.0
      %8291 = vmatprep.subr.mxu0 0.0
      %8292 = vmatpush1.xpose.msra.mxu0 0.0
      %8293 = vmatprep.mubr.f32.mxu0 0.0
      %8294 = vmatmul.mubr.f32.gmra.mrb[0].mxu0 %v8224
      %v8295 = vpop.f32.mrb[0].mxu0
      %v8296 = vadd.f32 0.0, %v8295
      %v8297 = vpop.f32.mrb[0].mxu0
      %8298 = vdwg.mxu0
      %v8300 = vsel %vm1755, %v7361, 0
      %v8303 = vsel %vm1755, %v7706, 0
      %8305 = vmatprep.subr.mxu0 0.0
      %8306 = vmatpush1.xpose.msra.mxu0 %v8303
      %8307 = vmatprep.subr.mxu0 0.0
      %8308 = vmatpush1.xpose.msra.mxu0 0.0
      %8309 = vmatprep.subr.mxu0 0.0
      %8310 = vmatpush1.xpose.msra.mxu0 0.0
      %8311 = vmatprep.subr.mxu0 0.0
      %8312 = vmatpush1.xpose.msra.mxu0 0.0
      %8313 = vmatprep.subr.mxu0 0.0
      %8314 = vmatpush1.xpose.msra.mxu0 0.0
      %8315 = vmatprep.subr.mxu0 0.0
      %8316 = vmatpush1.xpose.msra.mxu0 0.0
      %8317 = vmatprep.subr.mxu0 0.0
      %8318 = vmatpush1.xpose.msra.mxu0 0.0
      %8319 = vmatprep.subr.mxu0 0.0
      %8320 = vmatpush1.xpose.msra.mxu0 0.0
      %8321 = vmatprep.subr.mxu0 0.0
      %8322 = vmatpush1.xpose.msra.mxu0 0.0
      %8323 = vmatprep.subr.mxu0 0.0
      %8324 = vmatpush1.xpose.msra.mxu0 0.0
      %8325 = vmatprep.subr.mxu0 0.0
      %8326 = vmatpush1.xpose.msra.mxu0 0.0
      %8327 = vmatprep.subr.mxu0 0.0
      %8328 = vmatpush1.xpose.msra.mxu0 0.0
      %8329 = vmatprep.subr.mxu0 0.0
      %8330 = vmatpush1.xpose.msra.mxu0 0.0
      %8331 = vmatprep.subr.mxu0 0.0
      %8332 = vmatpush1.xpose.msra.mxu0 0.0
      %8333 = vmatprep.subr.mxu0 0.0
      %8334 = vmatpush1.xpose.msra.mxu0 0.0
      %8335 = vmatprep.subr.mxu0 0.0
      %8336 = vmatpush1.xpose.msra.mxu0 0.0
      %8337 = vmatprep.subr.mxu0 0.0
      %8338 = vmatpush1.xpose.msra.mxu0 0.0
      %8339 = vmatprep.subr.mxu0 0.0
      %8340 = vmatpush1.xpose.msra.mxu0 0.0
      %8341 = vmatprep.subr.mxu0 0.0
      %8342 = vmatpush1.xpose.msra.mxu0 0.0
      %8343 = vmatprep.subr.mxu0 0.0
      %8344 = vmatpush1.xpose.msra.mxu0 0.0
      %8345 = vmatprep.subr.mxu0 0.0
      %8346 = vmatpush1.xpose.msra.mxu0 0.0
      %8347 = vmatprep.subr.mxu0 0.0
      %8348 = vmatpush1.xpose.msra.mxu0 0.0
      %8349 = vmatprep.subr.mxu0 0.0
      %8350 = vmatpush1.xpose.msra.mxu0 0.0
      %8351 = vmatprep.subr.mxu0 0.0
      %8352 = vmatpush1.xpose.msra.mxu0 0.0
      %8353 = vmatprep.subr.mxu0 0.0
      %8354 = vmatpush1.xpose.msra.mxu0 0.0
      %8355 = vmatprep.subr.mxu0 0.0
      %8356 = vmatpush1.xpose.msra.mxu0 0.0
      %8357 = vmatprep.subr.mxu0 0.0
      %8358 = vmatpush1.xpose.msra.mxu0 0.0
      %8359 = vmatprep.subr.mxu0 0.0
      %8360 = vmatpush1.xpose.msra.mxu0 0.0
      %8361 = vmatprep.subr.mxu0 0.0
      %8362 = vmatpush1.xpose.msra.mxu0 0.0
      %8363 = vmatprep.subr.mxu0 0.0
      %8364 = vmatpush1.xpose.msra.mxu0 0.0
      %8365 = vmatprep.subr.mxu0 0.0
      %8366 = vmatpush1.xpose.msra.mxu0 0.0
      %8367 = vmatprep.subr.mxu0 0.0
      %8368 = vmatpush1.xpose.msra.mxu0 0.0
      %8369 = vmatprep.mubr.f32.mxu0 0.0
      %8370 = vmatmul.mubr.f32.gmra.mrb[0].mxu0 %v8300
      %v8371 = vpop.f32.mrb[0].mxu0
      %v8372 = vadd.f32 0.0, %v8371
      %v8373 = vpop.f32.mrb[0].mxu0
      %8374 = vdwg.mxu0
      %v8375 = vmul.f32 %v8144, 0.17677669
      %v8376 = vmul.f32 %v8220, 0.17677669
      %v8377 = vmul.f32 %v8296, 0.17677669
      %v8378 = vmul.f32 %v8372, 0.17677669
      %v8379 = vsel %vm2068, %v8375, -inf
      %8380 = vmax.xlane.f32.xlu0 %v8379
      %v8381 = vpop.xlane.xlu0 %8380
      %v8382 = vsel %vm2068, %v8376, -inf
      %8383 = vmax.xlane.f32.xlu0 %v8382
      %v8384 = vpop.xlane.xlu0 %8383
      %v8385 = vsel %vm2068, %v8377, -inf
      %8386 = vmax.xlane.f32.xlu0 %v8385
      %v8387 = vpop.xlane.xlu0 %8386
      %v8388 = vsel %vm2068, %v8378, -inf
      %8389 = vmax.xlane.f32.xlu0 %v8388
      %v8390 = vpop.xlane.xlu0 %8389
      %v8391 = vsub.f32 %v8375, %v8381
      %v8392 = vsub.f32 %v8376, %v8384
      %v8393 = vsub.f32 %v8377, %v8387
      %v8394 = vsub.f32 %v8378, %v8390
      %v8395 = vmul.f32 %v8391, 1.442695
      %v8396 = vpow.pop %v8395
      %v8397 = vmul.f32 %v8392, 1.442695
      %v8398 = vpow.pop %v8397
      %v8399 = vmul.f32 %v8393, 1.442695
      %v8400 = vpow.pop %v8399
      %v8401 = vmul.f32 %v8394, 1.442695
      %v8402 = vpow.pop %v8401
      %v8403 = vsel %vm2068, %v8396, 0.0
      %8404 = vadd.xlane.f32.xlu0 %v8403
      %v8405 = vpop.xlane.xlu0 %8404
      %v8406 = vsel %vm2068, %v8398, 0.0
      %8407 = vadd.xlane.f32.xlu0 %v8406
      %v8408 = vpop.xlane.xlu0 %8407
      %v8409 = vsel %vm2068, %v8400, 0.0
      %8410 = vadd.xlane.f32.xlu0 %v8409
      %v8411 = vpop.xlane.xlu0 %8410
      %v8412 = vsel %vm2068, %v8402, 0.0
      %8413 = vadd.xlane.f32.xlu0 %v8412
      %v8414 = vpop.xlane.xlu0 %8413
      %v8415 = vrcp.pop %v8405
      %v8416 = vmul.f32 %v8396, %v8415
      %v8417 = vrcp.pop %v8408
      %v8418 = vmul.f32 %v8398, %v8417
      %v8419 = vrcp.pop %v8411
      %v8420 = vmul.f32 %v8400, %v8419
      %v8421 = vrcp.pop %v8414
      %v8422 = vmul.f32 %v8402, %v8421
      %v8424 = vsel %vm2068, %v8416, 0
      %8426 = vmatprep.subr.mxu0 0.0
      %8427 = vmatpush1.msra.mxu0 %v7841
      %8428 = vmatprep.subr.mxu0 0.0
      %8429 = vmatpush1.msra.mxu0 0.0
      %8430 = vmatprep.subr.mxu0 0.0
      %8431 = vmatpush1.msra.mxu0 0.0
      %8432 = vmatprep.subr.mxu0 0.0
      %8433 = vmatpush1.msra.mxu0 0.0
      %8434 = vmatprep.subr.mxu0 0.0
      %8435 = vmatpush1.msra.mxu0 0.0
      %8436 = vmatprep.subr.mxu0 0.0
      %8437 = vmatpush1.msra.mxu0 0.0
      %8438 = vmatprep.subr.mxu0 0.0
      %8439 = vmatpush1.msra.mxu0 0.0
      %8440 = vmatprep.subr.mxu0 0.0
      %8441 = vmatpush1.msra.mxu0 0.0
      %8442 = vmatprep.subr.mxu0 0.0
      %8443 = vmatpush1.msra.mxu0 0.0
      %8444 = vmatprep.subr.mxu0 0.0
      %8445 = vmatpush1.msra.mxu0 0.0
      %8446 = vmatprep.subr.mxu0 0.0
      %8447 = vmatpush1.msra.mxu0 0.0
      %8448 = vmatprep.subr.mxu0 0.0
      %8449 = vmatpush1.msra.mxu0 0.0
      %8450 = vmatprep.subr.mxu0 0.0
      %8451 = vmatpush1.msra.mxu0 0.0
      %8452 = vmatprep.subr.mxu0 0.0
      %8453 = vmatpush1.msra.mxu0 0.0
      %8454 = vmatprep.subr.mxu0 0.0
      %8455 = vmatpush1.msra.mxu0 0.0
      %8456 = vmatprep.subr.mxu0 0.0
      %8457 = vmatpush1.msra.mxu0 0.0
      %8458 = vmatprep.subr.mxu0 0.0
      %8459 = vmatpush1.msra.mxu0 0.0
      %8460 = vmatprep.subr.mxu0 0.0
      %8461 = vmatpush1.msra.mxu0 0.0
      %8462 = vmatprep.subr.mxu0 0.0
      %8463 = vmatpush1.msra.mxu0 0.0
      %8464 = vmatprep.subr.mxu0 0.0
      %8465 = vmatpush1.msra.mxu0 0.0
      %8466 = vmatprep.subr.mxu0 0.0
      %8467 = vmatpush1.msra.mxu0 0.0
      %8468 = vmatprep.subr.mxu0 0.0
      %8469 = vmatpush1.msra.mxu0 0.0
      %8470 = vmatprep.subr.mxu0 0.0
      %8471 = vmatpush1.msra.mxu0 0.0
      %8472 = vmatprep.subr.mxu0 0.0
      %8473 = vmatpush1.msra.mxu0 0.0
      %8474 = vmatprep.subr.mxu0 0.0
      %8475 = vmatpush1.msra.mxu0 0.0
      %8476 = vmatprep.subr.mxu0 0.0
      %8477 = vmatpush1.msra.mxu0 0.0
      %8478 = vmatprep.subr.mxu0 0.0
      %8479 = vmatpush1.msra.mxu0 0.0
      %8480 = vmatprep.subr.mxu0 0.0
      %8481 = vmatpush1.msra.mxu0 0.0
      %8482 = vmatprep.subr.mxu0 0.0
      %8483 = vmatpush1.msra.mxu0 0.0
      %8484 = vmatprep.subr.mxu0 0.0
      %8485 = vmatpush1.msra.mxu0 0.0
      %8486 = vmatprep.subr.mxu0 0.0
      %8487 = vmatpush1.msra.mxu0 0.0
      %8488 = vmatprep.subr.mxu0 0.0
      %8489 = vmatpush1.msra.mxu0 0.0
      %8490 = vmatprep.mubr.f32.mxu0 0.0
      %8491 = vmatmul.mubr.f32.gmra.mrb[0].mxu0 %v8424
      %v8492 = vpop.f32.mrb[0].mxu0
      %v8493 = vadd.f32 0.0, %v8492
      %v8494 = vpop.f32.mrb[0].mxu0
      %8495 = vdwg.mxu0
      %v8497 = vsel %vm2068, %v8418, 0
      %8499 = vmatprep.subr.mxu0 0.0
      %8500 = vmatpush1.msra.mxu0 %v7911
      %8501 = vmatprep.subr.mxu0 0.0
      %8502 = vmatpush1.msra.mxu0 0.0
      %8503 = vmatprep.subr.mxu0 0.0
      %8504 = vmatpush1.msra.mxu0 0.0
      %8505 = vmatprep.subr.mxu0 0.0
      %8506 = vmatpush1.msra.mxu0 0.0
      %8507 = vmatprep.subr.mxu0 0.0
      %8508 = vmatpush1.msra.mxu0 0.0
      %8509 = vmatprep.subr.mxu0 0.0
      %8510 = vmatpush1.msra.mxu0 0.0
      %8511 = vmatprep.subr.mxu0 0.0
      %8512 = vmatpush1.msra.mxu0 0.0
      %8513 = vmatprep.subr.mxu0 0.0
      %8514 = vmatpush1.msra.mxu0 0.0
      %8515 = vmatprep.subr.mxu0 0.0
      %8516 = vmatpush1.msra.mxu0 0.0
      %8517 = vmatprep.subr.mxu0 0.0
      %8518 = vmatpush1.msra.mxu0 0.0
      %8519 = vmatprep.subr.mxu0 0.0
      %8520 = vmatpush1.msra.mxu0 0.0
      %8521 = vmatprep.subr.mxu0 0.0
      %8522 = vmatpush1.msra.mxu0 0.0
      %8523 = vmatprep.subr.mxu0 0.0
      %8524 = vmatpush1.msra.mxu0 0.0
      %8525 = vmatprep.subr.mxu0 0.0
      %8526 = vmatpush1.msra.mxu0 0.0
      %8527 = vmatprep.subr.mxu0 0.0
      %8528 = vmatpush1.msra.mxu0 0.0
      %8529 = vmatprep.subr.mxu0 0.0
      %8530 = vmatpush1.msra.mxu0 0.0
      %8531 = vmatprep.subr.mxu0 0.0
      %8532 = vmatpush1.msra.mxu0 0.0
      %8533 = vmatprep.subr.mxu0 0.0
      %8534 = vmatpush1.msra.mxu0 0.0
      %8535 = vmatprep.subr.mxu0 0.0
      %8536 = vmatpush1.msra.mxu0 0.0
      %8537 = vmatprep.subr.mxu0 0.0
      %8538 = vmatpush1.msra.mxu0 0.0
      %8539 = vmatprep.subr.mxu0 0.0
      %8540 = vmatpush1.msra.mxu0 0.0
      %8541 = vmatprep.subr.mxu0 0.0
      %8542 = vmatpush1.msra.mxu0 0.0
      %8543 = vmatprep.subr.mxu0 0.0
      %8544 = vmatpush1.msra.mxu0 0.0
      %8545 = vmatprep.subr.mxu0 0.0
      %8546 = vmatpush1.msra.mxu0 0.0
      %8547 = vmatprep.subr.mxu0 0.0
      %8548 = vmatpush1.msra.mxu0 0.0
      %8549 = vmatprep.subr.mxu0 0.0
      %8550 = vmatpush1.msra.mxu0 0.0
      %8551 = vmatprep.subr.mxu0 0.0
      %8552 = vmatpush1.msra.mxu0 0.0
      %8553 = vmatprep.subr.mxu0 0.0
      %8554 = vmatpush1.msra.mxu0 0.0
      %8555 = vmatprep.subr.mxu0 0.0
      %8556 = vmatpush1.msra.mxu0 0.0
      %8557 = vmatprep.subr.mxu0 0.0
      %8558 = vmatpush1.msra.mxu0 0.0
      %8559 = vmatprep.subr.mxu0 0.0
      %8560 = vmatpush1.msra.mxu0 0.0
      %8561 = vmatprep.subr.mxu0 0.0
      %8562 = vmatpush1.msra.mxu0 0.0
      %8563 = vmatprep.mubr.f32.mxu0 0.0
      %8564 = vmatmul.mubr.f32.gmra.mrb[0].mxu0 %v8497
      %v8565 = vpop.f32.mrb[0].mxu0
      %v8566 = vadd.f32 0.0, %v8565
      %v8567 = vpop.f32.mrb[0].mxu0
      %8568 = vdwg.mxu0
      %v8570 = vsel %vm2068, %v8420, 0
      %8572 = vmatprep.subr.mxu0 0.0
      %8573 = vmatpush1.msra.mxu0 %v7981
      %8574 = vmatprep.subr.mxu0 0.0
      %8575 = vmatpush1.msra.mxu0 0.0
      %8576 = vmatprep.subr.mxu0 0.0
      %8577 = vmatpush1.msra.mxu0 0.0
      %8578 = vmatprep.subr.mxu0 0.0
      %8579 = vmatpush1.msra.mxu0 0.0
      %8580 = vmatprep.subr.mxu0 0.0
      %8581 = vmatpush1.msra.mxu0 0.0
      %8582 = vmatprep.subr.mxu0 0.0
      %8583 = vmatpush1.msra.mxu0 0.0
      %8584 = vmatprep.subr.mxu0 0.0
      %8585 = vmatpush1.msra.mxu0 0.0
      %8586 = vmatprep.subr.mxu0 0.0
      %8587 = vmatpush1.msra.mxu0 0.0
      %8588 = vmatprep.subr.mxu0 0.0
      %8589 = vmatpush1.msra.mxu0 0.0
      %8590 = vmatprep.subr.mxu0 0.0
      %8591 = vmatpush1.msra.mxu0 0.0
      %8592 = vmatprep.subr.mxu0 0.0
      %8593 = vmatpush1.msra.mxu0 0.0
      %8594 = vmatprep.subr.mxu0 0.0
      %8595 = vmatpush1.msra.mxu0 0.0
      %8596 = vmatprep.subr.mxu0 0.0
      %8597 = vmatpush1.msra.mxu0 0.0
      %8598 = vmatprep.subr.mxu0 0.0
      %8599 = vmatpush1.msra.mxu0 0.0
      %8600 = vmatprep.subr.mxu0 0.0
      %8601 = vmatpush1.msra.mxu0 0.0
      %8602 = vmatprep.subr.mxu0 0.0
      %8603 = vmatpush1.msra.mxu0 0.0
      %8604 = vmatprep.subr.mxu0 0.0
      %8605 = vmatpush1.msra.mxu0 0.0
      %8606 = vmatprep.subr.mxu0 0.0
      %8607 = vmatpush1.msra.mxu0 0.0
      %8608 = vmatprep.subr.mxu0 0.0
      %8609 = vmatpush1.msra.mxu0 0.0
      %8610 = vmatprep.subr.mxu0 0.0
      %8611 = vmatpush1.msra.mxu0 0.0
      %8612 = vmatprep.subr.mxu0 0.0
      %8613 = vmatpush1.msra.mxu0 0.0
      %8614 = vmatprep.subr.mxu0 0.0
      %8615 = vmatpush1.msra.mxu0 0.0
      %8616 = vmatprep.subr.mxu0 0.0
      %8617 = vmatpush1.msra.mxu0 0.0
      %8618 = vmatprep.subr.mxu0 0.0
      %8619 = vmatpush1.msra.mxu0 0.0
      %8620 = vmatprep.subr.mxu0 0.0
      %8621 = vmatpush1.msra.mxu0 0.0
      %8622 = vmatprep.subr.mxu0 0.0
      %8623 = vmatpush1.msra.mxu0 0.0
      %8624 = vmatprep.subr.mxu0 0.0
      %8625 = vmatpush1.msra.mxu0 0.0
      %8626 = vmatprep.subr.mxu0 0.0
      %8627 = vmatpush1.msra.mxu0 0.0
      %8628 = vmatprep.subr.mxu0 0.0
      %8629 = vmatpush1.msra.mxu0 0.0
      %8630 = vmatprep.subr.mxu0 0.0
      %8631 = vmatpush1.msra.mxu0 0.0
      %8632 = vmatprep.subr.mxu0 0.0
      %8633 = vmatpush1.msra.mxu0 0.0
      %8634 = vmatprep.subr.mxu0 0.0
      %8635 = vmatpush1.msra.mxu0 0.0
      %8636 = vmatprep.mubr.f32.mxu0 0.0
      %8637 = vmatmul.mubr.f32.gmra.mrb[0].mxu0 %v8570
      %v8638 = vpop.f32.mrb[0].mxu0
      %v8639 = vadd.f32 0.0, %v8638
      %v8640 = vpop.f32.mrb[0].mxu0
      %8641 = vdwg.mxu0
      %v8643 = vsel %vm2068, %v8422, 0
      %8645 = vmatprep.subr.mxu0 0.0
      %8646 = vmatpush1.msra.mxu0 %v8051
      %8647 = vmatprep.subr.mxu0 0.0
      %8648 = vmatpush1.msra.mxu0 0.0
      %8649 = vmatprep.subr.mxu0 0.0
      %8650 = vmatpush1.msra.mxu0 0.0
      %8651 = vmatprep.subr.mxu0 0.0
      %8652 = vmatpush1.msra.mxu0 0.0
      %8653 = vmatprep.subr.mxu0 0.0
      %8654 = vmatpush1.msra.mxu0 0.0
      %8655 = vmatprep.subr.mxu0 0.0
      %8656 = vmatpush1.msra.mxu0 0.0
      %8657 = vmatprep.subr.mxu0 0.0
      %8658 = vmatpush1.msra.mxu0 0.0
      %8659 = vmatprep.subr.mxu0 0.0
      %8660 = vmatpush1.msra.mxu0 0.0
      %8661 = vmatprep.subr.mxu0 0.0
      %8662 = vmatpush1.msra.mxu0 0.0
      %8663 = vmatprep.subr.mxu0 0.0
      %8664 = vmatpush1.msra.mxu0 0.0
      %8665 = vmatprep.subr.mxu0 0.0
      %8666 = vmatpush1.msra.mxu0 0.0
      %8667 = vmatprep.subr.mxu0 0.0
      %8668 = vmatpush1.msra.mxu0 0.0
      %8669 = vmatprep.subr.mxu0 0.0
      %8670 = vmatpush1.msra.mxu0 0.0
      %8671 = vmatprep.subr.mxu0 0.0
      %8672 = vmatpush1.msra.mxu0 0.0
      %8673 = vmatprep.subr.mxu0 0.0
      %8674 = vmatpush1.msra.mxu0 0.0
      %8675 = vmatprep.subr.mxu0 0.0
      %8676 = vmatpush1.msra.mxu0 0.0
      %8677 = vmatprep.subr.mxu0 0.0
      %8678 = vmatpush1.msra.mxu0 0.0
      %8679 = vmatprep.subr.mxu0 0.0
      %8680 = vmatpush1.msra.mxu0 0.0
      %8681 = vmatprep.subr.mxu0 0.0
      %8682 = vmatpush1.msra.mxu0 0.0
      %8683 = vmatprep.subr.mxu0 0.0
      %8684 = vmatpush1.msra.mxu0 0.0
      %8685 = vmatprep.subr.mxu0 0.0
      %8686 = vmatpush1.msra.mxu0 0.0
      %8687 = vmatprep.subr.mxu0 0.0
      %8688 = vmatpush1.msra.mxu0 0.0
      %8689 = vmatprep.subr.mxu0 0.0
      %8690 = vmatpush1.msra.mxu0 0.0
      %8691 = vmatprep.subr.mxu0 0.0
      %8692 = vmatpush1.msra.mxu0 0.0
      %8693 = vmatprep.subr.mxu0 0.0
      %8694 = vmatpush1.msra.mxu0 0.0
      %8695 = vmatprep.subr.mxu0 0.0
      %8696 = vmatpush1.msra.mxu0 0.0
      %8697 = vmatprep.subr.mxu0 0.0
      %8698 = vmatpush1.msra.mxu0 0.0
      %8699 = vmatprep.subr.mxu0 0.0
      %8700 = vmatpush1.msra.mxu0 0.0
      %8701 = vmatprep.subr.mxu0 0.0
      %8702 = vmatpush1.msra.mxu0 0.0
      %8703 = vmatprep.subr.mxu0 0.0
      %8704 = vmatpush1.msra.mxu0 0.0
      %8705 = vmatprep.subr.mxu0 0.0
      %8706 = vmatpush1.msra.mxu0 0.0
      %8707 = vmatprep.subr.mxu0 0.0
      %8708 = vmatpush1.msra.mxu0 0.0
      %8709 = vmatprep.mubr.f32.mxu0 0.0
      %8710 = vmatmul.mubr.f32.gmra.mrb[0].mxu0 %v8643
      %v8711 = vpop.f32.mrb[0].mxu0
      %v8712 = vadd.f32 0.0, %v8711
      %v8713 = vpop.f32.mrb[0].mxu0
      %8714 = vdwg.mxu0
      %v8716 = vsel %vm1755, %v8493, 0
      %8718 = vmatprep.subr.mxu0 0.0
      %8719 = vmatpush1.msra.mxu0 %v8055
      %8720 = vmatprep.subr.mxu0 0.0
      %8721 = vmatpush1.msra.mxu0 %v8056
      %8722 = vmatprep.subr.mxu0 0.0
      %8723 = vmatpush1.msra.mxu0 %v8057
      %8724 = vmatprep.subr.mxu0 0.0
      %8725 = vmatpush1.msra.mxu0 %v8058
      %8726 = vmatprep.subr.mxu0 0.0
      %8727 = vmatpush1.msra.mxu0 0.0
      %8728 = vmatprep.subr.mxu0 0.0
      %8729 = vmatpush1.msra.mxu0 0.0
      %8730 = vmatprep.subr.mxu0 0.0
      %8731 = vmatpush1.msra.mxu0 0.0
      %8732 = vmatprep.subr.mxu0 0.0
      %8733 = vmatpush1.msra.mxu0 0.0
      %8734 = vmatprep.subr.mxu0 0.0
      %8735 = vmatpush1.msra.mxu0 0.0
      %8736 = vmatprep.subr.mxu0 0.0
      %8737 = vmatpush1.msra.mxu0 0.0
      %8738 = vmatprep.subr.mxu0 0.0
      %8739 = vmatpush1.msra.mxu0 0.0
      %8740 = vmatprep.subr.mxu0 0.0
      %8741 = vmatpush1.msra.mxu0 0.0
      %8742 = vmatprep.subr.mxu0 0.0
      %8743 = vmatpush1.msra.mxu0 0.0
      %8744 = vmatprep.subr.mxu0 0.0
      %8745 = vmatpush1.msra.mxu0 0.0
      %8746 = vmatprep.subr.mxu0 0.0
      %8747 = vmatpush1.msra.mxu0 0.0
      %8748 = vmatprep.subr.mxu0 0.0
      %8749 = vmatpush1.msra.mxu0 0.0
      %8750 = vmatprep.subr.mxu0 0.0
      %8751 = vmatpush1.msra.mxu0 0.0
      %8752 = vmatprep.subr.mxu0 0.0
      %8753 = vmatpush1.msra.mxu0 0.0
      %8754 = vmatprep.subr.mxu0 0.0
      %8755 = vmatpush1.msra.mxu0 0.0
      %8756 = vmatprep.subr.mxu0 0.0
      %8757 = vmatpush1.msra.mxu0 0.0
      %8758 = vmatprep.subr.mxu0 0.0
      %8759 = vmatpush1.msra.mxu0 0.0
      %8760 = vmatprep.subr.mxu0 0.0
      %8761 = vmatpush1.msra.mxu0 0.0
      %8762 = vmatprep.subr.mxu0 0.0
      %8763 = vmatpush1.msra.mxu0 0.0
      %8764 = vmatprep.subr.mxu0 0.0
      %8765 = vmatpush1.msra.mxu0 0.0
      %8766 = vmatprep.subr.mxu0 0.0
      %8767 = vmatpush1.msra.mxu0 0.0
      %8768 = vmatprep.subr.mxu0 0.0
      %8769 = vmatpush1.msra.mxu0 0.0
      %8770 = vmatprep.subr.mxu0 0.0
      %8771 = vmatpush1.msra.mxu0 0.0
      %8772 = vmatprep.subr.mxu0 0.0
      %8773 = vmatpush1.msra.mxu0 0.0
      %8774 = vmatprep.subr.mxu0 0.0
      %8775 = vmatpush1.msra.mxu0 0.0
      %8776 = vmatprep.subr.mxu0 0.0
      %8777 = vmatpush1.msra.mxu0 0.0
      %8778 = vmatprep.subr.mxu0 0.0
      %8779 = vmatpush1.msra.mxu0 0.0
      %8780 = vmatprep.subr.mxu0 0.0
      %8781 = vmatpush1.msra.mxu0 0.0
      %8782 = vmatprep.mubr.f32.mxu0 0.0
      %8783 = vmatmul.mubr.f32.gmra.mrb[0].mxu0 %v8716
      %v8784 = vpop.f32.mrb[0].mxu0
      %v8785 = vadd.f32 0.0, %v8784
      %v8786 = vpop.f32.mrb[0].mxu0
      %8787 = vdwg.mxu0
      %v8789 = vsel %vm1755, %v8566, 0
      %8791 = vmatprep.subr.mxu0 0.0
      %8792 = vmatpush1.msra.mxu0 %v8059
      %8793 = vmatprep.subr.mxu0 0.0
      %8794 = vmatpush1.msra.mxu0 %v8060
      %8795 = vmatprep.subr.mxu0 0.0
      %8796 = vmatpush1.msra.mxu0 %v8061
      %8797 = vmatprep.subr.mxu0 0.0
      %8798 = vmatpush1.msra.mxu0 %v8062
      %8799 = vmatprep.subr.mxu0 0.0
      %8800 = vmatpush1.msra.mxu0 0.0
      %8801 = vmatprep.subr.mxu0 0.0
      %8802 = vmatpush1.msra.mxu0 0.0
      %8803 = vmatprep.subr.mxu0 0.0
      %8804 = vmatpush1.msra.mxu0 0.0
      %8805 = vmatprep.subr.mxu0 0.0
      %8806 = vmatpush1.msra.mxu0 0.0
      %8807 = vmatprep.subr.mxu0 0.0
      %8808 = vmatpush1.msra.mxu0 0.0
      %8809 = vmatprep.subr.mxu0 0.0
      %8810 = vmatpush1.msra.mxu0 0.0
      %8811 = vmatprep.subr.mxu0 0.0
      %8812 = vmatpush1.msra.mxu0 0.0
      %8813 = vmatprep.subr.mxu0 0.0
      %8814 = vmatpush1.msra.mxu0 0.0
      %8815 = vmatprep.subr.mxu0 0.0
      %8816 = vmatpush1.msra.mxu0 0.0
      %8817 = vmatprep.subr.mxu0 0.0
      %8818 = vmatpush1.msra.mxu0 0.0
      %8819 = vmatprep.subr.mxu0 0.0
      %8820 = vmatpush1.msra.mxu0 0.0
      %8821 = vmatprep.subr.mxu0 0.0
      %8822 = vmatpush1.msra.mxu0 0.0
      %8823 = vmatprep.subr.mxu0 0.0
      %8824 = vmatpush1.msra.mxu0 0.0
      %8825 = vmatprep.subr.mxu0 0.0
      %8826 = vmatpush1.msra.mxu0 0.0
      %8827 = vmatprep.subr.mxu0 0.0
      %8828 = vmatpush1.msra.mxu0 0.0
      %8829 = vmatprep.subr.mxu0 0.0
      %8830 = vmatpush1.msra.mxu0 0.0
      %8831 = vmatprep.subr.mxu0 0.0
      %8832 = vmatpush1.msra.mxu0 0.0
      %8833 = vmatprep.subr.mxu0 0.0
      %8834 = vmatpush1.msra.mxu0 0.0
      %8835 = vmatprep.subr.mxu0 0.0
      %8836 = vmatpush1.msra.mxu0 0.0
      %8837 = vmatprep.subr.mxu0 0.0
      %8838 = vmatpush1.msra.mxu0 0.0
      %8839 = vmatprep.subr.mxu0 0.0
      %8840 = vmatpush1.msra.mxu0 0.0
      %8841 = vmatprep.subr.mxu0 0.0
      %8842 = vmatpush1.msra.mxu0 0.0
      %8843 = vmatprep.subr.mxu0 0.0
      %8844 = vmatpush1.msra.mxu0 0.0
      %8845 = vmatprep.subr.mxu0 0.0
      %8846 = vmatpush1.msra.mxu0 0.0
      %8847 = vmatprep.subr.mxu0 0.0
      %8848 = vmatpush1.msra.mxu0 0.0
      %8849 = vmatprep.subr.mxu0 0.0
      %8850 = vmatpush1.msra.mxu0 0.0
      %8851 = vmatprep.subr.mxu0 0.0
      %8852 = vmatpush1.msra.mxu0 0.0
      %8853 = vmatprep.subr.mxu0 0.0
      %8854 = vmatpush1.msra.mxu0 0.0
      %8855 = vmatprep.mubr.f32.mxu0 0.0
      %8856 = vmatmul.mubr.f32.gmra.mrb[0].mxu0 %v8789
      %v8857 = vpop.f32.mrb[0].mxu0
      %v8858 = vadd.f32 0.0, %v8857
      %v8859 = vpop.f32.mrb[0].mxu0
      %8860 = vdwg.mxu0
      %v8862 = vsel %vm1755, %v8639, 0
      %8864 = vmatprep.subr.mxu0 0.0
      %8865 = vmatpush1.msra.mxu0 %v8063
      %8866 = vmatprep.subr.mxu0 0.0
      %8867 = vmatpush1.msra.mxu0 %v8064
      %8868 = vmatprep.subr.mxu0 0.0
      %8869 = vmatpush1.msra.mxu0 %v8065
      %8870 = vmatprep.subr.mxu0 0.0
      %8871 = vmatpush1.msra.mxu0 %v8066
      %8872 = vmatprep.subr.mxu0 0.0
      %8873 = vmatpush1.msra.mxu0 0.0
      %8874 = vmatprep.subr.mxu0 0.0
      %8875 = vmatpush1.msra.mxu0 0.0
      %8876 = vmatprep.subr.mxu0 0.0
      %8877 = vmatpush1.msra.mxu0 0.0
      %8878 = vmatprep.subr.mxu0 0.0
      %8879 = vmatpush1.msra.mxu0 0.0
      %8880 = vmatprep.subr.mxu0 0.0
      %8881 = vmatpush1.msra.mxu0 0.0
      %8882 = vmatprep.subr.mxu0 0.0
      %8883 = vmatpush1.msra.mxu0 0.0
      %8884 = vmatprep.subr.mxu0 0.0
      %8885 = vmatpush1.msra.mxu0 0.0
      %8886 = vmatprep.subr.mxu0 0.0
      %8887 = vmatpush1.msra.mxu0 0.0
      %8888 = vmatprep.subr.mxu0 0.0
      %8889 = vmatpush1.msra.mxu0 0.0
      %8890 = vmatprep.subr.mxu0 0.0
      %8891 = vmatpush1.msra.mxu0 0.0
      %8892 = vmatprep.subr.mxu0 0.0
      %8893 = vmatpush1.msra.mxu0 0.0
      %8894 = vmatprep.subr.mxu0 0.0
      %8895 = vmatpush1.msra.mxu0 0.0
      %8896 = vmatprep.subr.mxu0 0.0
      %8897 = vmatpush1.msra.mxu0 0.0
      %8898 = vmatprep.subr.mxu0 0.0
      %8899 = vmatpush1.msra.mxu0 0.0
      %8900 = vmatprep.subr.mxu0 0.0
      %8901 = vmatpush1.msra.mxu0 0.0
      %8902 = vmatprep.subr.mxu0 0.0
      %8903 = vmatpush1.msra.mxu0 0.0
      %8904 = vmatprep.subr.mxu0 0.0
      %8905 = vmatpush1.msra.mxu0 0.0
      %8906 = vmatprep.subr.mxu0 0.0
      %8907 = vmatpush1.msra.mxu0 0.0
      %8908 = vmatprep.subr.mxu0 0.0
      %8909 = vmatpush1.msra.mxu0 0.0
      %8910 = vmatprep.subr.mxu0 0.0
      %8911 = vmatpush1.msra.mxu0 0.0
      %8912 = vmatprep.subr.mxu0 0.0
      %8913 = vmatpush1.msra.mxu0 0.0
      %8914 = vmatprep.subr.mxu0 0.0
      %8915 = vmatpush1.msra.mxu0 0.0
      %8916 = vmatprep.subr.mxu0 0.0
      %8917 = vmatpush1.msra.mxu0 0.0
      %8918 = vmatprep.subr.mxu0 0.0
      %8919 = vmatpush1.msra.mxu0 0.0
      %8920 = vmatprep.subr.mxu0 0.0
      %8921 = vmatpush1.msra.mxu0 0.0
      %8922 = vmatprep.subr.mxu0 0.0
      %8923 = vmatpush1.msra.mxu0 0.0
      %8924 = vmatprep.subr.mxu0 0.0
      %8925 = vmatpush1.msra.mxu0 0.0
      %8926 = vmatprep.subr.mxu0 0.0
      %8927 = vmatpush1.msra.mxu0 0.0
      %8928 = vmatprep.mubr.f32.mxu0 0.0
      %8929 = vmatmul.mubr.f32.gmra.mrb[0].mxu0 %v8862
      %v8930 = vpop.f32.mrb[0].mxu0
      %v8931 = vadd.f32 0.0, %v8930
      %v8932 = vpop.f32.mrb[0].mxu0
      %8933 = vdwg.mxu0
      %v8935 = vsel %vm1755, %v8712, 0
      %8937 = vmatprep.subr.mxu0 0.0
      %8938 = vmatpush1.msra.mxu0 %v8067
      %8939 = vmatprep.subr.mxu0 0.0
      %8940 = vmatpush1.msra.mxu0 %v8068
      %8941 = vmatprep.subr.mxu0 0.0
      %8942 = vmatpush1.msra.mxu0 %v8069
      %8943 = vmatprep.subr.mxu0 0.0
      %8944 = vmatpush1.msra.mxu0 %v8070
      %8945 = vmatprep.subr.mxu0 0.0
      %8946 = vmatpush1.msra.mxu0 0.0
      %8947 = vmatprep.subr.mxu0 0.0
      %8948 = vmatpush1.msra.mxu0 0.0
      %8949 = vmatprep.subr.mxu0 0.0
      %8950 = vmatpush1.msra.mxu0 0.0
      %8951 = vmatprep.subr.mxu0 0.0
      %8952 = vmatpush1.msra.mxu0 0.0
      %8953 = vmatprep.subr.mxu0 0.0
      %8954 = vmatpush1.msra.mxu0 0.0
      %8955 = vmatprep.subr.mxu0 0.0
      %8956 = vmatpush1.msra.mxu0 0.0
      %8957 = vmatprep.subr.mxu0 0.0
      %8958 = vmatpush1.msra.mxu0 0.0
      %8959 = vmatprep.subr.mxu0 0.0
      %8960 = vmatpush1.msra.mxu0 0.0
      %8961 = vmatprep.subr.mxu0 0.0
      %8962 = vmatpush1.msra.mxu0 0.0
      %8963 = vmatprep.subr.mxu0 0.0
      %8964 = vmatpush1.msra.mxu0 0.0
      %8965 = vmatprep.subr.mxu0 0.0
      %8966 = vmatpush1.msra.mxu0 0.0
      %8967 = vmatprep.subr.mxu0 0.0
      %8968 = vmatpush1.msra.mxu0 0.0
      %8969 = vmatprep.subr.mxu0 0.0
      %8970 = vmatpush1.msra.mxu0 0.0
      %8971 = vmatprep.subr.mxu0 0.0
      %8972 = vmatpush1.msra.mxu0 0.0
      %8973 = vmatprep.subr.mxu0 0.0
      %8974 = vmatpush1.msra.mxu0 0.0
      %8975 = vmatprep.subr.mxu0 0.0
      %8976 = vmatpush1.msra.mxu0 0.0
      %8977 = vmatprep.subr.mxu0 0.0
      %8978 = vmatpush1.msra.mxu0 0.0
      %8979 = vmatprep.subr.mxu0 0.0
      %8980 = vmatpush1.msra.mxu0 0.0
      %8981 = vmatprep.subr.mxu0 0.0
      %8982 = vmatpush1.msra.mxu0 0.0
      %8983 = vmatprep.subr.mxu0 0.0
      %8984 = vmatpush1.msra.mxu0 0.0
      %8985 = vmatprep.subr.mxu0 0.0
      %8986 = vmatpush1.msra.mxu0 0.0
      %8987 = vmatprep.subr.mxu0 0.0
      %8988 = vmatpush1.msra.mxu0 0.0
      %8989 = vmatprep.subr.mxu0 0.0
      %8990 = vmatpush1.msra.mxu0 0.0
      %8991 = vmatprep.subr.mxu0 0.0
      %8992 = vmatpush1.msra.mxu0 0.0
      %8993 = vmatprep.subr.mxu0 0.0
      %8994 = vmatpush1.msra.mxu0 0.0
      %8995 = vmatprep.subr.mxu0 0.0
      %8996 = vmatpush1.msra.mxu0 0.0
      %8997 = vmatprep.subr.mxu0 0.0
      %8998 = vmatpush1.msra.mxu0 0.0
      %8999 = vmatprep.subr.mxu0 0.0
      %9000 = vmatpush1.msra.mxu0 0.0
      %9001 = vmatprep.mubr.f32.mxu0 0.0
      %9002 = vmatmul.mubr.f32.gmra.mrb[0].mxu0 %v8935
      %v9003 = vpop.f32.mrb[0].mxu0
      %v9004 = vadd.f32 0.0, %v9003
      %v9005 = vpop.f32.mrb[0].mxu0
      %9006 = vdwg.mxu0
      %v9007 = vadd.f32 %v8785, %v8858
      %v9008 = vadd.f32 %v9007, %v8931
      %v9009 = vadd.f32 %v9008, %v9004
      %s9010 = scalar_lea.vmem %s12, 1
      %v9011 = vld [vmem:[%s9010] sm:$0x1]
      %s9012 = scalar_lea.vmem %s13, 1
      %v9013 = vld [vmem:[%s9012] sm:$0x1]
      %v9014 = vadd.f32 %v7018, %v9009
      %v9015 = vmul.f32 %v9014, %v700
      %9016 = vadd.xlane.f32.xlu0 %v9015
      %v9017 = vpop.xlane.xlu0 %9016
      %v9018 = vmul.f32 %v9017, 0.03125
      %v9019 = vsub.f32 %v9014, %v9018
      %v9020 = vmul.f32 %v9019, %v700
      %v9021 = vmul.f32 %v9020, %v9020
      %9022 = vadd.xlane.f32.xlu0 %v9021
      %v9023 = vpop.xlane.xlu0 %9022
      %v9024 = vmul.f32 %v9023, 0.032258064
      %v9025 = vrsqrt.pop %v9024
      %v9026 = vmul.f32 %v9024, %v9025
      %vm9027 = vcmp.eq.f32.partialorder %v9024, inf
      %v9028 = vsel %vm9027, %v9024, %v9026
      %vm9029 = vcmp.eq.f32.partialorder %v9024, 0.0
      %v9030 = vand.u32 %v9024, 2147483648
      %v9031 = vsel %vm9029, %v9030, %v9028
      %v9033 = vlaneseq
      %v9034 = vshrl.u32 %v9033, 7
      %v9035 = vsub.s32 0, %v9034
      %v9036 = vrot.slane %v9011, %v9035
      %v9038 = vmul.f32 %v9036, %v9019
      %v9039 = vadd.f32 %v9031, 1e-06
      %v9040 = vrcp.pop %v9039
      %v9041 = vmul.f32 %v9038, %v9040
      %v9043 = vlaneseq
      %v9044 = vshrl.u32 %v9043, 7
      %v9045 = vsub.s32 0, %v9044
      %v9046 = vrot.slane %v9013, %v9045
      %v9048 = vadd.f32 %v9041, %v9046
      %s9049 = scalar_lea.vmem %s14, 128
      %v9050 = vld [vmem:[%s9049] sm:$0xff]
      %v9051 = vld [vmem:[%s9049 + $0x8] sm:$0xff]
      %v9052 = vld [vmem:[%s9049 + $0x10] sm:$0xff]
      %v9053 = vld [vmem:[%s9049 + $0x18] sm:$0xff]
      %v9054 = vld [vmem:[%s9049 + $0x20] sm:$0xff]
      %v9055 = vld [vmem:[%s9049 + $0x28] sm:$0xff]
      %v9056 = vld [vmem:[%s9049 + $0x30] sm:$0xff]
      %v9057 = vld [vmem:[%s9049 + $0x38] sm:$0xff]
      %v9058 = vld [vmem:[%s9049 + $0x40] sm:$0xff]
      %v9059 = vld [vmem:[%s9049 + $0x48] sm:$0xff]
      %v9060 = vld [vmem:[%s9049 + $0x50] sm:$0xff]
      %v9061 = vld [vmem:[%s9049 + $0x58] sm:$0xff]
      %v9062 = vld [vmem:[%s9049 + $0x60] sm:$0xff]
      %v9063 = vld [vmem:[%s9049 + $0x68] sm:$0xff]
      %v9064 = vld [vmem:[%s9049 + $0x70] sm:$0xff]
      %v9065 = vld [vmem:[%s9049 + $0x78] sm:$0xff]
      %s9066 = scalar_lea.vmem %s15, 1
      %v9067 = vld [vmem:[%s9066] sm:$0x1]
      %v9069 = vlaneseq
      %v9070 = vshrl.u32 %v9069, 7
      %v9071 = vsub.s32 0, %v9070
      %v9072 = vrot.slane %v9067, %v9071
      %9074 = vmatprep.subr.mxu0 0.0
      %9075 = vmatpush1.msra.mxu0 %v9050
      %9076 = vmatprep.subr.mxu0 0.0
      %9077 = vmatpush1.msra.mxu0 %v9051
      %9078 = vmatprep.subr.mxu0 0.0
      %9079 = vmatpush1.msra.mxu0 %v9052
      %9080 = vmatprep.subr.mxu0 0.0
      %9081 = vmatpush1.msra.mxu0 %v9053
      %9082 = vmatprep.subr.mxu0 0.0
      %9083 = vmatpush1.msra.mxu0 %v9054
      %9084 = vmatprep.subr.mxu0 0.0
      %9085 = vmatpush1.msra.mxu0 %v9055
      %9086 = vmatprep.subr.mxu0 0.0
      %9087 = vmatpush1.msra.mxu0 %v9056
      %9088 = vmatprep.subr.mxu0 0.0
      %9089 = vmatpush1.msra.mxu0 %v9057
      %9090 = vmatprep.subr.mxu0 0.0
      %9091 = vmatpush1.msra.mxu0 %v9058
      %9092 = vmatprep.subr.mxu0 0.0
      %9093 = vmatpush1.msra.mxu0 %v9059
      %9094 = vmatprep.subr.mxu0 0.0
      %9095 = vmatpush1.msra.mxu0 %v9060
      %9096 = vmatprep.subr.mxu0 0.0
      %9097 = vmatpush1.msra.mxu0 %v9061
      %9098 = vmatprep.subr.mxu0 0.0
      %9099 = vmatpush1.msra.mxu0 %v9062
      %9100 = vmatprep.subr.mxu0 0.0
      %9101 = vmatpush1.msra.mxu0 %v9063
      %9102 = vmatprep.subr.mxu0 0.0
      %9103 = vmatpush1.msra.mxu0 %v9064
      %9104 = vmatprep.subr.mxu0 0.0
      %9105 = vmatpush1.msra.mxu0 %v9065
      %9106 = vmatprep.subr.mxu0 0.0
      %9107 = vmatpush1.msra.mxu0 0.0
      %9108 = vmatprep.subr.mxu0 0.0
      %9109 = vmatpush1.msra.mxu0 0.0
      %9110 = vmatprep.subr.mxu0 0.0
      %9111 = vmatpush1.msra.mxu0 0.0
      %9112 = vmatprep.subr.mxu0 0.0
      %9113 = vmatpush1.msra.mxu0 0.0
      %9114 = vmatprep.subr.mxu0 0.0
      %9115 = vmatpush1.msra.mxu0 0.0
      %9116 = vmatprep.subr.mxu0 0.0
      %9117 = vmatpush1.msra.mxu0 0.0
      %9118 = vmatprep.subr.mxu0 0.0
      %9119 = vmatpush1.msra.mxu0 0.0
      %9120 = vmatprep.subr.mxu0 0.0
      %9121 = vmatpush1.msra.mxu0 0.0
      %9122 = vmatprep.subr.mxu0 0.0
      %9123 = vmatpush1.msra.mxu0 0.0
      %9124 = vmatprep.subr.mxu0 0.0
      %9125 = vmatpush1.msra.mxu0 0.0
      %9126 = vmatprep.subr.mxu0 0.0
      %9127 = vmatpush1.msra.mxu0 0.0
      %9128 = vmatprep.subr.mxu0 0.0
      %9129 = vmatpush1.msra.mxu0 0.0
      %9130 = vmatprep.subr.mxu0 0.0
      %9131 = vmatpush1.msra.mxu0 0.0
      %9132 = vmatprep.subr.mxu0 0.0
      %9133 = vmatpush1.msra.mxu0 0.0
      %9134 = vmatprep.subr.mxu0 0.0
      %9135 = vmatpush1.msra.mxu0 0.0
      %9136 = vmatprep.subr.mxu0 0.0
      %9137 = vmatpush1.msra.mxu0 0.0
      %9138 = vmatprep.mubr.f32.mxu0 0.0
      %9139 = vmatmul.mubr.f32.gmra.mrb[0].mxu0 %v9048
      %v9140 = vpop.f32.mrb[0].mxu0
      %v9141 = vadd.f32 %v9072, %v9140
      %v9142 = vpop.f32.mrb[0].mxu0
      %9143 = vdwg.mxu0
      %v9144 = vmax.f32 %v9141, 0.0
      %s9145 = scalar_lea.vmem %s16, 128
      %v9146 = vld [vmem:[%s9145] sm:$0xff]
      %v9147 = vld [vmem:[%s9145 + $0x8] sm:$0xff]
      %v9148 = vld [vmem:[%s9145 + $0x10] sm:$0xff]
      %v9149 = vld [vmem:[%s9145 + $0x18] sm:$0xff]
      %v9150 = vld [vmem:[%s9145 + $0x20] sm:$0xff]
      %v9151 = vld [vmem:[%s9145 + $0x28] sm:$0xff]
      %v9152 = vld [vmem:[%s9145 + $0x30] sm:$0xff]
      %v9153 = vld [vmem:[%s9145 + $0x38] sm:$0xff]
      %v9154 = vld [vmem:[%s9145 + $0x40] sm:$0xff]
      %v9155 = vld [vmem:[%s9145 + $0x48] sm:$0xff]
      %v9156 = vld [vmem:[%s9145 + $0x50] sm:$0xff]
      %v9157 = vld [vmem:[%s9145 + $0x58] sm:$0xff]
      %v9158 = vld [vmem:[%s9145 + $0x60] sm:$0xff]
      %v9159 = vld [vmem:[%s9145 + $0x68] sm:$0xff]
      %v9160 = vld [vmem:[%s9145 + $0x70] sm:$0xff]
      %v9161 = vld [vmem:[%s9145 + $0x78] sm:$0xff]
      %s9162 = scalar_lea.vmem %s17, 1
      %v9163 = vld [vmem:[%s9162] sm:$0x1]
      %v9165 = vlaneseq
      %v9166 = vshrl.u32 %v9165, 7
      %v9167 = vsub.s32 0, %v9166
      %v9168 = vrot.slane %v9163, %v9167
      %9170 = vmatprep.subr.mxu0 0.0
      %9171 = vmatpush1.msra.mxu0 %v9146
      %9172 = vmatprep.subr.mxu0 0.0
      %9173 = vmatpush1.msra.mxu0 %v9147
      %9174 = vmatprep.subr.mxu0 0.0
      %9175 = vmatpush1.msra.mxu0 %v9148
      %9176 = vmatprep.subr.mxu0 0.0
      %9177 = vmatpush1.msra.mxu0 %v9149
      %9178 = vmatprep.subr.mxu0 0.0
      %9179 = vmatpush1.msra.mxu0 %v9150
      %9180 = vmatprep.subr.mxu0 0.0
      %9181 = vmatpush1.msra.mxu0 %v9151
      %9182 = vmatprep.subr.mxu0 0.0
      %9183 = vmatpush1.msra.mxu0 %v9152
      %9184 = vmatprep.subr.mxu0 0.0
      %9185 = vmatpush1.msra.mxu0 %v9153
      %9186 = vmatprep.subr.mxu0 0.0
      %9187 = vmatpush1.msra.mxu0 %v9154
      %9188 = vmatprep.subr.mxu0 0.0
      %9189 = vmatpush1.msra.mxu0 %v9155
      %9190 = vmatprep.subr.mxu0 0.0
      %9191 = vmatpush1.msra.mxu0 %v9156
      %9192 = vmatprep.subr.mxu0 0.0
      %9193 = vmatpush1.msra.mxu0 %v9157
      %9194 = vmatprep.subr.mxu0 0.0
      %9195 = vmatpush1.msra.mxu0 %v9158
      %9196 = vmatprep.subr.mxu0 0.0
      %9197 = vmatpush1.msra.mxu0 %v9159
      %9198 = vmatprep.subr.mxu0 0.0
      %9199 = vmatpush1.msra.mxu0 %v9160
      %9200 = vmatprep.subr.mxu0 0.0
      %9201 = vmatpush1.msra.mxu0 %v9161
      %9202 = vmatprep.subr.mxu0 0.0
      %9203 = vmatpush1.msra.mxu0 0.0
      %9204 = vmatprep.subr.mxu0 0.0
      %9205 = vmatpush1.msra.mxu0 0.0
      %9206 = vmatprep.subr.mxu0 0.0
      %9207 = vmatpush1.msra.mxu0 0.0
      %9208 = vmatprep.subr.mxu0 0.0
      %9209 = vmatpush1.msra.mxu0 0.0
      %9210 = vmatprep.subr.mxu0 0.0
      %9211 = vmatpush1.msra.mxu0 0.0
      %9212 = vmatprep.subr.mxu0 0.0
      %9213 = vmatpush1.msra.mxu0 0.0
      %9214 = vmatprep.subr.mxu0 0.0
      %9215 = vmatpush1.msra.mxu0 0.0
      %9216 = vmatprep.subr.mxu0 0.0
      %9217 = vmatpush1.msra.mxu0 0.0
      %9218 = vmatprep.subr.mxu0 0.0
      %9219 = vmatpush1.msra.mxu0 0.0
      %9220 = vmatprep.subr.mxu0 0.0
      %9221 = vmatpush1.msra.mxu0 0.0
      %9222 = vmatprep.subr.mxu0 0.0
      %9223 = vmatpush1.msra.mxu0 0.0
      %9224 = vmatprep.subr.mxu0 0.0
      %9225 = vmatpush1.msra.mxu0 0.0
      %9226 = vmatprep.subr.mxu0 0.0
      %9227 = vmatpush1.msra.mxu0 0.0
      %9228 = vmatprep.subr.mxu0 0.0
      %9229 = vmatpush1.msra.mxu0 0.0
      %9230 = vmatprep.subr.mxu0 0.0
      %9231 = vmatpush1.msra.mxu0 0.0
      %9232 = vmatprep.subr.mxu0 0.0
      %9233 = vmatpush1.msra.mxu0 0.0
      %9234 = vmatprep.mubr.f32.mxu0 0.0
      %9235 = vmatmul.mubr.f32.gmra.mrb[0].mxu0 %v9144
      %v9236 = vpop.f32.mrb[0].mxu0
      %v9237 = vadd.f32 %v9168, %v9236
      %v9238 = vpop.f32.mrb[0].mxu0
      %9239 = vdwg.mxu0
      %s9240 = scalar_lea.vmem %s18, 1
      %v9241 = vld [vmem:[%s9240] sm:$0x1]
      %s9242 = scalar_lea.vmem %s19, 1
      %v9243 = vld [vmem:[%s9242] sm:$0x1]
      %v9244 = vadd.f32 %v9048, %v9237
      %v9245 = vmul.f32 %v9244, %v700
      %9246 = vadd.xlane.f32.xlu0 %v9245
      %v9247 = vpop.xlane.xlu0 %9246
      %v9248 = vmul.f32 %v9247, 0.03125
      %v9249 = vsub.f32 %v9244, %v9248
      %v9250 = vmul.f32 %v9249, %v700
      %v9251 = vmul.f32 %v9250, %v9250
      %9252 = vadd.xlane.f32.xlu0 %v9251
      %v9253 = vpop.xlane.xlu0 %9252
      %v9254 = vmul.f32 %v9253, 0.032258064
      %v9255 = vrsqrt.pop %v9254
      %v9256 = vmul.f32 %v9254, %v9255
      %vm9257 = vcmp.eq.f32.partialorder %v9254, inf
      %v9258 = vsel %vm9257, %v9254, %v9256
      %vm9259 = vcmp.eq.f32.partialorder %v9254, 0.0
      %v9260 = vand.u32 %v9254, 2147483648
      %v9261 = vsel %vm9259, %v9260, %v9258
      %v9263 = vlaneseq
      %v9264 = vshrl.u32 %v9263, 7
      %v9265 = vsub.s32 0, %v9264
      %v9266 = vrot.slane %v9241, %v9265
      %v9268 = vmul.f32 %v9266, %v9249
      %v9269 = vadd.f32 %v9261, 1e-06
      %v9270 = vrcp.pop %v9269
      %v9271 = vmul.f32 %v9268, %v9270
      %v9273 = vlaneseq
      %v9274 = vshrl.u32 %v9273, 7
      %v9275 = vsub.s32 0, %v9274
      %v9276 = vrot.slane %v9243, %v9275
      %v9278 = vadd.f32 %v9271, %v9276
      %v9279 = vld [vmem:[%s20] sm:$0xff]
      %v9280 = vld [vmem:[%s20 + $0x8] sm:$0xff]
      %v9281 = vld [vmem:[%s20 + $0x10] sm:$0xff]
      %v9282 = vld [vmem:[%s20 + $0x18] sm:$0xff]
      %v9283 = vld [vmem:[%s20 + $0x20] sm:$0xff]
      %v9284 = vld [vmem:[%s20 + $0x28] sm:$0xff]
      %v9285 = vld [vmem:[%s20 + $0x30] sm:$0xff]
      %v9286 = vld [vmem:[%s20 + $0x38] sm:$0xff]
      %v9287 = vld [vmem:[%s20 + $0x40] sm:$0xff]
      %v9288 = vld [vmem:[%s20 + $0x48] sm:$0xff]
      %v9289 = vld [vmem:[%s20 + $0x50] sm:$0xff]
      %v9290 = vld [vmem:[%s20 + $0x58] sm:$0xff]
      %v9291 = vld [vmem:[%s20 + $0x60] sm:$0xff]
      %v9292 = vld [vmem:[%s20 + $0x68] sm:$0xff]
      %v9293 = vld [vmem:[%s20 + $0x70] sm:$0xff]
      %v9294 = vld [vmem:[%s20 + $0x78] sm:$0xff]
      %v9295 = vld [vmem:[%s21] sm:$0x1]
      %v9297 = vlaneseq
      %v9298 = vshrl.u32 %v9297, 7
      %v9299 = vsub.s32 0, %v9298
      %v9300 = vrot.slane %v9295, %v9299
      %9302 = vmatprep.subr.mxu0 0.0
      %9303 = vmatpush1.msra.mxu0 %v9279
      %9304 = vmatprep.subr.mxu0 0.0
      %9305 = vmatpush1.msra.mxu0 %v9280
      %9306 = vmatprep.subr.mxu0 0.0
      %9307 = vmatpush1.msra.mxu0 %v9281
      %9308 = vmatprep.subr.mxu0 0.0
      %9309 = vmatpush1.msra.mxu0 %v9282
      %9310 = vmatprep.subr.mxu0 0.0
      %9311 = vmatpush1.msra.mxu0 %v9283
      %9312 = vmatprep.subr.mxu0 0.0
      %9313 = vmatpush1.msra.mxu0 %v9284
      %9314 = vmatprep.subr.mxu0 0.0
      %9315 = vmatpush1.msra.mxu0 %v9285
      %9316 = vmatprep.subr.mxu0 0.0
      %9317 = vmatpush1.msra.mxu0 %v9286
      %9318 = vmatprep.subr.mxu0 0.0
      %9319 = vmatpush1.msra.mxu0 %v9287
      %9320 = vmatprep.subr.mxu0 0.0
      %9321 = vmatpush1.msra.mxu0 %v9288
      %9322 = vmatprep.subr.mxu0 0.0
      %9323 = vmatpush1.msra.mxu0 %v9289
      %9324 = vmatprep.subr.mxu0 0.0
      %9325 = vmatpush1.msra.mxu0 %v9290
      %9326 = vmatprep.subr.mxu0 0.0
      %9327 = vmatpush1.msra.mxu0 %v9291
      %9328 = vmatprep.subr.mxu0 0.0
      %9329 = vmatpush1.msra.mxu0 %v9292
      %9330 = vmatprep.subr.mxu0 0.0
      %9331 = vmatpush1.msra.mxu0 %v9293
      %9332 = vmatprep.subr.mxu0 0.0
      %9333 = vmatpush1.msra.mxu0 %v9294
      %9334 = vmatprep.subr.mxu0 0.0
      %9335 = vmatpush1.msra.mxu0 0.0
      %9336 = vmatprep.subr.mxu0 0.0
      %9337 = vmatpush1.msra.mxu0 0.0
      %9338 = vmatprep.subr.mxu0 0.0
      %9339 = vmatpush1.msra.mxu0 0.0
      %9340 = vmatprep.subr.mxu0 0.0
      %9341 = vmatpush1.msra.mxu0 0.0
      %9342 = vmatprep.subr.mxu0 0.0
      %9343 = vmatpush1.msra.mxu0 0.0
      %9344 = vmatprep.subr.mxu0 0.0
      %9345 = vmatpush1.msra.mxu0 0.0
      %9346 = vmatprep.subr.mxu0 0.0
      %9347 = vmatpush1.msra.mxu0 0.0
      %9348 = vmatprep.subr.mxu0 0.0
      %9349 = vmatpush1.msra.mxu0 0.0
      %9350 = vmatprep.subr.mxu0 0.0
      %9351 = vmatpush1.msra.mxu0 0.0
      %9352 = vmatprep.subr.mxu0 0.0
      %9353 = vmatpush1.msra.mxu0 0.0
      %9354 = vmatprep.subr.mxu0 0.0
      %9355 = vmatpush1.msra.mxu0 0.0
      %9356 = vmatprep.subr.mxu0 0.0
      %9357 = vmatpush1.msra.mxu0 0.0
      %9358 = vmatprep.subr.mxu0 0.0
      %9359 = vmatpush1.msra.mxu0 0.0
      %9360 = vmatprep.subr.mxu0 0.0
      %9361 = vmatpush1.msra.mxu0 0.0
      %9362 = vmatprep.subr.mxu0 0.0
      %9363 = vmatpush1.msra.mxu0 0.0
      %9364 = vmatprep.subr.mxu0 0.0
      %9365 = vmatpush1.msra.mxu0 0.0
      %9366 = vmatprep.mubr.f32.mxu0 0.0
      %9367 = vmatmul.mubr.f32.gmra.mrb[0].mxu0 %v9278
      %v9368 = vpop.f32.mrb[0].mxu0
      %v9369 = vadd.f32 %v9300, %v9368
      %v9370 = vpop.f32.mrb[0].mxu0
      %9371 = vdwg.mxu0
      %9372 = vst [vmem:[%s695] sm:$0xff] %v9369
      %p9373 = scmp.lt.s32.totalorder %s33, 1
      %s9374 = scalar_select %p9373, %s33, 1
      %s9375 = smul.addr %s9374, 8
      %s9376 = scalar_lea.vmem %s22, %s9375
      // Predicated region
      $region109: #{_forward_jit.1} parent=107 // pred_check
        %p9377 = pneg %p523
      $region110: #{_forward_jit.1} parent=107 // pred_check_branch
        %9379 = sbr.rel (%p9377) target = $region112
      $region111: #{_forward_jit.1} parent=107 // pred_region
        _
      $region112: #{_forward_jit.1} parent=107 // pred_fallthru
        _
    $region108: #{_forward_jit.1} parent=5 // pred_fallthru
      _
    %p9380 = scmp.le.s32.totalorder 2, %s28
    // Predicated region
    $region113: #{_forward_jit.1} parent=5 // pred_check
      %p9381 = pneg %p9380
    $region114: #{_forward_jit.1} parent=5 // pred_check_branch
      %9383 = sbr.rel (%p9381) target = $region116
    $region115: #{_forward_jit.1} parent=5 // pred_region
      %s9384 = ssub.s32 %s28, 2
      // Predicated region
      $region117: #{_forward_jit.1} parent=115 // pred_check
        %p9385 = pneg %p529
      $region118: #{_forward_jit.1} parent=115 // pred_check_branch
        %9387 = sbr.rel (%p9385) target = $region120
      $region119: #{_forward_jit.1} parent=115 // pred_region
        %p9388 = scmp.lt.s32.totalorder %s34, 1
        %s9389 = scalar_select %p9388, %s34, 1
        %s9390 = smul.addr %s9389, 8
        %s9391 = scalar_lea.vmem %s22, %s9390
      $region120: #{_forward_jit.1} parent=115 // pred_fallthru
        _
    $region116: #{_forward_jit.1} parent=5 // pred_fallthru
      _
  $region6: #{_forward_jit.1} parent=0 // loop_footer
    %s32 = sadd.s32 1, %s28
  $region7: #{_forward_jit.1} parent=0 // loop_footer_branch
    %27 = sbr.rel target = $region3
  $region8: #{_forward_jit.1} parent=0 // loop_exit
    _

</llo_original>
